<compile_context>
chip_gen: v5e
topology: v5e:2x2
jax: 0.10.0
libtpu: 0.0.40
codegen_flags: <defaults>
</compile_context>

<pallas_src>
import functools
from math import sqrt

import jax
import jax.numpy as jnp
import numpy as np
from jax import lax
from jax.experimental import pallas as pl
from jax.experimental.pallas import tpu as pltpu

# Safe on every generation (v7x: 64 MiB physical; v5e/v6e: 128 MiB — could go
# higher there).  TODO(synk): single-buffer the invariant weight blocks
# (pl.Buffered(1)) on v7x once that path is verified on the target jax build.
_VMEM_LIMIT_BYTES = 48 * 1024 * 1024

_SQRT_2_OVER_PI = np.float32(sqrt(2.0 / np.pi))
_GELU_C = np.float32(0.044715)


# ----------------------------------------------------------------------------
# In-kernel helpers (operate on VMEM-resident arrays)
# ----------------------------------------------------------------------------
def _layernorm(x, gamma, beta, eps=1e-5):
    mean = jnp.mean(x, axis=-1, keepdims=True)
    cent = x - mean
    var = jnp.mean(cent * cent, axis=-1, keepdims=True)
    return cent * lax.rsqrt(var + eps) * gamma + beta


def _gelu_tanh(x):
    # tanh approximation -> EUP slot instead of a long VPU erf polynomial.
    return 0.5 * x * (1.0 + jnp.tanh(_SQRT_2_OVER_PI * (x + _GELU_C * x * x * x)))


def _attn_core(Q, K, V, wo_bf, bo, n_heads):
    """Scaled-dot-product attention + single full-K output projection.

    Q: (TB, L, D) f32, K/V: (TB, S, D) f32, wo_bf: (D, D) bf16, bo: (1, D) f32.
    Returns (TB*L, D) f32.
    """
    tb, L, D = Q.shape
    dk = D // n_heads
    scale = np.float32(1.0 / sqrt(dk))
    heads = []
    for h in range(n_heads):                       # static, small head loop
        lo = h * dk
        qh = Q[:, :, lo:lo + dk].astype(jnp.bfloat16)
        kh = K[:, :, lo:lo + dk].astype(jnp.bfloat16)
        vh = V[:, :, lo:lo + dk].astype(jnp.bfloat16)
        s = jnp.einsum('bld,bsd->bls', qh, kh,
                       preferred_element_type=jnp.float32) * scale
        s = s - jnp.max(s, axis=-1, keepdims=True)
        p = jnp.exp(s)
        a = p * pl.reciprocal(jnp.sum(p, axis=-1, keepdims=True), approx=True)
        heads.append(jnp.einsum('bls,bsd->bld', a.astype(jnp.bfloat16), vh,
                                preferred_element_type=jnp.float32))
    # concat(heads) @ Wo  — one full-K matmul instead of n_heads tiny-K matmuls.
    o2 = jnp.concatenate(heads, axis=-1).reshape(tb * L, D).astype(jnp.bfloat16)
    return jnp.dot(o2, wo_bf, preferred_element_type=jnp.float32) + bo


def _add_norm_mlp_norm(x2, a2, g1, be1, w1_bf, b1, w2_bf, b2, g2, be2):
    """z = LN_b(y + MLP(y)),  y = LN_a(x + a);  x2/a2 (M, D) f32, weights bf16."""
    y = _layernorm(x2 + a2, g1, be1)
    h = jnp.dot(y.astype(jnp.bfloat16), w1_bf,
                preferred_element_type=jnp.float32) + b1
    h = _gelu_tanh(h)
    m = jnp.dot(h.astype(jnp.bfloat16), w2_bf,
                preferred_element_type=jnp.float32) + b2
    return _layernorm(y + m, g2, be2)


# ----------------------------------------------------------------------------
# Stage kernels (one fused pallas_call per TSA stage)
# ----------------------------------------------------------------------------
def _tsa_stage1_kernel(x_ref,
                       wqkv, bqkv, wo, bo,
                       g1, be1, w1, b1, w2, b2, g2, be2,
                       o_ref, *, n_heads):
    x3 = x_ref[...].astype(jnp.float32)                      # (TB, SEG, D)
    tb, L, D = x3.shape
    x2 = x3.reshape(tb * L, D)
    # Fused [Wq|Wk|Wv] projection: one MXU op with N = 3D.
    qkv = jnp.dot(x2.astype(jnp.bfloat16), wqkv[...],
                  preferred_element_type=jnp.float32) + bqkv[...]
    Q = qkv[:, :D].reshape(tb, L, D)
    K = qkv[:, D:2 * D].reshape(tb, L, D)
    V = qkv[:, 2 * D:].reshape(tb, L, D)
    attn2 = _attn_core(Q, K, V, wo[...], bo[...], n_heads)
    z2 = _add_norm_mlp_norm(x2, attn2,
                            g1[...], be1[...], w1[...], b1[...],
                            w2[...], b2[...], g2[...], be2[...])
    o_ref[...] = z2.reshape(tb, L, D).astype(o_ref.dtype)


def _tsa_stage2_kernel(x_ref, r_ref,
                       swq, sbq, swkv, sbkv, swo, sbo,
                       rwq, rbq, rwkv, rbkv, rwo, rbo,
                       g3, be3, w1, b1, w2, b2, g4, be4,
                       o_ref, *, n_heads, router_reps):
    x3 = x_ref[...].astype(jnp.float32)                      # (TB, TS, D) dim_send
    tb, L, D = x3.shape
    rt = r_ref[...].astype(jnp.float32)
    if router_reps >= 1:
        # Tile spans router_reps whole batch elements: replicate router in VMEM.
        seg, F, _ = rt.shape
        rt3 = jnp.broadcast_to(rt[None], (router_reps, seg, F, D)
                               ).reshape(router_reps * seg, F, D)
    else:
        rt3 = rt                                             # (TB, F, D) pre-selected
    F = rt3.shape[1]

    x2_bf = x3.reshape(tb * L, D).astype(jnp.bfloat16)
    rt2_bf = rt3.reshape(tb * F, D).astype(jnp.bfloat16)

    # dim_buffer = sender-MHA(router <- dim_send); stays in VMEM.
    Qs = (jnp.dot(rt2_bf, swq[...], preferred_element_type=jnp.float32)
          + sbq[...]).reshape(tb, F, D)
    KVs = jnp.dot(x2_bf, swkv[...], preferred_element_type=jnp.float32) + sbkv[...]
    Ks = KVs[:, :D].reshape(tb, L, D)
    Vs = KVs[:, D:].reshape(tb, L, D)
    buf2 = _attn_core(Qs, Ks, Vs, swo[...], sbo[...], n_heads)      # (TB*F, D)

    # dim_receive = receiver-MHA(dim_send <- dim_buffer); stays in VMEM.
    Qr = (jnp.dot(x2_bf, rwq[...], preferred_element_type=jnp.float32)
          + rbq[...]).reshape(tb, L, D)
    KVr = jnp.dot(buf2.astype(jnp.bfloat16), rwkv[...],
                  preferred_element_type=jnp.float32) + rbkv[...]
    Kr = KVr[:, :D].reshape(tb, F, D)
    Vr = KVr[:, D:].reshape(tb, F, D)
    recv2 = _attn_core(Qr, Kr, Vr, rwo[...], rbo[...], n_heads)     # (TB*L, D)

    z2 = _add_norm_mlp_norm(x3.reshape(tb * L, D), recv2,
                            g3[...], be3[...], w1[...], b1[...],
                            w2[...], b2[...], g4[...], be4[...])
    o_ref[...] = z2.reshape(tb, L, D).astype(o_ref.dtype)


# ----------------------------------------------------------------------------
# pallas_call wrappers
# ----------------------------------------------------------------------------
def _const_spec(shape):
    shape = tuple(int(s) for s in shape)
    return pl.BlockSpec(shape, lambda i: (0,) * len(shape))


def _compiler_params():
    return pltpu.CompilerParams(dimension_semantics=("parallel",),
                                vmem_limit_bytes=_VMEM_LIMIT_BYTES)


def _tsa_stage1(x3, attn_p, norm_a, mlp_p, norm_b, n_heads, tb):
    N, L, D = x3.shape
    wqkv, bqkv, wo, bo = attn_p
    (g1, be1), (w1, b1, w2, b2), (g2, be2) = norm_a, mlp_p, norm_b
    row_spec = pl.BlockSpec((tb, L, D), lambda i: (i, 0, 0))
    consts = (wqkv, bqkv, wo, bo, g1, be1, w1, b1, w2, b2, g2, be2)
    in_specs = [row_spec] + [_const_spec(a.shape) for a in consts]
    return pl.pallas_call(
        functools.partial(_tsa_stage1_kernel, n_heads=n_heads),
        out_shape=jax.ShapeDtypeStruct((N, L, D), x3.dtype),
        grid=(N // tb,),
        in_specs=in_specs,
        out_specs=row_spec,
        compiler_params=_compiler_params(),
    )(x3, *consts)


def _tsa_stage2(dim_send, router, send_p, recv_p, norm_a, mlp_p, norm_b,
                n_heads, tb):
    N2, TS, D = dim_send.shape
    SEG, F, _ = router.shape
    swq, sbq, swkv, sbkv, swo, sbo = send_p
    rwq, rbq, rwkv, rbkv, rwo, rbo = recv_p
    (g3, be3), (w1, b1, w2, b2), (g4, be4) = norm_a, mlp_p, norm_b

    row_spec = pl.BlockSpec((tb, TS, D), lambda i: (i, 0, 0))
    if tb % SEG == 0:
        # Tile spans whole batch elements: pass the full router once (constant
        # block, no per-step re-DMA) and replicate it in VMEM inside the kernel.
        router_reps = tb // SEG
        router_spec = pl.BlockSpec((SEG, F, D), lambda i: (0, 0, 0))
    else:
        # tb divides SEG: router[b*SEG + seg] == router[seg]; select the block
        # with pure index arithmetic (tiles stay batch-aligned).
        assert SEG % tb == 0
        router_reps = 0
        nsb = SEG // tb
        router_spec = pl.BlockSpec((tb, F, D), lambda i: (i % nsb, 0, 0))

    consts = (swq, sbq, swkv, sbkv, swo, sbo,
              rwq, rbq, rwkv, rbkv, rwo, rbo,
              g3, be3, w1, b1, w2, b2, g4, be4)
    in_specs = [row_spec, router_spec] + [_const_spec(a.shape) for a in consts]
    return pl.pallas_call(
        functools.partial(_tsa_stage2_kernel, n_heads=n_heads,
                          router_reps=router_reps),
        out_shape=jax.ShapeDtypeStruct((N2, TS, D), dim_send.dtype),
        grid=(N2 // tb,),
        in_specs=in_specs,
        out_specs=row_spec,
        compiler_params=_compiler_params(),
    )(dim_send, router, *consts)


def _pick_row_tile(n_rows, seq_len, seg=None, target_rows=1024, min_steps=2):
    """Pick the largest row tile TB with TB*seq_len <= target_rows.

    If seg is None (stage 1) any divisor of n_rows is allowed.  Otherwise
    (stage 2) TB must be a divisor of seg or a batch-aligned multiple of seg
    (so the router broadcast stays correct).  TB is shrunk so the grid keeps
    >= min_steps steps when possible (megacore / pipeline depth)."""
    if seg is None:
        cands = sorted(c for c in range(1, n_rows + 1) if n_rows % c == 0)
    else:
        cands = sorted({c for c in range(1, seg + 1) if seg % c == 0} |
                       {c for c in range(seg, n_rows + 1, seg) if n_rows % c == 0})
    fitting = [c for c in cands if c * seq_len <= target_rows] or cands[:1]
    best = max(fitting)
    while n_rows // best < min_steps:
        smaller = [c for c in fitting if c < best]
        if not smaller:
            break
        best = max(smaller)
    return best


# ----------------------------------------------------------------------------
# TwoStageAttentionLayer forward
# ----------------------------------------------------------------------------
def two_stage_attention(x, params, n_heads):
    B, TS, SEG, D = x.shape

    # ---- stage 1: self-attention over the segment (time) axis, fully fused ----
    time_in = x.reshape(B * TS, SEG, D)
    tb1 = _pick_row_tile(B * TS, SEG)
    dim_in = _tsa_stage1(time_in, params["time_attn"], params["norm1"],
                         params["mlp1"], params["norm2"], n_heads, tb1)

    # ---- stage 2: router attention over the ts_d axis, fully fused ----
    # TODO(synk): fold the two inter-stage transposes into stage-2 BlockSpecs;
    # doing it without an extra HBM pass needs an in-kernel sublane transpose
    # that is not guaranteed to lower for non-8-aligned ts_d / seg_num.
    dim_send = (dim_in.reshape(B, TS, SEG, D)
                      .transpose(0, 2, 1, 3)
                      .reshape(B * SEG, TS, D))
    tb2 = _pick_row_tile(B * SEG, TS, seg=SEG)
    dim_enc = _tsa_stage2(dim_send, params["router"],
                          params["dim_sender"], params["dim_receiver"],
                          params["norm3"], params["mlp2"], params["norm4"],
                          n_heads, tb2)

    # TODO(synk): when d_model < 128 the output stores are lane-masked; pad D
    # to 128 (or pack L*D onto lanes) for production shapes below 128.
    return dim_enc.reshape(B, SEG, TS, D).transpose(0, 2, 1, 3)


# ----------------------------------------------------------------------------
# Deterministic parameter init (synthetic, no checkpoint).
# Matmul weights are stored in bf16 (shared by kernel and reference); biases,
# LayerNorm params and the router stay f32.
# ----------------------------------------------------------------------------
def _init_linear(key, d_in, d_out):
    k1, k2 = jax.random.split(key)
    w = jax.random.normal(k1, (d_in, d_out), jnp.float32) * (1.0 / sqrt(d_in))
    b = jax.random.normal(k2, (1, d_out), jnp.float32) * 0.02
    return w, b


def _init_attn_raw(key, d_model):
    ks = jax.random.split(key, 4)
    wq, bq = _init_linear(ks[0], d_model, d_model)
    wk, bk = _init_linear(ks[1], d_model, d_model)
    wv, bv = _init_linear(ks[2], d_model, d_model)
    wo, bo = _init_linear(ks[3], d_model, d_model)
    return wq, bq, wk, bk, wv, bv, wo, bo


def init_params(key, seg_num, factor, d_model, d_ff):
    ks = jax.random.split(key, 8)
    bf = lambda a: a.astype(jnp.bfloat16)

    # Stage-1 self attention: packed [Wq|Wk|Wv] (D, 3D).
    wq, bq, wk, bk, wv, bv, wo, bo = _init_attn_raw(ks[0], d_model)
    time_attn = (bf(jnp.concatenate([wq, wk, wv], axis=1)),
                 jnp.concatenate([bq, bk, bv], axis=1),
                 bf(wo), bo)

    # Stage-2 cross attentions: separate Wq, packed [Wk|Wv] (D, 2D).
    def cross_attn(k):
        wq, bq, wk, bk, wv, bv, wo, bo = _init_attn_raw(k, d_model)
        return (bf(wq), bq,
                bf(jnp.concatenate([wk, wv], axis=1)),
                jnp.concatenate([bk, bv], axis=1),
                bf(wo), bo)

    ln = lambda: (jnp.ones((1, d_model), jnp.float32),
                  jnp.zeros((1, d_model), jnp.float32))
    m1w1, m1b1 = _init_linear(ks[3], d_model, d_ff)
    m1w2, m1b2 = _init_linear(ks[4], d_ff, d_model)
    m2w1, m2b1 = _init_linear(ks[5], d_model, d_ff)
    m2w2, m2b2 = _init_linear(ks[6], d_ff, d_model)
    return {
        "time_attn": time_attn,
        "dim_sender": cross_attn(ks[1]),
        "dim_receiver": cross_attn(ks[2]),
        "router": jax.random.normal(ks[7], (seg_num, factor, d_model), jnp.float32),
        "norm1": ln(), "norm2": ln(), "norm3": ln(), "norm4": ln(),
        "mlp1": (bf(m1w1), m1b1, bf(m1w2), m1b2),
        "mlp2": (bf(m2w1), m2b1, bf(m2w2), m2b2),
    }


# ----------------------------------------------------------------------------
# Pure-JAX reference (mirrors the PyTorch forward, eval mode; f32 math with
# the same bf16-valued weights as the kernel)
# ----------------------------------------------------------------------------
def _ref_mha(q, kv, p, n_heads):
    wq, bq, wk, bk, wv, bv, wo, bo = p
    B, L, D = q.shape
    S = kv.shape[1]
    dk = D // n_heads
    Q = (q @ wq + bq).reshape(B, L, n_heads, dk)
    K = (kv @ wk + bk).reshape(B, S, n_heads, dk)
    V = (kv @ wv + bv).reshape(B, S, n_heads, dk)
    s = jnp.einsum('blhe,bshe->bhls', Q, K) * (1.0 / sqrt(dk))
    a = jax.nn.softmax(s, axis=-1)
    o = jnp.einsum('bhls,bshd->blhd', a, V).reshape(B, L, D)
    return o @ wo + bo


def _ref_ln(x, gb, eps=1e-5):
    g, b = gb
    m = jnp.mean(x, axis=-1, keepdims=True)
    v = jnp.mean((x - m) ** 2, axis=-1, keepdims=True)
    return (x - m) / jnp.sqrt(v + eps) * g + b


def _ref_mlp(x, p):
    w1, b1, w2, b2 = p
    return jax.nn.gelu(x @ w1 + b1, approximate=False) @ w2 + b2


def _ref_unpack_self(p, D):
    wqkv, bqkv, wo, bo = p
    f = lambda a: a.astype(jnp.float32)
    return (f(wqkv[:, :D]), bqkv[:, :D], f(wqkv[:, D:2 * D]), bqkv[:, D:2 * D],
            f(wqkv[:, 2 * D:]), bqkv[:, 2 * D:], f(wo), bo)


def _ref_unpack_cross(p, D):
    wq, bq, wkv, bkv, wo, bo = p
    f = lambda a: a.astype(jnp.float32)
    return (f(wq), bq, f(wkv[:, :D]), bkv[:, :D], f(wkv[:, D:]), bkv[:, D:],
            f(wo), bo)


def two_stage_attention_ref(x, params, n_heads):
    B, TS, SEG, D = x.shape
    time_p = _ref_unpack_self(params["time_attn"], D)
    send_p = _ref_unpack_cross(params["dim_sender"], D)
    recv_p = _ref_unpack_cross(params["dim_receiver"], D)
    mlp1 = tuple(a.astype(jnp.float32) for a in params["mlp1"])
    mlp2 = tuple(a.astype(jnp.float32) for a in params["mlp2"])

    time_in = x.reshape(B * TS, SEG, D)
    time_enc = _ref_mha(time_in, time_in, time_p, n_heads)
    dim_in = _ref_ln(time_in + time_enc, params["norm1"])
    dim_in = _ref_ln(dim_in + _ref_mlp(dim_in, mlp1), params["norm2"])
    dim_send = (dim_in.reshape(B, TS, SEG, D).transpose(0, 2, 1, 3)
                      .reshape(B * SEG, TS, D))
    batch_router = jnp.tile(params["router"], (B, 1, 1))
    dim_buffer = _ref_mha(batch_router, dim_send, send_p, n_heads)
    dim_receive = _ref_mha(dim_send, dim_buffer, recv_p, n_heads)
    dim_enc = _ref_ln(dim_send + dim_receive, params["norm3"])
    dim_enc = _ref_ln(dim_enc + _ref_mlp(dim_enc, mlp2), params["norm4"])
    return dim_enc.reshape(B, SEG, TS, D).transpose(0, 2, 1, 3)


if __name__ == "__main__":
    batch, ts_d, seg_num, d_model = 2, 4, 8, 32
    n_heads, factor = 4, 5
    d_ff = 4 * d_model

    key = jax.random.PRNGKey(0)
    kx, kp = jax.random.split(key)
    x = jax.random.normal(kx, (batch, ts_d, seg_num, d_model), jnp.float32)
    params = init_params(kp, seg_num, factor, d_model, d_ff)

    fwd = jax.jit(functools.partial(two_stage_attention, n_heads=n_heads))
    out = fwd(x, params)
    jax.block_until_ready(out)

    ref = two_stage_attention_ref(x, params, n_heads)
    assert out.shape == (batch, ts_d, seg_num, d_model)
    assert bool(jnp.all(jnp.isfinite(out)))
    # Loose tolerance: kernel uses bf16 matmul operands (f32 accumulation),
    # tanh-GELU and an approximate softmax reciprocal vs the exact f32 reference.
    err = float(jnp.max(jnp.abs(out - ref)))
    assert err < 1e-1, f"mismatch vs JAX reference: max abs err = {err}"
    print("KERNEL_OK")
</pallas_src>

<mosaic_0001>
module attributes {stable_mosaic.version = 11 : i64} {
  func.func @_tsa_stage1_kernel(%arg0: i32, %arg1: memref<4x8x32xf32, #tpu.memory_space<vmem>>, %arg2: memref<32x96xbf16, #tpu.memory_space<vmem>>, %arg3: memref<1x96xf32, #tpu.memory_space<vmem>>, %arg4: memref<32x32xbf16, #tpu.memory_space<vmem>>, %arg5: memref<1x32xf32, #tpu.memory_space<vmem>>, %arg6: memref<1x32xf32, #tpu.memory_space<vmem>>, %arg7: memref<1x32xf32, #tpu.memory_space<vmem>>, %arg8: memref<32x128xbf16, #tpu.memory_space<vmem>>, %arg9: memref<1x128xf32, #tpu.memory_space<vmem>>, %arg10: memref<128x32xbf16, #tpu.memory_space<vmem>>, %arg11: memref<1x32xf32, #tpu.memory_space<vmem>>, %arg12: memref<1x32xf32, #tpu.memory_space<vmem>>, %arg13: memref<1x32xf32, #tpu.memory_space<vmem>>, %arg14: memref<4x8x32xf32, #tpu.memory_space<vmem>>) attributes {dimension_semantics = [#tpu.dimension_semantics<parallel>], iteration_bounds = array<i64: 2>, scalar_prefetch = 0 : i64, scratch_operands = 0 : i64, tpu.core_type = #tpu.core_type<tc>, window_params = [{transform_indices = @transform_0, window_bounds = array<i64: 4, 8, 32>}, {pipeline_mode = #tpu.pipeline_mode<synchronous>, transform_indices = @transform_1, window_bounds = array<i64: 32, 96>}, {pipeline_mode = #tpu.pipeline_mode<synchronous>, transform_indices = @transform_2, window_bounds = array<i64: 1, 96>}, {pipeline_mode = #tpu.pipeline_mode<synchronous>, transform_indices = @transform_3, window_bounds = array<i64: 32, 32>}, {pipeline_mode = #tpu.pipeline_mode<synchronous>, transform_indices = @transform_4, window_bounds = array<i64: 1, 32>}, {pipeline_mode = #tpu.pipeline_mode<synchronous>, transform_indices = @transform_5, window_bounds = array<i64: 1, 32>}, {pipeline_mode = #tpu.pipeline_mode<synchronous>, transform_indices = @transform_6, window_bounds = array<i64: 1, 32>}, {pipeline_mode = #tpu.pipeline_mode<synchronous>, transform_indices = @transform_7, window_bounds = array<i64: 32, 128>}, {pipeline_mode = #tpu.pipeline_mode<synchronous>, transform_indices = @transform_8, window_bounds = array<i64: 1, 128>}, {pipeline_mode = #tpu.pipeline_mode<synchronous>, transform_indices = @transform_9, window_bounds = array<i64: 128, 32>}, {pipeline_mode = #tpu.pipeline_mode<synchronous>, transform_indices = @transform_10, window_bounds = array<i64: 1, 32>}, {pipeline_mode = #tpu.pipeline_mode<synchronous>, transform_indices = @transform_11, window_bounds = array<i64: 1, 32>}, {pipeline_mode = #tpu.pipeline_mode<synchronous>, transform_indices = @transform_12, window_bounds = array<i64: 1, 32>}, {transform_indices = @transform_13, window_bounds = array<i64: 4, 8, 32>}]} {
    %c0 = arith.constant 0 : index
    %c0_0 = arith.constant 0 : index
    %c0_1 = arith.constant 0 : index
    %0 = vector.load %arg1[%c0, %c0_0, %c0_1] : memref<4x8x32xf32, #tpu.memory_space<vmem>>, vector<4x8x32xf32>
    %1 = vector.shape_cast %0 : vector<4x8x32xf32> to vector<32x32xf32>
    %2 = arith.truncf %1 : vector<32x32xf32> to vector<32x32xbf16>
    %c0_2 = arith.constant 0 : index
    %c0_3 = arith.constant 0 : index
    %3 = vector.load %arg2[%c0_2, %c0_3] : memref<32x96xbf16, #tpu.memory_space<vmem>>, vector<32x96xbf16>
    %cst = arith.constant dense<0.000000e+00> : vector<32x96xf32>
    %4 = tpu.matmul %2, %3, %cst {dimension_numbers = #tpu.dot_dimension_numbers<[1], [0], [0], [1], [0, 0, 1, 1], [], []>} : vector<32x32xbf16>, vector<32x96xbf16>, vector<32x96xf32> -> vector<32x96xf32>
    %c0_4 = arith.constant 0 : index
    %c0_5 = arith.constant 0 : index
    %5 = vector.load %arg3[%c0_4, %c0_5] : memref<1x96xf32, #tpu.memory_space<vmem>>, vector<1x96xf32>
    %6 = vector.broadcast %5 : vector<1x96xf32> to vector<32x96xf32>
    %7 = arith.addf %4, %6 : vector<32x96xf32>
    %8 = vector.extract_strided_slice %7 {offsets = [0, 0], sizes = [32, 32], strides = [1, 1]} : vector<32x96xf32> to vector<32x32xf32>
    %9 = vector.shape_cast %8 : vector<32x32xf32> to vector<4x8x32xf32>
    %10 = vector.extract_strided_slice %7 {offsets = [0, 32], sizes = [32, 32], strides = [1, 1]} : vector<32x96xf32> to vector<32x32xf32>
    %11 = vector.shape_cast %10 : vector<32x32xf32> to vector<4x8x32xf32>
    %12 = vector.extract_strided_slice %7 {offsets = [0, 64], sizes = [32, 32], strides = [1, 1]} : vector<32x96xf32> to vector<32x32xf32>
    %13 = vector.shape_cast %12 : vector<32x32xf32> to vector<4x8x32xf32>
    %c0_6 = arith.constant 0 : index
    %c0_7 = arith.constant 0 : index
    %14 = vector.load %arg4[%c0_6, %c0_7] : memref<32x32xbf16, #tpu.memory_space<vmem>>, vector<32x32xbf16>
    %c0_8 = arith.constant 0 : index
    %c0_9 = arith.constant 0 : index
    %15 = vector.load %arg5[%c0_8, %c0_9] : memref<1x32xf32, #tpu.memory_space<vmem>>, vector<1x32xf32>
    %16 = vector.extract_strided_slice %9 {offsets = [0, 0, 0], sizes = [4, 8, 8], strides = [1, 1, 1]} : vector<4x8x32xf32> to vector<4x8x8xf32>
    %17 = arith.truncf %16 : vector<4x8x8xf32> to vector<4x8x8xbf16>
    %18 = vector.extract_strided_slice %11 {offsets = [0, 0, 0], sizes = [4, 8, 8], strides = [1, 1, 1]} : vector<4x8x32xf32> to vector<4x8x8xf32>
    %19 = arith.truncf %18 : vector<4x8x8xf32> to vector<4x8x8xbf16>
    %20 = vector.extract_strided_slice %13 {offsets = [0, 0, 0], sizes = [4, 8, 8], strides = [1, 1, 1]} : vector<4x8x32xf32> to vector<4x8x8xf32>
    %21 = arith.truncf %20 : vector<4x8x8xf32> to vector<4x8x8xbf16>
    "tpu.trace_start"() <{level = 10 : i32, message = "bld,bsd->bls"}> : () -> ()
    %cst_10 = arith.constant dense<0.000000e+00> : vector<4x8x8xf32>
    %22 = tpu.matmul %17, %19, %cst_10 {dimension_numbers = #tpu.dot_dimension_numbers<[2], [2], [1], [1], [0, 0, 0, 1, 1, 1], [0], [0]>} : vector<4x8x8xbf16>, vector<4x8x8xbf16>, vector<4x8x8xf32> -> vector<4x8x8xf32>
    "tpu.trace_stop"() : () -> ()
    %cst_11 = arith.constant 0.353553385 : f32
    %23 = vector.broadcast %cst_11 : f32 to vector<4x8x8xf32>
    %24 = arith.mulf %22, %23 : vector<4x8x8xf32>
    %cst_12 = arith.constant dense<0xFF800000> : vector<4x8xf32>
    %25 = vector.multi_reduction <maximumf>, %24, %cst_12 [2] : vector<4x8x8xf32> to vector<4x8xf32>
    %26 = vector.shape_cast %25 : vector<4x8xf32> to vector<4x8x1xf32>
    %27 = vector.broadcast %26 : vector<4x8x1xf32> to vector<4x8x8xf32>
    %28 = arith.subf %24, %27 : vector<4x8x8xf32>
    %29 = math.exp %28 : vector<4x8x8xf32>
    %cst_13 = arith.constant dense<0.000000e+00> : vector<4x8xf32>
    %30 = vector.multi_reduction <add>, %29, %cst_13 [2] : vector<4x8x8xf32> to vector<4x8xf32>
    %31 = vector.shape_cast %30 : vector<4x8xf32> to vector<4x8x1xf32>
    %32 = tpu.reciprocal %31 {approx = true} : vector<4x8x1xf32> -> vector<4x8x1xf32>
    %33 = vector.broadcast %32 : vector<4x8x1xf32> to vector<4x8x8xf32>
    %34 = arith.mulf %29, %33 : vector<4x8x8xf32>
    %35 = arith.truncf %34 : vector<4x8x8xf32> to vector<4x8x8xbf16>
    "tpu.trace_start"() <{level = 10 : i32, message = "bls,bsd->bld"}> : () -> ()
    %cst_14 = arith.constant dense<0.000000e+00> : vector<4x8x8xf32>
    %36 = tpu.matmul %35, %21, %cst_14 {dimension_numbers = #tpu.dot_dimension_numbers<[2], [1], [1], [2], [0, 0, 0, 1, 1, 2], [0], [0]>} : vector<4x8x8xbf16>, vector<4x8x8xbf16>, vector<4x8x8xf32> -> vector<4x8x8xf32>
    "tpu.trace_stop"() : () -> ()
    %37 = vector.extract_strided_slice %9 {offsets = [0, 0, 8], sizes = [4, 8, 8], strides = [1, 1, 1]} : vector<4x8x32xf32> to vector<4x8x8xf32>
    %38 = arith.truncf %37 : vector<4x8x8xf32> to vector<4x8x8xbf16>
    %39 = vector.extract_strided_slice %11 {offsets = [0, 0, 8], sizes = [4, 8, 8], strides = [1, 1, 1]} : vector<4x8x32xf32> to vector<4x8x8xf32>
    %40 = arith.truncf %39 : vector<4x8x8xf32> to vector<4x8x8xbf16>
    %41 = vector.extract_strided_slice %13 {offsets = [0, 0, 8], sizes = [4, 8, 8], strides = [1, 1, 1]} : vector<4x8x32xf32> to vector<4x8x8xf32>
    %42 = arith.truncf %41 : vector<4x8x8xf32> to vector<4x8x8xbf16>
    "tpu.trace_start"() <{level = 10 : i32, message = "bld,bsd->bls"}> : () -> ()
    %cst_15 = arith.constant dense<0.000000e+00> : vector<4x8x8xf32>
    %43 = tpu.matmul %38, %40, %cst_15 {dimension_numbers = #tpu.dot_dimension_numbers<[2], [2], [1], [1], [0, 0, 0, 1, 1, 1], [0], [0]>} : vector<4x8x8xbf16>, vector<4x8x8xbf16>, vector<4x8x8xf32> -> vector<4x8x8xf32>
    "tpu.trace_stop"() : () -> ()
    %cst_16 = arith.constant 0.353553385 : f32
    %44 = vector.broadcast %cst_16 : f32 to vector<4x8x8xf32>
    %45 = arith.mulf %43, %44 : vector<4x8x8xf32>
    %cst_17 = arith.constant dense<0xFF800000> : vector<4x8xf32>
    %46 = vector.multi_reduction <maximumf>, %45, %cst_17 [2] : vector<4x8x8xf32> to vector<4x8xf32>
    %47 = vector.shape_cast %46 : vector<4x8xf32> to vector<4x8x1xf32>
    %48 = vector.broadcast %47 : vector<4x8x1xf32> to vector<4x8x8xf32>
    %49 = arith.subf %45, %48 : vector<4x8x8xf32>
    %50 = math.exp %49 : vector<4x8x8xf32>
    %cst_18 = arith.constant dense<0.000000e+00> : vector<4x8xf32>
    %51 = vector.multi_reduction <add>, %50, %cst_18 [2] : vector<4x8x8xf32> to vector<4x8xf32>
    %52 = vector.shape_cast %51 : vector<4x8xf32> to vector<4x8x1xf32>
    %53 = tpu.reciprocal %52 {approx = true} : vector<4x8x1xf32> -> vector<4x8x1xf32>
    %54 = vector.broadcast %53 : vector<4x8x1xf32> to vector<4x8x8xf32>
    %55 = arith.mulf %50, %54 : vector<4x8x8xf32>
    %56 = arith.truncf %55 : vector<4x8x8xf32> to vector<4x8x8xbf16>
    "tpu.trace_start"() <{level = 10 : i32, message = "bls,bsd->bld"}> : () -> ()
    %cst_19 = arith.constant dense<0.000000e+00> : vector<4x8x8xf32>
    %57 = tpu.matmul %56, %42, %cst_19 {dimension_numbers = #tpu.dot_dimension_numbers<[2], [1], [1], [2], [0, 0, 0, 1, 1, 2], [0], [0]>} : vector<4x8x8xbf16>, vector<4x8x8xbf16>, vector<4x8x8xf32> -> vector<4x8x8xf32>
    "tpu.trace_stop"() : () -> ()
    %58 = vector.extract_strided_slice %9 {offsets = [0, 0, 16], sizes = [4, 8, 8], strides = [1, 1, 1]} : vector<4x8x32xf32> to vector<4x8x8xf32>
    %59 = arith.truncf %58 : vector<4x8x8xf32> to vector<4x8x8xbf16>
    %60 = vector.extract_strided_slice %11 {offsets = [0, 0, 16], sizes = [4, 8, 8], strides = [1, 1, 1]} : vector<4x8x32xf32> to vector<4x8x8xf32>
    %61 = arith.truncf %60 : vector<4x8x8xf32> to vector<4x8x8xbf16>
    %62 = vector.extract_strided_slice %13 {offsets = [0, 0, 16], sizes = [4, 8, 8], strides = [1, 1, 1]} : vector<4x8x32xf32> to vector<4x8x8xf32>
    %63 = arith.truncf %62 : vector<4x8x8xf32> to vector<4x8x8xbf16>
    "tpu.trace_start"() <{level = 10 : i32, message = "bld,bsd->bls"}> : () -> ()
    %cst_20 = arith.constant dense<0.000000e+00> : vector<4x8x8xf32>
    %64 = tpu.matmul %59, %61, %cst_20 {dimension_numbers = #tpu.dot_dimension_numbers<[2], [2], [1], [1], [0, 0, 0, 1, 1, 1], [0], [0]>} : vector<4x8x8xbf16>, vector<4x8x8xbf16>, vector<4x8x8xf32> -> vector<4x8x8xf32>
    "tpu.trace_stop"() : () -> ()
    %cst_21 = arith.constant 0.353553385 : f32
    %65 = vector.broadcast %cst_21 : f32 to vector<4x8x8xf32>
    %66 = arith.mulf %64, %65 : vector<4x8x8xf32>
    %cst_22 = arith.constant dense<0xFF800000> : vector<4x8xf32>
    %67 = vector.multi_reduction <maximumf>, %66, %cst_22 [2] : vector<4x8x8xf32> to vector<4x8xf32>
    %68 = vector.shape_cast %67 : vector<4x8xf32> to vector<4x8x1xf32>
    %69 = vector.broadcast %68 : vector<4x8x1xf32> to vector<4x8x8xf32>
    %70 = arith.subf %66, %69 : vector<4x8x8xf32>
    %71 = math.exp %70 : vector<4x8x8xf32>
    %cst_23 = arith.constant dense<0.000000e+00> : vector<4x8xf32>
    %72 = vector.multi_reduction <add>, %71, %cst_23 [2] : vector<4x8x8xf32> to vector<4x8xf32>
    %73 = vector.shape_cast %72 : vector<4x8xf32> to vector<4x8x1xf32>
    %74 = tpu.reciprocal %73 {approx = true} : vector<4x8x1xf32> -> vector<4x8x1xf32>
    %75 = vector.broadcast %74 : vector<4x8x1xf32> to vector<4x8x8xf32>
    %76 = arith.mulf %71, %75 : vector<4x8x8xf32>
    %77 = arith.truncf %76 : vector<4x8x8xf32> to vector<4x8x8xbf16>
    "tpu.trace_start"() <{level = 10 : i32, message = "bls,bsd->bld"}> : () -> ()
    %cst_24 = arith.constant dense<0.000000e+00> : vector<4x8x8xf32>
    %78 = tpu.matmul %77, %63, %cst_24 {dimension_numbers = #tpu.dot_dimension_numbers<[2], [1], [1], [2], [0, 0, 0, 1, 1, 2], [0], [0]>} : vector<4x8x8xbf16>, vector<4x8x8xbf16>, vector<4x8x8xf32> -> vector<4x8x8xf32>
    "tpu.trace_stop"() : () -> ()
    %79 = vector.extract_strided_slice %9 {offsets = [0, 0, 24], sizes = [4, 8, 8], strides = [1, 1, 1]} : vector<4x8x32xf32> to vector<4x8x8xf32>
    %80 = arith.truncf %79 : vector<4x8x8xf32> to vector<4x8x8xbf16>
    %81 = vector.extract_strided_slice %11 {offsets = [0, 0, 24], sizes = [4, 8, 8], strides = [1, 1, 1]} : vector<4x8x32xf32> to vector<4x8x8xf32>
    %82 = arith.truncf %81 : vector<4x8x8xf32> to vector<4x8x8xbf16>
    %83 = vector.extract_strided_slice %13 {offsets = [0, 0, 24], sizes = [4, 8, 8], strides = [1, 1, 1]} : vector<4x8x32xf32> to vector<4x8x8xf32>
    %84 = arith.truncf %83 : vector<4x8x8xf32> to vector<4x8x8xbf16>
    "tpu.trace_start"() <{level = 10 : i32, message = "bld,bsd->bls"}> : () -> ()
    %cst_25 = arith.constant dense<0.000000e+00> : vector<4x8x8xf32>
    %85 = tpu.matmul %80, %82, %cst_25 {dimension_numbers = #tpu.dot_dimension_numbers<[2], [2], [1], [1], [0, 0, 0, 1, 1, 1], [0], [0]>} : vector<4x8x8xbf16>, vector<4x8x8xbf16>, vector<4x8x8xf32> -> vector<4x8x8xf32>
    "tpu.trace_stop"() : () -> ()
    %cst_26 = arith.constant 0.353553385 : f32
    %86 = vector.broadcast %cst_26 : f32 to vector<4x8x8xf32>
    %87 = arith.mulf %85, %86 : vector<4x8x8xf32>
    %cst_27 = arith.constant dense<0xFF800000> : vector<4x8xf32>
    %88 = vector.multi_reduction <maximumf>, %87, %cst_27 [2] : vector<4x8x8xf32> to vector<4x8xf32>
    %89 = vector.shape_cast %88 : vector<4x8xf32> to vector<4x8x1xf32>
    %90 = vector.broadcast %89 : vector<4x8x1xf32> to vector<4x8x8xf32>
    %91 = arith.subf %87, %90 : vector<4x8x8xf32>
    %92 = math.exp %91 : vector<4x8x8xf32>
    %cst_28 = arith.constant dense<0.000000e+00> : vector<4x8xf32>
    %93 = vector.multi_reduction <add>, %92, %cst_28 [2] : vector<4x8x8xf32> to vector<4x8xf32>
    %94 = vector.shape_cast %93 : vector<4x8xf32> to vector<4x8x1xf32>
    %95 = tpu.reciprocal %94 {approx = true} : vector<4x8x1xf32> -> vector<4x8x1xf32>
    %96 = vector.broadcast %95 : vector<4x8x1xf32> to vector<4x8x8xf32>
    %97 = arith.mulf %92, %96 : vector<4x8x8xf32>
    %98 = arith.truncf %97 : vector<4x8x8xf32> to vector<4x8x8xbf16>
    "tpu.trace_start"() <{level = 10 : i32, message = "bls,bsd->bld"}> : () -> ()
    %cst_29 = arith.constant dense<0.000000e+00> : vector<4x8x8xf32>
    %99 = tpu.matmul %98, %84, %cst_29 {dimension_numbers = #tpu.dot_dimension_numbers<[2], [1], [1], [2], [0, 0, 0, 1, 1, 2], [0], [0]>} : vector<4x8x8xbf16>, vector<4x8x8xbf16>, vector<4x8x8xf32> -> vector<4x8x8xf32>
    "tpu.trace_stop"() : () -> ()
    %100 = tpu.concatenate %36, %57, %78, %99 in 2 : vector<4x8x8xf32>, vector<4x8x8xf32>, vector<4x8x8xf32>, vector<4x8x8xf32> -> vector<4x8x32xf32>
    %101 = vector.shape_cast %100 : vector<4x8x32xf32> to vector<32x32xf32>
    %102 = arith.truncf %101 : vector<32x32xf32> to vector<32x32xbf16>
    %cst_30 = arith.constant dense<0.000000e+00> : vector<32x32xf32>
    %103 = tpu.matmul %102, %14, %cst_30 {dimension_numbers = #tpu.dot_dimension_numbers<[1], [0], [0], [1], [0, 0, 1, 1], [], []>} : vector<32x32xbf16>, vector<32x32xbf16>, vector<32x32xf32> -> vector<32x32xf32>
    %104 = vector.broadcast %15 : vector<1x32xf32> to vector<32x32xf32>
    %105 = arith.addf %103, %104 : vector<32x32xf32>
    %c0_31 = arith.constant 0 : index
    %c0_32 = arith.constant 0 : index
    %106 = vector.load %arg6[%c0_31, %c0_32] : memref<1x32xf32, #tpu.memory_space<vmem>>, vector<1x32xf32>
    %c0_33 = arith.constant 0 : index
    %c0_34 = arith.constant 0 : index
    %107 = vector.load %arg7[%c0_33, %c0_34] : memref<1x32xf32, #tpu.memory_space<vmem>>, vector<1x32xf32>
    %c0_35 = arith.constant 0 : index
    %c0_36 = arith.constant 0 : index
    %108 = vector.load %arg8[%c0_35, %c0_36] : memref<32x128xbf16, #tpu.memory_space<vmem>>, vector<32x128xbf16>
    %c0_37 = arith.constant 0 : index
    %c0_38 = arith.constant 0 : index
    %109 = vector.load %arg9[%c0_37, %c0_38] : memref<1x128xf32, #tpu.memory_space<vmem>>, vector<1x128xf32>
    %c0_39 = arith.constant 0 : index
    %c0_40 = arith.constant 0 : index
    %110 = vector.load %arg10[%c0_39, %c0_40] : memref<128x32xbf16, #tpu.memory_space<vmem>>, vector<128x32xbf16>
    %c0_41 = arith.constant 0 : index
    %c0_42 = arith.constant 0 : index
    %111 = vector.load %arg11[%c0_41, %c0_42] : memref<1x32xf32, #tpu.memory_space<vmem>>, vector<1x32xf32>
    %c0_43 = arith.constant 0 : index
    %c0_44 = arith.constant 0 : index
    %112 = vector.load %arg12[%c0_43, %c0_44] : memref<1x32xf32, #tpu.memory_space<vmem>>, vector<1x32xf32>
    %c0_45 = arith.constant 0 : index
    %c0_46 = arith.constant 0 : index
    %113 = vector.load %arg13[%c0_45, %c0_46] : memref<1x32xf32, #tpu.memory_space<vmem>>, vector<1x32xf32>
    %114 = arith.addf %1, %105 : vector<32x32xf32>
    %cst_47 = arith.constant dense<0.000000e+00> : vector<32xf32>
    %115 = vector.multi_reduction <add>, %114, %cst_47 [1] : vector<32x32xf32> to vector<32xf32>
    %116 = vector.shape_cast %115 : vector<32xf32> to vector<32x1xf32>
    %cst_48 = arith.constant 3.200000e+01 : f32
    %117 = vector.broadcast %cst_48 : f32 to vector<32x1xf32>
    %118 = arith.divf %116, %117 : vector<32x1xf32>
    %119 = vector.broadcast %118 : vector<32x1xf32> to vector<32x32xf32>
    %120 = arith.subf %114, %119 : vector<32x32xf32>
    %121 = arith.mulf %120, %120 : vector<32x32xf32>
    %cst_49 = arith.constant dense<0.000000e+00> : vector<32xf32>
    %122 = vector.multi_reduction <add>, %121, %cst_49 [1] : vector<32x32xf32> to vector<32xf32>
    %123 = vector.shape_cast %122 : vector<32xf32> to vector<32x1xf32>
    %cst_50 = arith.constant 3.200000e+01 : f32
    %124 = vector.broadcast %cst_50 : f32 to vector<32x1xf32>
    %125 = arith.divf %123, %124 : vector<32x1xf32>
    %cst_51 = arith.constant 9.99999974E-6 : f32
    %126 = vector.broadcast %cst_51 : f32 to vector<32x1xf32>
    %127 = arith.addf %125, %126 : vector<32x1xf32>
    %128 = math.rsqrt %127 : vector<32x1xf32>
    %129 = vector.broadcast %128 : vector<32x1xf32> to vector<32x32xf32>
    %130 = arith.mulf %120, %129 : vector<32x32xf32>
    %131 = vector.broadcast %106 : vector<1x32xf32> to vector<32x32xf32>
    %132 = arith.mulf %130, %131 : vector<32x32xf32>
    %133 = vector.broadcast %107 : vector<1x32xf32> to vector<32x32xf32>
    %134 = arith.addf %132, %133 : vector<32x32xf32>
    %135 = arith.truncf %134 : vector<32x32xf32> to vector<32x32xbf16>
    %cst_52 = arith.constant dense<0.000000e+00> : vector<32x128xf32>
    %136 = tpu.matmul %135, %108, %cst_52 {dimension_numbers = #tpu.dot_dimension_numbers<[1], [0], [0], [1], [0, 0, 1, 1], [], []>} : vector<32x32xbf16>, vector<32x128xbf16>, vector<32x128xf32> -> vector<32x128xf32>
    %137 = vector.broadcast %109 : vector<1x128xf32> to vector<32x128xf32>
    %138 = arith.addf %136, %137 : vector<32x128xf32>
    %cst_53 = arith.constant 5.000000e-01 : f32
    %139 = vector.broadcast %cst_53 : f32 to vector<32x128xf32>
    %140 = arith.mulf %139, %138 : vector<32x128xf32>
    %cst_54 = arith.constant 4.471500e-02 : f32
    %141 = vector.broadcast %cst_54 : f32 to vector<32x128xf32>
    %142 = arith.mulf %141, %138 : vector<32x128xf32>
    %143 = arith.mulf %142, %138 : vector<32x128xf32>
    %144 = arith.mulf %143, %138 : vector<32x128xf32>
    %145 = arith.addf %138, %144 : vector<32x128xf32>
    %cst_55 = arith.constant 0.797884583 : f32
    %146 = vector.broadcast %cst_55 : f32 to vector<32x128xf32>
    %147 = arith.mulf %146, %145 : vector<32x128xf32>
    %148 = math.tanh %147 : vector<32x128xf32>
    %cst_56 = arith.constant 1.000000e+00 : f32
    %149 = vector.broadcast %cst_56 : f32 to vector<32x128xf32>
    %150 = arith.addf %149, %148 : vector<32x128xf32>
    %151 = arith.mulf %140, %150 : vector<32x128xf32>
    %152 = arith.truncf %151 : vector<32x128xf32> to vector<32x128xbf16>
    %cst_57 = arith.constant dense<0.000000e+00> : vector<32x32xf32>
    %153 = tpu.matmul %152, %110, %cst_57 {dimension_numbers = #tpu.dot_dimension_numbers<[1], [0], [0], [1], [0, 0, 1, 1], [], []>} : vector<32x128xbf16>, vector<128x32xbf16>, vector<32x32xf32> -> vector<32x32xf32>
    %154 = vector.broadcast %111 : vector<1x32xf32> to vector<32x32xf32>
    %155 = arith.addf %153, %154 : vector<32x32xf32>
    %156 = arith.addf %134, %155 : vector<32x32xf32>
    %cst_58 = arith.constant dense<0.000000e+00> : vector<32xf32>
    %157 = vector.multi_reduction <add>, %156, %cst_58 [1] : vector<32x32xf32> to vector<32xf32>
    %158 = vector.shape_cast %157 : vector<32xf32> to vector<32x1xf32>
    %cst_59 = arith.constant 3.200000e+01 : f32
    %159 = vector.broadcast %cst_59 : f32 to vector<32x1xf32>
    %160 = arith.divf %158, %159 : vector<32x1xf32>
    %161 = vector.broadcast %160 : vector<32x1xf32> to vector<32x32xf32>
    %162 = arith.subf %156, %161 : vector<32x32xf32>
    %163 = arith.mulf %162, %162 : vector<32x32xf32>
    %cst_60 = arith.constant dense<0.000000e+00> : vector<32xf32>
    %164 = vector.multi_reduction <add>, %163, %cst_60 [1] : vector<32x32xf32> to vector<32xf32>
    %165 = vector.shape_cast %164 : vector<32xf32> to vector<32x1xf32>
    %cst_61 = arith.constant 3.200000e+01 : f32
    %166 = vector.broadcast %cst_61 : f32 to vector<32x1xf32>
    %167 = arith.divf %165, %166 : vector<32x1xf32>
    %cst_62 = arith.constant 9.99999974E-6 : f32
    %168 = vector.broadcast %cst_62 : f32 to vector<32x1xf32>
    %169 = arith.addf %167, %168 : vector<32x1xf32>
    %170 = math.rsqrt %169 : vector<32x1xf32>
    %171 = vector.broadcast %170 : vector<32x1xf32> to vector<32x32xf32>
    %172 = arith.mulf %162, %171 : vector<32x32xf32>
    %173 = vector.broadcast %112 : vector<1x32xf32> to vector<32x32xf32>
    %174 = arith.mulf %172, %173 : vector<32x32xf32>
    %175 = vector.broadcast %113 : vector<1x32xf32> to vector<32x32xf32>
    %176 = arith.addf %174, %175 : vector<32x32xf32>
    %177 = vector.shape_cast %176 : vector<32x32xf32> to vector<4x8x32xf32>
    %c0_63 = arith.constant 0 : index
    %c0_64 = arith.constant 0 : index
    %c0_65 = arith.constant 0 : index
    %178 = vector.load %arg14[%c0_63, %c0_64, %c0_65] : memref<4x8x32xf32, #tpu.memory_space<vmem>>, vector<4x8x32xf32>
    tpu.vector_store %arg14[%c0_63, %c0_64, %c0_65], %177 {strides = array<i32>} : memref<4x8x32xf32, #tpu.memory_space<vmem>>, vector<4x8x32xf32>,
    return
  }
  func.func @transform_0(%arg0: i32) -> (i32, i32, i32) {
    %c0_i32 = arith.constant 0 : i32
    %c0_i32_0 = arith.constant 0 : i32
    %c0_i32_1 = arith.constant 0 : i32
    return %arg0, %c0_i32, %c0_i32_0 : i32, i32, i32
  }
  func.func @transform_1(%arg0: i32) -> (i32, i32) {
    %c0_i32 = arith.constant 0 : i32
    %c0_i32_0 = arith.constant 0 : i32
    %c0_i32_1 = arith.constant 0 : i32
    return %c0_i32, %c0_i32_0 : i32, i32
  }
  func.func @transform_2(%arg0: i32) -> (i32, i32) {
    %c0_i32 = arith.constant 0 : i32
    %c0_i32_0 = arith.constant 0 : i32
    %c0_i32_1 = arith.constant 0 : i32
    return %c0_i32, %c0_i32_0 : i32, i32
  }
  func.func @transform_3(%arg0: i32) -> (i32, i32) {
    %c0_i32 = arith.constant 0 : i32
    %c0_i32_0 = arith.constant 0 : i32
    %c0_i32_1 = arith.constant 0 : i32
    return %c0_i32, %c0_i32_0 : i32, i32
  }
  func.func @transform_4(%arg0: i32) -> (i32, i32) {
    %c0_i32 = arith.constant 0 : i32
    %c0_i32_0 = arith.constant 0 : i32
    %c0_i32_1 = arith.constant 0 : i32
    return %c0_i32, %c0_i32_0 : i32, i32
  }
  func.func @transform_5(%arg0: i32) -> (i32, i32) {
    %c0_i32 = arith.constant 0 : i32
    %c0_i32_0 = arith.constant 0 : i32
    %c0_i32_1 = arith.constant 0 : i32
    return %c0_i32, %c0_i32_0 : i32, i32
  }
  func.func @transform_6(%arg0: i32) -> (i32, i32) {
    %c0_i32 = arith.constant 0 : i32
    %c0_i32_0 = arith.constant 0 : i32
    %c0_i32_1 = arith.constant 0 : i32
    return %c0_i32, %c0_i32_0 : i32, i32
  }
  func.func @transform_7(%arg0: i32) -> (i32, i32) {
    %c0_i32 = arith.constant 0 : i32
    %c0_i32_0 = arith.constant 0 : i32
    %c0_i32_1 = arith.constant 0 : i32
    return %c0_i32, %c0_i32_0 : i32, i32
  }
  func.func @transform_8(%arg0: i32) -> (i32, i32) {
    %c0_i32 = arith.constant 0 : i32
    %c0_i32_0 = arith.constant 0 : i32
    %c0_i32_1 = arith.constant 0 : i32
    return %c0_i32, %c0_i32_0 : i32, i32
  }
  func.func @transform_9(%arg0: i32) -> (i32, i32) {
    %c0_i32 = arith.constant 0 : i32
    %c0_i32_0 = arith.constant 0 : i32
    %c0_i32_1 = arith.constant 0 : i32
    return %c0_i32, %c0_i32_0 : i32, i32
  }
  func.func @transform_10(%arg0: i32) -> (i32, i32) {
    %c0_i32 = arith.constant 0 : i32
    %c0_i32_0 = arith.constant 0 : i32
    %c0_i32_1 = arith.constant 0 : i32
    return %c0_i32, %c0_i32_0 : i32, i32
  }
  func.func @transform_11(%arg0: i32) -> (i32, i32) {
    %c0_i32 = arith.constant 0 : i32
    %c0_i32_0 = arith.constant 0 : i32
    %c0_i32_1 = arith.constant 0 : i32
    return %c0_i32, %c0_i32_0 : i32, i32
  }
  func.func @transform_12(%arg0: i32) -> (i32, i32) {
    %c0_i32 = arith.constant 0 : i32
    %c0_i32_0 = arith.constant 0 : i32
    %c0_i32_1 = arith.constant 0 : i32
    return %c0_i32, %c0_i32_0 : i32, i32
  }
  func.func @transform_13(%arg0: i32) -> (i32, i32, i32) {
    %c0_i32 = arith.constant 0 : i32
    %c0_i32_0 = arith.constant 0 : i32
    %c0_i32_1 = arith.constant 0 : i32
    return %arg0, %c0_i32, %c0_i32_0 : i32, i32, i32
  }
}

module attributes {stable_mosaic.version = 11 : i64} {
  func.func @_tsa_stage2_kernel(%arg0: i32, %arg1: memref<8x4x32xf32, #tpu.memory_space<vmem>>, %arg2: memref<8x5x32xf32, #tpu.memory_space<vmem>>, %arg3: memref<32x32xbf16, #tpu.memory_space<vmem>>, %arg4: memref<1x32xf32, #tpu.memory_space<vmem>>, %arg5: memref<32x64xbf16, #tpu.memory_space<vmem>>, %arg6: memref<1x64xf32, #tpu.memory_space<vmem>>, %arg7: memref<32x32xbf16, #tpu.memory_space<vmem>>, %arg8: memref<1x32xf32, #tpu.memory_space<vmem>>, %arg9: memref<32x32xbf16, #tpu.memory_space<vmem>>, %arg10: memref<1x32xf32, #tpu.memory_space<vmem>>, %arg11: memref<32x64xbf16, #tpu.memory_space<vmem>>, %arg12: memref<1x64xf32, #tpu.memory_space<vmem>>, %arg13: memref<32x32xbf16, #tpu.memory_space<vmem>>, %arg14: memref<1x32xf32, #tpu.memory_space<vmem>>, %arg15: memref<1x32xf32, #tpu.memory_space<vmem>>, %arg16: memref<1x32xf32, #tpu.memory_space<vmem>>, %arg17: memref<32x128xbf16, #tpu.memory_space<vmem>>, %arg18: memref<1x128xf32, #tpu.memory_space<vmem>>, %arg19: memref<128x32xbf16, #tpu.memory_space<vmem>>, %arg20: memref<1x32xf32, #tpu.memory_space<vmem>>, %arg21: memref<1x32xf32, #tpu.memory_space<vmem>>, %arg22: memref<1x32xf32, #tpu.memory_space<vmem>>, %arg23: memref<8x4x32xf32, #tpu.memory_space<vmem>>) attributes {dimension_semantics = [#tpu.dimension_semantics<parallel>], iteration_bounds = array<i64: 2>, scalar_prefetch = 0 : i64, scratch_operands = 0 : i64, tpu.core_type = #tpu.core_type<tc>, window_params = [{transform_indices = @transform_0, window_bounds = array<i64: 8, 4, 32>}, {pipeline_mode = #tpu.pipeline_mode<synchronous>, transform_indices = @transform_1, window_bounds = array<i64: 8, 5, 32>}, {pipeline_mode = #tpu.pipeline_mode<synchronous>, transform_indices = @transform_2, window_bounds = array<i64: 32, 32>}, {pipeline_mode = #tpu.pipeline_mode<synchronous>, transform_indices = @transform_3, window_bounds = array<i64: 1, 32>}, {pipeline_mode = #tpu.pipeline_mode<synchronous>, transform_indices = @transform_4, window_bounds = array<i64: 32, 64>}, {pipeline_mode = #tpu.pipeline_mode<synchronous>, transform_indices = @transform_5, window_bounds = array<i64: 1, 64>}, {pipeline_mode = #tpu.pipeline_mode<synchronous>, transform_indices = @transform_6, window_bounds = array<i64: 32, 32>}, {pipeline_mode = #tpu.pipeline_mode<synchronous>, transform_indices = @transform_7, window_bounds = array<i64: 1, 32>}, {pipeline_mode = #tpu.pipeline_mode<synchronous>, transform_indices = @transform_8, window_bounds = array<i64: 32, 32>}, {pipeline_mode = #tpu.pipeline_mode<synchronous>, transform_indices = @transform_9, window_bounds = array<i64: 1, 32>}, {pipeline_mode = #tpu.pipeline_mode<synchronous>, transform_indices = @transform_10, window_bounds = array<i64: 32, 64>}, {pipeline_mode = #tpu.pipeline_mode<synchronous>, transform_indices = @transform_11, window_bounds = array<i64: 1, 64>}, {pipeline_mode = #tpu.pipeline_mode<synchronous>, transform_indices = @transform_12, window_bounds = array<i64: 32, 32>}, {pipeline_mode = #tpu.pipeline_mode<synchronous>, transform_indices = @transform_13, window_bounds = array<i64: 1, 32>}, {pipeline_mode = #tpu.pipeline_mode<synchronous>, transform_indices = @transform_14, window_bounds = array<i64: 1, 32>}, {pipeline_mode = #tpu.pipeline_mode<synchronous>, transform_indices = @transform_15, window_bounds = array<i64: 1, 32>}, {pipeline_mode = #tpu.pipeline_mode<synchronous>, transform_indices = @transform_16, window_bounds = array<i64: 32, 128>}, {pipeline_mode = #tpu.pipeline_mode<synchronous>, transform_indices = @transform_17, window_bounds = array<i64: 1, 128>}, {pipeline_mode = #tpu.pipeline_mode<synchronous>, transform_indices = @transform_18, window_bounds = array<i64: 128, 32>}, {pipeline_mode = #tpu.pipeline_mode<synchronous>, transform_indices = @transform_19, window_bounds = array<i64: 1, 32>}, {pipeline_mode = #tpu.pipeline_mode<synchronous>, transform_indices = @transform_20, window_bounds = array<i64: 1, 32>}, {pipeline_mode = #tpu.pipeline_mode<synchronous>, transform_indices = @transform_21, window_bounds = array<i64: 1, 32>}, {transform_indices = @transform_22, window_bounds = array<i64: 8, 4, 32>}]} {
    %c0 = arith.constant 0 : index
    %c0_0 = arith.constant 0 : index
    %c0_1 = arith.constant 0 : index
    %0 = vector.load %arg1[%c0, %c0_0, %c0_1] : memref<8x4x32xf32, #tpu.memory_space<vmem>>, vector<8x4x32xf32>
    %c0_2 = arith.constant 0 : index
    %c0_3 = arith.constant 0 : index
    %c0_4 = arith.constant 0 : index
    %1 = vector.load %arg2[%c0_2, %c0_3, %c0_4] : memref<8x5x32xf32, #tpu.memory_space<vmem>>, vector<8x5x32xf32>
    %2 = vector.shape_cast %1 : vector<8x5x32xf32> to vector<1x8x5x32xf32>
    %3 = vector.shape_cast %2 : vector<1x8x5x32xf32> to vector<8x5x32xf32>
    %4 = vector.shape_cast %0 : vector<8x4x32xf32> to vector<32x32xf32>
    %5 = arith.truncf %4 : vector<32x32xf32> to vector<32x32xbf16>
    %6 = vector.shape_cast %3 : vector<8x5x32xf32> to vector<40x32xf32>
    %7 = arith.truncf %6 : vector<40x32xf32> to vector<40x32xbf16>
    %c0_5 = arith.constant 0 : index
    %c0_6 = arith.constant 0 : index
    %8 = vector.load %arg3[%c0_5, %c0_6] : memref<32x32xbf16, #tpu.memory_space<vmem>>, vector<32x32xbf16>
    %cst = arith.constant dense<0.000000e+00> : vector<40x32xf32>
    %9 = tpu.matmul %7, %8, %cst {dimension_numbers = #tpu.dot_dimension_numbers<[1], [0], [0], [1], [0, 0, 1, 1], [], []>} : vector<40x32xbf16>, vector<32x32xbf16>, vector<40x32xf32> -> vector<40x32xf32>
    %c0_7 = arith.constant 0 : index
    %c0_8 = arith.constant 0 : index
    %10 = vector.load %arg4[%c0_7, %c0_8] : memref<1x32xf32, #tpu.memory_space<vmem>>, vector<1x32xf32>
    %11 = vector.broadcast %10 : vector<1x32xf32> to vector<40x32xf32>
    %12 = arith.addf %9, %11 : vector<40x32xf32>
    %13 = vector.shape_cast %12 : vector<40x32xf32> to vector<8x5x32xf32>
    %c0_9 = arith.constant 0 : index
    %c0_10 = arith.constant 0 : index
    %14 = vector.load %arg5[%c0_9, %c0_10] : memref<32x64xbf16, #tpu.memory_space<vmem>>, vector<32x64xbf16>
    %cst_11 = arith.constant dense<0.000000e+00> : vector<32x64xf32>
    %15 = tpu.matmul %5, %14, %cst_11 {dimension_numbers = #tpu.dot_dimension_numbers<[1], [0], [0], [1], [0, 0, 1, 1], [], []>} : vector<32x32xbf16>, vector<32x64xbf16>, vector<32x64xf32> -> vector<32x64xf32>
    %c0_12 = arith.constant 0 : index
    %c0_13 = arith.constant 0 : index
    %16 = vector.load %arg6[%c0_12, %c0_13] : memref<1x64xf32, #tpu.memory_space<vmem>>, vector<1x64xf32>
    %17 = vector.broadcast %16 : vector<1x64xf32> to vector<32x64xf32>
    %18 = arith.addf %15, %17 : vector<32x64xf32>
    %19 = vector.extract_strided_slice %18 {offsets = [0, 0], sizes = [32, 32], strides = [1, 1]} : vector<32x64xf32> to vector<32x32xf32>
    %20 = vector.shape_cast %19 : vector<32x32xf32> to vector<8x4x32xf32>
    %21 = vector.extract_strided_slice %18 {offsets = [0, 32], sizes = [32, 32], strides = [1, 1]} : vector<32x64xf32> to vector<32x32xf32>
    %22 = vector.shape_cast %21 : vector<32x32xf32> to vector<8x4x32xf32>
    %c0_14 = arith.constant 0 : index
    %c0_15 = arith.constant 0 : index
    %23 = vector.load %arg7[%c0_14, %c0_15] : memref<32x32xbf16, #tpu.memory_space<vmem>>, vector<32x32xbf16>
    %c0_16 = arith.constant 0 : index
    %c0_17 = arith.constant 0 : index
    %24 = vector.load %arg8[%c0_16, %c0_17] : memref<1x32xf32, #tpu.memory_space<vmem>>, vector<1x32xf32>
    %25 = vector.extract_strided_slice %13 {offsets = [0, 0, 0], sizes = [8, 5, 8], strides = [1, 1, 1]} : vector<8x5x32xf32> to vector<8x5x8xf32>
    %26 = arith.truncf %25 : vector<8x5x8xf32> to vector<8x5x8xbf16>
    %27 = vector.extract_strided_slice %20 {offsets = [0, 0, 0], sizes = [8, 4, 8], strides = [1, 1, 1]} : vector<8x4x32xf32> to vector<8x4x8xf32>
    %28 = arith.truncf %27 : vector<8x4x8xf32> to vector<8x4x8xbf16>
    %29 = vector.extract_strided_slice %22 {offsets = [0, 0, 0], sizes = [8, 4, 8], strides = [1, 1, 1]} : vector<8x4x32xf32> to vector<8x4x8xf32>
    %30 = arith.truncf %29 : vector<8x4x8xf32> to vector<8x4x8xbf16>
    "tpu.trace_start"() <{level = 10 : i32, message = "bld,bsd->bls"}> : () -> ()
    %cst_18 = arith.constant dense<0.000000e+00> : vector<8x5x4xf32>
    %31 = tpu.matmul %26, %28, %cst_18 {dimension_numbers = #tpu.dot_dimension_numbers<[2], [2], [1], [1], [0, 0, 0, 1, 1, 1], [0], [0]>} : vector<8x5x8xbf16>, vector<8x4x8xbf16>, vector<8x5x4xf32> -> vector<8x5x4xf32>
    "tpu.trace_stop"() : () -> ()
    %cst_19 = arith.constant 0.353553385 : f32
    %32 = vector.broadcast %cst_19 : f32 to vector<8x5x4xf32>
    %33 = arith.mulf %31, %32 : vector<8x5x4xf32>
    %cst_20 = arith.constant dense<0xFF800000> : vector<8x5xf32>
    %34 = vector.multi_reduction <maximumf>, %33, %cst_20 [2] : vector<8x5x4xf32> to vector<8x5xf32>
    %35 = vector.shape_cast %34 : vector<8x5xf32> to vector<8x5x1xf32>
    %36 = vector.broadcast %35 : vector<8x5x1xf32> to vector<8x5x4xf32>
    %37 = arith.subf %33, %36 : vector<8x5x4xf32>
    %38 = math.exp %37 : vector<8x5x4xf32>
    %cst_21 = arith.constant dense<0.000000e+00> : vector<8x5xf32>
    %39 = vector.multi_reduction <add>, %38, %cst_21 [2] : vector<8x5x4xf32> to vector<8x5xf32>
    %40 = vector.shape_cast %39 : vector<8x5xf32> to vector<8x5x1xf32>
    %41 = tpu.reciprocal %40 {approx = true} : vector<8x5x1xf32> -> vector<8x5x1xf32>
    %42 = vector.broadcast %41 : vector<8x5x1xf32> to vector<8x5x4xf32>
    %43 = arith.mulf %38, %42 : vector<8x5x4xf32>
    %44 = arith.truncf %43 : vector<8x5x4xf32> to vector<8x5x4xbf16>
    "tpu.trace_start"() <{level = 10 : i32, message = "bls,bsd->bld"}> : () -> ()
    %cst_22 = arith.constant dense<0.000000e+00> : vector<8x5x8xf32>
    %45 = tpu.matmul %44, %30, %cst_22 {dimension_numbers = #tpu.dot_dimension_numbers<[2], [1], [1], [2], [0, 0, 0, 1, 1, 2], [0], [0]>} : vector<8x5x4xbf16>, vector<8x4x8xbf16>, vector<8x5x8xf32> -> vector<8x5x8xf32>
    "tpu.trace_stop"() : () -> ()
    %46 = vector.extract_strided_slice %13 {offsets = [0, 0, 8], sizes = [8, 5, 8], strides = [1, 1, 1]} : vector<8x5x32xf32> to vector<8x5x8xf32>
    %47 = arith.truncf %46 : vector<8x5x8xf32> to vector<8x5x8xbf16>
    %48 = vector.extract_strided_slice %20 {offsets = [0, 0, 8], sizes = [8, 4, 8], strides = [1, 1, 1]} : vector<8x4x32xf32> to vector<8x4x8xf32>
    %49 = arith.truncf %48 : vector<8x4x8xf32> to vector<8x4x8xbf16>
    %50 = vector.extract_strided_slice %22 {offsets = [0, 0, 8], sizes = [8, 4, 8], strides = [1, 1, 1]} : vector<8x4x32xf32> to vector<8x4x8xf32>
    %51 = arith.truncf %50 : vector<8x4x8xf32> to vector<8x4x8xbf16>
    "tpu.trace_start"() <{level = 10 : i32, message = "bld,bsd->bls"}> : () -> ()
    %cst_23 = arith.constant dense<0.000000e+00> : vector<8x5x4xf32>
    %52 = tpu.matmul %47, %49, %cst_23 {dimension_numbers = #tpu.dot_dimension_numbers<[2], [2], [1], [1], [0, 0, 0, 1, 1, 1], [0], [0]>} : vector<8x5x8xbf16>, vector<8x4x8xbf16>, vector<8x5x4xf32> -> vector<8x5x4xf32>
    "tpu.trace_stop"() : () -> ()
    %cst_24 = arith.constant 0.353553385 : f32
    %53 = vector.broadcast %cst_24 : f32 to vector<8x5x4xf32>
    %54 = arith.mulf %52, %53 : vector<8x5x4xf32>
    %cst_25 = arith.constant dense<0xFF800000> : vector<8x5xf32>
    %55 = vector.multi_reduction <maximumf>, %54, %cst_25 [2] : vector<8x5x4xf32> to vector<8x5xf32>
    %56 = vector.shape_cast %55 : vector<8x5xf32> to vector<8x5x1xf32>
    %57 = vector.broadcast %56 : vector<8x5x1xf32> to vector<8x5x4xf32>
    %58 = arith.subf %54, %57 : vector<8x5x4xf32>
    %59 = math.exp %58 : vector<8x5x4xf32>
    %cst_26 = arith.constant dense<0.000000e+00> : vector<8x5xf32>
    %60 = vector.multi_reduction <add>, %59, %cst_26 [2] : vector<8x5x4xf32> to vector<8x5xf32>
    %61 = vector.shape_cast %60 : vector<8x5xf32> to vector<8x5x1xf32>
    %62 = tpu.reciprocal %61 {approx = true} : vector<8x5x1xf32> -> vector<8x5x1xf32>
    %63 = vector.broadcast %62 : vector<8x5x1xf32> to vector<8x5x4xf32>
    %64 = arith.mulf %59, %63 : vector<8x5x4xf32>
    %65 = arith.truncf %64 : vector<8x5x4xf32> to vector<8x5x4xbf16>
    "tpu.trace_start"() <{level = 10 : i32, message = "bls,bsd->bld"}> : () -> ()
    %cst_27 = arith.constant dense<0.000000e+00> : vector<8x5x8xf32>
    %66 = tpu.matmul %65, %51, %cst_27 {dimension_numbers = #tpu.dot_dimension_numbers<[2], [1], [1], [2], [0, 0, 0, 1, 1, 2], [0], [0]>} : vector<8x5x4xbf16>, vector<8x4x8xbf16>, vector<8x5x8xf32> -> vector<8x5x8xf32>
    "tpu.trace_stop"() : () -> ()
    %67 = vector.extract_strided_slice %13 {offsets = [0, 0, 16], sizes = [8, 5, 8], strides = [1, 1, 1]} : vector<8x5x32xf32> to vector<8x5x8xf32>
    %68 = arith.truncf %67 : vector<8x5x8xf32> to vector<8x5x8xbf16>
    %69 = vector.extract_strided_slice %20 {offsets = [0, 0, 16], sizes = [8, 4, 8], strides = [1, 1, 1]} : vector<8x4x32xf32> to vector<8x4x8xf32>
    %70 = arith.truncf %69 : vector<8x4x8xf32> to vector<8x4x8xbf16>
    %71 = vector.extract_strided_slice %22 {offsets = [0, 0, 16], sizes = [8, 4, 8], strides = [1, 1, 1]} : vector<8x4x32xf32> to vector<8x4x8xf32>
    %72 = arith.truncf %71 : vector<8x4x8xf32> to vector<8x4x8xbf16>
    "tpu.trace_start"() <{level = 10 : i32, message = "bld,bsd->bls"}> : () -> ()
    %cst_28 = arith.constant dense<0.000000e+00> : vector<8x5x4xf32>
    %73 = tpu.matmul %68, %70, %cst_28 {dimension_numbers = #tpu.dot_dimension_numbers<[2], [2], [1], [1], [0, 0, 0, 1, 1, 1], [0], [0]>} : vector<8x5x8xbf16>, vector<8x4x8xbf16>, vector<8x5x4xf32> -> vector<8x5x4xf32>
    "tpu.trace_stop"() : () -> ()
    %cst_29 = arith.constant 0.353553385 : f32
    %74 = vector.broadcast %cst_29 : f32 to vector<8x5x4xf32>
    %75 = arith.mulf %73, %74 : vector<8x5x4xf32>
    %cst_30 = arith.constant dense<0xFF800000> : vector<8x5xf32>
    %76 = vector.multi_reduction <maximumf>, %75, %cst_30 [2] : vector<8x5x4xf32> to vector<8x5xf32>
    %77 = vector.shape_cast %76 : vector<8x5xf32> to vector<8x5x1xf32>
    %78 = vector.broadcast %77 : vector<8x5x1xf32> to vector<8x5x4xf32>
    %79 = arith.subf %75, %78 : vector<8x5x4xf32>
    %80 = math.exp %79 : vector<8x5x4xf32>
    %cst_31 = arith.constant dense<0.000000e+00> : vector<8x5xf32>
    %81 = vector.multi_reduction <add>, %80, %cst_31 [2] : vector<8x5x4xf32> to vector<8x5xf32>
    %82 = vector.shape_cast %81 : vector<8x5xf32> to vector<8x5x1xf32>
    %83 = tpu.reciprocal %82 {approx = true} : vector<8x5x1xf32> -> vector<8x5x1xf32>
    %84 = vector.broadcast %83 : vector<8x5x1xf32> to vector<8x5x4xf32>
    %85 = arith.mulf %80, %84 : vector<8x5x4xf32>
    %86 = arith.truncf %85 : vector<8x5x4xf32> to vector<8x5x4xbf16>
    "tpu.trace_start"() <{level = 10 : i32, message = "bls,bsd->bld"}> : () -> ()
    %cst_32 = arith.constant dense<0.000000e+00> : vector<8x5x8xf32>
    %87 = tpu.matmul %86, %72, %cst_32 {dimension_numbers = #tpu.dot_dimension_numbers<[2], [1], [1], [2], [0, 0, 0, 1, 1, 2], [0], [0]>} : vector<8x5x4xbf16>, vector<8x4x8xbf16>, vector<8x5x8xf32> -> vector<8x5x8xf32>
    "tpu.trace_stop"() : () -> ()
    %88 = vector.extract_strided_slice %13 {offsets = [0, 0, 24], sizes = [8, 5, 8], strides = [1, 1, 1]} : vector<8x5x32xf32> to vector<8x5x8xf32>
    %89 = arith.truncf %88 : vector<8x5x8xf32> to vector<8x5x8xbf16>
    %90 = vector.extract_strided_slice %20 {offsets = [0, 0, 24], sizes = [8, 4, 8], strides = [1, 1, 1]} : vector<8x4x32xf32> to vector<8x4x8xf32>
    %91 = arith.truncf %90 : vector<8x4x8xf32> to vector<8x4x8xbf16>
    %92 = vector.extract_strided_slice %22 {offsets = [0, 0, 24], sizes = [8, 4, 8], strides = [1, 1, 1]} : vector<8x4x32xf32> to vector<8x4x8xf32>
    %93 = arith.truncf %92 : vector<8x4x8xf32> to vector<8x4x8xbf16>
    "tpu.trace_start"() <{level = 10 : i32, message = "bld,bsd->bls"}> : () -> ()
    %cst_33 = arith.constant dense<0.000000e+00> : vector<8x5x4xf32>
    %94 = tpu.matmul %89, %91, %cst_33 {dimension_numbers = #tpu.dot_dimension_numbers<[2], [2], [1], [1], [0, 0, 0, 1, 1, 1], [0], [0]>} : vector<8x5x8xbf16>, vector<8x4x8xbf16>, vector<8x5x4xf32> -> vector<8x5x4xf32>
    "tpu.trace_stop"() : () -> ()
    %cst_34 = arith.constant 0.353553385 : f32
    %95 = vector.broadcast %cst_34 : f32 to vector<8x5x4xf32>
    %96 = arith.mulf %94, %95 : vector<8x5x4xf32>
    %cst_35 = arith.constant dense<0xFF800000> : vector<8x5xf32>
    %97 = vector.multi_reduction <maximumf>, %96, %cst_35 [2] : vector<8x5x4xf32> to vector<8x5xf32>
    %98 = vector.shape_cast %97 : vector<8x5xf32> to vector<8x5x1xf32>
    %99 = vector.broadcast %98 : vector<8x5x1xf32> to vector<8x5x4xf32>
    %100 = arith.subf %96, %99 : vector<8x5x4xf32>
    %101 = math.exp %100 : vector<8x5x4xf32>
    %cst_36 = arith.constant dense<0.000000e+00> : vector<8x5xf32>
    %102 = vector.multi_reduction <add>, %101, %cst_36 [2] : vector<8x5x4xf32> to vector<8x5xf32>
    %103 = vector.shape_cast %102 : vector<8x5xf32> to vector<8x5x1xf32>
    %104 = tpu.reciprocal %103 {approx = true} : vector<8x5x1xf32> -> vector<8x5x1xf32>
    %105 = vector.broadcast %104 : vector<8x5x1xf32> to vector<8x5x4xf32>
    %106 = arith.mulf %101, %105 : vector<8x5x4xf32>
    %107 = arith.truncf %106 : vector<8x5x4xf32> to vector<8x5x4xbf16>
    "tpu.trace_start"() <{level = 10 : i32, message = "bls,bsd->bld"}> : () -> ()
    %cst_37 = arith.constant dense<0.000000e+00> : vector<8x5x8xf32>
    %108 = tpu.matmul %107, %93, %cst_37 {dimension_numbers = #tpu.dot_dimension_numbers<[2], [1], [1], [2], [0, 0, 0, 1, 1, 2], [0], [0]>} : vector<8x5x4xbf16>, vector<8x4x8xbf16>, vector<8x5x8xf32> -> vector<8x5x8xf32>
    "tpu.trace_stop"() : () -> ()
    %109 = tpu.concatenate %45, %66, %87, %108 in 2 : vector<8x5x8xf32>, vector<8x5x8xf32>, vector<8x5x8xf32>, vector<8x5x8xf32> -> vector<8x5x32xf32>
    %110 = vector.shape_cast %109 : vector<8x5x32xf32> to vector<40x32xf32>
    %111 = arith.truncf %110 : vector<40x32xf32> to vector<40x32xbf16>
    %cst_38 = arith.constant dense<0.000000e+00> : vector<40x32xf32>
    %112 = tpu.matmul %111, %23, %cst_38 {dimension_numbers = #tpu.dot_dimension_numbers<[1], [0], [0], [1], [0, 0, 1, 1], [], []>} : vector<40x32xbf16>, vector<32x32xbf16>, vector<40x32xf32> -> vector<40x32xf32>
    %113 = vector.broadcast %24 : vector<1x32xf32> to vector<40x32xf32>
    %114 = arith.addf %112, %113 : vector<40x32xf32>
    %c0_39 = arith.constant 0 : index
    %c0_40 = arith.constant 0 : index
    %115 = vector.load %arg9[%c0_39, %c0_40] : memref<32x32xbf16, #tpu.memory_space<vmem>>, vector<32x32xbf16>
    %cst_41 = arith.constant dense<0.000000e+00> : vector<32x32xf32>
    %116 = tpu.matmul %5, %115, %cst_41 {dimension_numbers = #tpu.dot_dimension_numbers<[1], [0], [0], [1], [0, 0, 1, 1], [], []>} : vector<32x32xbf16>, vector<32x32xbf16>, vector<32x32xf32> -> vector<32x32xf32>
    %c0_42 = arith.constant 0 : index
    %c0_43 = arith.constant 0 : index
    %117 = vector.load %arg10[%c0_42, %c0_43] : memref<1x32xf32, #tpu.memory_space<vmem>>, vector<1x32xf32>
    %118 = vector.broadcast %117 : vector<1x32xf32> to vector<32x32xf32>
    %119 = arith.addf %116, %118 : vector<32x32xf32>
    %120 = vector.shape_cast %119 : vector<32x32xf32> to vector<8x4x32xf32>
    %121 = arith.truncf %114 : vector<40x32xf32> to vector<40x32xbf16>
    %c0_44 = arith.constant 0 : index
    %c0_45 = arith.constant 0 : index
    %122 = vector.load %arg11[%c0_44, %c0_45] : memref<32x64xbf16, #tpu.memory_space<vmem>>, vector<32x64xbf16>
    %cst_46 = arith.constant dense<0.000000e+00> : vector<40x64xf32>
    %123 = tpu.matmul %121, %122, %cst_46 {dimension_numbers = #tpu.dot_dimension_numbers<[1], [0], [0], [1], [0, 0, 1, 1], [], []>} : vector<40x32xbf16>, vector<32x64xbf16>, vector<40x64xf32> -> vector<40x64xf32>
    %c0_47 = arith.constant 0 : index
    %c0_48 = arith.constant 0 : index
    %124 = vector.load %arg12[%c0_47, %c0_48] : memref<1x64xf32, #tpu.memory_space<vmem>>, vector<1x64xf32>
    %125 = vector.broadcast %124 : vector<1x64xf32> to vector<40x64xf32>
    %126 = arith.addf %123, %125 : vector<40x64xf32>
    %127 = vector.extract_strided_slice %126 {offsets = [0, 0], sizes = [40, 32], strides = [1, 1]} : vector<40x64xf32> to vector<40x32xf32>
    %128 = vector.shape_cast %127 : vector<40x32xf32> to vector<8x5x32xf32>
    %129 = vector.extract_strided_slice %126 {offsets = [0, 32], sizes = [40, 32], strides = [1, 1]} : vector<40x64xf32> to vector<40x32xf32>
    %130 = vector.shape_cast %129 : vector<40x32xf32> to vector<8x5x32xf32>
    %c0_49 = arith.constant 0 : index
    %c0_50 = arith.constant 0 : index
    %131 = vector.load %arg13[%c0_49, %c0_50] : memref<32x32xbf16, #tpu.memory_space<vmem>>, vector<32x32xbf16>
    %c0_51 = arith.constant 0 : index
    %c0_52 = arith.constant 0 : index
    %132 = vector.load %arg14[%c0_51, %c0_52] : memref<1x32xf32, #tpu.memory_space<vmem>>, vector<1x32xf32>
    %133 = vector.extract_strided_slice %120 {offsets = [0, 0, 0], sizes = [8, 4, 8], strides = [1, 1, 1]} : vector<8x4x32xf32> to vector<8x4x8xf32>
    %134 = arith.truncf %133 : vector<8x4x8xf32> to vector<8x4x8xbf16>
    %135 = vector.extract_strided_slice %128 {offsets = [0, 0, 0], sizes = [8, 5, 8], strides = [1, 1, 1]} : vector<8x5x32xf32> to vector<8x5x8xf32>
    %136 = arith.truncf %135 : vector<8x5x8xf32> to vector<8x5x8xbf16>
    %137 = vector.extract_strided_slice %130 {offsets = [0, 0, 0], sizes = [8, 5, 8], strides = [1, 1, 1]} : vector<8x5x32xf32> to vector<8x5x8xf32>
    %138 = arith.truncf %137 : vector<8x5x8xf32> to vector<8x5x8xbf16>
    "tpu.trace_start"() <{level = 10 : i32, message = "bld,bsd->bls"}> : () -> ()
    %cst_53 = arith.constant dense<0.000000e+00> : vector<8x4x5xf32>
    %139 = tpu.matmul %134, %136, %cst_53 {dimension_numbers = #tpu.dot_dimension_numbers<[2], [2], [1], [1], [0, 0, 0, 1, 1, 1], [0], [0]>} : vector<8x4x8xbf16>, vector<8x5x8xbf16>, vector<8x4x5xf32> -> vector<8x4x5xf32>
    "tpu.trace_stop"() : () -> ()
    %cst_54 = arith.constant 0.353553385 : f32
    %140 = vector.broadcast %cst_54 : f32 to vector<8x4x5xf32>
    %141 = arith.mulf %139, %140 : vector<8x4x5xf32>
    %cst_55 = arith.constant dense<0xFF800000> : vector<8x4xf32>
    %142 = vector.multi_reduction <maximumf>, %141, %cst_55 [2] : vector<8x4x5xf32> to vector<8x4xf32>
    %143 = vector.shape_cast %142 : vector<8x4xf32> to vector<8x4x1xf32>
    %144 = vector.broadcast %143 : vector<8x4x1xf32> to vector<8x4x5xf32>
    %145 = arith.subf %141, %144 : vector<8x4x5xf32>
    %146 = math.exp %145 : vector<8x4x5xf32>
    %cst_56 = arith.constant dense<0.000000e+00> : vector<8x4xf32>
    %147 = vector.multi_reduction <add>, %146, %cst_56 [2] : vector<8x4x5xf32> to vector<8x4xf32>
    %148 = vector.shape_cast %147 : vector<8x4xf32> to vector<8x4x1xf32>
    %149 = tpu.reciprocal %148 {approx = true} : vector<8x4x1xf32> -> vector<8x4x1xf32>
    %150 = vector.broadcast %149 : vector<8x4x1xf32> to vector<8x4x5xf32>
    %151 = arith.mulf %146, %150 : vector<8x4x5xf32>
    %152 = arith.truncf %151 : vector<8x4x5xf32> to vector<8x4x5xbf16>
    "tpu.trace_start"() <{level = 10 : i32, message = "bls,bsd->bld"}> : () -> ()
    %cst_57 = arith.constant dense<0.000000e+00> : vector<8x4x8xf32>
    %153 = tpu.matmul %152, %138, %cst_57 {dimension_numbers = #tpu.dot_dimension_numbers<[2], [1], [1], [2], [0, 0, 0, 1, 1, 2], [0], [0]>} : vector<8x4x5xbf16>, vector<8x5x8xbf16>, vector<8x4x8xf32> -> vector<8x4x8xf32>
    "tpu.trace_stop"() : () -> ()
    %154 = vector.extract_strided_slice %120 {offsets = [0, 0, 8], sizes = [8, 4, 8], strides = [1, 1, 1]} : vector<8x4x32xf32> to vector<8x4x8xf32>
    %155 = arith.truncf %154 : vector<8x4x8xf32> to vector<8x4x8xbf16>
    %156 = vector.extract_strided_slice %128 {offsets = [0, 0, 8], sizes = [8, 5, 8], strides = [1, 1, 1]} : vector<8x5x32xf32> to vector<8x5x8xf32>
    %157 = arith.truncf %156 : vector<8x5x8xf32> to vector<8x5x8xbf16>
    %158 = vector.extract_strided_slice %130 {offsets = [0, 0, 8], sizes = [8, 5, 8], strides = [1, 1, 1]} : vector<8x5x32xf32> to vector<8x5x8xf32>
    %159 = arith.truncf %158 : vector<8x5x8xf32> to vector<8x5x8xbf16>
    "tpu.trace_start"() <{level = 10 : i32, message = "bld,bsd->bls"}> : () -> ()
    %cst_58 = arith.constant dense<0.000000e+00> : vector<8x4x5xf32>
    %160 = tpu.matmul %155, %157, %cst_58 {dimension_numbers = #tpu.dot_dimension_numbers<[2], [2], [1], [1], [0, 0, 0, 1, 1, 1], [0], [0]>} : vector<8x4x8xbf16>, vector<8x5x8xbf16>, vector<8x4x5xf32> -> vector<8x4x5xf32>
    "tpu.trace_stop"() : () -> ()
    %cst_59 = arith.constant 0.353553385 : f32
    %161 = vector.broadcast %cst_59 : f32 to vector<8x4x5xf32>
    %162 = arith.mulf %160, %161 : vector<8x4x5xf32>
    %cst_60 = arith.constant dense<0xFF800000> : vector<8x4xf32>
    %163 = vector.multi_reduction <maximumf>, %162, %cst_60 [2] : vector<8x4x5xf32> to vector<8x4xf32>
    %164 = vector.shape_cast %163 : vector<8x4xf32> to vector<8x4x1xf32>
    %165 = vector.broadcast %164 : vector<8x4x1xf32> to vector<8x4x5xf32>
    %166 = arith.subf %162, %165 : vector<8x4x5xf32>
    %167 = math.exp %166 : vector<8x4x5xf32>
    %cst_61 = arith.constant dense<0.000000e+00> : vector<8x4xf32>
    %168 = vector.multi_reduction <add>, %167, %cst_61 [2] : vector<8x4x5xf32> to vector<8x4xf32>
    %169 = vector.shape_cast %168 : vector<8x4xf32> to vector<8x4x1xf32>
    %170 = tpu.reciprocal %169 {approx = true} : vector<8x4x1xf32> -> vector<8x4x1xf32>
    %171 = vector.broadcast %170 : vector<8x4x1xf32> to vector<8x4x5xf32>
    %172 = arith.mulf %167, %171 : vector<8x4x5xf32>
    %173 = arith.truncf %172 : vector<8x4x5xf32> to vector<8x4x5xbf16>
    "tpu.trace_start"() <{level = 10 : i32, message = "bls,bsd->bld"}> : () -> ()
    %cst_62 = arith.constant dense<0.000000e+00> : vector<8x4x8xf32>
    %174 = tpu.matmul %173, %159, %cst_62 {dimension_numbers = #tpu.dot_dimension_numbers<[2], [1], [1], [2], [0, 0, 0, 1, 1, 2], [0], [0]>} : vector<8x4x5xbf16>, vector<8x5x8xbf16>, vector<8x4x8xf32> -> vector<8x4x8xf32>
    "tpu.trace_stop"() : () -> ()
    %175 = vector.extract_strided_slice %120 {offsets = [0, 0, 16], sizes = [8, 4, 8], strides = [1, 1, 1]} : vector<8x4x32xf32> to vector<8x4x8xf32>
    %176 = arith.truncf %175 : vector<8x4x8xf32> to vector<8x4x8xbf16>
    %177 = vector.extract_strided_slice %128 {offsets = [0, 0, 16], sizes = [8, 5, 8], strides = [1, 1, 1]} : vector<8x5x32xf32> to vector<8x5x8xf32>
    %178 = arith.truncf %177 : vector<8x5x8xf32> to vector<8x5x8xbf16>
    %179 = vector.extract_strided_slice %130 {offsets = [0, 0, 16], sizes = [8, 5, 8], strides = [1, 1, 1]} : vector<8x5x32xf32> to vector<8x5x8xf32>
    %180 = arith.truncf %179 : vector<8x5x8xf32> to vector<8x5x8xbf16>
    "tpu.trace_start"() <{level = 10 : i32, message = "bld,bsd->bls"}> : () -> ()
    %cst_63 = arith.constant dense<0.000000e+00> : vector<8x4x5xf32>
    %181 = tpu.matmul %176, %178, %cst_63 {dimension_numbers = #tpu.dot_dimension_numbers<[2], [2], [1], [1], [0, 0, 0, 1, 1, 1], [0], [0]>} : vector<8x4x8xbf16>, vector<8x5x8xbf16>, vector<8x4x5xf32> -> vector<8x4x5xf32>
    "tpu.trace_stop"() : () -> ()
    %cst_64 = arith.constant 0.353553385 : f32
    %182 = vector.broadcast %cst_64 : f32 to vector<8x4x5xf32>
    %183 = arith.mulf %181, %182 : vector<8x4x5xf32>
    %cst_65 = arith.constant dense<0xFF800000> : vector<8x4xf32>
    %184 = vector.multi_reduction <maximumf>, %183, %cst_65 [2] : vector<8x4x5xf32> to vector<8x4xf32>
    %185 = vector.shape_cast %184 : vector<8x4xf32> to vector<8x4x1xf32>
    %186 = vector.broadcast %185 : vector<8x4x1xf32> to vector<8x4x5xf32>
    %187 = arith.subf %183, %186 : vector<8x4x5xf32>
    %188 = math.exp %187 : vector<8x4x5xf32>
    %cst_66 = arith.constant dense<0.000000e+00> : vector<8x4xf32>
    %189 = vector.multi_reduction <add>, %188, %cst_66 [2] : vector<8x4x5xf32> to vector<8x4xf32>
    %190 = vector.shape_cast %189 : vector<8x4xf32> to vector<8x4x1xf32>
    %191 = tpu.reciprocal %190 {approx = true} : vector<8x4x1xf32> -> vector<8x4x1xf32>
    %192 = vector.broadcast %191 : vector<8x4x1xf32> to vector<8x4x5xf32>
    %193 = arith.mulf %188, %192 : vector<8x4x5xf32>
    %194 = arith.truncf %193 : vector<8x4x5xf32> to vector<8x4x5xbf16>
    "tpu.trace_start"() <{level = 10 : i32, message = "bls,bsd->bld"}> : () -> ()
    %cst_67 = arith.constant dense<0.000000e+00> : vector<8x4x8xf32>
    %195 = tpu.matmul %194, %180, %cst_67 {dimension_numbers = #tpu.dot_dimension_numbers<[2], [1], [1], [2], [0, 0, 0, 1, 1, 2], [0], [0]>} : vector<8x4x5xbf16>, vector<8x5x8xbf16>, vector<8x4x8xf32> -> vector<8x4x8xf32>
    "tpu.trace_stop"() : () -> ()
    %196 = vector.extract_strided_slice %120 {offsets = [0, 0, 24], sizes = [8, 4, 8], strides = [1, 1, 1]} : vector<8x4x32xf32> to vector<8x4x8xf32>
    %197 = arith.truncf %196 : vector<8x4x8xf32> to vector<8x4x8xbf16>
    %198 = vector.extract_strided_slice %128 {offsets = [0, 0, 24], sizes = [8, 5, 8], strides = [1, 1, 1]} : vector<8x5x32xf32> to vector<8x5x8xf32>
    %199 = arith.truncf %198 : vector<8x5x8xf32> to vector<8x5x8xbf16>
    %200 = vector.extract_strided_slice %130 {offsets = [0, 0, 24], sizes = [8, 5, 8], strides = [1, 1, 1]} : vector<8x5x32xf32> to vector<8x5x8xf32>
    %201 = arith.truncf %200 : vector<8x5x8xf32> to vector<8x5x8xbf16>
    "tpu.trace_start"() <{level = 10 : i32, message = "bld,bsd->bls"}> : () -> ()
    %cst_68 = arith.constant dense<0.000000e+00> : vector<8x4x5xf32>
    %202 = tpu.matmul %197, %199, %cst_68 {dimension_numbers = #tpu.dot_dimension_numbers<[2], [2], [1], [1], [0, 0, 0, 1, 1, 1], [0], [0]>} : vector<8x4x8xbf16>, vector<8x5x8xbf16>, vector<8x4x5xf32> -> vector<8x4x5xf32>
    "tpu.trace_stop"() : () -> ()
    %cst_69 = arith.constant 0.353553385 : f32
    %203 = vector.broadcast %cst_69 : f32 to vector<8x4x5xf32>
    %204 = arith.mulf %202, %203 : vector<8x4x5xf32>
    %cst_70 = arith.constant dense<0xFF800000> : vector<8x4xf32>
    %205 = vector.multi_reduction <maximumf>, %204, %cst_70 [2] : vector<8x4x5xf32> to vector<8x4xf32>
    %206 = vector.shape_cast %205 : vector<8x4xf32> to vector<8x4x1xf32>
    %207 = vector.broadcast %206 : vector<8x4x1xf32> to vector<8x4x5xf32>
    %208 = arith.subf %204, %207 : vector<8x4x5xf32>
    %209 = math.exp %208 : vector<8x4x5xf32>
    %cst_71 = arith.constant dense<0.000000e+00> : vector<8x4xf32>
    %210 = vector.multi_reduction <add>, %209, %cst_71 [2] : vector<8x4x5xf32> to vector<8x4xf32>
    %211 = vector.shape_cast %210 : vector<8x4xf32> to vector<8x4x1xf32>
    %212 = tpu.reciprocal %211 {approx = true} : vector<8x4x1xf32> -> vector<8x4x1xf32>
    %213 = vector.broadcast %212 : vector<8x4x1xf32> to vector<8x4x5xf32>
    %214 = arith.mulf %209, %213 : vector<8x4x5xf32>
    %215 = arith.truncf %214 : vector<8x4x5xf32> to vector<8x4x5xbf16>
    "tpu.trace_start"() <{level = 10 : i32, message = "bls,bsd->bld"}> : () -> ()
    %cst_72 = arith.constant dense<0.000000e+00> : vector<8x4x8xf32>
    %216 = tpu.matmul %215, %201, %cst_72 {dimension_numbers = #tpu.dot_dimension_numbers<[2], [1], [1], [2], [0, 0, 0, 1, 1, 2], [0], [0]>} : vector<8x4x5xbf16>, vector<8x5x8xbf16>, vector<8x4x8xf32> -> vector<8x4x8xf32>
    "tpu.trace_stop"() : () -> ()
    %217 = tpu.concatenate %153, %174, %195, %216 in 2 : vector<8x4x8xf32>, vector<8x4x8xf32>, vector<8x4x8xf32>, vector<8x4x8xf32> -> vector<8x4x32xf32>
    %218 = vector.shape_cast %217 : vector<8x4x32xf32> to vector<32x32xf32>
    %219 = arith.truncf %218 : vector<32x32xf32> to vector<32x32xbf16>
    %cst_73 = arith.constant dense<0.000000e+00> : vector<32x32xf32>
    %220 = tpu.matmul %219, %131, %cst_73 {dimension_numbers = #tpu.dot_dimension_numbers<[1], [0], [0], [1], [0, 0, 1, 1], [], []>} : vector<32x32xbf16>, vector<32x32xbf16>, vector<32x32xf32> -> vector<32x32xf32>
    %221 = vector.broadcast %132 : vector<1x32xf32> to vector<32x32xf32>
    %222 = arith.addf %220, %221 : vector<32x32xf32>
    %223 = vector.shape_cast %0 : vector<8x4x32xf32> to vector<32x32xf32>
    %c0_74 = arith.constant 0 : index
    %c0_75 = arith.constant 0 : index
    %224 = vector.load %arg15[%c0_74, %c0_75] : memref<1x32xf32, #tpu.memory_space<vmem>>, vector<1x32xf32>
    %c0_76 = arith.constant 0 : index
    %c0_77 = arith.constant 0 : index
    %225 = vector.load %arg16[%c0_76, %c0_77] : memref<1x32xf32, #tpu.memory_space<vmem>>, vector<1x32xf32>
    %c0_78 = arith.constant 0 : index
    %c0_79 = arith.constant 0 : index
    %226 = vector.load %arg17[%c0_78, %c0_79] : memref<32x128xbf16, #tpu.memory_space<vmem>>, vector<32x128xbf16>
    %c0_80 = arith.constant 0 : index
    %c0_81 = arith.constant 0 : index
    %227 = vector.load %arg18[%c0_80, %c0_81] : memref<1x128xf32, #tpu.memory_space<vmem>>, vector<1x128xf32>
    %c0_82 = arith.constant 0 : index
    %c0_83 = arith.constant 0 : index
    %228 = vector.load %arg19[%c0_82, %c0_83] : memref<128x32xbf16, #tpu.memory_space<vmem>>, vector<128x32xbf16>
    %c0_84 = arith.constant 0 : index
    %c0_85 = arith.constant 0 : index
    %229 = vector.load %arg20[%c0_84, %c0_85] : memref<1x32xf32, #tpu.memory_space<vmem>>, vector<1x32xf32>
    %c0_86 = arith.constant 0 : index
    %c0_87 = arith.constant 0 : index
    %230 = vector.load %arg21[%c0_86, %c0_87] : memref<1x32xf32, #tpu.memory_space<vmem>>, vector<1x32xf32>
    %c0_88 = arith.constant 0 : index
    %c0_89 = arith.constant 0 : index
    %231 = vector.load %arg22[%c0_88, %c0_89] : memref<1x32xf32, #tpu.memory_space<vmem>>, vector<1x32xf32>
    %232 = arith.addf %223, %222 : vector<32x32xf32>
    %cst_90 = arith.constant dense<0.000000e+00> : vector<32xf32>
    %233 = vector.multi_reduction <add>, %232, %cst_90 [1] : vector<32x32xf32> to vector<32xf32>
    %234 = vector.shape_cast %233 : vector<32xf32> to vector<32x1xf32>
    %cst_91 = arith.constant 3.200000e+01 : f32
    %235 = vector.broadcast %cst_91 : f32 to vector<32x1xf32>
    %236 = arith.divf %234, %235 : vector<32x1xf32>
    %237 = vector.broadcast %236 : vector<32x1xf32> to vector<32x32xf32>
    %238 = arith.subf %232, %237 : vector<32x32xf32>
    %239 = arith.mulf %238, %238 : vector<32x32xf32>
    %cst_92 = arith.constant dense<0.000000e+00> : vector<32xf32>
    %240 = vector.multi_reduction <add>, %239, %cst_92 [1] : vector<32x32xf32> to vector<32xf32>
    %241 = vector.shape_cast %240 : vector<32xf32> to vector<32x1xf32>
    %cst_93 = arith.constant 3.200000e+01 : f32
    %242 = vector.broadcast %cst_93 : f32 to vector<32x1xf32>
    %243 = arith.divf %241, %242 : vector<32x1xf32>
    %cst_94 = arith.constant 9.99999974E-6 : f32
    %244 = vector.broadcast %cst_94 : f32 to vector<32x1xf32>
    %245 = arith.addf %243, %244 : vector<32x1xf32>
    %246 = math.rsqrt %245 : vector<32x1xf32>
    %247 = vector.broadcast %246 : vector<32x1xf32> to vector<32x32xf32>
    %248 = arith.mulf %238, %247 : vector<32x32xf32>
    %249 = vector.broadcast %224 : vector<1x32xf32> to vector<32x32xf32>
    %250 = arith.mulf %248, %249 : vector<32x32xf32>
    %251 = vector.broadcast %225 : vector<1x32xf32> to vector<32x32xf32>
    %252 = arith.addf %250, %251 : vector<32x32xf32>
    %253 = arith.truncf %252 : vector<32x32xf32> to vector<32x32xbf16>
    %cst_95 = arith.constant dense<0.000000e+00> : vector<32x128xf32>
    %254 = tpu.matmul %253, %226, %cst_95 {dimension_numbers = #tpu.dot_dimension_numbers<[1], [0], [0], [1], [0, 0, 1, 1], [], []>} : vector<32x32xbf16>, vector<32x128xbf16>, vector<32x128xf32> -> vector<32x128xf32>
    %255 = vector.broadcast %227 : vector<1x128xf32> to vector<32x128xf32>
    %256 = arith.addf %254, %255 : vector<32x128xf32>
    %cst_96 = arith.constant 5.000000e-01 : f32
    %257 = vector.broadcast %cst_96 : f32 to vector<32x128xf32>
    %258 = arith.mulf %257, %256 : vector<32x128xf32>
    %cst_97 = arith.constant 4.471500e-02 : f32
    %259 = vector.broadcast %cst_97 : f32 to vector<32x128xf32>
    %260 = arith.mulf %259, %256 : vector<32x128xf32>
    %261 = arith.mulf %260, %256 : vector<32x128xf32>
    %262 = arith.mulf %261, %256 : vector<32x128xf32>
    %263 = arith.addf %256, %262 : vector<32x128xf32>
    %cst_98 = arith.constant 0.797884583 : f32
    %264 = vector.broadcast %cst_98 : f32 to vector<32x128xf32>
    %265 = arith.mulf %264, %263 : vector<32x128xf32>
    %266 = math.tanh %265 : vector<32x128xf32>
    %cst_99 = arith.constant 1.000000e+00 : f32
    %267 = vector.broadcast %cst_99 : f32 to vector<32x128xf32>
    %268 = arith.addf %267, %266 : vector<32x128xf32>
    %269 = arith.mulf %258, %268 : vector<32x128xf32>
    %270 = arith.truncf %269 : vector<32x128xf32> to vector<32x128xbf16>
    %cst_100 = arith.constant dense<0.000000e+00> : vector<32x32xf32>
    %271 = tpu.matmul %270, %228, %cst_100 {dimension_numbers = #tpu.dot_dimension_numbers<[1], [0], [0], [1], [0, 0, 1, 1], [], []>} : vector<32x128xbf16>, vector<128x32xbf16>, vector<32x32xf32> -> vector<32x32xf32>
    %272 = vector.broadcast %229 : vector<1x32xf32> to vector<32x32xf32>
    %273 = arith.addf %271, %272 : vector<32x32xf32>
    %274 = arith.addf %252, %273 : vector<32x32xf32>
    %cst_101 = arith.constant dense<0.000000e+00> : vector<32xf32>
    %275 = vector.multi_reduction <add>, %274, %cst_101 [1] : vector<32x32xf32> to vector<32xf32>
    %276 = vector.shape_cast %275 : vector<32xf32> to vector<32x1xf32>
    %cst_102 = arith.constant 3.200000e+01 : f32
    %277 = vector.broadcast %cst_102 : f32 to vector<32x1xf32>
    %278 = arith.divf %276, %277 : vector<32x1xf32>
    %279 = vector.broadcast %278 : vector<32x1xf32> to vector<32x32xf32>
    %280 = arith.subf %274, %279 : vector<32x32xf32>
    %281 = arith.mulf %280, %280 : vector<32x32xf32>
    %cst_103 = arith.constant dense<0.000000e+00> : vector<32xf32>
    %282 = vector.multi_reduction <add>, %281, %cst_103 [1] : vector<32x32xf32> to vector<32xf32>
    %283 = vector.shape_cast %282 : vector<32xf32> to vector<32x1xf32>
    %cst_104 = arith.constant 3.200000e+01 : f32
    %284 = vector.broadcast %cst_104 : f32 to vector<32x1xf32>
    %285 = arith.divf %283, %284 : vector<32x1xf32>
    %cst_105 = arith.constant 9.99999974E-6 : f32
    %286 = vector.broadcast %cst_105 : f32 to vector<32x1xf32>
    %287 = arith.addf %285, %286 : vector<32x1xf32>
    %288 = math.rsqrt %287 : vector<32x1xf32>
    %289 = vector.broadcast %288 : vector<32x1xf32> to vector<32x32xf32>
    %290 = arith.mulf %280, %289 : vector<32x32xf32>
    %291 = vector.broadcast %230 : vector<1x32xf32> to vector<32x32xf32>
    %292 = arith.mulf %290, %291 : vector<32x32xf32>
    %293 = vector.broadcast %231 : vector<1x32xf32> to vector<32x32xf32>
    %294 = arith.addf %292, %293 : vector<32x32xf32>
    %295 = vector.shape_cast %294 : vector<32x32xf32> to vector<8x4x32xf32>
    %c0_106 = arith.constant 0 : index
    %c0_107 = arith.constant 0 : index
    %c0_108 = arith.constant 0 : index
    %296 = vector.load %arg23[%c0_106, %c0_107, %c0_108] : memref<8x4x32xf32, #tpu.memory_space<vmem>>, vector<8x4x32xf32>
    tpu.vector_store %arg23[%c0_106, %c0_107, %c0_108], %295 {strides = array<i32>} : memref<8x4x32xf32, #tpu.memory_space<vmem>>, vector<8x4x32xf32>,
    return
  }
  func.func @transform_0(%arg0: i32) -> (i32, i32, i32) {
    %c0_i32 = arith.constant 0 : i32
    %c0_i32_0 = arith.constant 0 : i32
    %c0_i32_1 = arith.constant 0 : i32
    return %arg0, %c0_i32, %c0_i32_0 : i32, i32, i32
  }
  func.func @transform_1(%arg0: i32) -> (i32, i32, i32) {
    %c0_i32 = arith.constant 0 : i32
    %c0_i32_0 = arith.constant 0 : i32
    %c0_i32_1 = arith.constant 0 : i32
    %c0_i32_2 = arith.constant 0 : i32
    return %c0_i32, %c0_i32_0, %c0_i32_1 : i32, i32, i32
  }
  func.func @transform_2(%arg0: i32) -> (i32, i32) {
    %c0_i32 = arith.constant 0 : i32
    %c0_i32_0 = arith.constant 0 : i32
    %c0_i32_1 = arith.constant 0 : i32
    return %c0_i32, %c0_i32_0 : i32, i32
  }
  func.func @transform_3(%arg0: i32) -> (i32, i32) {
    %c0_i32 = arith.constant 0 : i32
    %c0_i32_0 = arith.constant 0 : i32
    %c0_i32_1 = arith.constant 0 : i32
    return %c0_i32, %c0_i32_0 : i32, i32
  }
  func.func @transform_4(%arg0: i32) -> (i32, i32) {
    %c0_i32 = arith.constant 0 : i32
    %c0_i32_0 = arith.constant 0 : i32
    %c0_i32_1 = arith.constant 0 : i32
    return %c0_i32, %c0_i32_0 : i32, i32
  }
  func.func @transform_5(%arg0: i32) -> (i32, i32) {
    %c0_i32 = arith.constant 0 : i32
    %c0_i32_0 = arith.constant 0 : i32
    %c0_i32_1 = arith.constant 0 : i32
    return %c0_i32, %c0_i32_0 : i32, i32
  }
  func.func @transform_6(%arg0: i32) -> (i32, i32) {
    %c0_i32 = arith.constant 0 : i32
    %c0_i32_0 = arith.constant 0 : i32
    %c0_i32_1 = arith.constant 0 : i32
    return %c0_i32, %c0_i32_0 : i32, i32
  }
  func.func @transform_7(%arg0: i32) -> (i32, i32) {
    %c0_i32 = arith.constant 0 : i32
    %c0_i32_0 = arith.constant 0 : i32
    %c0_i32_1 = arith.constant 0 : i32
    return %c0_i32, %c0_i32_0 : i32, i32
  }
  func.func @transform_8(%arg0: i32) -> (i32, i32) {
    %c0_i32 = arith.constant 0 : i32
    %c0_i32_0 = arith.constant 0 : i32
    %c0_i32_1 = arith.constant 0 : i32
    return %c0_i32, %c0_i32_0 : i32, i32
  }
  func.func @transform_9(%arg0: i32) -> (i32, i32) {
    %c0_i32 = arith.constant 0 : i32
    %c0_i32_0 = arith.constant 0 : i32
    %c0_i32_1 = arith.constant 0 : i32
    return %c0_i32, %c0_i32_0 : i32, i32
  }
  func.func @transform_10(%arg0: i32) -> (i32, i32) {
    %c0_i32 = arith.constant 0 : i32
    %c0_i32_0 = arith.constant 0 : i32
    %c0_i32_1 = arith.constant 0 : i32
    return %c0_i32, %c0_i32_0 : i32, i32
  }
  func.func @transform_11(%arg0: i32) -> (i32, i32) {
    %c0_i32 = arith.constant 0 : i32
    %c0_i32_0 = arith.constant 0 : i32
    %c0_i32_1 = arith.constant 0 : i32
    return %c0_i32, %c0_i32_0 : i32, i32
  }
  func.func @transform_12(%arg0: i32) -> (i32, i32) {
    %c0_i32 = arith.constant 0 : i32
    %c0_i32_0 = arith.constant 0 : i32
    %c0_i32_1 = arith.constant 0 : i32
    return %c0_i32, %c0_i32_0 : i32, i32
  }
  func.func @transform_13(%arg0: i32) -> (i32, i32) {
    %c0_i32 = arith.constant 0 : i32
    %c0_i32_0 = arith.constant 0 : i32
    %c0_i32_1 = arith.constant 0 : i32
    return %c0_i32, %c0_i32_0 : i32, i32
  }
  func.func @transform_14(%arg0: i32) -> (i32, i32) {
    %c0_i32 = arith.constant 0 : i32
    %c0_i32_0 = arith.constant 0 : i32
    %c0_i32_1 = arith.constant 0 : i32
    return %c0_i32, %c0_i32_0 : i32, i32
  }
  func.func @transform_15(%arg0: i32) -> (i32, i32) {
    %c0_i32 = arith.constant 0 : i32
    %c0_i32_0 = arith.constant 0 : i32
    %c0_i32_1 = arith.constant 0 : i32
    return %c0_i32, %c0_i32_0 : i32, i32
  }
  func.func @transform_16(%arg0: i32) -> (i32, i32) {
    %c0_i32 = arith.constant 0 : i32
    %c0_i32_0 = arith.constant 0 : i32
    %c0_i32_1 = arith.constant 0 : i32
    return %c0_i32, %c0_i32_0 : i32, i32
  }
  func.func @transform_17(%arg0: i32) -> (i32, i32) {
    %c0_i32 = arith.constant 0 : i32
    %c0_i32_0 = arith.constant 0 : i32
    %c0_i32_1 = arith.constant 0 : i32
    return %c0_i32, %c0_i32_0 : i32, i32
  }
  func.func @transform_18(%arg0: i32) -> (i32, i32) {
    %c0_i32 = arith.constant 0 : i32
    %c0_i32_0 = arith.constant 0 : i32
    %c0_i32_1 = arith.constant 0 : i32
    return %c0_i32, %c0_i32_0 : i32, i32
  }
  func.func @transform_19(%arg0: i32) -> (i32, i32) {
    %c0_i32 = arith.constant 0 : i32
    %c0_i32_0 = arith.constant 0 : i32
    %c0_i32_1 = arith.constant 0 : i32
    return %c0_i32, %c0_i32_0 : i32, i32
  }
  func.func @transform_20(%arg0: i32) -> (i32, i32) {
    %c0_i32 = arith.constant 0 : i32
    %c0_i32_0 = arith.constant 0 : i32
    %c0_i32_1 = arith.constant 0 : i32
    return %c0_i32, %c0_i32_0 : i32, i32
  }
  func.func @transform_21(%arg0: i32) -> (i32, i32) {
    %c0_i32 = arith.constant 0 : i32
    %c0_i32_0 = arith.constant 0 : i32
    %c0_i32_1 = arith.constant 0 : i32
    return %c0_i32, %c0_i32_0 : i32, i32
  }
  func.func @transform_22(%arg0: i32) -> (i32, i32, i32) {
    %c0_i32 = arith.constant 0 : i32
    %c0_i32_0 = arith.constant 0 : i32
    %c0_i32_1 = arith.constant 0 : i32
    return %arg0, %c0_i32, %c0_i32_0 : i32, i32, i32
  }
}

</mosaic_0001>

<llo_original>
// kernel: two_stage_attention.2
$region0: #{two_stage_attention.2}
  #allocation0 [shape = 'u32[]', space=smem, size = 0x4, offset = 0x4, fixed_abs, tag = 'smem constant byte address 0x4 - core index']
  #allocation1 [shape = 'u32[72,128]{1,0:T(1,128)}', space=vmem, size = 0x9000, scoped, tag = 'internal scratch']
  %s0 = inlined_call_operand.vmem [shape: f32[8,8,32], index: 0, kind: input, shape index: {}]
  %s1 = inlined_call_operand.vmem [shape: bf16[32,96], index: 1, kind: input, shape index: {}]
  %s2 = inlined_call_operand.vmem [shape: f32[1,96], index: 2, kind: input, shape index: {}]
  %s3 = inlined_call_operand.vmem [shape: bf16[32,32], index: 3, kind: input, shape index: {}]
  %s4 = inlined_call_operand.vmem [shape: f32[1,32], index: 4, kind: input, shape index: {}]
  %s5 = inlined_call_operand.vmem [shape: f32[1,32], index: 5, kind: input, shape index: {}]
  %s6 = inlined_call_operand.vmem [shape: f32[1,32], index: 6, kind: input, shape index: {}]
  %s7 = inlined_call_operand.hbm [shape: bf16[32,128], index: 7, kind: input, shape index: {}]
  %s8 = inlined_call_operand.hbm [shape: f32[1,128], index: 8, kind: input, shape index: {}]
  %s9 = inlined_call_operand.vmem [shape: bf16[128,32], index: 9, kind: input, shape index: {}]
  %s10 = inlined_call_operand.hbm [shape: f32[1,32], index: 10, kind: input, shape index: {}]
  %s11 = inlined_call_operand.vmem [shape: f32[1,32], index: 11, kind: input, shape index: {}]
  %s12 = inlined_call_operand.vmem [shape: f32[1,32], index: 12, kind: input, shape index: {}]
  %s13 = inlined_call_operand.vmem [shape: f32[8,8,32], index: 13, kind: output, shape index: {}]
  %s14 = sld [smem:[#allocation0]]
  $region97: #{two_stage_attention.2} parent=0
    _
  %s16 = ssub.s32 1, %s14
  %s17 = scalar_select 0, %s16, %s14
  $region1: #{two_stage_attention.2} parent=0
    #allocation2 [shape = 'u8[8192]{0}', space=vmem, size = 0x2000, scoped, tag = 'input window, operand 7, single buffered']
    #allocation3 [shape = 's32[2]{0}', space=sflag, size = 0x8, scoped, tag = 'scoped memory for two_stage_attention.2']
    #allocation4 [shape = 'u8[512]{0}', space=vmem, size = 0x400, scoped, tag = 'input window, operand 8, single buffered']
    #allocation5 [shape = 's32[1]{0}', space=sflag, size = 0x4, scoped, tag = 'scoped memory for two_stage_attention.2']
    #allocation6 [shape = 'u8[512]{0}', space=vmem, size = 0x400, scoped, tag = 'input window, operand 10, single buffered']
    %18 = vsyncpa [#allocation3], 0
    %19 = vsyncpa [#allocation5], 0
    loop: start=0, step=1, limit=4
    $region2: #{two_stage_attention.2} parent=1 // loop_pre_header
      _
    $region3: #{two_stage_attention.2} parent=1 // loop_header
      %s21 = sphi 0, %s25
      %p22 = scmp.ge.s32.totalorder %s21, 4
      %s31 = sphi 0, %s33
      %s34 = sphi 0, %s31
      %s35 = sphi 0, %s34
      %s51 = sphi 0, %s35
      %s55 = sphi 0, %s55
      %s57 = sphi 0, %s55
      %s58 = sphi 0, %s57
      %s72 = sphi 0, %s58
      %s76 = sphi 0, %s76
      %s78 = sphi 0, %s76
      %s79 = sphi 0, %s78
      %s93 = sphi 0, %s79
      %s97 = sphi 0, %s97
      %s99 = sphi 0, %s97
      %s100 = sphi 0, %s99
      %s114 = sphi 0, %s100
      %s118 = sphi 0, %s118
      %s120 = sphi 0, %s118
      %s121 = sphi 0, %s120
      %s135 = sphi 0, %s121
      %s139 = sphi 0, %s139
      %s141 = sphi 0, %s139
      %s142 = sphi 0, %s141
      %s156 = sphi 0, %s142
      %s160 = sphi 0, %s160
      %s162 = sphi 0, %s160
      %s163 = sphi 0, %s162
      %s177 = sphi 0, %s163
      %s181 = sphi 0, %s181
      %s183 = sphi 0, %s181
      %s184 = sphi 0, %s183
      %s198 = sphi 0, %s184
      %s202 = sphi 0, %s202
      %s204 = sphi 0, %s202
      %s205 = sphi 0, %s204
      %s219 = sphi 0, %s205
      %s223 = sphi 0, %s223
      %s225 = sphi 0, %s223
      %s226 = sphi 0, %s225
      %s240 = sphi 0, %s226
      %s244 = sphi 0, %s244
      %s246 = sphi 0, %s244
      %s247 = sphi 0, %s246
      %s261 = sphi 0, %s247
      %s265 = sphi 0, %s265
      %s267 = sphi 0, %s265
      %s268 = sphi 0, %s267
      %s282 = sphi 0, %s268
      %s286 = sphi 0, %s286
      %s288 = sphi 0, %s286
      %s289 = sphi 0, %s288
      %s303 = sphi 0, %s289
      %s309 = sphi 0, %s311
      %s312 = sphi 0, %s309
      %s313 = sphi 0, %s312
      %s329 = sphi 0, %s313
    $region4: #{two_stage_attention.2} parent=1 // loop_header_branch
      %24 = sbr.rel (%p22) target = $region8
    $region5: #{two_stage_attention.2} parent=1 // loop_body
      %s26 = ssub.s32 %s21, 1
      %s27 = ssub.s32 %s21, 2
      %s28 = sadd.s32 %s21, 1
      %s29 = ssub.s32 %s21, %s28
      %p30 = scmp.eq.s32.totalorder %s29, 0
      %s32 = sadd.s32 %s31, 1
      %s33 = scalar_select %p30, %s31, %s32
      %p36 = pneg %p30
      %p37 = scmp.eq.s32.totalorder %s21, 1
      %p38 = por %p36, %p37
      %p39 = scmp.ne.s32.totalorder %s31, %s34
      %p40 = scmp.eq.s32.totalorder %s21, 0
      %p41 = por %p39, %p40
      %p42 = scmp.ne.s32.totalorder %s31, %s34
      %p43 = scmp.eq.s32.totalorder %s26, 1
      %p44 = por %p42, %p43
      %p45 = scmp.ne.s32.totalorder %s34, %s35
      %p46 = scmp.eq.s32.totalorder %s26, 0
      %p47 = por %p45, %p46
      %p48 = scmp.ne.s32.totalorder %s34, %s35
      %p49 = scmp.eq.s32.totalorder %s27, 1
      %p50 = por %p48, %p49
      %p52 = scmp.ne.s32.totalorder %s35, %s51
      %p53 = scmp.eq.s32.totalorder %s27, 0
      %p54 = por %p52, %p53
      %s56 = sadd.s32 %s55, 1
      %p59 = scmp.eq.s32.totalorder %s21, 1
      %p60 = scmp.ne.s32.totalorder %s55, %s57
      %p61 = scmp.eq.s32.totalorder %s21, 0
      %p62 = por %p60, %p61
      %p63 = scmp.ne.s32.totalorder %s55, %s57
      %p64 = scmp.eq.s32.totalorder %s26, 1
      %p65 = por %p63, %p64
      %p66 = scmp.ne.s32.totalorder %s57, %s58
      %p67 = scmp.eq.s32.totalorder %s26, 0
      %p68 = por %p66, %p67
      %p69 = scmp.ne.s32.totalorder %s57, %s58
      %p70 = scmp.eq.s32.totalorder %s27, 1
      %p71 = por %p69, %p70
      %p73 = scmp.ne.s32.totalorder %s58, %s72
      %p74 = scmp.eq.s32.totalorder %s27, 0
      %p75 = por %p73, %p74
      %s77 = sadd.s32 %s76, 1
      %p80 = scmp.eq.s32.totalorder %s21, 1
      %p81 = scmp.ne.s32.totalorder %s76, %s78
      %p82 = scmp.eq.s32.totalorder %s21, 0
      %p83 = por %p81, %p82
      %p84 = scmp.ne.s32.totalorder %s76, %s78
      %p85 = scmp.eq.s32.totalorder %s26, 1
      %p86 = por %p84, %p85
      %p87 = scmp.ne.s32.totalorder %s78, %s79
      %p88 = scmp.eq.s32.totalorder %s26, 0
      %p89 = por %p87, %p88
      %p90 = scmp.ne.s32.totalorder %s78, %s79
      %p91 = scmp.eq.s32.totalorder %s27, 1
      %p92 = por %p90, %p91
      %p94 = scmp.ne.s32.totalorder %s79, %s93
      %p95 = scmp.eq.s32.totalorder %s27, 0
      %p96 = por %p94, %p95
      %s98 = sadd.s32 %s97, 1
      %p101 = scmp.eq.s32.totalorder %s21, 1
      %p102 = scmp.ne.s32.totalorder %s97, %s99
      %p103 = scmp.eq.s32.totalorder %s21, 0
      %p104 = por %p102, %p103
      %p105 = scmp.ne.s32.totalorder %s97, %s99
      %p106 = scmp.eq.s32.totalorder %s26, 1
      %p107 = por %p105, %p106
      %p108 = scmp.ne.s32.totalorder %s99, %s100
      %p109 = scmp.eq.s32.totalorder %s26, 0
      %p110 = por %p108, %p109
      %p111 = scmp.ne.s32.totalorder %s99, %s100
      %p112 = scmp.eq.s32.totalorder %s27, 1
      %p113 = por %p111, %p112
      %p115 = scmp.ne.s32.totalorder %s100, %s114
      %p116 = scmp.eq.s32.totalorder %s27, 0
      %p117 = por %p115, %p116
      %s119 = sadd.s32 %s118, 1
      %p122 = scmp.eq.s32.totalorder %s21, 1
      %p123 = scmp.ne.s32.totalorder %s118, %s120
      %p124 = scmp.eq.s32.totalorder %s21, 0
      %p125 = por %p123, %p124
      %p126 = scmp.ne.s32.totalorder %s118, %s120
      %p127 = scmp.eq.s32.totalorder %s26, 1
      %p128 = por %p126, %p127
      %p129 = scmp.ne.s32.totalorder %s120, %s121
      %p130 = scmp.eq.s32.totalorder %s26, 0
      %p131 = por %p129, %p130
      %p132 = scmp.ne.s32.totalorder %s120, %s121
      %p133 = scmp.eq.s32.totalorder %s27, 1
      %p134 = por %p132, %p133
      %p136 = scmp.ne.s32.totalorder %s121, %s135
      %p137 = scmp.eq.s32.totalorder %s27, 0
      %p138 = por %p136, %p137
      %s140 = sadd.s32 %s139, 1
      %p143 = scmp.eq.s32.totalorder %s21, 1
      %p144 = scmp.ne.s32.totalorder %s139, %s141
      %p145 = scmp.eq.s32.totalorder %s21, 0
      %p146 = por %p144, %p145
      %p147 = scmp.ne.s32.totalorder %s139, %s141
      %p148 = scmp.eq.s32.totalorder %s26, 1
      %p149 = por %p147, %p148
      %p150 = scmp.ne.s32.totalorder %s141, %s142
      %p151 = scmp.eq.s32.totalorder %s26, 0
      %p152 = por %p150, %p151
      %p153 = scmp.ne.s32.totalorder %s141, %s142
      %p154 = scmp.eq.s32.totalorder %s27, 1
      %p155 = por %p153, %p154
      %p157 = scmp.ne.s32.totalorder %s142, %s156
      %p158 = scmp.eq.s32.totalorder %s27, 0
      %p159 = por %p157, %p158
      %s161 = sadd.s32 %s160, 1
      %p164 = scmp.eq.s32.totalorder %s21, 1
      %p165 = scmp.ne.s32.totalorder %s160, %s162
      %p166 = scmp.eq.s32.totalorder %s21, 0
      %p167 = por %p165, %p166
      %p168 = scmp.ne.s32.totalorder %s160, %s162
      %p169 = scmp.eq.s32.totalorder %s26, 1
      %p170 = por %p168, %p169
      %p171 = scmp.ne.s32.totalorder %s162, %s163
      %p172 = scmp.eq.s32.totalorder %s26, 0
      %p173 = por %p171, %p172
      %p174 = scmp.ne.s32.totalorder %s162, %s163
      %p175 = scmp.eq.s32.totalorder %s27, 1
      %p176 = por %p174, %p175
      %p178 = scmp.ne.s32.totalorder %s163, %s177
      %p179 = scmp.eq.s32.totalorder %s27, 0
      %p180 = por %p178, %p179
      %s182 = sadd.s32 %s181, 1
      %p185 = scmp.eq.s32.totalorder %s21, 1
      %p186 = scmp.ne.s32.totalorder %s181, %s183
      %p187 = scmp.eq.s32.totalorder %s21, 0
      %p188 = por %p186, %p187
      %p189 = scmp.ne.s32.totalorder %s181, %s183
      %p190 = scmp.eq.s32.totalorder %s26, 1
      %p191 = por %p189, %p190
      %p192 = scmp.ne.s32.totalorder %s183, %s184
      %p193 = scmp.eq.s32.totalorder %s26, 0
      %p194 = por %p192, %p193
      %p195 = scmp.ne.s32.totalorder %s183, %s184
      %p196 = scmp.eq.s32.totalorder %s27, 1
      %p197 = por %p195, %p196
      %p199 = scmp.ne.s32.totalorder %s184, %s198
      %p200 = scmp.eq.s32.totalorder %s27, 0
      %p201 = por %p199, %p200
      %s203 = sadd.s32 %s202, 1
      %p206 = scmp.eq.s32.totalorder %s21, 1
      %p207 = scmp.ne.s32.totalorder %s202, %s204
      %p208 = scmp.eq.s32.totalorder %s21, 0
      %p209 = por %p207, %p208
      %p210 = scmp.ne.s32.totalorder %s202, %s204
      %p211 = scmp.eq.s32.totalorder %s26, 1
      %p212 = por %p210, %p211
      %p213 = scmp.ne.s32.totalorder %s204, %s205
      %p214 = scmp.eq.s32.totalorder %s26, 0
      %p215 = por %p213, %p214
      %p216 = scmp.ne.s32.totalorder %s204, %s205
      %p217 = scmp.eq.s32.totalorder %s27, 1
      %p218 = por %p216, %p217
      %p220 = scmp.ne.s32.totalorder %s205, %s219
      %p221 = scmp.eq.s32.totalorder %s27, 0
      %p222 = por %p220, %p221
      %s224 = sadd.s32 %s223, 1
      %p227 = scmp.eq.s32.totalorder %s21, 1
      %p228 = scmp.ne.s32.totalorder %s223, %s225
      %p229 = scmp.eq.s32.totalorder %s21, 0
      %p230 = por %p228, %p229
      %p231 = scmp.ne.s32.totalorder %s223, %s225
      %p232 = scmp.eq.s32.totalorder %s26, 1
      %p233 = por %p231, %p232
      %p234 = scmp.ne.s32.totalorder %s225, %s226
      %p235 = scmp.eq.s32.totalorder %s26, 0
      %p236 = por %p234, %p235
      %p237 = scmp.ne.s32.totalorder %s225, %s226
      %p238 = scmp.eq.s32.totalorder %s27, 1
      %p239 = por %p237, %p238
      %p241 = scmp.ne.s32.totalorder %s226, %s240
      %p242 = scmp.eq.s32.totalorder %s27, 0
      %p243 = por %p241, %p242
      %s245 = sadd.s32 %s244, 1
      %p248 = scmp.eq.s32.totalorder %s21, 1
      %p249 = scmp.ne.s32.totalorder %s244, %s246
      %p250 = scmp.eq.s32.totalorder %s21, 0
      %p251 = por %p249, %p250
      %p252 = scmp.ne.s32.totalorder %s244, %s246
      %p253 = scmp.eq.s32.totalorder %s26, 1
      %p254 = por %p252, %p253
      %p255 = scmp.ne.s32.totalorder %s246, %s247
      %p256 = scmp.eq.s32.totalorder %s26, 0
      %p257 = por %p255, %p256
      %p258 = scmp.ne.s32.totalorder %s246, %s247
      %p259 = scmp.eq.s32.totalorder %s27, 1
      %p260 = por %p258, %p259
      %p262 = scmp.ne.s32.totalorder %s247, %s261
      %p263 = scmp.eq.s32.totalorder %s27, 0
      %p264 = por %p262, %p263
      %s266 = sadd.s32 %s265, 1
      %p269 = scmp.eq.s32.totalorder %s21, 1
      %p270 = scmp.ne.s32.totalorder %s265, %s267
      %p271 = scmp.eq.s32.totalorder %s21, 0
      %p272 = por %p270, %p271
      %p273 = scmp.ne.s32.totalorder %s265, %s267
      %p274 = scmp.eq.s32.totalorder %s26, 1
      %p275 = por %p273, %p274
      %p276 = scmp.ne.s32.totalorder %s267, %s268
      %p277 = scmp.eq.s32.totalorder %s26, 0
      %p278 = por %p276, %p277
      %p279 = scmp.ne.s32.totalorder %s267, %s268
      %p280 = scmp.eq.s32.totalorder %s27, 1
      %p281 = por %p279, %p280
      %p283 = scmp.ne.s32.totalorder %s268, %s282
      %p284 = scmp.eq.s32.totalorder %s27, 0
      %p285 = por %p283, %p284
      %s287 = sadd.s32 %s286, 1
      %p290 = scmp.eq.s32.totalorder %s21, 1
      %p291 = scmp.ne.s32.totalorder %s286, %s288
      %p292 = scmp.eq.s32.totalorder %s21, 0
      %p293 = por %p291, %p292
      %p294 = scmp.ne.s32.totalorder %s286, %s288
      %p295 = scmp.eq.s32.totalorder %s26, 1
      %p296 = por %p294, %p295
      %p297 = scmp.ne.s32.totalorder %s288, %s289
      %p298 = scmp.eq.s32.totalorder %s26, 0
      %p299 = por %p297, %p298
      %p300 = scmp.ne.s32.totalorder %s288, %s289
      %p301 = scmp.eq.s32.totalorder %s27, 1
      %p302 = por %p300, %p301
      %p304 = scmp.ne.s32.totalorder %s289, %s303
      %p305 = scmp.eq.s32.totalorder %s27, 0
      %p306 = por %p304, %p305
      %s307 = ssub.s32 %s21, %s28
      %p308 = scmp.eq.s32.totalorder %s307, 0
      %s310 = sadd.s32 %s309, 1
      %s311 = scalar_select %p308, %s309, %s310
      %p314 = pneg %p308
      %p315 = scmp.eq.s32.totalorder %s21, 1
      %p316 = por %p314, %p315
      %p317 = scmp.ne.s32.totalorder %s309, %s312
      %p318 = scmp.eq.s32.totalorder %s21, 0
      %p319 = por %p317, %p318
      %p320 = scmp.ne.s32.totalorder %s309, %s312
      %p321 = scmp.eq.s32.totalorder %s26, 1
      %p322 = por %p320, %p321
      %p323 = scmp.ne.s32.totalorder %s312, %s313
      %p324 = scmp.eq.s32.totalorder %s26, 0
      %p325 = por %p323, %p324
      %p326 = scmp.ne.s32.totalorder %s312, %s313
      %p327 = scmp.eq.s32.totalorder %s27, 1
      %p328 = por %p326, %p327
      %p330 = scmp.ne.s32.totalorder %s313, %s329
      %p331 = scmp.eq.s32.totalorder %s27, 0
      %p332 = por %p330, %p331
      %p333 = scmp.le.s32.totalorder 1, %s21
      %p334 = scmp.lt.s32.totalorder %s21, 3
      %p335 = pnand %p333, %p334
      %p336 = pneg %p335
      // Predicated region
      $region9: #{two_stage_attention.2} parent=5 // pred_check
        _
      $region10: #{two_stage_attention.2} parent=5 // pred_check_branch
        %338 = sbr.rel (%p335) target = $region12
      $region11: #{two_stage_attention.2} parent=5 // pred_region
        %s339 = ssub.s32 %s21, 1
        // Predicated region
        $region13: #{two_stage_attention.2} parent=11 // pred_check
          %p340 = pneg %p68
        $region14: #{two_stage_attention.2} parent=11 // pred_check_branch
          %342 = sbr.rel (%p340) target = $region16
        $region15: #{two_stage_attention.2} parent=11 // pred_region
          _
        $region16: #{two_stage_attention.2} parent=11 // pred_fallthru
          _
        // Predicated region
        $region17: #{two_stage_attention.2} parent=11 // pred_check
          %p343 = pneg %p89
        $region18: #{two_stage_attention.2} parent=11 // pred_check_branch
          %345 = sbr.rel (%p343) target = $region20
        $region19: #{two_stage_attention.2} parent=11 // pred_region
          _
        $region20: #{two_stage_attention.2} parent=11 // pred_fallthru
          _
        // Predicated region
        $region21: #{two_stage_attention.2} parent=11 // pred_check
          %p346 = pneg %p110
        $region22: #{two_stage_attention.2} parent=11 // pred_check_branch
          %348 = sbr.rel (%p346) target = $region24
        $region23: #{two_stage_attention.2} parent=11 // pred_region
          _
        $region24: #{two_stage_attention.2} parent=11 // pred_fallthru
          _
        // Predicated region
        $region25: #{two_stage_attention.2} parent=11 // pred_check
          %p349 = pneg %p131
        $region26: #{two_stage_attention.2} parent=11 // pred_check_branch
          %351 = sbr.rel (%p349) target = $region28
        $region27: #{two_stage_attention.2} parent=11 // pred_region
          _
        $region28: #{two_stage_attention.2} parent=11 // pred_fallthru
          _
        // Predicated region
        $region29: #{two_stage_attention.2} parent=11 // pred_check
          %p352 = pneg %p152
        $region30: #{two_stage_attention.2} parent=11 // pred_check_branch
          %354 = sbr.rel (%p352) target = $region32
        $region31: #{two_stage_attention.2} parent=11 // pred_region
          _
        $region32: #{two_stage_attention.2} parent=11 // pred_fallthru
          _
        // Predicated region
        $region33: #{two_stage_attention.2} parent=11 // pred_check
          %p355 = pneg %p173
        $region34: #{two_stage_attention.2} parent=11 // pred_check_branch
          %357 = sbr.rel (%p355) target = $region36
        $region35: #{two_stage_attention.2} parent=11 // pred_region
          _
        $region36: #{two_stage_attention.2} parent=11 // pred_fallthru
          _
        // Predicated region
        $region37: #{two_stage_attention.2} parent=11 // pred_check
          %p358 = pneg %p194
        $region38: #{two_stage_attention.2} parent=11 // pred_check_branch
          %360 = sbr.rel (%p358) target = $region40
        $region39: #{two_stage_attention.2} parent=11 // pred_region
          %362 = vsyncadd [#allocation3], 0
          %s363 = sshll.u32 %s7, 4
          %s364 = int_to_ptr.hbm [resolvable:$true] %s363
          %s365 = sshll.u32 [#allocation2], 4
          %s366 = int_to_ptr.vmem [resolvable:$true] %s365
          %371 = dma.hbm_to_vmem [thread:$0]  %s364, 256, %s366, [#allocation3], 64, 64, 4
        $region40: #{two_stage_attention.2} parent=11 // pred_fallthru
          _
        // Predicated region
        $region41: #{two_stage_attention.2} parent=11 // pred_check
          %p372 = pneg %p215
        $region42: #{two_stage_attention.2} parent=11 // pred_check_branch
          %374 = sbr.rel (%p372) target = $region44
        $region43: #{two_stage_attention.2} parent=11 // pred_region
          %376 = vsyncadd [#allocation5], 0
          %s378 = sshll.u32 %s8, 4
          %s379 = int_to_ptr.hbm [resolvable:$true] %s378
          %s380 = sshll.u32 [#allocation4], 4
          %s381 = int_to_ptr.vmem [resolvable:$true] %s380
          %383 = dma.hbm_to_vmem [thread:$0]  %s379, 16, %s381, [#allocation5]
        $region44: #{two_stage_attention.2} parent=11 // pred_fallthru
          _
        // Predicated region
        $region45: #{two_stage_attention.2} parent=11 // pred_check
          %p384 = pneg %p236
        $region46: #{two_stage_attention.2} parent=11 // pred_check_branch
          %386 = sbr.rel (%p384) target = $region48
        $region47: #{two_stage_attention.2} parent=11 // pred_region
          _
        $region48: #{two_stage_attention.2} parent=11 // pred_fallthru
          _
        // Predicated region
        $region49: #{two_stage_attention.2} parent=11 // pred_check
          %p387 = pneg %p257
        $region50: #{two_stage_attention.2} parent=11 // pred_check_branch
          %389 = sbr.rel (%p387) target = $region52
        $region51: #{two_stage_attention.2} parent=11 // pred_region
          %391 = vsyncadd [#allocation5], 0
          %s393 = sshll.u32 %s10, 4
          %s394 = int_to_ptr.hbm [resolvable:$true] %s393
          %s395 = sshll.u32 [#allocation6], 4
          %s396 = int_to_ptr.vmem [resolvable:$true] %s395
          %398 = dma.hbm_to_vmem [thread:$0]  %s394, 16, %s396, [#allocation5]
        $region52: #{two_stage_attention.2} parent=11 // pred_fallthru
          _
        // Predicated region
        $region53: #{two_stage_attention.2} parent=11 // pred_check
          %p399 = pneg %p278
        $region54: #{two_stage_attention.2} parent=11 // pred_check_branch
          %401 = sbr.rel (%p399) target = $region56
        $region55: #{two_stage_attention.2} parent=11 // pred_region
          _
        $region56: #{two_stage_attention.2} parent=11 // pred_fallthru
          _
        // Predicated region
        $region57: #{two_stage_attention.2} parent=11 // pred_check
          %p402 = pneg %p299
        $region58: #{two_stage_attention.2} parent=11 // pred_check_branch
          %404 = sbr.rel (%p402) target = $region60
        $region59: #{two_stage_attention.2} parent=11 // pred_region
          _
        $region60: #{two_stage_attention.2} parent=11 // pred_fallthru
          _
      $region12: #{two_stage_attention.2} parent=5 // pred_fallthru
        _
      %p405 = scmp.lt.s32.totalorder %s21, 2
      // Predicated region
      $region61: #{two_stage_attention.2} parent=5 // pred_check
        %p406 = pneg %p405
      $region62: #{two_stage_attention.2} parent=5 // pred_check_branch
        %408 = sbr.rel (%p406) target = $region64
      $region63: #{two_stage_attention.2} parent=5 // pred_region
        // Predicated region
        $region65: #{two_stage_attention.2} parent=63 // pred_check
          %p409 = pneg %p41
        $region66: #{two_stage_attention.2} parent=63 // pred_check_branch
          %411 = sbr.rel (%p409) target = $region68
        $region67: #{two_stage_attention.2} parent=63 // pred_region
          %s412 = smul.u32 4, %s21
          %p413 = scmp.lt.s32.totalorder %s412, 7
          %s414 = scalar_select %p413, %s412, 7
          %s415 = smul.addr %s414, 8
          %s416 = scalar_lea.vmem %s0, %s415
          %s417 = smul.u32 4, %s21
        $region68: #{two_stage_attention.2} parent=63 // pred_fallthru
          _
      $region64: #{two_stage_attention.2} parent=5 // pred_fallthru
        _
      %p418 = scmp.le.s32.totalorder 1, %s21
      %p419 = scmp.lt.s32.totalorder %s21, 3
      %p420 = pnand %p418, %p419
      %p421 = pneg %p420
      // Predicated region
      $region69: #{two_stage_attention.2} parent=5 // pred_check
        _
      $region70: #{two_stage_attention.2} parent=5 // pred_check_branch
        %423 = sbr.rel (%p420) target = $region72
      $region71: #{two_stage_attention.2} parent=5 // pred_region
        %s424 = ssub.s32 %s21, 1
        // Predicated region
        $region73: #{two_stage_attention.2} parent=71 // pred_check
          %p425 = pneg %p194
        $region74: #{two_stage_attention.2} parent=71 // pred_check_branch
          %427 = sbr.rel (%p425) target = $region76
        $region75: #{two_stage_attention.2} parent=71 // pred_region
          %429 = dma.done [#allocation3], 256
        $region76: #{two_stage_attention.2} parent=71 // pred_fallthru
          _
        // Predicated region
        $region77: #{two_stage_attention.2} parent=71 // pred_check
          %p430 = pneg %p215
        $region78: #{two_stage_attention.2} parent=71 // pred_check_branch
          %432 = sbr.rel (%p430) target = $region80
        $region79: #{two_stage_attention.2} parent=71 // pred_region
          %434 = dma.done [#allocation5], 16
        $region80: #{two_stage_attention.2} parent=71 // pred_fallthru
          _
        // Predicated region
        $region81: #{two_stage_attention.2} parent=71 // pred_check
          %p435 = pneg %p257
        $region82: #{two_stage_attention.2} parent=71 // pred_check_branch
          %437 = sbr.rel (%p435) target = $region84
        $region83: #{two_stage_attention.2} parent=71 // pred_region
          %439 = dma.done [#allocation5], 16
        $region84: #{two_stage_attention.2} parent=71 // pred_fallthru
          _
        %s440 = smul.u32 4, %s26
        %p441 = scmp.lt.s32.totalorder %s440, 7
        %s442 = scalar_select %p441, %s440, 7
        %s443 = smul.addr %s442, 8
        %s444 = scalar_lea.vmem %s0, %s443
        %p445 = pneg %p47
        %p446 = pneg %p44
        %p447 = pneg %p68
        %p448 = pneg %p65
        %p449 = pneg %p89
        %p450 = pneg %p86
        %p451 = pneg %p110
        %p452 = pneg %p107
        %p453 = pneg %p131
        %p454 = pneg %p128
        %p455 = pneg %p152
        %p456 = pneg %p149
        %p457 = pneg %p173
        %p458 = pneg %p170
        %p459 = pneg %p194
        %p460 = pneg %p191
        %p461 = pneg %p215
        %p462 = pneg %p212
        %p463 = pneg %p236
        %p464 = pneg %p233
        %p465 = pneg %p257
        %p466 = pneg %p254
        %p467 = pneg %p278
        %p468 = pneg %p275
        %p469 = pneg %p299
        %p470 = pneg %p296
        %p471 = pneg %p325
        %p472 = pneg %p322
        %s473 = smul.u32 4, %s26
        %p474 = scmp.lt.s32.totalorder %s473, 7
        %s475 = scalar_select %p474, %s473, 7
        %s476 = smul.addr %s475, 8
        %s477 = scalar_lea.vmem %s13, %s476
        %s478 = smul.u32 4, %s26
        %p479 = scmp.lt.s32.totalorder %s478, 7
        %s480 = scalar_select %p479, %s478, 7
        %s481 = smul.addr %s480, 8
        %s482 = scalar_lea.vmem %s0, %s481
        %s483 = smul.u32 4, %s26
        %s484 = smul.u32 4, %s26
        %p485 = scmp.lt.s32.totalorder %s484, 7
        %s486 = scalar_select %p485, %s484, 7
        %s487 = smul.addr %s486, 8
        %s488 = scalar_lea.vmem %s13, %s487
        %s489 = smul.u32 4, %s26
        %v491 = vld [vmem:[%s482] sm:$0xff]
        %v492 = vld [vmem:[%s482 + $0x8] sm:$0xff]
        %v493 = vld [vmem:[%s482 + $0x10] sm:$0xff]
        %v494 = vld [vmem:[%s482 + $0x18] sm:$0xff]
        %v495 = vpack.c.bf16 %v492, %v491
        %v496 = vpack.c.bf16 %v494, %v493
        %v497 = vld [vmem:[%s1] sm:$0xf]
        %v498 = vld [vmem:[%s1 + $0x4] sm:$0xf]
        %v499 = vld [vmem:[%s1 + $0x8] sm:$0xf]
        %v500 = vld [vmem:[%s1 + $0xc] sm:$0xf]
        %v501 = vld [vmem:[%s2] sm:$0x1]
        %v503 = vperm.slane %v501, 0
        %v509 = vunpack.c.l.b16 %v497
        %v510 = vunpack.c.l.b16 %v498
        %v511 = vunpack.c.l.b16 %v499
        %v512 = vunpack.c.l.b16 %v500
        %v513 = vpack.c.b16 %v510, %v509
        %v514 = vpack.c.b16 %v512, %v511
        %vm517 = vcmask 261120
        %v519 = vsel %vm517, %v495, 0
        %v522 = vsel %vm517, %v496, 0
        %524 = vmatpush.bf16.msra.mxu0 0
        %525 = vmatpush.bf16.msra.mxu0 0
        %526 = vmatpush.bf16.msra.mxu0 0
        %527 = vmatpush.bf16.msra.mxu0 0
        %528 = vmatpush.bf16.msra.mxu0 0
        %529 = vmatpush.bf16.msra.mxu0 0
        %530 = vmatpush.bf16.msra.mxu0 %v514
        %531 = vmatpush.bf16.msra.mxu0 %v513
        %532 = vmatmul.bf16.gmra.mxu0 %v519
        %v533 = vpop.f32.mrf.mxu0
        %v534 = vadd.f32 %v503, %v533
        %v535 = vpop.f32.mrf.mxu0
        %v536 = vadd.f32 %v503, %v535
        %537 = vmatmul.bf16.gmra.mxu0 %v522
        %v538 = vpop.f32.mrf.mxu0
        %v539 = vadd.f32 %v503, %v538
        %v540 = vpop.f32.mrf.mxu0
        %v541 = vadd.f32 %v503, %v540
        %542 = vdwg.mxu0
        %v543 = vld [vmem:[%s3] sm:$0xf]
        %v544 = vld [vmem:[%s3 + $0x4] sm:$0xf]
        %v545 = vld [vmem:[%s3 + $0x8] sm:$0xf]
        %v546 = vld [vmem:[%s3 + $0xc] sm:$0xf]
        %v547 = vld [vmem:[%s4] sm:$0x1]
        %v548 = vpack.c.bf16 %v534, %v534
        %v549 = vpack.c.bf16 %v536, %v536
        %v550 = vpack.c.bf16 %v539, %v539
        %v551 = vpack.c.bf16 %v541, %v541
        %v553 = vunpack.c.l.b16 %v548
        %v554 = vpack.c.b16 %v553, %v553
        %555 = vrot.lane.b32.xlu0 %v554, 96
        %v556 = vpop.permute.xlu0 %555
        %vm557 = vcmask 64512
        %v559 = vsel %vm557, %v548, 0
        %v562 = vsel %vm557, %v556, 0
        %564 = vmatpush.bf16.xpose.msra.mxu0 0
        %565 = vmatpush.bf16.xpose.msra.mxu0 0
        %566 = vmatpush.bf16.xpose.msra.mxu0 0
        %567 = vmatpush.bf16.xpose.msra.mxu0 0
        %568 = vmatpush.bf16.xpose.msra.mxu0 0
        %569 = vmatpush.bf16.xpose.msra.mxu0 0
        %570 = vmatpush.bf16.xpose.msra.mxu0 0
        %571 = vmatpush.bf16.xpose.msra.mxu0 %v562
        %572 = vmatmul.bf16.gmra.mxu0 %v559
        %v573 = vpop.f32.mrf.mxu0
        %v574 = vadd.f32 0.0, %v573
        %v575 = vpop.f32.mrf.mxu0
        %576 = vdwg.mxu0
        %v578 = vunpack.c.l.b16 %v549
        %v579 = vpack.c.b16 %v578, %v578
        %580 = vrot.lane.b32.xlu0 %v579, 96
        %v581 = vpop.permute.xlu0 %580
        %v583 = vsel %vm557, %v549, 0
        %v586 = vsel %vm557, %v581, 0
        %588 = vmatpush.bf16.xpose.msra.mxu0 0
        %589 = vmatpush.bf16.xpose.msra.mxu0 0
        %590 = vmatpush.bf16.xpose.msra.mxu0 0
        %591 = vmatpush.bf16.xpose.msra.mxu0 0
        %592 = vmatpush.bf16.xpose.msra.mxu0 0
        %593 = vmatpush.bf16.xpose.msra.mxu0 0
        %594 = vmatpush.bf16.xpose.msra.mxu0 0
        %595 = vmatpush.bf16.xpose.msra.mxu0 %v586
        %596 = vmatmul.bf16.gmra.mxu0 %v583
        %v597 = vpop.f32.mrf.mxu0
        %v598 = vadd.f32 0.0, %v597
        %v599 = vpop.f32.mrf.mxu0
        %600 = vdwg.mxu0
        %v602 = vunpack.c.l.b16 %v550
        %v603 = vpack.c.b16 %v602, %v602
        %604 = vrot.lane.b32.xlu0 %v603, 96
        %v605 = vpop.permute.xlu0 %604
        %v607 = vsel %vm557, %v550, 0
        %v610 = vsel %vm557, %v605, 0
        %612 = vmatpush.bf16.xpose.msra.mxu0 0
        %613 = vmatpush.bf16.xpose.msra.mxu0 0
        %614 = vmatpush.bf16.xpose.msra.mxu0 0
        %615 = vmatpush.bf16.xpose.msra.mxu0 0
        %616 = vmatpush.bf16.xpose.msra.mxu0 0
        %617 = vmatpush.bf16.xpose.msra.mxu0 0
        %618 = vmatpush.bf16.xpose.msra.mxu0 0
        %619 = vmatpush.bf16.xpose.msra.mxu0 %v610
        %620 = vmatmul.bf16.gmra.mxu0 %v607
        %v621 = vpop.f32.mrf.mxu0
        %v622 = vadd.f32 0.0, %v621
        %v623 = vpop.f32.mrf.mxu0
        %624 = vdwg.mxu0
        %v626 = vunpack.c.l.b16 %v551
        %v627 = vpack.c.b16 %v626, %v626
        %628 = vrot.lane.b32.xlu0 %v627, 96
        %v629 = vpop.permute.xlu0 %628
        %v631 = vsel %vm557, %v551, 0
        %v634 = vsel %vm557, %v629, 0
        %636 = vmatpush.bf16.xpose.msra.mxu0 0
        %637 = vmatpush.bf16.xpose.msra.mxu0 0
        %638 = vmatpush.bf16.xpose.msra.mxu0 0
        %639 = vmatpush.bf16.xpose.msra.mxu0 0
        %640 = vmatpush.bf16.xpose.msra.mxu0 0
        %641 = vmatpush.bf16.xpose.msra.mxu0 0
        %642 = vmatpush.bf16.xpose.msra.mxu0 0
        %643 = vmatpush.bf16.xpose.msra.mxu0 %v634
        %644 = vmatmul.bf16.gmra.mxu0 %v631
        %v645 = vpop.f32.mrf.mxu0
        %v646 = vadd.f32 0.0, %v645
        %v647 = vpop.f32.mrf.mxu0
        %648 = vdwg.mxu0
        %v649 = vmul.f32 %v574, 0.35355338
        %v650 = vmul.f32 %v598, 0.35355338
        %v651 = vmul.f32 %v622, 0.35355338
        %v652 = vmul.f32 %v646, 0.35355338
        %v653 = vsel %vm557, %v649, -inf
        %654 = vmax.xlane.f32.xlu0 %v653
        %v655 = vpop.xlane.xlu0 %654
        %v656 = vsel %vm557, %v650, -inf
        %657 = vmax.xlane.f32.xlu0 %v656
        %v658 = vpop.xlane.xlu0 %657
        %v659 = vsel %vm557, %v651, -inf
        %660 = vmax.xlane.f32.xlu0 %v659
        %v661 = vpop.xlane.xlu0 %660
        %v662 = vsel %vm557, %v652, -inf
        %663 = vmax.xlane.f32.xlu0 %v662
        %v664 = vpop.xlane.xlu0 %663
        %v665 = vsub.f32 %v649, %v655
        %v666 = vsub.f32 %v650, %v658
        %v667 = vsub.f32 %v651, %v661
        %v668 = vsub.f32 %v652, %v664
        %v669 = vmul.f32 %v665, 1.442695
        %v670 = vpow.pop %v669
        %v671 = vmul.f32 %v666, 1.442695
        %v672 = vpow.pop %v671
        %v673 = vmul.f32 %v667, 1.442695
        %v674 = vpow.pop %v673
        %v675 = vmul.f32 %v668, 1.442695
        %v676 = vpow.pop %v675
        %v677 = vsel %vm557, %v670, 0.0
        %678 = vadd.xlane.f32.xlu0 %v677
        %v679 = vpop.xlane.xlu0 %678
        %v680 = vsel %vm557, %v672, 0.0
        %681 = vadd.xlane.f32.xlu0 %v680
        %v682 = vpop.xlane.xlu0 %681
        %v683 = vsel %vm557, %v674, 0.0
        %684 = vadd.xlane.f32.xlu0 %v683
        %v685 = vpop.xlane.xlu0 %684
        %v686 = vsel %vm557, %v676, 0.0
        %687 = vadd.xlane.f32.xlu0 %v686
        %v688 = vpop.xlane.xlu0 %687
        %v689 = vrcp.pop %v679
        %v690 = vrcp.pop %v682
        %v691 = vrcp.pop %v685
        %v692 = vrcp.pop %v688
        %v693 = vmul.f32 %v670, %v689
        %v694 = vmul.f32 %v672, %v690
        %v695 = vmul.f32 %v674, %v691
        %v696 = vmul.f32 %v676, %v692
        %v697 = vpack.c.bf16 %v693, %v693
        %v698 = vpack.c.bf16 %v694, %v694
        %v699 = vpack.c.bf16 %v695, %v695
        %v700 = vpack.c.bf16 %v696, %v696
        %701 = vrot.lane.b32.xlu0 %v554, 64
        %v702 = vpop.permute.xlu0 %701
        %v704 = vsel %vm557, %v697, 0
        %vm706 = vcmask 1043456
        %v708 = vsel %vm706, %v702, 0
        %710 = vmatpush.bf16.msra.mxu0 0
        %711 = vmatpush.bf16.msra.mxu0 0
        %712 = vmatpush.bf16.msra.mxu0 0
        %713 = vmatpush.bf16.msra.mxu0 0
        %714 = vmatpush.bf16.msra.mxu0 0
        %715 = vmatpush.bf16.msra.mxu0 0
        %716 = vmatpush.bf16.msra.mxu0 0
        %717 = vmatpush.bf16.msra.mxu0 %v708
        %718 = vmatmul.bf16.gmra.mxu0 %v704
        %v719 = vpop.f32.mrf.mxu0
        %v720 = vadd.f32 0.0, %v719
        %v721 = vpop.f32.mrf.mxu0
        %722 = vdwg.mxu0
        %723 = vrot.lane.b32.xlu0 %v579, 64
        %v724 = vpop.permute.xlu0 %723
        %v726 = vsel %vm557, %v698, 0
        %v729 = vsel %vm706, %v724, 0
        %731 = vmatpush.bf16.msra.mxu0 0
        %732 = vmatpush.bf16.msra.mxu0 0
        %733 = vmatpush.bf16.msra.mxu0 0
        %734 = vmatpush.bf16.msra.mxu0 0
        %735 = vmatpush.bf16.msra.mxu0 0
        %736 = vmatpush.bf16.msra.mxu0 0
        %737 = vmatpush.bf16.msra.mxu0 0
        %738 = vmatpush.bf16.msra.mxu0 %v729
        %739 = vmatmul.bf16.gmra.mxu0 %v726
        %v740 = vpop.f32.mrf.mxu0
        %v741 = vadd.f32 0.0, %v740
        %v742 = vpop.f32.mrf.mxu0
        %743 = vdwg.mxu0
        %744 = vrot.lane.b32.xlu0 %v603, 64
        %v745 = vpop.permute.xlu0 %744
        %v747 = vsel %vm557, %v699, 0
        %v750 = vsel %vm706, %v745, 0
        %752 = vmatpush.bf16.msra.mxu0 0
        %753 = vmatpush.bf16.msra.mxu0 0
        %754 = vmatpush.bf16.msra.mxu0 0
        %755 = vmatpush.bf16.msra.mxu0 0
        %756 = vmatpush.bf16.msra.mxu0 0
        %757 = vmatpush.bf16.msra.mxu0 0
        %758 = vmatpush.bf16.msra.mxu0 0
        %759 = vmatpush.bf16.msra.mxu0 %v750
        %760 = vmatmul.bf16.gmra.mxu0 %v747
        %v761 = vpop.f32.mrf.mxu0
        %v762 = vadd.f32 0.0, %v761
        %v763 = vpop.f32.mrf.mxu0
        %764 = vdwg.mxu0
        %765 = vrot.lane.b32.xlu0 %v627, 64
        %v766 = vpop.permute.xlu0 %765
        %v768 = vsel %vm557, %v700, 0
        %v771 = vsel %vm706, %v766, 0
        %773 = vmatpush.bf16.msra.mxu0 0
        %774 = vmatpush.bf16.msra.mxu0 0
        %775 = vmatpush.bf16.msra.mxu0 0
        %776 = vmatpush.bf16.msra.mxu0 0
        %777 = vmatpush.bf16.msra.mxu0 0
        %778 = vmatpush.bf16.msra.mxu0 0
        %779 = vmatpush.bf16.msra.mxu0 0
        %780 = vmatpush.bf16.msra.mxu0 %v771
        %781 = vmatmul.bf16.gmra.mxu0 %v768
        %v782 = vpop.f32.mrf.mxu0
        %v783 = vadd.f32 0.0, %v782
        %v784 = vpop.f32.mrf.mxu0
        %785 = vdwg.mxu0
        %786 = vrot.lane.b32.xlu0 %v554, 120
        %v787 = vpop.permute.xlu0 %786
        %788 = vrot.lane.b32.xlu0 %v554, 88
        %v789 = vpop.permute.xlu0 %788
        %v791 = vsel %vm557, %v787, 0
        %v794 = vsel %vm557, %v789, 0
        %796 = vmatpush.bf16.xpose.msra.mxu0 0
        %797 = vmatpush.bf16.xpose.msra.mxu0 0
        %798 = vmatpush.bf16.xpose.msra.mxu0 0
        %799 = vmatpush.bf16.xpose.msra.mxu0 0
        %800 = vmatpush.bf16.xpose.msra.mxu0 0
        %801 = vmatpush.bf16.xpose.msra.mxu0 0
        %802 = vmatpush.bf16.xpose.msra.mxu0 0
        %803 = vmatpush.bf16.xpose.msra.mxu0 %v794
        %804 = vmatmul.bf16.gmra.mxu0 %v791
        %v805 = vpop.f32.mrf.mxu0
        %v806 = vadd.f32 0.0, %v805
        %v807 = vpop.f32.mrf.mxu0
        %808 = vdwg.mxu0
        %809 = vrot.lane.b32.xlu0 %v579, 120
        %v810 = vpop.permute.xlu0 %809
        %811 = vrot.lane.b32.xlu0 %v579, 88
        %v812 = vpop.permute.xlu0 %811
        %v814 = vsel %vm557, %v810, 0
        %v817 = vsel %vm557, %v812, 0
        %819 = vmatpush.bf16.xpose.msra.mxu0 0
        %820 = vmatpush.bf16.xpose.msra.mxu0 0
        %821 = vmatpush.bf16.xpose.msra.mxu0 0
        %822 = vmatpush.bf16.xpose.msra.mxu0 0
        %823 = vmatpush.bf16.xpose.msra.mxu0 0
        %824 = vmatpush.bf16.xpose.msra.mxu0 0
        %825 = vmatpush.bf16.xpose.msra.mxu0 0
        %826 = vmatpush.bf16.xpose.msra.mxu0 %v817
        %827 = vmatmul.bf16.gmra.mxu0 %v814
        %v828 = vpop.f32.mrf.mxu0
        %v829 = vadd.f32 0.0, %v828
        %v830 = vpop.f32.mrf.mxu0
        %831 = vdwg.mxu0
        %832 = vrot.lane.b32.xlu0 %v603, 120
        %v833 = vpop.permute.xlu0 %832
        %834 = vrot.lane.b32.xlu0 %v603, 88
        %v835 = vpop.permute.xlu0 %834
        %v837 = vsel %vm557, %v833, 0
        %v840 = vsel %vm557, %v835, 0
        %842 = vmatpush.bf16.xpose.msra.mxu0 0
        %843 = vmatpush.bf16.xpose.msra.mxu0 0
        %844 = vmatpush.bf16.xpose.msra.mxu0 0
        %845 = vmatpush.bf16.xpose.msra.mxu0 0
        %846 = vmatpush.bf16.xpose.msra.mxu0 0
        %847 = vmatpush.bf16.xpose.msra.mxu0 0
        %848 = vmatpush.bf16.xpose.msra.mxu0 0
        %849 = vmatpush.bf16.xpose.msra.mxu0 %v840
        %850 = vmatmul.bf16.gmra.mxu0 %v837
        %v851 = vpop.f32.mrf.mxu0
        %v852 = vadd.f32 0.0, %v851
        %v853 = vpop.f32.mrf.mxu0
        %854 = vdwg.mxu0
        %855 = vrot.lane.b32.xlu0 %v627, 120
        %v856 = vpop.permute.xlu0 %855
        %857 = vrot.lane.b32.xlu0 %v627, 88
        %v858 = vpop.permute.xlu0 %857
        %v860 = vsel %vm557, %v856, 0
        %v863 = vsel %vm557, %v858, 0
        %865 = vmatpush.bf16.xpose.msra.mxu0 0
        %866 = vmatpush.bf16.xpose.msra.mxu0 0
        %867 = vmatpush.bf16.xpose.msra.mxu0 0
        %868 = vmatpush.bf16.xpose.msra.mxu0 0
        %869 = vmatpush.bf16.xpose.msra.mxu0 0
        %870 = vmatpush.bf16.xpose.msra.mxu0 0
        %871 = vmatpush.bf16.xpose.msra.mxu0 0
        %872 = vmatpush.bf16.xpose.msra.mxu0 %v863
        %873 = vmatmul.bf16.gmra.mxu0 %v860
        %v874 = vpop.f32.mrf.mxu0
        %v875 = vadd.f32 0.0, %v874
        %v876 = vpop.f32.mrf.mxu0
        %877 = vdwg.mxu0
        %v878 = vmul.f32 %v806, 0.35355338
        %v879 = vmul.f32 %v829, 0.35355338
        %v880 = vmul.f32 %v852, 0.35355338
        %v881 = vmul.f32 %v875, 0.35355338
        %v882 = vsel %vm557, %v878, -inf
        %883 = vmax.xlane.f32.xlu0 %v882
        %v884 = vpop.xlane.xlu0 %883
        %v885 = vsel %vm557, %v879, -inf
        %886 = vmax.xlane.f32.xlu0 %v885
        %v887 = vpop.xlane.xlu0 %886
        %v888 = vsel %vm557, %v880, -inf
        %889 = vmax.xlane.f32.xlu0 %v888
        %v890 = vpop.xlane.xlu0 %889
        %v891 = vsel %vm557, %v881, -inf
        %892 = vmax.xlane.f32.xlu0 %v891
        %v893 = vpop.xlane.xlu0 %892
        %v894 = vsub.f32 %v878, %v884
        %v895 = vsub.f32 %v879, %v887
        %v896 = vsub.f32 %v880, %v890
        %v897 = vsub.f32 %v881, %v893
        %v898 = vmul.f32 %v894, 1.442695
        %v899 = vpow.pop %v898
        %v900 = vmul.f32 %v895, 1.442695
        %v901 = vpow.pop %v900
        %v902 = vmul.f32 %v896, 1.442695
        %v903 = vpow.pop %v902
        %v904 = vmul.f32 %v897, 1.442695
        %v905 = vpow.pop %v904
        %v906 = vsel %vm557, %v899, 0.0
        %907 = vadd.xlane.f32.xlu0 %v906
        %v908 = vpop.xlane.xlu0 %907
        %v909 = vsel %vm557, %v901, 0.0
        %910 = vadd.xlane.f32.xlu0 %v909
        %v911 = vpop.xlane.xlu0 %910
        %v912 = vsel %vm557, %v903, 0.0
        %913 = vadd.xlane.f32.xlu0 %v912
        %v914 = vpop.xlane.xlu0 %913
        %v915 = vsel %vm557, %v905, 0.0
        %916 = vadd.xlane.f32.xlu0 %v915
        %v917 = vpop.xlane.xlu0 %916
        %v918 = vrcp.pop %v908
        %v919 = vrcp.pop %v911
        %v920 = vrcp.pop %v914
        %v921 = vrcp.pop %v917
        %v922 = vmul.f32 %v899, %v918
        %v923 = vmul.f32 %v901, %v919
        %v924 = vmul.f32 %v903, %v920
        %v925 = vmul.f32 %v905, %v921
        %v926 = vpack.c.bf16 %v922, %v922
        %v927 = vpack.c.bf16 %v923, %v923
        %v928 = vpack.c.bf16 %v924, %v924
        %v929 = vpack.c.bf16 %v925, %v925
        %930 = vrot.lane.b32.xlu0 %v554, 56
        %v931 = vpop.permute.xlu0 %930
        %v933 = vsel %vm557, %v926, 0
        %v936 = vsel %vm706, %v931, 0
        %938 = vmatpush.bf16.msra.mxu0 0
        %939 = vmatpush.bf16.msra.mxu0 0
        %940 = vmatpush.bf16.msra.mxu0 0
        %941 = vmatpush.bf16.msra.mxu0 0
        %942 = vmatpush.bf16.msra.mxu0 0
        %943 = vmatpush.bf16.msra.mxu0 0
        %944 = vmatpush.bf16.msra.mxu0 0
        %945 = vmatpush.bf16.msra.mxu0 %v936
        %946 = vmatmul.bf16.gmra.mxu0 %v933
        %v947 = vpop.f32.mrf.mxu0
        %v948 = vadd.f32 0.0, %v947
        %v949 = vpop.f32.mrf.mxu0
        %950 = vdwg.mxu0
        %951 = vrot.lane.b32.xlu0 %v579, 56
        %v952 = vpop.permute.xlu0 %951
        %v954 = vsel %vm557, %v927, 0
        %v957 = vsel %vm706, %v952, 0
        %959 = vmatpush.bf16.msra.mxu0 0
        %960 = vmatpush.bf16.msra.mxu0 0
        %961 = vmatpush.bf16.msra.mxu0 0
        %962 = vmatpush.bf16.msra.mxu0 0
        %963 = vmatpush.bf16.msra.mxu0 0
        %964 = vmatpush.bf16.msra.mxu0 0
        %965 = vmatpush.bf16.msra.mxu0 0
        %966 = vmatpush.bf16.msra.mxu0 %v957
        %967 = vmatmul.bf16.gmra.mxu0 %v954
        %v968 = vpop.f32.mrf.mxu0
        %v969 = vadd.f32 0.0, %v968
        %v970 = vpop.f32.mrf.mxu0
        %971 = vdwg.mxu0
        %972 = vrot.lane.b32.xlu0 %v603, 56
        %v973 = vpop.permute.xlu0 %972
        %v975 = vsel %vm557, %v928, 0
        %v978 = vsel %vm706, %v973, 0
        %980 = vmatpush.bf16.msra.mxu0 0
        %981 = vmatpush.bf16.msra.mxu0 0
        %982 = vmatpush.bf16.msra.mxu0 0
        %983 = vmatpush.bf16.msra.mxu0 0
        %984 = vmatpush.bf16.msra.mxu0 0
        %985 = vmatpush.bf16.msra.mxu0 0
        %986 = vmatpush.bf16.msra.mxu0 0
        %987 = vmatpush.bf16.msra.mxu0 %v978
        %988 = vmatmul.bf16.gmra.mxu0 %v975
        %v989 = vpop.f32.mrf.mxu0
        %v990 = vadd.f32 0.0, %v989
        %v991 = vpop.f32.mrf.mxu0
        %992 = vdwg.mxu0
        %993 = vrot.lane.b32.xlu0 %v627, 56
        %v994 = vpop.permute.xlu0 %993
        %v996 = vsel %vm557, %v929, 0
        %v999 = vsel %vm706, %v994, 0
        %1001 = vmatpush.bf16.msra.mxu0 0
        %1002 = vmatpush.bf16.msra.mxu0 0
        %1003 = vmatpush.bf16.msra.mxu0 0
        %1004 = vmatpush.bf16.msra.mxu0 0
        %1005 = vmatpush.bf16.msra.mxu0 0
        %1006 = vmatpush.bf16.msra.mxu0 0
        %1007 = vmatpush.bf16.msra.mxu0 0
        %1008 = vmatpush.bf16.msra.mxu0 %v999
        %1009 = vmatmul.bf16.gmra.mxu0 %v996
        %v1010 = vpop.f32.mrf.mxu0
        %v1011 = vadd.f32 0.0, %v1010
        %v1012 = vpop.f32.mrf.mxu0
        %1013 = vdwg.mxu0
        %1014 = vrot.lane.b32.xlu0 %v554, 112
        %v1015 = vpop.permute.xlu0 %1014
        %1016 = vrot.lane.b32.xlu0 %v554, 80
        %v1017 = vpop.permute.xlu0 %1016
        %v1019 = vsel %vm557, %v1015, 0
        %v1022 = vsel %vm557, %v1017, 0
        %1024 = vmatpush.bf16.xpose.msra.mxu0 0
        %1025 = vmatpush.bf16.xpose.msra.mxu0 0
        %1026 = vmatpush.bf16.xpose.msra.mxu0 0
        %1027 = vmatpush.bf16.xpose.msra.mxu0 0
        %1028 = vmatpush.bf16.xpose.msra.mxu0 0
        %1029 = vmatpush.bf16.xpose.msra.mxu0 0
        %1030 = vmatpush.bf16.xpose.msra.mxu0 0
        %1031 = vmatpush.bf16.xpose.msra.mxu0 %v1022
        %1032 = vmatmul.bf16.gmra.mxu0 %v1019
        %v1033 = vpop.f32.mrf.mxu0
        %v1034 = vadd.f32 0.0, %v1033
        %v1035 = vpop.f32.mrf.mxu0
        %1036 = vdwg.mxu0
        %1037 = vrot.lane.b32.xlu0 %v579, 112
        %v1038 = vpop.permute.xlu0 %1037
        %1039 = vrot.lane.b32.xlu0 %v579, 80
        %v1040 = vpop.permute.xlu0 %1039
        %v1042 = vsel %vm557, %v1038, 0
        %v1045 = vsel %vm557, %v1040, 0
        %1047 = vmatpush.bf16.xpose.msra.mxu0 0
        %1048 = vmatpush.bf16.xpose.msra.mxu0 0
        %1049 = vmatpush.bf16.xpose.msra.mxu0 0
        %1050 = vmatpush.bf16.xpose.msra.mxu0 0
        %1051 = vmatpush.bf16.xpose.msra.mxu0 0
        %1052 = vmatpush.bf16.xpose.msra.mxu0 0
        %1053 = vmatpush.bf16.xpose.msra.mxu0 0
        %1054 = vmatpush.bf16.xpose.msra.mxu0 %v1045
        %1055 = vmatmul.bf16.gmra.mxu0 %v1042
        %v1056 = vpop.f32.mrf.mxu0
        %v1057 = vadd.f32 0.0, %v1056
        %v1058 = vpop.f32.mrf.mxu0
        %1059 = vdwg.mxu0
        %1060 = vrot.lane.b32.xlu0 %v603, 112
        %v1061 = vpop.permute.xlu0 %1060
        %1062 = vrot.lane.b32.xlu0 %v603, 80
        %v1063 = vpop.permute.xlu0 %1062
        %v1065 = vsel %vm557, %v1061, 0
        %v1068 = vsel %vm557, %v1063, 0
        %1070 = vmatpush.bf16.xpose.msra.mxu0 0
        %1071 = vmatpush.bf16.xpose.msra.mxu0 0
        %1072 = vmatpush.bf16.xpose.msra.mxu0 0
        %1073 = vmatpush.bf16.xpose.msra.mxu0 0
        %1074 = vmatpush.bf16.xpose.msra.mxu0 0
        %1075 = vmatpush.bf16.xpose.msra.mxu0 0
        %1076 = vmatpush.bf16.xpose.msra.mxu0 0
        %1077 = vmatpush.bf16.xpose.msra.mxu0 %v1068
        %1078 = vmatmul.bf16.gmra.mxu0 %v1065
        %v1079 = vpop.f32.mrf.mxu0
        %v1080 = vadd.f32 0.0, %v1079
        %v1081 = vpop.f32.mrf.mxu0
        %1082 = vdwg.mxu0
        %1083 = vrot.lane.b32.xlu0 %v627, 112
        %v1084 = vpop.permute.xlu0 %1083
        %1085 = vrot.lane.b32.xlu0 %v627, 80
        %v1086 = vpop.permute.xlu0 %1085
        %v1088 = vsel %vm557, %v1084, 0
        %v1091 = vsel %vm557, %v1086, 0
        %1093 = vmatpush.bf16.xpose.msra.mxu0 0
        %1094 = vmatpush.bf16.xpose.msra.mxu0 0
        %1095 = vmatpush.bf16.xpose.msra.mxu0 0
        %1096 = vmatpush.bf16.xpose.msra.mxu0 0
        %1097 = vmatpush.bf16.xpose.msra.mxu0 0
        %1098 = vmatpush.bf16.xpose.msra.mxu0 0
        %1099 = vmatpush.bf16.xpose.msra.mxu0 0
        %1100 = vmatpush.bf16.xpose.msra.mxu0 %v1091
        %1101 = vmatmul.bf16.gmra.mxu0 %v1088
        %v1102 = vpop.f32.mrf.mxu0
        %v1103 = vadd.f32 0.0, %v1102
        %v1104 = vpop.f32.mrf.mxu0
        %1105 = vdwg.mxu0
        %v1106 = vmul.f32 %v1034, 0.35355338
        %v1107 = vmul.f32 %v1057, 0.35355338
        %v1108 = vmul.f32 %v1080, 0.35355338
        %v1109 = vmul.f32 %v1103, 0.35355338
        %v1110 = vsel %vm557, %v1106, -inf
        %1111 = vmax.xlane.f32.xlu0 %v1110
        %v1112 = vpop.xlane.xlu0 %1111
        %v1113 = vsel %vm557, %v1107, -inf
        %1114 = vmax.xlane.f32.xlu0 %v1113
        %v1115 = vpop.xlane.xlu0 %1114
        %v1116 = vsel %vm557, %v1108, -inf
        %1117 = vmax.xlane.f32.xlu0 %v1116
        %v1118 = vpop.xlane.xlu0 %1117
        %v1119 = vsel %vm557, %v1109, -inf
        %1120 = vmax.xlane.f32.xlu0 %v1119
        %v1121 = vpop.xlane.xlu0 %1120
        %v1122 = vsub.f32 %v1106, %v1112
        %v1123 = vsub.f32 %v1107, %v1115
        %v1124 = vsub.f32 %v1108, %v1118
        %v1125 = vsub.f32 %v1109, %v1121
        %v1126 = vmul.f32 %v1122, 1.442695
        %v1127 = vpow.pop %v1126
        %v1128 = vmul.f32 %v1123, 1.442695
        %v1129 = vpow.pop %v1128
        %v1130 = vmul.f32 %v1124, 1.442695
        %v1131 = vpow.pop %v1130
        %v1132 = vmul.f32 %v1125, 1.442695
        %v1133 = vpow.pop %v1132
        %v1134 = vsel %vm557, %v1127, 0.0
        %1135 = vadd.xlane.f32.xlu0 %v1134
        %v1136 = vpop.xlane.xlu0 %1135
        %v1137 = vsel %vm557, %v1129, 0.0
        %1138 = vadd.xlane.f32.xlu0 %v1137
        %v1139 = vpop.xlane.xlu0 %1138
        %v1140 = vsel %vm557, %v1131, 0.0
        %1141 = vadd.xlane.f32.xlu0 %v1140
        %v1142 = vpop.xlane.xlu0 %1141
        %v1143 = vsel %vm557, %v1133, 0.0
        %1144 = vadd.xlane.f32.xlu0 %v1143
        %v1145 = vpop.xlane.xlu0 %1144
        %v1146 = vrcp.pop %v1136
        %v1147 = vrcp.pop %v1139
        %v1148 = vrcp.pop %v1142
        %v1149 = vrcp.pop %v1145
        %v1150 = vmul.f32 %v1127, %v1146
        %v1151 = vmul.f32 %v1129, %v1147
        %v1152 = vmul.f32 %v1131, %v1148
        %v1153 = vmul.f32 %v1133, %v1149
        %v1154 = vpack.c.bf16 %v1150, %v1150
        %v1155 = vpack.c.bf16 %v1151, %v1151
        %v1156 = vpack.c.bf16 %v1152, %v1152
        %v1157 = vpack.c.bf16 %v1153, %v1153
        %1158 = vrot.lane.b32.xlu0 %v554, 48
        %v1159 = vpop.permute.xlu0 %1158
        %v1161 = vsel %vm557, %v1154, 0
        %v1164 = vsel %vm706, %v1159, 0
        %1166 = vmatpush.bf16.msra.mxu0 0
        %1167 = vmatpush.bf16.msra.mxu0 0
        %1168 = vmatpush.bf16.msra.mxu0 0
        %1169 = vmatpush.bf16.msra.mxu0 0
        %1170 = vmatpush.bf16.msra.mxu0 0
        %1171 = vmatpush.bf16.msra.mxu0 0
        %1172 = vmatpush.bf16.msra.mxu0 0
        %1173 = vmatpush.bf16.msra.mxu0 %v1164
        %1174 = vmatmul.bf16.gmra.mxu0 %v1161
        %v1175 = vpop.f32.mrf.mxu0
        %v1176 = vadd.f32 0.0, %v1175
        %v1177 = vpop.f32.mrf.mxu0
        %1178 = vdwg.mxu0
        %1179 = vrot.lane.b32.xlu0 %v579, 48
        %v1180 = vpop.permute.xlu0 %1179
        %v1182 = vsel %vm557, %v1155, 0
        %v1185 = vsel %vm706, %v1180, 0
        %1187 = vmatpush.bf16.msra.mxu0 0
        %1188 = vmatpush.bf16.msra.mxu0 0
        %1189 = vmatpush.bf16.msra.mxu0 0
        %1190 = vmatpush.bf16.msra.mxu0 0
        %1191 = vmatpush.bf16.msra.mxu0 0
        %1192 = vmatpush.bf16.msra.mxu0 0
        %1193 = vmatpush.bf16.msra.mxu0 0
        %1194 = vmatpush.bf16.msra.mxu0 %v1185
        %1195 = vmatmul.bf16.gmra.mxu0 %v1182
        %v1196 = vpop.f32.mrf.mxu0
        %v1197 = vadd.f32 0.0, %v1196
        %v1198 = vpop.f32.mrf.mxu0
        %1199 = vdwg.mxu0
        %1200 = vrot.lane.b32.xlu0 %v603, 48
        %v1201 = vpop.permute.xlu0 %1200
        %v1203 = vsel %vm557, %v1156, 0
        %v1206 = vsel %vm706, %v1201, 0
        %1208 = vmatpush.bf16.msra.mxu0 0
        %1209 = vmatpush.bf16.msra.mxu0 0
        %1210 = vmatpush.bf16.msra.mxu0 0
        %1211 = vmatpush.bf16.msra.mxu0 0
        %1212 = vmatpush.bf16.msra.mxu0 0
        %1213 = vmatpush.bf16.msra.mxu0 0
        %1214 = vmatpush.bf16.msra.mxu0 0
        %1215 = vmatpush.bf16.msra.mxu0 %v1206
        %1216 = vmatmul.bf16.gmra.mxu0 %v1203
        %v1217 = vpop.f32.mrf.mxu0
        %v1218 = vadd.f32 0.0, %v1217
        %v1219 = vpop.f32.mrf.mxu0
        %1220 = vdwg.mxu0
        %1221 = vrot.lane.b32.xlu0 %v627, 48
        %v1222 = vpop.permute.xlu0 %1221
        %v1224 = vsel %vm557, %v1157, 0
        %v1227 = vsel %vm706, %v1222, 0
        %1229 = vmatpush.bf16.msra.mxu0 0
        %1230 = vmatpush.bf16.msra.mxu0 0
        %1231 = vmatpush.bf16.msra.mxu0 0
        %1232 = vmatpush.bf16.msra.mxu0 0
        %1233 = vmatpush.bf16.msra.mxu0 0
        %1234 = vmatpush.bf16.msra.mxu0 0
        %1235 = vmatpush.bf16.msra.mxu0 0
        %1236 = vmatpush.bf16.msra.mxu0 %v1227
        %1237 = vmatmul.bf16.gmra.mxu0 %v1224
        %v1238 = vpop.f32.mrf.mxu0
        %v1239 = vadd.f32 0.0, %v1238
        %v1240 = vpop.f32.mrf.mxu0
        %1241 = vdwg.mxu0
        %1242 = vrot.lane.b32.xlu0 %v554, 104
        %v1243 = vpop.permute.xlu0 %1242
        %1244 = vrot.lane.b32.xlu0 %v554, 72
        %v1245 = vpop.permute.xlu0 %1244
        %v1247 = vsel %vm557, %v1243, 0
        %v1250 = vsel %vm557, %v1245, 0
        %1252 = vmatpush.bf16.xpose.msra.mxu0 0
        %1253 = vmatpush.bf16.xpose.msra.mxu0 0
        %1254 = vmatpush.bf16.xpose.msra.mxu0 0
        %1255 = vmatpush.bf16.xpose.msra.mxu0 0
        %1256 = vmatpush.bf16.xpose.msra.mxu0 0
        %1257 = vmatpush.bf16.xpose.msra.mxu0 0
        %1258 = vmatpush.bf16.xpose.msra.mxu0 0
        %1259 = vmatpush.bf16.xpose.msra.mxu0 %v1250
        %1260 = vmatmul.bf16.gmra.mxu0 %v1247
        %v1261 = vpop.f32.mrf.mxu0
        %v1262 = vadd.f32 0.0, %v1261
        %v1263 = vpop.f32.mrf.mxu0
        %1264 = vdwg.mxu0
        %1265 = vrot.lane.b32.xlu0 %v579, 104
        %v1266 = vpop.permute.xlu0 %1265
        %1267 = vrot.lane.b32.xlu0 %v579, 72
        %v1268 = vpop.permute.xlu0 %1267
        %v1270 = vsel %vm557, %v1266, 0
        %v1273 = vsel %vm557, %v1268, 0
        %1275 = vmatpush.bf16.xpose.msra.mxu0 0
        %1276 = vmatpush.bf16.xpose.msra.mxu0 0
        %1277 = vmatpush.bf16.xpose.msra.mxu0 0
        %1278 = vmatpush.bf16.xpose.msra.mxu0 0
        %1279 = vmatpush.bf16.xpose.msra.mxu0 0
        %1280 = vmatpush.bf16.xpose.msra.mxu0 0
        %1281 = vmatpush.bf16.xpose.msra.mxu0 0
        %1282 = vmatpush.bf16.xpose.msra.mxu0 %v1273
        %1283 = vmatmul.bf16.gmra.mxu0 %v1270
        %v1284 = vpop.f32.mrf.mxu0
        %v1285 = vadd.f32 0.0, %v1284
        %v1286 = vpop.f32.mrf.mxu0
        %1287 = vdwg.mxu0
        %1288 = vrot.lane.b32.xlu0 %v603, 104
        %v1289 = vpop.permute.xlu0 %1288
        %1290 = vrot.lane.b32.xlu0 %v603, 72
        %v1291 = vpop.permute.xlu0 %1290
        %v1293 = vsel %vm557, %v1289, 0
        %v1296 = vsel %vm557, %v1291, 0
        %1298 = vmatpush.bf16.xpose.msra.mxu0 0
        %1299 = vmatpush.bf16.xpose.msra.mxu0 0
        %1300 = vmatpush.bf16.xpose.msra.mxu0 0
        %1301 = vmatpush.bf16.xpose.msra.mxu0 0
        %1302 = vmatpush.bf16.xpose.msra.mxu0 0
        %1303 = vmatpush.bf16.xpose.msra.mxu0 0
        %1304 = vmatpush.bf16.xpose.msra.mxu0 0
        %1305 = vmatpush.bf16.xpose.msra.mxu0 %v1296
        %1306 = vmatmul.bf16.gmra.mxu0 %v1293
        %v1307 = vpop.f32.mrf.mxu0
        %v1308 = vadd.f32 0.0, %v1307
        %v1309 = vpop.f32.mrf.mxu0
        %1310 = vdwg.mxu0
        %1311 = vrot.lane.b32.xlu0 %v627, 104
        %v1312 = vpop.permute.xlu0 %1311
        %1313 = vrot.lane.b32.xlu0 %v627, 72
        %v1314 = vpop.permute.xlu0 %1313
        %v1316 = vsel %vm557, %v1312, 0
        %v1319 = vsel %vm557, %v1314, 0
        %1321 = vmatpush.bf16.xpose.msra.mxu0 0
        %1322 = vmatpush.bf16.xpose.msra.mxu0 0
        %1323 = vmatpush.bf16.xpose.msra.mxu0 0
        %1324 = vmatpush.bf16.xpose.msra.mxu0 0
        %1325 = vmatpush.bf16.xpose.msra.mxu0 0
        %1326 = vmatpush.bf16.xpose.msra.mxu0 0
        %1327 = vmatpush.bf16.xpose.msra.mxu0 0
        %1328 = vmatpush.bf16.xpose.msra.mxu0 %v1319
        %1329 = vmatmul.bf16.gmra.mxu0 %v1316
        %v1330 = vpop.f32.mrf.mxu0
        %v1331 = vadd.f32 0.0, %v1330
        %v1332 = vpop.f32.mrf.mxu0
        %1333 = vdwg.mxu0
        %v1334 = vmul.f32 %v1262, 0.35355338
        %v1335 = vmul.f32 %v1285, 0.35355338
        %v1336 = vmul.f32 %v1308, 0.35355338
        %v1337 = vmul.f32 %v1331, 0.35355338
        %v1338 = vsel %vm557, %v1334, -inf
        %1339 = vmax.xlane.f32.xlu0 %v1338
        %v1340 = vpop.xlane.xlu0 %1339
        %v1341 = vsel %vm557, %v1335, -inf
        %1342 = vmax.xlane.f32.xlu0 %v1341
        %v1343 = vpop.xlane.xlu0 %1342
        %v1344 = vsel %vm557, %v1336, -inf
        %1345 = vmax.xlane.f32.xlu0 %v1344
        %v1346 = vpop.xlane.xlu0 %1345
        %v1347 = vsel %vm557, %v1337, -inf
        %1348 = vmax.xlane.f32.xlu0 %v1347
        %v1349 = vpop.xlane.xlu0 %1348
        %v1350 = vsub.f32 %v1334, %v1340
        %v1351 = vsub.f32 %v1335, %v1343
        %v1352 = vsub.f32 %v1336, %v1346
        %v1353 = vsub.f32 %v1337, %v1349
        %v1354 = vmul.f32 %v1350, 1.442695
        %v1355 = vpow.pop %v1354
        %v1356 = vmul.f32 %v1351, 1.442695
        %v1357 = vpow.pop %v1356
        %v1358 = vmul.f32 %v1352, 1.442695
        %v1359 = vpow.pop %v1358
        %v1360 = vmul.f32 %v1353, 1.442695
        %v1361 = vpow.pop %v1360
        %v1362 = vsel %vm557, %v1355, 0.0
        %1363 = vadd.xlane.f32.xlu0 %v1362
        %v1364 = vpop.xlane.xlu0 %1363
        %v1365 = vsel %vm557, %v1357, 0.0
        %1366 = vadd.xlane.f32.xlu0 %v1365
        %v1367 = vpop.xlane.xlu0 %1366
        %v1368 = vsel %vm557, %v1359, 0.0
        %1369 = vadd.xlane.f32.xlu0 %v1368
        %v1370 = vpop.xlane.xlu0 %1369
        %v1371 = vsel %vm557, %v1361, 0.0
        %1372 = vadd.xlane.f32.xlu0 %v1371
        %v1373 = vpop.xlane.xlu0 %1372
        %v1374 = vrcp.pop %v1364
        %v1375 = vrcp.pop %v1367
        %v1376 = vrcp.pop %v1370
        %v1377 = vrcp.pop %v1373
        %v1378 = vmul.f32 %v1355, %v1374
        %v1379 = vmul.f32 %v1357, %v1375
        %v1380 = vmul.f32 %v1359, %v1376
        %v1381 = vmul.f32 %v1361, %v1377
        %v1382 = vpack.c.bf16 %v1378, %v1378
        %v1383 = vpack.c.bf16 %v1379, %v1379
        %v1384 = vpack.c.bf16 %v1380, %v1380
        %v1385 = vpack.c.bf16 %v1381, %v1381
        %1386 = vrot.lane.b32.xlu0 %v554, 40
        %v1387 = vpop.permute.xlu0 %1386
        %v1389 = vsel %vm557, %v1382, 0
        %v1392 = vsel %vm706, %v1387, 0
        %1394 = vmatpush.bf16.msra.mxu0 0
        %1395 = vmatpush.bf16.msra.mxu0 0
        %1396 = vmatpush.bf16.msra.mxu0 0
        %1397 = vmatpush.bf16.msra.mxu0 0
        %1398 = vmatpush.bf16.msra.mxu0 0
        %1399 = vmatpush.bf16.msra.mxu0 0
        %1400 = vmatpush.bf16.msra.mxu0 0
        %1401 = vmatpush.bf16.msra.mxu0 %v1392
        %1402 = vmatmul.bf16.gmra.mxu0 %v1389
        %v1403 = vpop.f32.mrf.mxu0
        %v1404 = vadd.f32 0.0, %v1403
        %v1405 = vpop.f32.mrf.mxu0
        %1406 = vdwg.mxu0
        %1407 = vrot.lane.b32.xlu0 %v579, 40
        %v1408 = vpop.permute.xlu0 %1407
        %v1410 = vsel %vm557, %v1383, 0
        %v1413 = vsel %vm706, %v1408, 0
        %1415 = vmatpush.bf16.msra.mxu0 0
        %1416 = vmatpush.bf16.msra.mxu0 0
        %1417 = vmatpush.bf16.msra.mxu0 0
        %1418 = vmatpush.bf16.msra.mxu0 0
        %1419 = vmatpush.bf16.msra.mxu0 0
        %1420 = vmatpush.bf16.msra.mxu0 0
        %1421 = vmatpush.bf16.msra.mxu0 0
        %1422 = vmatpush.bf16.msra.mxu0 %v1413
        %1423 = vmatmul.bf16.gmra.mxu0 %v1410
        %v1424 = vpop.f32.mrf.mxu0
        %v1425 = vadd.f32 0.0, %v1424
        %v1426 = vpop.f32.mrf.mxu0
        %1427 = vdwg.mxu0
        %1428 = vrot.lane.b32.xlu0 %v603, 40
        %v1429 = vpop.permute.xlu0 %1428
        %v1431 = vsel %vm557, %v1384, 0
        %v1434 = vsel %vm706, %v1429, 0
        %1436 = vmatpush.bf16.msra.mxu0 0
        %1437 = vmatpush.bf16.msra.mxu0 0
        %1438 = vmatpush.bf16.msra.mxu0 0
        %1439 = vmatpush.bf16.msra.mxu0 0
        %1440 = vmatpush.bf16.msra.mxu0 0
        %1441 = vmatpush.bf16.msra.mxu0 0
        %1442 = vmatpush.bf16.msra.mxu0 0
        %1443 = vmatpush.bf16.msra.mxu0 %v1434
        %1444 = vmatmul.bf16.gmra.mxu0 %v1431
        %v1445 = vpop.f32.mrf.mxu0
        %v1446 = vadd.f32 0.0, %v1445
        %v1447 = vpop.f32.mrf.mxu0
        %1448 = vdwg.mxu0
        %1449 = vrot.lane.b32.xlu0 %v627, 40
        %v1450 = vpop.permute.xlu0 %1449
        %v1452 = vsel %vm557, %v1385, 0
        %v1455 = vsel %vm706, %v1450, 0
        %1457 = vmatpush.bf16.msra.mxu0 0
        %1458 = vmatpush.bf16.msra.mxu0 0
        %1459 = vmatpush.bf16.msra.mxu0 0
        %1460 = vmatpush.bf16.msra.mxu0 0
        %1461 = vmatpush.bf16.msra.mxu0 0
        %1462 = vmatpush.bf16.msra.mxu0 0
        %1463 = vmatpush.bf16.msra.mxu0 0
        %1464 = vmatpush.bf16.msra.mxu0 %v1455
        %1465 = vmatmul.bf16.gmra.mxu0 %v1452
        %v1466 = vpop.f32.mrf.mxu0
        %v1467 = vadd.f32 0.0, %v1466
        %v1468 = vpop.f32.mrf.mxu0
        %1469 = vdwg.mxu0
        %1474 = vrot.lane.b32.xlu0 %v948, 8
        %v1475 = vpop.permute.xlu0 %1474
        %1476 = vrot.lane.b32.xlu0 %v969, 8
        %v1477 = vpop.permute.xlu0 %1476
        %1478 = vrot.lane.b32.xlu0 %v990, 8
        %v1479 = vpop.permute.xlu0 %1478
        %1480 = vrot.lane.b32.xlu0 %v1011, 8
        %v1481 = vpop.permute.xlu0 %1480
        %1490 = vrot.lane.b32.xlu0 %v1176, 16
        %v1491 = vpop.permute.xlu0 %1490
        %1492 = vrot.lane.b32.xlu0 %v1197, 16
        %v1493 = vpop.permute.xlu0 %1492
        %1494 = vrot.lane.b32.xlu0 %v1218, 16
        %v1495 = vpop.permute.xlu0 %1494
        %1496 = vrot.lane.b32.xlu0 %v1239, 16
        %v1497 = vpop.permute.xlu0 %1496
        %1506 = vrot.lane.b32.xlu0 %v1404, 24
        %v1507 = vpop.permute.xlu0 %1506
        %1508 = vrot.lane.b32.xlu0 %v1425, 24
        %v1509 = vpop.permute.xlu0 %1508
        %1510 = vrot.lane.b32.xlu0 %v1446, 24
        %v1511 = vpop.permute.xlu0 %1510
        %1512 = vrot.lane.b32.xlu0 %v1467, 24
        %v1513 = vpop.permute.xlu0 %1512
        %v1518 = vsel %vm557, %v720, %v1475
        %v1519 = vsel %vm557, %v741, %v1477
        %v1520 = vsel %vm557, %v762, %v1479
        %v1521 = vsel %vm557, %v783, %v1481
        %vm1522 = vcmask 130048
        %v1523 = vsel %vm1522, %v1518, %v1491
        %v1524 = vsel %vm1522, %v1519, %v1493
        %v1525 = vsel %vm1522, %v1520, %v1495
        %v1526 = vsel %vm1522, %v1521, %v1497
        %vm1527 = vcmask 195584
        %v1528 = vsel %vm1527, %v1523, %v1507
        %v1529 = vsel %vm1527, %v1524, %v1509
        %v1530 = vsel %vm1527, %v1525, %v1511
        %v1531 = vsel %vm1527, %v1526, %v1513
        %v1532 = vpack.c.bf16 %v1529, %v1528
        %v1533 = vpack.c.bf16 %v1531, %v1530
        %v1535 = vperm.slane %v547, 0
        %v1541 = vunpack.c.l.b16 %v543
        %v1542 = vunpack.c.l.b16 %v544
        %v1543 = vunpack.c.l.b16 %v545
        %v1544 = vunpack.c.l.b16 %v546
        %v1545 = vpack.c.b16 %v1542, %v1541
        %v1546 = vpack.c.b16 %v1544, %v1543
        %v1550 = vsel %vm517, %v1532, 0
        %v1553 = vsel %vm517, %v1533, 0
        %1555 = vmatpush.bf16.msra.mxu0 0
        %1556 = vmatpush.bf16.msra.mxu0 0
        %1557 = vmatpush.bf16.msra.mxu0 0
        %1558 = vmatpush.bf16.msra.mxu0 0
        %1559 = vmatpush.bf16.msra.mxu0 0
        %1560 = vmatpush.bf16.msra.mxu0 0
        %1561 = vmatpush.bf16.msra.mxu0 %v1546
        %1562 = vmatpush.bf16.msra.mxu0 %v1545
        %1563 = vmatmul.bf16.gmra.mxu0 %v1550
        %v1564 = vpop.f32.mrf.mxu0
        %v1565 = vadd.f32 %v1535, %v1564
        %v1566 = vpop.f32.mrf.mxu0
        %v1567 = vadd.f32 %v1535, %v1566
        %1568 = vmatmul.bf16.gmra.mxu0 %v1553
        %v1569 = vpop.f32.mrf.mxu0
        %v1570 = vadd.f32 %v1535, %v1569
        %v1571 = vpop.f32.mrf.mxu0
        %v1572 = vadd.f32 %v1535, %v1571
        %1573 = vdwg.mxu0
        %v1574 = vld [vmem:[%s5] sm:$0x1]
        %v1575 = vld [vmem:[%s6] sm:$0x1]
        %v1576 = vld [vmem:[#allocation2] sm:$0xf]
        %v1577 = vld [vmem:[#allocation2 + $0x4] sm:$0xf]
        %v1578 = vld [vmem:[#allocation2 + $0x8] sm:$0xf]
        %v1579 = vld [vmem:[#allocation2 + $0xc] sm:$0xf]
        %v1580 = vld [vmem:[#allocation4] sm:$0x1]
        %v1581 = vld [vmem:[%s9] sm:$0xf]
        %v1582 = vld [vmem:[%s9 + $0x4] sm:$0xf]
        %v1583 = vld [vmem:[%s9 + $0x8] sm:$0xf]
        %v1584 = vld [vmem:[%s9 + $0xc] sm:$0xf]
        %v1585 = vld [vmem:[%s9 + $0x10] sm:$0xf]
        %v1586 = vld [vmem:[%s9 + $0x14] sm:$0xf]
        %v1587 = vld [vmem:[%s9 + $0x18] sm:$0xf]
        %v1588 = vld [vmem:[%s9 + $0x1c] sm:$0xf]
        %v1589 = vld [vmem:[%s9 + $0x20] sm:$0xf]
        %v1590 = vld [vmem:[%s9 + $0x24] sm:$0xf]
        %v1591 = vld [vmem:[%s9 + $0x28] sm:$0xf]
        %v1592 = vld [vmem:[%s9 + $0x2c] sm:$0xf]
        %v1593 = vld [vmem:[%s9 + $0x30] sm:$0xf]
        %v1594 = vld [vmem:[%s9 + $0x34] sm:$0xf]
        %v1595 = vld [vmem:[%s9 + $0x38] sm:$0xf]
        %v1596 = vld [vmem:[%s9 + $0x3c] sm:$0xf]
        %v1597 = vld [vmem:[#allocation6] sm:$0x1]
        %v1598 = vld [vmem:[%s11] sm:$0x1]
        %v1599 = vld [vmem:[%s12] sm:$0x1]
        %v1600 = vadd.f32 %v491, %v1565
        %v1601 = vadd.f32 %v492, %v1567
        %v1602 = vadd.f32 %v493, %v1570
        %v1603 = vadd.f32 %v494, %v1572
        %v1604 = vsel %vm517, %v1600, 0.0
        %1605 = vadd.xlane.f32.xlu0 %v1604
        %v1606 = vpop.xlane.xlu0 %1605
        %v1607 = vsel %vm517, %v1601, 0.0
        %1608 = vadd.xlane.f32.xlu0 %v1607
        %v1609 = vpop.xlane.xlu0 %1608
        %v1610 = vsel %vm517, %v1602, 0.0
        %1611 = vadd.xlane.f32.xlu0 %v1610
        %v1612 = vpop.xlane.xlu0 %1611
        %v1613 = vsel %vm517, %v1603, 0.0
        %1614 = vadd.xlane.f32.xlu0 %v1613
        %v1615 = vpop.xlane.xlu0 %1614
        %v1616 = vrcp.pop 32.0
        %v1617 = vmul.f32 32.0, %v1616
        %v1618 = vsub.f32 1.0, %v1617
        %v1619 = vmul.f32 %v1616, %v1618
        %v1620 = vadd.f32 %v1616, %v1619
        %vm1621 = vweird.f32 %v1616
        %v1622 = vsel %vm1621, %v1616, %v1620
        %v1623 = vmul.f32 %v1606, %v1622
        %v1624 = vmul.f32 %v1609, %v1622
        %v1625 = vmul.f32 %v1612, %v1622
        %v1626 = vmul.f32 %v1615, %v1622
        %v1627 = vsub.f32 %v1600, %v1623
        %v1628 = vsub.f32 %v1601, %v1624
        %v1629 = vsub.f32 %v1602, %v1625
        %v1630 = vsub.f32 %v1603, %v1626
        %v1631 = vmul.f32 %v1627, %v1627
        %v1632 = vmul.f32 %v1628, %v1628
        %v1633 = vmul.f32 %v1629, %v1629
        %v1634 = vmul.f32 %v1630, %v1630
        %v1635 = vsel %vm517, %v1631, 0.0
        %1636 = vadd.xlane.f32.xlu0 %v1635
        %v1637 = vpop.xlane.xlu0 %1636
        %v1638 = vsel %vm517, %v1632, 0.0
        %1639 = vadd.xlane.f32.xlu0 %v1638
        %v1640 = vpop.xlane.xlu0 %1639
        %v1641 = vsel %vm517, %v1633, 0.0
        %1642 = vadd.xlane.f32.xlu0 %v1641
        %v1643 = vpop.xlane.xlu0 %1642
        %v1644 = vsel %vm517, %v1634, 0.0
        %1645 = vadd.xlane.f32.xlu0 %v1644
        %v1646 = vpop.xlane.xlu0 %1645
        %v1647 = vmul.f32 %v1637, %v1622
        %v1648 = vmul.f32 %v1640, %v1622
        %v1649 = vmul.f32 %v1643, %v1622
        %v1650 = vmul.f32 %v1646, %v1622
        %v1651 = vadd.f32 %v1647, 1e-05
        %v1652 = vadd.f32 %v1648, 1e-05
        %v1653 = vadd.f32 %v1649, 1e-05
        %v1654 = vadd.f32 %v1650, 1e-05
        %v1655 = vrsqrt.pop %v1651
        %v1656 = vmul.f32 %v1655, %v1651
        %v1657 = vmul.f32 %v1656, %v1655
        %v1658 = vmul.f32 0.5, %v1657
        %v1659 = vsub.f32 1.5, %v1658
        %v1660 = vmul.f32 %v1655, %v1659
        %vm1661 = vweird.f32 %v1651
        %vm1662 = vweird.f32 %v1655
        %vm1663 = vmor %vm1661, %vm1662
        %v1664 = vsel %vm1663, %v1655, %v1660
        %v1665 = vrsqrt.pop %v1652
        %v1666 = vmul.f32 %v1665, %v1652
        %v1667 = vmul.f32 %v1666, %v1665
        %v1668 = vmul.f32 0.5, %v1667
        %v1669 = vsub.f32 1.5, %v1668
        %v1670 = vmul.f32 %v1665, %v1669
        %vm1671 = vweird.f32 %v1652
        %vm1672 = vweird.f32 %v1665
        %vm1673 = vmor %vm1671, %vm1672
        %v1674 = vsel %vm1673, %v1665, %v1670
        %v1675 = vrsqrt.pop %v1653
        %v1676 = vmul.f32 %v1675, %v1653
        %v1677 = vmul.f32 %v1676, %v1675
        %v1678 = vmul.f32 0.5, %v1677
        %v1679 = vsub.f32 1.5, %v1678
        %v1680 = vmul.f32 %v1675, %v1679
        %vm1681 = vweird.f32 %v1653
        %vm1682 = vweird.f32 %v1675
        %vm1683 = vmor %vm1681, %vm1682
        %v1684 = vsel %vm1683, %v1675, %v1680
        %v1685 = vrsqrt.pop %v1654
        %v1686 = vmul.f32 %v1685, %v1654
        %v1687 = vmul.f32 %v1686, %v1685
        %v1688 = vmul.f32 0.5, %v1687
        %v1689 = vsub.f32 1.5, %v1688
        %v1690 = vmul.f32 %v1685, %v1689
        %vm1691 = vweird.f32 %v1654
        %vm1692 = vweird.f32 %v1685
        %vm1693 = vmor %vm1691, %vm1692
        %v1694 = vsel %vm1693, %v1685, %v1690
        %v1695 = vmul.f32 %v1627, %v1664
        %v1696 = vmul.f32 %v1628, %v1674
        %v1697 = vmul.f32 %v1629, %v1684
        %v1698 = vmul.f32 %v1630, %v1694
        %v1700 = vperm.slane %v1574, 0
        %v1702 = vmul.f32 %v1695, %v1700
        %v1703 = vmul.f32 %v1696, %v1700
        %v1704 = vmul.f32 %v1697, %v1700
        %v1705 = vmul.f32 %v1698, %v1700
        %v1707 = vperm.slane %v1575, 0
        %v1709 = vadd.f32 %v1702, %v1707
        %v1710 = vadd.f32 %v1703, %v1707
        %v1711 = vadd.f32 %v1704, %v1707
        %v1712 = vadd.f32 %v1705, %v1707
        %v1713 = vpack.c.bf16 %v1710, %v1709
        %v1714 = vpack.c.bf16 %v1712, %v1711
        %v1716 = vperm.slane %v1580, 0
        %v1722 = vunpack.c.l.b16 %v1576
        %v1723 = vunpack.c.l.b16 %v1577
        %v1724 = vunpack.c.l.b16 %v1578
        %v1725 = vunpack.c.l.b16 %v1579
        %v1726 = vpack.c.b16 %v1723, %v1722
        %v1727 = vpack.c.b16 %v1725, %v1724
        %v1731 = vsel %vm517, %v1713, 0
        %v1734 = vsel %vm517, %v1714, 0
        %1736 = vmatpush.bf16.msra.mxu0 0
        %1737 = vmatpush.bf16.msra.mxu0 0
        %1738 = vmatpush.bf16.msra.mxu0 0
        %1739 = vmatpush.bf16.msra.mxu0 0
        %1740 = vmatpush.bf16.msra.mxu0 0
        %1741 = vmatpush.bf16.msra.mxu0 0
        %1742 = vmatpush.bf16.msra.mxu0 %v1727
        %1743 = vmatpush.bf16.msra.mxu0 %v1726
        %1744 = vmatmul.bf16.gmra.mxu0 %v1731
        %v1745 = vpop.f32.mrf.mxu0
        %v1746 = vadd.f32 %v1716, %v1745
        %v1747 = vpop.f32.mrf.mxu0
        %v1748 = vadd.f32 %v1716, %v1747
        %1749 = vmatmul.bf16.gmra.mxu0 %v1734
        %v1750 = vpop.f32.mrf.mxu0
        %v1751 = vadd.f32 %v1716, %v1750
        %v1752 = vpop.f32.mrf.mxu0
        %v1753 = vadd.f32 %v1716, %v1752
        %1754 = vdwg.mxu0
        %v1755 = vmul.f32 %v1746, 0.5
        %v1756 = vmul.f32 %v1748, 0.5
        %v1757 = vmul.f32 %v1751, 0.5
        %v1758 = vmul.f32 %v1753, 0.5
        %v1759 = vmul.f32 %v1746, 0.044715
        %v1760 = vmul.f32 %v1748, 0.044715
        %v1761 = vmul.f32 %v1751, 0.044715
        %v1762 = vmul.f32 %v1753, 0.044715
        %v1763 = vmul.f32 %v1759, %v1746
        %v1764 = vmul.f32 %v1760, %v1748
        %v1765 = vmul.f32 %v1761, %v1751
        %v1766 = vmul.f32 %v1762, %v1753
        %v1767 = vmul.f32 %v1763, %v1746
        %v1768 = vmul.f32 %v1764, %v1748
        %v1769 = vmul.f32 %v1765, %v1751
        %v1770 = vmul.f32 %v1766, %v1753
        %v1771 = vadd.f32 %v1746, %v1767
        %v1772 = vadd.f32 %v1748, %v1768
        %v1773 = vadd.f32 %v1751, %v1769
        %v1774 = vadd.f32 %v1753, %v1770
        %v1775 = vmul.f32 %v1771, 0.7978846
        %v1776 = vmul.f32 %v1772, 0.7978846
        %v1777 = vmul.f32 %v1773, 0.7978846
        %v1778 = vmul.f32 %v1774, 0.7978846
        %v1779 = vtanh.pop %v1775
        %v1780 = vtanh.pop %v1776
        %v1781 = vtanh.pop %v1777
        %v1782 = vtanh.pop %v1778
        %v1783 = vadd.f32 %v1779, 1.0
        %v1784 = vadd.f32 %v1780, 1.0
        %v1785 = vadd.f32 %v1781, 1.0
        %v1786 = vadd.f32 %v1782, 1.0
        %v1787 = vmul.f32 %v1755, %v1783
        %v1788 = vmul.f32 %v1756, %v1784
        %v1789 = vmul.f32 %v1757, %v1785
        %v1790 = vmul.f32 %v1758, %v1786
        %v1791 = vpack.c.bf16 %v1788, %v1787
        %v1792 = vpack.c.bf16 %v1790, %v1789
        %v1794 = vperm.slane %v1597, 0
        %v1812 = vunpack.c.l.b16 %v1581
        %v1813 = vunpack.c.l.b16 %v1582
        %v1814 = vunpack.c.l.b16 %v1583
        %v1815 = vunpack.c.l.b16 %v1584
        %v1816 = vunpack.c.l.b16 %v1585
        %v1817 = vunpack.c.l.b16 %v1586
        %v1818 = vunpack.c.l.b16 %v1587
        %v1819 = vunpack.c.l.b16 %v1588
        %v1820 = vunpack.c.l.b16 %v1589
        %v1821 = vunpack.c.l.b16 %v1590
        %v1822 = vunpack.c.l.b16 %v1591
        %v1823 = vunpack.c.l.b16 %v1592
        %v1824 = vunpack.c.l.b16 %v1593
        %v1825 = vunpack.c.l.b16 %v1594
        %v1826 = vunpack.c.l.b16 %v1595
        %v1827 = vunpack.c.l.b16 %v1596
        %v1828 = vpack.c.b16 %v1813, %v1812
        %v1829 = vpack.c.b16 %v1815, %v1814
        %v1830 = vpack.c.b16 %v1817, %v1816
        %v1831 = vpack.c.b16 %v1819, %v1818
        %v1832 = vpack.c.b16 %v1821, %v1820
        %v1833 = vpack.c.b16 %v1823, %v1822
        %v1834 = vpack.c.b16 %v1825, %v1824
        %v1835 = vpack.c.b16 %v1827, %v1826
        %1844 = vmatpush.bf16.msra.mxu0 %v1835
        %1845 = vmatpush.bf16.msra.mxu0 %v1834
        %1846 = vmatpush.bf16.msra.mxu0 %v1833
        %1847 = vmatpush.bf16.msra.mxu0 %v1832
        %1848 = vmatpush.bf16.msra.mxu0 %v1831
        %1849 = vmatpush.bf16.msra.mxu0 %v1830
        %1850 = vmatpush.bf16.msra.mxu0 %v1829
        %1851 = vmatpush.bf16.msra.mxu0 %v1828
        %1852 = vmatmul.bf16.gmra.mxu0 %v1791
        %v1853 = vpop.f32.mrf.mxu0
        %v1854 = vadd.f32 %v1794, %v1853
        %v1855 = vpop.f32.mrf.mxu0
        %v1856 = vadd.f32 %v1794, %v1855
        %1857 = vmatmul.bf16.gmra.mxu0 %v1792
        %v1858 = vpop.f32.mrf.mxu0
        %v1859 = vadd.f32 %v1794, %v1858
        %v1860 = vpop.f32.mrf.mxu0
        %v1861 = vadd.f32 %v1794, %v1860
        %1862 = vdwg.mxu0
        %v1863 = vadd.f32 %v1709, %v1854
        %v1864 = vadd.f32 %v1710, %v1856
        %v1865 = vadd.f32 %v1711, %v1859
        %v1866 = vadd.f32 %v1712, %v1861
        %v1867 = vsel %vm517, %v1863, 0.0
        %1868 = vadd.xlane.f32.xlu0 %v1867
        %v1869 = vpop.xlane.xlu0 %1868
        %v1870 = vsel %vm517, %v1864, 0.0
        %1871 = vadd.xlane.f32.xlu0 %v1870
        %v1872 = vpop.xlane.xlu0 %1871
        %v1873 = vsel %vm517, %v1865, 0.0
        %1874 = vadd.xlane.f32.xlu0 %v1873
        %v1875 = vpop.xlane.xlu0 %1874
        %v1876 = vsel %vm517, %v1866, 0.0
        %1877 = vadd.xlane.f32.xlu0 %v1876
        %v1878 = vpop.xlane.xlu0 %1877
        %v1879 = vmul.f32 %v1869, %v1622
        %v1880 = vmul.f32 %v1872, %v1622
        %v1881 = vmul.f32 %v1875, %v1622
        %v1882 = vmul.f32 %v1878, %v1622
        %v1883 = vsub.f32 %v1863, %v1879
        %v1884 = vsub.f32 %v1864, %v1880
        %v1885 = vsub.f32 %v1865, %v1881
        %v1886 = vsub.f32 %v1866, %v1882
        %v1887 = vmul.f32 %v1883, %v1883
        %v1888 = vmul.f32 %v1884, %v1884
        %v1889 = vmul.f32 %v1885, %v1885
        %v1890 = vmul.f32 %v1886, %v1886
        %v1891 = vsel %vm517, %v1887, 0.0
        %1892 = vadd.xlane.f32.xlu0 %v1891
        %v1893 = vpop.xlane.xlu0 %1892
        %v1894 = vsel %vm517, %v1888, 0.0
        %1895 = vadd.xlane.f32.xlu0 %v1894
        %v1896 = vpop.xlane.xlu0 %1895
        %v1897 = vsel %vm517, %v1889, 0.0
        %1898 = vadd.xlane.f32.xlu0 %v1897
        %v1899 = vpop.xlane.xlu0 %1898
        %v1900 = vsel %vm517, %v1890, 0.0
        %1901 = vadd.xlane.f32.xlu0 %v1900
        %v1902 = vpop.xlane.xlu0 %1901
        %v1903 = vmul.f32 %v1893, %v1622
        %v1904 = vmul.f32 %v1896, %v1622
        %v1905 = vmul.f32 %v1899, %v1622
        %v1906 = vmul.f32 %v1902, %v1622
        %v1907 = vadd.f32 %v1903, 1e-05
        %v1908 = vadd.f32 %v1904, 1e-05
        %v1909 = vadd.f32 %v1905, 1e-05
        %v1910 = vadd.f32 %v1906, 1e-05
        %v1911 = vrsqrt.pop %v1907
        %v1912 = vmul.f32 %v1911, %v1907
        %v1913 = vmul.f32 %v1912, %v1911
        %v1914 = vmul.f32 0.5, %v1913
        %v1915 = vsub.f32 1.5, %v1914
        %v1916 = vmul.f32 %v1911, %v1915
        %vm1917 = vweird.f32 %v1907
        %vm1918 = vweird.f32 %v1911
        %vm1919 = vmor %vm1917, %vm1918
        %v1920 = vsel %vm1919, %v1911, %v1916
        %v1921 = vrsqrt.pop %v1908
        %v1922 = vmul.f32 %v1921, %v1908
        %v1923 = vmul.f32 %v1922, %v1921
        %v1924 = vmul.f32 0.5, %v1923
        %v1925 = vsub.f32 1.5, %v1924
        %v1926 = vmul.f32 %v1921, %v1925
        %vm1927 = vweird.f32 %v1908
        %vm1928 = vweird.f32 %v1921
        %vm1929 = vmor %vm1927, %vm1928
        %v1930 = vsel %vm1929, %v1921, %v1926
        %v1931 = vrsqrt.pop %v1909
        %v1932 = vmul.f32 %v1931, %v1909
        %v1933 = vmul.f32 %v1932, %v1931
        %v1934 = vmul.f32 0.5, %v1933
        %v1935 = vsub.f32 1.5, %v1934
        %v1936 = vmul.f32 %v1931, %v1935
        %vm1937 = vweird.f32 %v1909
        %vm1938 = vweird.f32 %v1931
        %vm1939 = vmor %vm1937, %vm1938
        %v1940 = vsel %vm1939, %v1931, %v1936
        %v1941 = vrsqrt.pop %v1910
        %v1942 = vmul.f32 %v1941, %v1910
        %v1943 = vmul.f32 %v1942, %v1941
        %v1944 = vmul.f32 0.5, %v1943
        %v1945 = vsub.f32 1.5, %v1944
        %v1946 = vmul.f32 %v1941, %v1945
        %vm1947 = vweird.f32 %v1910
        %vm1948 = vweird.f32 %v1941
        %vm1949 = vmor %vm1947, %vm1948
        %v1950 = vsel %vm1949, %v1941, %v1946
        %v1951 = vmul.f32 %v1883, %v1920
        %v1952 = vmul.f32 %v1884, %v1930
        %v1953 = vmul.f32 %v1885, %v1940
        %v1954 = vmul.f32 %v1886, %v1950
        %v1956 = vperm.slane %v1598, 0
        %v1958 = vmul.f32 %v1951, %v1956
        %v1959 = vmul.f32 %v1952, %v1956
        %v1960 = vmul.f32 %v1953, %v1956
        %v1961 = vmul.f32 %v1954, %v1956
        %v1963 = vperm.slane %v1599, 0
        %v1965 = vadd.f32 %v1958, %v1963
        %v1966 = vadd.f32 %v1959, %v1963
        %v1967 = vadd.f32 %v1960, %v1963
        %v1968 = vadd.f32 %v1961, %v1963
        %1969 = vst.msk [vmem:[%s488] sm:$0xff] %vm517, %v1965
        %1970 = vst.msk [vmem:[%s488 + $0x8] sm:$0xff] %vm517, %v1966
        %1971 = vst.msk [vmem:[%s488 + $0x10] sm:$0xff] %vm517, %v1967
        %1972 = vst.msk [vmem:[%s488 + $0x18] sm:$0xff] %vm517, %v1968
        %s1973 = smul.u32 4, %s26
        %p1974 = scmp.lt.s32.totalorder %s1973, 7
        %s1975 = scalar_select %p1974, %s1973, 7
        %s1976 = smul.addr %s1975, 8
        %s1977 = scalar_lea.vmem %s13, %s1976
        // Predicated region
        $region85: #{two_stage_attention.2} parent=71 // pred_check
          %p1978 = pneg %p322
        $region86: #{two_stage_attention.2} parent=71 // pred_check_branch
          %1980 = sbr.rel (%p1978) target = $region88
        $region87: #{two_stage_attention.2} parent=71 // pred_region
          %s1981 = smul.u32 4, %s26
        $region88: #{two_stage_attention.2} parent=71 // pred_fallthru
          _
      $region72: #{two_stage_attention.2} parent=5 // pred_fallthru
        _
      %p1982 = scmp.le.s32.totalorder 2, %s21
      // Predicated region
      $region89: #{two_stage_attention.2} parent=5 // pred_check
        %p1983 = pneg %p1982
      $region90: #{two_stage_attention.2} parent=5 // pred_check_branch
        %1985 = sbr.rel (%p1983) target = $region92
      $region91: #{two_stage_attention.2} parent=5 // pred_region
        %s1986 = ssub.s32 %s21, 2
        // Predicated region
        $region93: #{two_stage_attention.2} parent=91 // pred_check
          %p1987 = pneg %p328
        $region94: #{two_stage_attention.2} parent=91 // pred_check_branch
          %1989 = sbr.rel (%p1987) target = $region96
        $region95: #{two_stage_attention.2} parent=91 // pred_region
          %s1990 = smul.u32 4, %s27
          %p1991 = scmp.lt.s32.totalorder %s1990, 7
          %s1992 = scalar_select %p1991, %s1990, 7
          %s1993 = smul.addr %s1992, 8
          %s1994 = scalar_lea.vmem %s13, %s1993
        $region96: #{two_stage_attention.2} parent=91 // pred_fallthru
          _
      $region92: #{two_stage_attention.2} parent=5 // pred_fallthru
        _
    $region6: #{two_stage_attention.2} parent=1 // loop_footer
      %s25 = sadd.s32 1, %s21
    $region7: #{two_stage_attention.2} parent=1 // loop_footer_branch
      %20 = sbr.rel target = $region3
    $region8: #{two_stage_attention.2} parent=1 // loop_exit
      _
    %1995 = vsyncpa [#allocation3], 1
    %s1996 = scalar_lea.sflag [#allocation3], 1
    %1997 = vsyncpa %s1996, 1
    %1998 = vsyncpa [#allocation5], 1

// kernel: two_stage_attention.3
$region0: #{two_stage_attention.3}
  #allocation0 [shape = 'u32[]', space=smem, size = 0x4, offset = 0x4, fixed_abs, tag = 'smem constant byte address 0x4 - core index']
  #allocation1 [shape = 'u32[72,128]{1,0:T(1,128)}', space=vmem, size = 0x9000, scoped, tag = 'internal scratch']
  %s0 = inlined_call_operand.vmem [shape: f32[16,4,32], index: 0, kind: input, shape index: {}]
  %s1 = inlined_call_operand.vmem [shape: f32[8,5,32], index: 1, kind: input, shape index: {}]
  %s2 = inlined_call_operand.vmem [shape: bf16[32,32], index: 2, kind: input, shape index: {}]
  %s3 = inlined_call_operand.vmem [shape: f32[1,32], index: 3, kind: input, shape index: {}]
  %s4 = inlined_call_operand.vmem [shape: bf16[32,64], index: 4, kind: input, shape index: {}]
  %s5 = inlined_call_operand.vmem [shape: f32[1,64], index: 5, kind: input, shape index: {}]
  %s6 = inlined_call_operand.vmem [shape: bf16[32,32], index: 6, kind: input, shape index: {}]
  %s7 = inlined_call_operand.vmem [shape: f32[1,32], index: 7, kind: input, shape index: {}]
  %s8 = inlined_call_operand.vmem [shape: bf16[32,32], index: 8, kind: input, shape index: {}]
  %s9 = inlined_call_operand.vmem [shape: f32[1,32], index: 9, kind: input, shape index: {}]
  %s10 = inlined_call_operand.vmem [shape: bf16[32,64], index: 10, kind: input, shape index: {}]
  %s11 = inlined_call_operand.vmem [shape: f32[1,64], index: 11, kind: input, shape index: {}]
  %s12 = inlined_call_operand.vmem [shape: bf16[32,32], index: 12, kind: input, shape index: {}]
  %s13 = inlined_call_operand.vmem [shape: f32[1,32], index: 13, kind: input, shape index: {}]
  %s14 = inlined_call_operand.vmem [shape: f32[1,32], index: 14, kind: input, shape index: {}]
  %s15 = inlined_call_operand.vmem [shape: f32[1,32], index: 15, kind: input, shape index: {}]
  %s16 = inlined_call_operand.vmem [shape: bf16[32,128], index: 16, kind: input, shape index: {}]
  %s17 = inlined_call_operand.vmem [shape: f32[1,128], index: 17, kind: input, shape index: {}]
  %s18 = inlined_call_operand.vmem [shape: bf16[128,32], index: 18, kind: input, shape index: {}]
  %s19 = inlined_call_operand.vmem [shape: f32[1,32], index: 19, kind: input, shape index: {}]
  %s20 = inlined_call_operand.vmem [shape: f32[1,32], index: 20, kind: input, shape index: {}]
  %s21 = inlined_call_operand.vmem [shape: f32[1,32], index: 21, kind: input, shape index: {}]
  %s22 = inlined_call_operand.vmem [shape: f32[16,4,32], index: 22, kind: output, shape index: {}]
  %s23 = sld [smem:[#allocation0]]
  $region121: #{two_stage_attention.3} parent=0
    _
  %s25 = ssub.s32 1, %s23
  %s26 = scalar_select 0, %s25, %s23
  loop: start=0, step=1, limit=4
  $region2: #{two_stage_attention.3} parent=0 // loop_pre_header
    _
  $region3: #{two_stage_attention.3} parent=0 // loop_header
    %s28 = sphi 0, %s32
    %p29 = scmp.ge.s32.totalorder %s28, 4
    %s38 = sphi 0, %s40
    %s41 = sphi 0, %s38
    %s42 = sphi 0, %s41
    %s58 = sphi 0, %s42
    %s62 = sphi 0, %s62
    %s64 = sphi 0, %s62
    %s65 = sphi 0, %s64
    %s79 = sphi 0, %s65
    %s83 = sphi 0, %s83
    %s85 = sphi 0, %s83
    %s86 = sphi 0, %s85
    %s100 = sphi 0, %s86
    %s104 = sphi 0, %s104
    %s106 = sphi 0, %s104
    %s107 = sphi 0, %s106
    %s121 = sphi 0, %s107
    %s125 = sphi 0, %s125
    %s127 = sphi 0, %s125
    %s128 = sphi 0, %s127
    %s142 = sphi 0, %s128
    %s146 = sphi 0, %s146
    %s148 = sphi 0, %s146
    %s149 = sphi 0, %s148
    %s163 = sphi 0, %s149
    %s167 = sphi 0, %s167
    %s169 = sphi 0, %s167
    %s170 = sphi 0, %s169
    %s184 = sphi 0, %s170
    %s188 = sphi 0, %s188
    %s190 = sphi 0, %s188
    %s191 = sphi 0, %s190
    %s205 = sphi 0, %s191
    %s209 = sphi 0, %s209
    %s211 = sphi 0, %s209
    %s212 = sphi 0, %s211
    %s226 = sphi 0, %s212
    %s230 = sphi 0, %s230
    %s232 = sphi 0, %s230
    %s233 = sphi 0, %s232
    %s247 = sphi 0, %s233
    %s251 = sphi 0, %s251
    %s253 = sphi 0, %s251
    %s254 = sphi 0, %s253
    %s268 = sphi 0, %s254
    %s272 = sphi 0, %s272
    %s274 = sphi 0, %s272
    %s275 = sphi 0, %s274
    %s289 = sphi 0, %s275
    %s293 = sphi 0, %s293
    %s295 = sphi 0, %s293
    %s296 = sphi 0, %s295
    %s310 = sphi 0, %s296
    %s314 = sphi 0, %s314
    %s316 = sphi 0, %s314
    %s317 = sphi 0, %s316
    %s331 = sphi 0, %s317
    %s335 = sphi 0, %s335
    %s337 = sphi 0, %s335
    %s338 = sphi 0, %s337
    %s352 = sphi 0, %s338
    %s356 = sphi 0, %s356
    %s358 = sphi 0, %s356
    %s359 = sphi 0, %s358
    %s373 = sphi 0, %s359
    %s377 = sphi 0, %s377
    %s379 = sphi 0, %s377
    %s380 = sphi 0, %s379
    %s394 = sphi 0, %s380
    %s398 = sphi 0, %s398
    %s400 = sphi 0, %s398
    %s401 = sphi 0, %s400
    %s415 = sphi 0, %s401
    %s419 = sphi 0, %s419
    %s421 = sphi 0, %s419
    %s422 = sphi 0, %s421
    %s436 = sphi 0, %s422
    %s440 = sphi 0, %s440
    %s442 = sphi 0, %s440
    %s443 = sphi 0, %s442
    %s457 = sphi 0, %s443
    %s461 = sphi 0, %s461
    %s463 = sphi 0, %s461
    %s464 = sphi 0, %s463
    %s478 = sphi 0, %s464
    %s482 = sphi 0, %s482
    %s484 = sphi 0, %s482
    %s485 = sphi 0, %s484
    %s499 = sphi 0, %s485
    %s505 = sphi 0, %s507
    %s508 = sphi 0, %s505
    %s509 = sphi 0, %s508
    %s525 = sphi 0, %s509
  $region4: #{two_stage_attention.3} parent=0 // loop_header_branch
    %31 = sbr.rel (%p29) target = $region8
  $region5: #{two_stage_attention.3} parent=0 // loop_body
    %s33 = ssub.s32 %s28, 1
    %s34 = ssub.s32 %s28, 2
    %s35 = sadd.s32 %s28, 1
    %s36 = ssub.s32 %s28, %s35
    %p37 = scmp.eq.s32.totalorder %s36, 0
    %s39 = sadd.s32 %s38, 1
    %s40 = scalar_select %p37, %s38, %s39
    %p43 = pneg %p37
    %p44 = scmp.eq.s32.totalorder %s28, 1
    %p45 = por %p43, %p44
    %p46 = scmp.ne.s32.totalorder %s38, %s41
    %p47 = scmp.eq.s32.totalorder %s28, 0
    %p48 = por %p46, %p47
    %p49 = scmp.ne.s32.totalorder %s38, %s41
    %p50 = scmp.eq.s32.totalorder %s33, 1
    %p51 = por %p49, %p50
    %p52 = scmp.ne.s32.totalorder %s41, %s42
    %p53 = scmp.eq.s32.totalorder %s33, 0
    %p54 = por %p52, %p53
    %p55 = scmp.ne.s32.totalorder %s41, %s42
    %p56 = scmp.eq.s32.totalorder %s34, 1
    %p57 = por %p55, %p56
    %p59 = scmp.ne.s32.totalorder %s42, %s58
    %p60 = scmp.eq.s32.totalorder %s34, 0
    %p61 = por %p59, %p60
    %s63 = sadd.s32 %s62, 1
    %p66 = scmp.eq.s32.totalorder %s28, 1
    %p67 = scmp.ne.s32.totalorder %s62, %s64
    %p68 = scmp.eq.s32.totalorder %s28, 0
    %p69 = por %p67, %p68
    %p70 = scmp.ne.s32.totalorder %s62, %s64
    %p71 = scmp.eq.s32.totalorder %s33, 1
    %p72 = por %p70, %p71
    %p73 = scmp.ne.s32.totalorder %s64, %s65
    %p74 = scmp.eq.s32.totalorder %s33, 0
    %p75 = por %p73, %p74
    %p76 = scmp.ne.s32.totalorder %s64, %s65
    %p77 = scmp.eq.s32.totalorder %s34, 1
    %p78 = por %p76, %p77
    %p80 = scmp.ne.s32.totalorder %s65, %s79
    %p81 = scmp.eq.s32.totalorder %s34, 0
    %p82 = por %p80, %p81
    %s84 = sadd.s32 %s83, 1
    %p87 = scmp.eq.s32.totalorder %s28, 1
    %p88 = scmp.ne.s32.totalorder %s83, %s85
    %p89 = scmp.eq.s32.totalorder %s28, 0
    %p90 = por %p88, %p89
    %p91 = scmp.ne.s32.totalorder %s83, %s85
    %p92 = scmp.eq.s32.totalorder %s33, 1
    %p93 = por %p91, %p92
    %p94 = scmp.ne.s32.totalorder %s85, %s86
    %p95 = scmp.eq.s32.totalorder %s33, 0
    %p96 = por %p94, %p95
    %p97 = scmp.ne.s32.totalorder %s85, %s86
    %p98 = scmp.eq.s32.totalorder %s34, 1
    %p99 = por %p97, %p98
    %p101 = scmp.ne.s32.totalorder %s86, %s100
    %p102 = scmp.eq.s32.totalorder %s34, 0
    %p103 = por %p101, %p102
    %s105 = sadd.s32 %s104, 1
    %p108 = scmp.eq.s32.totalorder %s28, 1
    %p109 = scmp.ne.s32.totalorder %s104, %s106
    %p110 = scmp.eq.s32.totalorder %s28, 0
    %p111 = por %p109, %p110
    %p112 = scmp.ne.s32.totalorder %s104, %s106
    %p113 = scmp.eq.s32.totalorder %s33, 1
    %p114 = por %p112, %p113
    %p115 = scmp.ne.s32.totalorder %s106, %s107
    %p116 = scmp.eq.s32.totalorder %s33, 0
    %p117 = por %p115, %p116
    %p118 = scmp.ne.s32.totalorder %s106, %s107
    %p119 = scmp.eq.s32.totalorder %s34, 1
    %p120 = por %p118, %p119
    %p122 = scmp.ne.s32.totalorder %s107, %s121
    %p123 = scmp.eq.s32.totalorder %s34, 0
    %p124 = por %p122, %p123
    %s126 = sadd.s32 %s125, 1
    %p129 = scmp.eq.s32.totalorder %s28, 1
    %p130 = scmp.ne.s32.totalorder %s125, %s127
    %p131 = scmp.eq.s32.totalorder %s28, 0
    %p132 = por %p130, %p131
    %p133 = scmp.ne.s32.totalorder %s125, %s127
    %p134 = scmp.eq.s32.totalorder %s33, 1
    %p135 = por %p133, %p134
    %p136 = scmp.ne.s32.totalorder %s127, %s128
    %p137 = scmp.eq.s32.totalorder %s33, 0
    %p138 = por %p136, %p137
    %p139 = scmp.ne.s32.totalorder %s127, %s128
    %p140 = scmp.eq.s32.totalorder %s34, 1
    %p141 = por %p139, %p140
    %p143 = scmp.ne.s32.totalorder %s128, %s142
    %p144 = scmp.eq.s32.totalorder %s34, 0
    %p145 = por %p143, %p144
    %s147 = sadd.s32 %s146, 1
    %p150 = scmp.eq.s32.totalorder %s28, 1
    %p151 = scmp.ne.s32.totalorder %s146, %s148
    %p152 = scmp.eq.s32.totalorder %s28, 0
    %p153 = por %p151, %p152
    %p154 = scmp.ne.s32.totalorder %s146, %s148
    %p155 = scmp.eq.s32.totalorder %s33, 1
    %p156 = por %p154, %p155
    %p157 = scmp.ne.s32.totalorder %s148, %s149
    %p158 = scmp.eq.s32.totalorder %s33, 0
    %p159 = por %p157, %p158
    %p160 = scmp.ne.s32.totalorder %s148, %s149
    %p161 = scmp.eq.s32.totalorder %s34, 1
    %p162 = por %p160, %p161
    %p164 = scmp.ne.s32.totalorder %s149, %s163
    %p165 = scmp.eq.s32.totalorder %s34, 0
    %p166 = por %p164, %p165
    %s168 = sadd.s32 %s167, 1
    %p171 = scmp.eq.s32.totalorder %s28, 1
    %p172 = scmp.ne.s32.totalorder %s167, %s169
    %p173 = scmp.eq.s32.totalorder %s28, 0
    %p174 = por %p172, %p173
    %p175 = scmp.ne.s32.totalorder %s167, %s169
    %p176 = scmp.eq.s32.totalorder %s33, 1
    %p177 = por %p175, %p176
    %p178 = scmp.ne.s32.totalorder %s169, %s170
    %p179 = scmp.eq.s32.totalorder %s33, 0
    %p180 = por %p178, %p179
    %p181 = scmp.ne.s32.totalorder %s169, %s170
    %p182 = scmp.eq.s32.totalorder %s34, 1
    %p183 = por %p181, %p182
    %p185 = scmp.ne.s32.totalorder %s170, %s184
    %p186 = scmp.eq.s32.totalorder %s34, 0
    %p187 = por %p185, %p186
    %s189 = sadd.s32 %s188, 1
    %p192 = scmp.eq.s32.totalorder %s28, 1
    %p193 = scmp.ne.s32.totalorder %s188, %s190
    %p194 = scmp.eq.s32.totalorder %s28, 0
    %p195 = por %p193, %p194
    %p196 = scmp.ne.s32.totalorder %s188, %s190
    %p197 = scmp.eq.s32.totalorder %s33, 1
    %p198 = por %p196, %p197
    %p199 = scmp.ne.s32.totalorder %s190, %s191
    %p200 = scmp.eq.s32.totalorder %s33, 0
    %p201 = por %p199, %p200
    %p202 = scmp.ne.s32.totalorder %s190, %s191
    %p203 = scmp.eq.s32.totalorder %s34, 1
    %p204 = por %p202, %p203
    %p206 = scmp.ne.s32.totalorder %s191, %s205
    %p207 = scmp.eq.s32.totalorder %s34, 0
    %p208 = por %p206, %p207
    %s210 = sadd.s32 %s209, 1
    %p213 = scmp.eq.s32.totalorder %s28, 1
    %p214 = scmp.ne.s32.totalorder %s209, %s211
    %p215 = scmp.eq.s32.totalorder %s28, 0
    %p216 = por %p214, %p215
    %p217 = scmp.ne.s32.totalorder %s209, %s211
    %p218 = scmp.eq.s32.totalorder %s33, 1
    %p219 = por %p217, %p218
    %p220 = scmp.ne.s32.totalorder %s211, %s212
    %p221 = scmp.eq.s32.totalorder %s33, 0
    %p222 = por %p220, %p221
    %p223 = scmp.ne.s32.totalorder %s211, %s212
    %p224 = scmp.eq.s32.totalorder %s34, 1
    %p225 = por %p223, %p224
    %p227 = scmp.ne.s32.totalorder %s212, %s226
    %p228 = scmp.eq.s32.totalorder %s34, 0
    %p229 = por %p227, %p228
    %s231 = sadd.s32 %s230, 1
    %p234 = scmp.eq.s32.totalorder %s28, 1
    %p235 = scmp.ne.s32.totalorder %s230, %s232
    %p236 = scmp.eq.s32.totalorder %s28, 0
    %p237 = por %p235, %p236
    %p238 = scmp.ne.s32.totalorder %s230, %s232
    %p239 = scmp.eq.s32.totalorder %s33, 1
    %p240 = por %p238, %p239
    %p241 = scmp.ne.s32.totalorder %s232, %s233
    %p242 = scmp.eq.s32.totalorder %s33, 0
    %p243 = por %p241, %p242
    %p244 = scmp.ne.s32.totalorder %s232, %s233
    %p245 = scmp.eq.s32.totalorder %s34, 1
    %p246 = por %p244, %p245
    %p248 = scmp.ne.s32.totalorder %s233, %s247
    %p249 = scmp.eq.s32.totalorder %s34, 0
    %p250 = por %p248, %p249
    %s252 = sadd.s32 %s251, 1
    %p255 = scmp.eq.s32.totalorder %s28, 1
    %p256 = scmp.ne.s32.totalorder %s251, %s253
    %p257 = scmp.eq.s32.totalorder %s28, 0
    %p258 = por %p256, %p257
    %p259 = scmp.ne.s32.totalorder %s251, %s253
    %p260 = scmp.eq.s32.totalorder %s33, 1
    %p261 = por %p259, %p260
    %p262 = scmp.ne.s32.totalorder %s253, %s254
    %p263 = scmp.eq.s32.totalorder %s33, 0
    %p264 = por %p262, %p263
    %p265 = scmp.ne.s32.totalorder %s253, %s254
    %p266 = scmp.eq.s32.totalorder %s34, 1
    %p267 = por %p265, %p266
    %p269 = scmp.ne.s32.totalorder %s254, %s268
    %p270 = scmp.eq.s32.totalorder %s34, 0
    %p271 = por %p269, %p270
    %s273 = sadd.s32 %s272, 1
    %p276 = scmp.eq.s32.totalorder %s28, 1
    %p277 = scmp.ne.s32.totalorder %s272, %s274
    %p278 = scmp.eq.s32.totalorder %s28, 0
    %p279 = por %p277, %p278
    %p280 = scmp.ne.s32.totalorder %s272, %s274
    %p281 = scmp.eq.s32.totalorder %s33, 1
    %p282 = por %p280, %p281
    %p283 = scmp.ne.s32.totalorder %s274, %s275
    %p284 = scmp.eq.s32.totalorder %s33, 0
    %p285 = por %p283, %p284
    %p286 = scmp.ne.s32.totalorder %s274, %s275
    %p287 = scmp.eq.s32.totalorder %s34, 1
    %p288 = por %p286, %p287
    %p290 = scmp.ne.s32.totalorder %s275, %s289
    %p291 = scmp.eq.s32.totalorder %s34, 0
    %p292 = por %p290, %p291
    %s294 = sadd.s32 %s293, 1
    %p297 = scmp.eq.s32.totalorder %s28, 1
    %p298 = scmp.ne.s32.totalorder %s293, %s295
    %p299 = scmp.eq.s32.totalorder %s28, 0
    %p300 = por %p298, %p299
    %p301 = scmp.ne.s32.totalorder %s293, %s295
    %p302 = scmp.eq.s32.totalorder %s33, 1
    %p303 = por %p301, %p302
    %p304 = scmp.ne.s32.totalorder %s295, %s296
    %p305 = scmp.eq.s32.totalorder %s33, 0
    %p306 = por %p304, %p305
    %p307 = scmp.ne.s32.totalorder %s295, %s296
    %p308 = scmp.eq.s32.totalorder %s34, 1
    %p309 = por %p307, %p308
    %p311 = scmp.ne.s32.totalorder %s296, %s310
    %p312 = scmp.eq.s32.totalorder %s34, 0
    %p313 = por %p311, %p312
    %s315 = sadd.s32 %s314, 1
    %p318 = scmp.eq.s32.totalorder %s28, 1
    %p319 = scmp.ne.s32.totalorder %s314, %s316
    %p320 = scmp.eq.s32.totalorder %s28, 0
    %p321 = por %p319, %p320
    %p322 = scmp.ne.s32.totalorder %s314, %s316
    %p323 = scmp.eq.s32.totalorder %s33, 1
    %p324 = por %p322, %p323
    %p325 = scmp.ne.s32.totalorder %s316, %s317
    %p326 = scmp.eq.s32.totalorder %s33, 0
    %p327 = por %p325, %p326
    %p328 = scmp.ne.s32.totalorder %s316, %s317
    %p329 = scmp.eq.s32.totalorder %s34, 1
    %p330 = por %p328, %p329
    %p332 = scmp.ne.s32.totalorder %s317, %s331
    %p333 = scmp.eq.s32.totalorder %s34, 0
    %p334 = por %p332, %p333
    %s336 = sadd.s32 %s335, 1
    %p339 = scmp.eq.s32.totalorder %s28, 1
    %p340 = scmp.ne.s32.totalorder %s335, %s337
    %p341 = scmp.eq.s32.totalorder %s28, 0
    %p342 = por %p340, %p341
    %p343 = scmp.ne.s32.totalorder %s335, %s337
    %p344 = scmp.eq.s32.totalorder %s33, 1
    %p345 = por %p343, %p344
    %p346 = scmp.ne.s32.totalorder %s337, %s338
    %p347 = scmp.eq.s32.totalorder %s33, 0
    %p348 = por %p346, %p347
    %p349 = scmp.ne.s32.totalorder %s337, %s338
    %p350 = scmp.eq.s32.totalorder %s34, 1
    %p351 = por %p349, %p350
    %p353 = scmp.ne.s32.totalorder %s338, %s352
    %p354 = scmp.eq.s32.totalorder %s34, 0
    %p355 = por %p353, %p354
    %s357 = sadd.s32 %s356, 1
    %p360 = scmp.eq.s32.totalorder %s28, 1
    %p361 = scmp.ne.s32.totalorder %s356, %s358
    %p362 = scmp.eq.s32.totalorder %s28, 0
    %p363 = por %p361, %p362
    %p364 = scmp.ne.s32.totalorder %s356, %s358
    %p365 = scmp.eq.s32.totalorder %s33, 1
    %p366 = por %p364, %p365
    %p367 = scmp.ne.s32.totalorder %s358, %s359
    %p368 = scmp.eq.s32.totalorder %s33, 0
    %p369 = por %p367, %p368
    %p370 = scmp.ne.s32.totalorder %s358, %s359
    %p371 = scmp.eq.s32.totalorder %s34, 1
    %p372 = por %p370, %p371
    %p374 = scmp.ne.s32.totalorder %s359, %s373
    %p375 = scmp.eq.s32.totalorder %s34, 0
    %p376 = por %p374, %p375
    %s378 = sadd.s32 %s377, 1
    %p381 = scmp.eq.s32.totalorder %s28, 1
    %p382 = scmp.ne.s32.totalorder %s377, %s379
    %p383 = scmp.eq.s32.totalorder %s28, 0
    %p384 = por %p382, %p383
    %p385 = scmp.ne.s32.totalorder %s377, %s379
    %p386 = scmp.eq.s32.totalorder %s33, 1
    %p387 = por %p385, %p386
    %p388 = scmp.ne.s32.totalorder %s379, %s380
    %p389 = scmp.eq.s32.totalorder %s33, 0
    %p390 = por %p388, %p389
    %p391 = scmp.ne.s32.totalorder %s379, %s380
    %p392 = scmp.eq.s32.totalorder %s34, 1
    %p393 = por %p391, %p392
    %p395 = scmp.ne.s32.totalorder %s380, %s394
    %p396 = scmp.eq.s32.totalorder %s34, 0
    %p397 = por %p395, %p396
    %s399 = sadd.s32 %s398, 1
    %p402 = scmp.eq.s32.totalorder %s28, 1
    %p403 = scmp.ne.s32.totalorder %s398, %s400
    %p404 = scmp.eq.s32.totalorder %s28, 0
    %p405 = por %p403, %p404
    %p406 = scmp.ne.s32.totalorder %s398, %s400
    %p407 = scmp.eq.s32.totalorder %s33, 1
    %p408 = por %p406, %p407
    %p409 = scmp.ne.s32.totalorder %s400, %s401
    %p410 = scmp.eq.s32.totalorder %s33, 0
    %p411 = por %p409, %p410
    %p412 = scmp.ne.s32.totalorder %s400, %s401
    %p413 = scmp.eq.s32.totalorder %s34, 1
    %p414 = por %p412, %p413
    %p416 = scmp.ne.s32.totalorder %s401, %s415
    %p417 = scmp.eq.s32.totalorder %s34, 0
    %p418 = por %p416, %p417
    %s420 = sadd.s32 %s419, 1
    %p423 = scmp.eq.s32.totalorder %s28, 1
    %p424 = scmp.ne.s32.totalorder %s419, %s421
    %p425 = scmp.eq.s32.totalorder %s28, 0
    %p426 = por %p424, %p425
    %p427 = scmp.ne.s32.totalorder %s419, %s421
    %p428 = scmp.eq.s32.totalorder %s33, 1
    %p429 = por %p427, %p428
    %p430 = scmp.ne.s32.totalorder %s421, %s422
    %p431 = scmp.eq.s32.totalorder %s33, 0
    %p432 = por %p430, %p431
    %p433 = scmp.ne.s32.totalorder %s421, %s422
    %p434 = scmp.eq.s32.totalorder %s34, 1
    %p435 = por %p433, %p434
    %p437 = scmp.ne.s32.totalorder %s422, %s436
    %p438 = scmp.eq.s32.totalorder %s34, 0
    %p439 = por %p437, %p438
    %s441 = sadd.s32 %s440, 1
    %p444 = scmp.eq.s32.totalorder %s28, 1
    %p445 = scmp.ne.s32.totalorder %s440, %s442
    %p446 = scmp.eq.s32.totalorder %s28, 0
    %p447 = por %p445, %p446
    %p448 = scmp.ne.s32.totalorder %s440, %s442
    %p449 = scmp.eq.s32.totalorder %s33, 1
    %p450 = por %p448, %p449
    %p451 = scmp.ne.s32.totalorder %s442, %s443
    %p452 = scmp.eq.s32.totalorder %s33, 0
    %p453 = por %p451, %p452
    %p454 = scmp.ne.s32.totalorder %s442, %s443
    %p455 = scmp.eq.s32.totalorder %s34, 1
    %p456 = por %p454, %p455
    %p458 = scmp.ne.s32.totalorder %s443, %s457
    %p459 = scmp.eq.s32.totalorder %s34, 0
    %p460 = por %p458, %p459
    %s462 = sadd.s32 %s461, 1
    %p465 = scmp.eq.s32.totalorder %s28, 1
    %p466 = scmp.ne.s32.totalorder %s461, %s463
    %p467 = scmp.eq.s32.totalorder %s28, 0
    %p468 = por %p466, %p467
    %p469 = scmp.ne.s32.totalorder %s461, %s463
    %p470 = scmp.eq.s32.totalorder %s33, 1
    %p471 = por %p469, %p470
    %p472 = scmp.ne.s32.totalorder %s463, %s464
    %p473 = scmp.eq.s32.totalorder %s33, 0
    %p474 = por %p472, %p473
    %p475 = scmp.ne.s32.totalorder %s463, %s464
    %p476 = scmp.eq.s32.totalorder %s34, 1
    %p477 = por %p475, %p476
    %p479 = scmp.ne.s32.totalorder %s464, %s478
    %p480 = scmp.eq.s32.totalorder %s34, 0
    %p481 = por %p479, %p480
    %s483 = sadd.s32 %s482, 1
    %p486 = scmp.eq.s32.totalorder %s28, 1
    %p487 = scmp.ne.s32.totalorder %s482, %s484
    %p488 = scmp.eq.s32.totalorder %s28, 0
    %p489 = por %p487, %p488
    %p490 = scmp.ne.s32.totalorder %s482, %s484
    %p491 = scmp.eq.s32.totalorder %s33, 1
    %p492 = por %p490, %p491
    %p493 = scmp.ne.s32.totalorder %s484, %s485
    %p494 = scmp.eq.s32.totalorder %s33, 0
    %p495 = por %p493, %p494
    %p496 = scmp.ne.s32.totalorder %s484, %s485
    %p497 = scmp.eq.s32.totalorder %s34, 1
    %p498 = por %p496, %p497
    %p500 = scmp.ne.s32.totalorder %s485, %s499
    %p501 = scmp.eq.s32.totalorder %s34, 0
    %p502 = por %p500, %p501
    %s503 = ssub.s32 %s28, %s35
    %p504 = scmp.eq.s32.totalorder %s503, 0
    %s506 = sadd.s32 %s505, 1
    %s507 = scalar_select %p504, %s505, %s506
    %p510 = pneg %p504
    %p511 = scmp.eq.s32.totalorder %s28, 1
    %p512 = por %p510, %p511
    %p513 = scmp.ne.s32.totalorder %s505, %s508
    %p514 = scmp.eq.s32.totalorder %s28, 0
    %p515 = por %p513, %p514
    %p516 = scmp.ne.s32.totalorder %s505, %s508
    %p517 = scmp.eq.s32.totalorder %s33, 1
    %p518 = por %p516, %p517
    %p519 = scmp.ne.s32.totalorder %s508, %s509
    %p520 = scmp.eq.s32.totalorder %s33, 0
    %p521 = por %p519, %p520
    %p522 = scmp.ne.s32.totalorder %s508, %s509
    %p523 = scmp.eq.s32.totalorder %s34, 1
    %p524 = por %p522, %p523
    %p526 = scmp.ne.s32.totalorder %s509, %s525
    %p527 = scmp.eq.s32.totalorder %s34, 0
    %p528 = por %p526, %p527
    %p529 = scmp.le.s32.totalorder 1, %s28
    %p530 = scmp.lt.s32.totalorder %s28, 3
    %p531 = pnand %p529, %p530
    %p532 = pneg %p531
    // Predicated region
    $region9: #{two_stage_attention.3} parent=5 // pred_check
      _
    $region10: #{two_stage_attention.3} parent=5 // pred_check_branch
      %534 = sbr.rel (%p531) target = $region12
    $region11: #{two_stage_attention.3} parent=5 // pred_region
      %s535 = ssub.s32 %s28, 1
      // Predicated region
      $region13: #{two_stage_attention.3} parent=11 // pred_check
        %p536 = pneg %p75
      $region14: #{two_stage_attention.3} parent=11 // pred_check_branch
        %538 = sbr.rel (%p536) target = $region16
      $region15: #{two_stage_attention.3} parent=11 // pred_region
        _
      $region16: #{two_stage_attention.3} parent=11 // pred_fallthru
        _
      // Predicated region
      $region17: #{two_stage_attention.3} parent=11 // pred_check
        %p539 = pneg %p96
      $region18: #{two_stage_attention.3} parent=11 // pred_check_branch
        %541 = sbr.rel (%p539) target = $region20
      $region19: #{two_stage_attention.3} parent=11 // pred_region
        _
      $region20: #{two_stage_attention.3} parent=11 // pred_fallthru
        _
      // Predicated region
      $region21: #{two_stage_attention.3} parent=11 // pred_check
        %p542 = pneg %p117
      $region22: #{two_stage_attention.3} parent=11 // pred_check_branch
        %544 = sbr.rel (%p542) target = $region24
      $region23: #{two_stage_attention.3} parent=11 // pred_region
        _
      $region24: #{two_stage_attention.3} parent=11 // pred_fallthru
        _
      // Predicated region
      $region25: #{two_stage_attention.3} parent=11 // pred_check
        %p545 = pneg %p138
      $region26: #{two_stage_attention.3} parent=11 // pred_check_branch
        %547 = sbr.rel (%p545) target = $region28
      $region27: #{two_stage_attention.3} parent=11 // pred_region
        _
      $region28: #{two_stage_attention.3} parent=11 // pred_fallthru
        _
      // Predicated region
      $region29: #{two_stage_attention.3} parent=11 // pred_check
        %p548 = pneg %p159
      $region30: #{two_stage_attention.3} parent=11 // pred_check_branch
        %550 = sbr.rel (%p548) target = $region32
      $region31: #{two_stage_attention.3} parent=11 // pred_region
        _
      $region32: #{two_stage_attention.3} parent=11 // pred_fallthru
        _
      // Predicated region
      $region33: #{two_stage_attention.3} parent=11 // pred_check
        %p551 = pneg %p180
      $region34: #{two_stage_attention.3} parent=11 // pred_check_branch
        %553 = sbr.rel (%p551) target = $region36
      $region35: #{two_stage_attention.3} parent=11 // pred_region
        _
      $region36: #{two_stage_attention.3} parent=11 // pred_fallthru
        _
      // Predicated region
      $region37: #{two_stage_attention.3} parent=11 // pred_check
        %p554 = pneg %p201
      $region38: #{two_stage_attention.3} parent=11 // pred_check_branch
        %556 = sbr.rel (%p554) target = $region40
      $region39: #{two_stage_attention.3} parent=11 // pred_region
        _
      $region40: #{two_stage_attention.3} parent=11 // pred_fallthru
        _
      // Predicated region
      $region41: #{two_stage_attention.3} parent=11 // pred_check
        %p557 = pneg %p222
      $region42: #{two_stage_attention.3} parent=11 // pred_check_branch
        %559 = sbr.rel (%p557) target = $region44
      $region43: #{two_stage_attention.3} parent=11 // pred_region
        _
      $region44: #{two_stage_attention.3} parent=11 // pred_fallthru
        _
      // Predicated region
      $region45: #{two_stage_attention.3} parent=11 // pred_check
        %p560 = pneg %p243
      $region46: #{two_stage_attention.3} parent=11 // pred_check_branch
        %562 = sbr.rel (%p560) target = $region48
      $region47: #{two_stage_attention.3} parent=11 // pred_region
        _
      $region48: #{two_stage_attention.3} parent=11 // pred_fallthru
        _
      // Predicated region
      $region49: #{two_stage_attention.3} parent=11 // pred_check
        %p563 = pneg %p264
      $region50: #{two_stage_attention.3} parent=11 // pred_check_branch
        %565 = sbr.rel (%p563) target = $region52
      $region51: #{two_stage_attention.3} parent=11 // pred_region
        _
      $region52: #{two_stage_attention.3} parent=11 // pred_fallthru
        _
      // Predicated region
      $region53: #{two_stage_attention.3} parent=11 // pred_check
        %p566 = pneg %p285
      $region54: #{two_stage_attention.3} parent=11 // pred_check_branch
        %568 = sbr.rel (%p566) target = $region56
      $region55: #{two_stage_attention.3} parent=11 // pred_region
        _
      $region56: #{two_stage_attention.3} parent=11 // pred_fallthru
        _
      // Predicated region
      $region57: #{two_stage_attention.3} parent=11 // pred_check
        %p569 = pneg %p306
      $region58: #{two_stage_attention.3} parent=11 // pred_check_branch
        %571 = sbr.rel (%p569) target = $region60
      $region59: #{two_stage_attention.3} parent=11 // pred_region
        _
      $region60: #{two_stage_attention.3} parent=11 // pred_fallthru
        _
      // Predicated region
      $region61: #{two_stage_attention.3} parent=11 // pred_check
        %p572 = pneg %p327
      $region62: #{two_stage_attention.3} parent=11 // pred_check_branch
        %574 = sbr.rel (%p572) target = $region64
      $region63: #{two_stage_attention.3} parent=11 // pred_region
        _
      $region64: #{two_stage_attention.3} parent=11 // pred_fallthru
        _
      // Predicated region
      $region65: #{two_stage_attention.3} parent=11 // pred_check
        %p575 = pneg %p348
      $region66: #{two_stage_attention.3} parent=11 // pred_check_branch
        %577 = sbr.rel (%p575) target = $region68
      $region67: #{two_stage_attention.3} parent=11 // pred_region
        _
      $region68: #{two_stage_attention.3} parent=11 // pred_fallthru
        _
      // Predicated region
      $region69: #{two_stage_attention.3} parent=11 // pred_check
        %p578 = pneg %p369
      $region70: #{two_stage_attention.3} parent=11 // pred_check_branch
        %580 = sbr.rel (%p578) target = $region72
      $region71: #{two_stage_attention.3} parent=11 // pred_region
        _
      $region72: #{two_stage_attention.3} parent=11 // pred_fallthru
        _
      // Predicated region
      $region73: #{two_stage_attention.3} parent=11 // pred_check
        %p581 = pneg %p390
      $region74: #{two_stage_attention.3} parent=11 // pred_check_branch
        %583 = sbr.rel (%p581) target = $region76
      $region75: #{two_stage_attention.3} parent=11 // pred_region
        _
      $region76: #{two_stage_attention.3} parent=11 // pred_fallthru
        _
      // Predicated region
      $region77: #{two_stage_attention.3} parent=11 // pred_check
        %p584 = pneg %p411
      $region78: #{two_stage_attention.3} parent=11 // pred_check_branch
        %586 = sbr.rel (%p584) target = $region80
      $region79: #{two_stage_attention.3} parent=11 // pred_region
        _
      $region80: #{two_stage_attention.3} parent=11 // pred_fallthru
        _
      // Predicated region
      $region81: #{two_stage_attention.3} parent=11 // pred_check
        %p587 = pneg %p432
      $region82: #{two_stage_attention.3} parent=11 // pred_check_branch
        %589 = sbr.rel (%p587) target = $region84
      $region83: #{two_stage_attention.3} parent=11 // pred_region
        _
      $region84: #{two_stage_attention.3} parent=11 // pred_fallthru
        _
      // Predicated region
      $region85: #{two_stage_attention.3} parent=11 // pred_check
        %p590 = pneg %p453
      $region86: #{two_stage_attention.3} parent=11 // pred_check_branch
        %592 = sbr.rel (%p590) target = $region88
      $region87: #{two_stage_attention.3} parent=11 // pred_region
        _
      $region88: #{two_stage_attention.3} parent=11 // pred_fallthru
        _
      // Predicated region
      $region89: #{two_stage_attention.3} parent=11 // pred_check
        %p593 = pneg %p474
      $region90: #{two_stage_attention.3} parent=11 // pred_check_branch
        %595 = sbr.rel (%p593) target = $region92
      $region91: #{two_stage_attention.3} parent=11 // pred_region
        _
      $region92: #{two_stage_attention.3} parent=11 // pred_fallthru
        _
      // Predicated region
      $region93: #{two_stage_attention.3} parent=11 // pred_check
        %p596 = pneg %p495
      $region94: #{two_stage_attention.3} parent=11 // pred_check_branch
        %598 = sbr.rel (%p596) target = $region96
      $region95: #{two_stage_attention.3} parent=11 // pred_region
        _
      $region96: #{two_stage_attention.3} parent=11 // pred_fallthru
        _
    $region12: #{two_stage_attention.3} parent=5 // pred_fallthru
      _
    %p599 = scmp.lt.s32.totalorder %s28, 2
    // Predicated region
    $region97: #{two_stage_attention.3} parent=5 // pred_check
      %p600 = pneg %p599
    $region98: #{two_stage_attention.3} parent=5 // pred_check_branch
      %602 = sbr.rel (%p600) target = $region100
    $region99: #{two_stage_attention.3} parent=5 // pred_region
      // Predicated region
      $region101: #{two_stage_attention.3} parent=99 // pred_check
        %p603 = pneg %p48
      $region102: #{two_stage_attention.3} parent=99 // pred_check_branch
        %605 = sbr.rel (%p603) target = $region104
      $region103: #{two_stage_attention.3} parent=99 // pred_region
        %s606 = smul.u32 8, %s28
        %p607 = scmp.lt.s32.totalorder %s606, 15
        %s608 = scalar_select %p607, %s606, 15
        %s609 = smul.addr %s608, 4
        %s610 = scalar_lea.vmem %s0, %s609
        %s611 = smul.u32 8, %s28
      $region104: #{two_stage_attention.3} parent=99 // pred_fallthru
        _
    $region100: #{two_stage_attention.3} parent=5 // pred_fallthru
      _
    %p612 = scmp.le.s32.totalorder 1, %s28
    %p613 = scmp.lt.s32.totalorder %s28, 3
    %p614 = pnand %p612, %p613
    %p615 = pneg %p614
    // Predicated region
    $region105: #{two_stage_attention.3} parent=5 // pred_check
      _
    $region106: #{two_stage_attention.3} parent=5 // pred_check_branch
      %617 = sbr.rel (%p614) target = $region108
    $region107: #{two_stage_attention.3} parent=5 // pred_region
      %s618 = ssub.s32 %s28, 1
      %s619 = smul.u32 8, %s33
      %p620 = scmp.lt.s32.totalorder %s619, 15
      %s621 = scalar_select %p620, %s619, 15
      %s622 = smul.addr %s621, 4
      %s623 = scalar_lea.vmem %s0, %s622
      %p624 = pneg %p54
      %p625 = pneg %p51
      %p626 = pneg %p75
      %p627 = pneg %p72
      %p628 = pneg %p96
      %p629 = pneg %p93
      %p630 = pneg %p117
      %p631 = pneg %p114
      %p632 = pneg %p138
      %p633 = pneg %p135
      %p634 = pneg %p159
      %p635 = pneg %p156
      %p636 = pneg %p180
      %p637 = pneg %p177
      %p638 = pneg %p201
      %p639 = pneg %p198
      %p640 = pneg %p222
      %p641 = pneg %p219
      %p642 = pneg %p243
      %p643 = pneg %p240
      %p644 = pneg %p264
      %p645 = pneg %p261
      %p646 = pneg %p285
      %p647 = pneg %p282
      %p648 = pneg %p306
      %p649 = pneg %p303
      %p650 = pneg %p327
      %p651 = pneg %p324
      %p652 = pneg %p348
      %p653 = pneg %p345
      %p654 = pneg %p369
      %p655 = pneg %p366
      %p656 = pneg %p390
      %p657 = pneg %p387
      %p658 = pneg %p411
      %p659 = pneg %p408
      %p660 = pneg %p432
      %p661 = pneg %p429
      %p662 = pneg %p453
      %p663 = pneg %p450
      %p664 = pneg %p474
      %p665 = pneg %p471
      %p666 = pneg %p495
      %p667 = pneg %p492
      %p668 = pneg %p521
      %p669 = pneg %p518
      %s670 = smul.u32 8, %s33
      %p671 = scmp.lt.s32.totalorder %s670, 15
      %s672 = scalar_select %p671, %s670, 15
      %s673 = smul.addr %s672, 4
      %s674 = scalar_lea.vmem %s22, %s673
      %s675 = smul.u32 8, %s33
      %p676 = scmp.lt.s32.totalorder %s675, 15
      %s677 = scalar_select %p676, %s675, 15
      %s678 = smul.addr %s677, 4
      %s679 = scalar_lea.vmem %s0, %s678
      %s680 = smul.u32 8, %s33
      %s681 = smul.u32 8, %s33
      %p682 = scmp.lt.s32.totalorder %s681, 15
      %s683 = scalar_select %p682, %s681, 15
      %s684 = smul.addr %s683, 4
      %s685 = scalar_lea.vmem %s22, %s684
      %s686 = smul.u32 8, %s33
      %v688 = vld [vmem:[%s679] sm:$0xf]
      %v689 = vld [vmem:[%s679 + $0x4] sm:$0xf]
      %v690 = vld [vmem:[%s679 + $0x8] sm:$0xf]
      %v691 = vld [vmem:[%s679 + $0xc] sm:$0xf]
      %v692 = vld [vmem:[%s679 + $0x10] sm:$0xf]
      %v693 = vld [vmem:[%s679 + $0x14] sm:$0xf]
      %v694 = vld [vmem:[%s679 + $0x18] sm:$0xf]
      %v695 = vld [vmem:[%s679 + $0x1c] sm:$0xf]
      %v696 = vld [vmem:[%s1] sm:$0x1f]
      %v697 = vld [vmem:[%s1 + $0x8] sm:$0x1f]
      %v698 = vld [vmem:[%s1 + $0x10] sm:$0x1f]
      %v699 = vld [vmem:[%s1 + $0x18] sm:$0x1f]
      %v700 = vld [vmem:[%s1 + $0x20] sm:$0x1f]
      %v701 = vld [vmem:[%s1 + $0x28] sm:$0x1f]
      %v702 = vld [vmem:[%s1 + $0x30] sm:$0x1f]
      %v703 = vld [vmem:[%s1 + $0x38] sm:$0x1f]
      %712 = vst [vmem:[#allocation1] ss:$2 sm:$0xff] %v688
      %s713 = scalar_lea.vmem [#allocation1], 1
      %714 = vst [vmem:[%s713] ss:$2 sm:$0xff] %v689
      %s715 = scalar_lea.vmem [#allocation1], 16
      %716 = vst [vmem:[%s715] ss:$2 sm:$0xff] %v690
      %s717 = scalar_lea.vmem [#allocation1], 17
      %718 = vst [vmem:[%s717] ss:$2 sm:$0xff] %v691
      %s719 = scalar_lea.vmem [#allocation1], 32
      %720 = vst [vmem:[%s719] ss:$2 sm:$0xff] %v692
      %s721 = scalar_lea.vmem [#allocation1], 33
      %722 = vst [vmem:[%s721] ss:$2 sm:$0xff] %v693
      %s723 = scalar_lea.vmem [#allocation1], 48
      %724 = vst [vmem:[%s723] ss:$2 sm:$0xff] %v694
      %s725 = scalar_lea.vmem [#allocation1], 49
      %726 = vst [vmem:[%s725] ss:$2 sm:$0xff] %v695
      %v727 = vld.sshfl [vmem:[#allocation1] sm:$0xff pattern:$0x75316420]
      %v728 = vld.sshfl [vmem:[#allocation1 + $0x10] sm:$0xff pattern:$0x75316420]
      %v729 = vld.sshfl [vmem:[#allocation1 + $0x20] sm:$0xff pattern:$0x75316420]
      %v730 = vld.sshfl [vmem:[#allocation1 + $0x30] sm:$0xff pattern:$0x75316420]
      %v735 = vpack.c.bf16 %v728, %v727
      %v736 = vpack.c.bf16 %v730, %v729
      %v745 = vrot.slane %v696, 1
      %v746 = vrot.slane %v696, 2
      %v747 = vrot.slane %v696, 3
      %v748 = vrot.slane %v696, 4
      %v749 = vrot.slane %v697, 1
      %v750 = vrot.slane %v697, 2
      %v751 = vrot.slane %v697, 3
      %v752 = vrot.slane %v697, 4
      %v753 = vrot.slane %v698, 1
      %v754 = vrot.slane %v698, 2
      %v755 = vrot.slane %v698, 3
      %v756 = vrot.slane %v698, 4
      %v757 = vrot.slane %v699, 1
      %v758 = vrot.slane %v699, 2
      %v759 = vrot.slane %v699, 3
      %v760 = vrot.slane %v699, 4
      %v761 = vrot.slane %v700, 1
      %v762 = vrot.slane %v700, 2
      %v763 = vrot.slane %v700, 3
      %v764 = vrot.slane %v700, 4
      %v765 = vrot.slane %v701, 1
      %v766 = vrot.slane %v701, 2
      %v767 = vrot.slane %v701, 3
      %v768 = vrot.slane %v701, 4
      %v769 = vrot.slane %v702, 1
      %v770 = vrot.slane %v702, 2
      %v771 = vrot.slane %v702, 3
      %v772 = vrot.slane %v702, 4
      %v773 = vrot.slane %v703, 1
      %v774 = vrot.slane %v703, 2
      %v775 = vrot.slane %v703, 3
      %v776 = vrot.slane %v703, 4
      %777 = vst [vmem:[#allocation1] ss:$9 sm:$0xff] %v696
      %s778 = scalar_lea.vmem [#allocation1], 1
      %779 = vst [vmem:[%s778] ss:$9 sm:$0xff] %v745
      %s780 = scalar_lea.vmem [#allocation1], 2
      %781 = vst [vmem:[%s780] ss:$9 sm:$0xff] %v746
      %s782 = scalar_lea.vmem [#allocation1], 3
      %783 = vst [vmem:[%s782] ss:$9 sm:$0xff] %v747
      %s784 = scalar_lea.vmem [#allocation1], 4
      %785 = vst [vmem:[%s784] ss:$9 sm:$0xff] %v748
      %s786 = scalar_lea.vmem [#allocation1], 5
      %787 = vst [vmem:[%s786] ss:$9 sm:$0xff] %v697
      %s788 = scalar_lea.vmem [#allocation1], 6
      %789 = vst [vmem:[%s788] ss:$9 sm:$0xff] %v749
      %s790 = scalar_lea.vmem [#allocation1], 7
      %791 = vst [vmem:[%s790] ss:$9 sm:$0xff] %v750
      %v792 = vld [vmem:[#allocation1] sm:$0xff]
      %793 = vst [vmem:[#allocation1] ss:$9 sm:$0xff] %v751
      %794 = vst [vmem:[%s778] ss:$9 sm:$0xff] %v752
      %795 = vst [vmem:[%s780] ss:$9 sm:$0xff] %v698
      %796 = vst [vmem:[%s782] ss:$9 sm:$0xff] %v753
      %797 = vst [vmem:[%s784] ss:$9 sm:$0xff] %v754
      %798 = vst [vmem:[%s786] ss:$9 sm:$0xff] %v755
      %799 = vst [vmem:[%s788] ss:$9 sm:$0xff] %v756
      %800 = vst [vmem:[%s790] ss:$9 sm:$0xff] %v699
      %v801 = vld [vmem:[#allocation1] sm:$0xff]
      %802 = vst [vmem:[#allocation1] ss:$9 sm:$0xff] %v757
      %803 = vst [vmem:[%s778] ss:$9 sm:$0xff] %v758
      %804 = vst [vmem:[%s780] ss:$9 sm:$0xff] %v759
      %805 = vst [vmem:[%s782] ss:$9 sm:$0xff] %v760
      %806 = vst [vmem:[%s784] ss:$9 sm:$0xff] %v700
      %807 = vst [vmem:[%s786] ss:$9 sm:$0xff] %v761
      %808 = vst [vmem:[%s788] ss:$9 sm:$0xff] %v762
      %809 = vst [vmem:[%s790] ss:$9 sm:$0xff] %v763
      %v810 = vld [vmem:[#allocation1] sm:$0xff]
      %811 = vst [vmem:[#allocation1] ss:$9 sm:$0xff] %v764
      %812 = vst [vmem:[%s778] ss:$9 sm:$0xff] %v701
      %813 = vst [vmem:[%s780] ss:$9 sm:$0xff] %v765
      %814 = vst [vmem:[%s782] ss:$9 sm:$0xff] %v766
      %815 = vst [vmem:[%s784] ss:$9 sm:$0xff] %v767
      %816 = vst [vmem:[%s786] ss:$9 sm:$0xff] %v768
      %817 = vst [vmem:[%s788] ss:$9 sm:$0xff] %v702
      %818 = vst [vmem:[%s790] ss:$9 sm:$0xff] %v769
      %v819 = vld [vmem:[#allocation1] sm:$0xff]
      %820 = vst [vmem:[#allocation1] ss:$9 sm:$0xff] %v770
      %821 = vst [vmem:[%s778] ss:$9 sm:$0xff] %v771
      %822 = vst [vmem:[%s780] ss:$9 sm:$0xff] %v772
      %823 = vst [vmem:[%s782] ss:$9 sm:$0xff] %v703
      %824 = vst [vmem:[%s784] ss:$9 sm:$0xff] %v773
      %825 = vst [vmem:[%s786] ss:$9 sm:$0xff] %v774
      %826 = vst [vmem:[%s788] ss:$9 sm:$0xff] %v775
      %827 = vst [vmem:[%s790] ss:$9 sm:$0xff] %v776
      %v828 = vld [vmem:[#allocation1] sm:$0xff]
      %v834 = vpack.c.bf16 %v801, %v792
      %v835 = vpack.c.bf16 %v819, %v810
      %v836 = vpack.c.bf16 %v828, %v828
      %v837 = vld [vmem:[%s2] sm:$0xf]
      %v838 = vld [vmem:[%s2 + $0x4] sm:$0xf]
      %v839 = vld [vmem:[%s2 + $0x8] sm:$0xf]
      %v840 = vld [vmem:[%s2 + $0xc] sm:$0xf]
      %v841 = vld [vmem:[%s3] sm:$0x1]
      %v843 = vperm.slane %v841, 0
      %v849 = vunpack.c.l.b16 %v837
      %v850 = vunpack.c.l.b16 %v838
      %v851 = vunpack.c.l.b16 %v839
      %v852 = vunpack.c.l.b16 %v840
      %v853 = vpack.c.b16 %v850, %v849
      %v854 = vpack.c.b16 %v852, %v851
      %vm857 = vcmask 261120
      %v859 = vsel %vm857, %v834, 0
      %v862 = vsel %vm857, %v835, 0
      %v865 = vsel %vm857, %v836, 0
      %867 = vmatpush.bf16.msra.mxu0 0
      %868 = vmatpush.bf16.msra.mxu0 0
      %869 = vmatpush.bf16.msra.mxu0 0
      %870 = vmatpush.bf16.msra.mxu0 0
      %871 = vmatpush.bf16.msra.mxu0 0
      %872 = vmatpush.bf16.msra.mxu0 0
      %873 = vmatpush.bf16.msra.mxu0 %v854
      %874 = vmatpush.bf16.msra.mxu0 %v853
      %875 = vmatmul.bf16.gmra.mxu0 %v859
      %v876 = vpop.f32.mrf.mxu0
      %v877 = vadd.f32 %v843, %v876
      %v878 = vpop.f32.mrf.mxu0
      %v879 = vadd.f32 %v843, %v878
      %880 = vmatmul.bf16.gmra.mxu0 %v862
      %v881 = vpop.f32.mrf.mxu0
      %v882 = vadd.f32 %v843, %v881
      %v883 = vpop.f32.mrf.mxu0
      %v884 = vadd.f32 %v843, %v883
      %885 = vmatmul.bf16.gmra.mxu0 %v865
      %v886 = vpop.f32.mrf.mxu0
      %v887 = vadd.f32 %v843, %v886
      %v888 = vpop.f32.mrf.mxu0
      %889 = vdwg.mxu0
      %v895 = vrot.slane %v877, 1
      %v896 = vrot.slane %v877, 2
      %v897 = vrot.slane %v877, 3
      %v898 = vrot.slane %v877, 4
      %v899 = vrot.slane %v877, 5
      %v900 = vrot.slane %v877, 6
      %v901 = vrot.slane %v877, 7
      %v902 = vrot.slane %v879, 1
      %v903 = vrot.slane %v879, 2
      %v904 = vrot.slane %v879, 3
      %v905 = vrot.slane %v879, 4
      %v906 = vrot.slane %v879, 5
      %v907 = vrot.slane %v879, 6
      %v908 = vrot.slane %v879, 7
      %v909 = vrot.slane %v882, 1
      %v910 = vrot.slane %v882, 2
      %v911 = vrot.slane %v882, 3
      %v912 = vrot.slane %v882, 4
      %v913 = vrot.slane %v882, 5
      %v914 = vrot.slane %v882, 6
      %v915 = vrot.slane %v882, 7
      %v916 = vrot.slane %v884, 1
      %v917 = vrot.slane %v884, 2
      %v918 = vrot.slane %v884, 3
      %v919 = vrot.slane %v884, 4
      %v920 = vrot.slane %v884, 5
      %v921 = vrot.slane %v884, 6
      %v922 = vrot.slane %v884, 7
      %v923 = vrot.slane %v887, 1
      %v924 = vrot.slane %v887, 2
      %v925 = vrot.slane %v887, 3
      %v926 = vrot.slane %v887, 4
      %v927 = vrot.slane %v887, 5
      %v928 = vrot.slane %v887, 6
      %v929 = vrot.slane %v887, 7
      %v930 = vld [vmem:[%s4] sm:$0xf]
      %v931 = vld [vmem:[%s4 + $0x4] sm:$0xf]
      %v932 = vld [vmem:[%s4 + $0x8] sm:$0xf]
      %v933 = vld [vmem:[%s4 + $0xc] sm:$0xf]
      %v934 = vld [vmem:[%s5] sm:$0x1]
      %v936 = vperm.slane %v934, 0
      %v942 = vunpack.c.l.b16 %v930
      %v943 = vunpack.c.l.b16 %v931
      %v944 = vunpack.c.l.b16 %v932
      %v945 = vunpack.c.l.b16 %v933
      %v946 = vpack.c.b16 %v943, %v942
      %v947 = vpack.c.b16 %v945, %v944
      %v951 = vsel %vm857, %v735, 0
      %v954 = vsel %vm857, %v736, 0
      %956 = vmatpush.bf16.msra.mxu0 0
      %957 = vmatpush.bf16.msra.mxu0 0
      %958 = vmatpush.bf16.msra.mxu0 0
      %959 = vmatpush.bf16.msra.mxu0 0
      %960 = vmatpush.bf16.msra.mxu0 0
      %961 = vmatpush.bf16.msra.mxu0 0
      %962 = vmatpush.bf16.msra.mxu0 %v947
      %963 = vmatpush.bf16.msra.mxu0 %v946
      %964 = vmatmul.bf16.gmra.mxu0 %v951
      %v965 = vpop.f32.mrf.mxu0
      %v966 = vadd.f32 %v936, %v965
      %v967 = vpop.f32.mrf.mxu0
      %v968 = vadd.f32 %v936, %v967
      %969 = vmatmul.bf16.gmra.mxu0 %v954
      %v970 = vpop.f32.mrf.mxu0
      %v971 = vadd.f32 %v936, %v970
      %v972 = vpop.f32.mrf.mxu0
      %v973 = vadd.f32 %v936, %v972
      %974 = vdwg.mxu0
      %v979 = vrot.slane %v966, 4
      %v980 = vrot.slane %v968, 4
      %v981 = vrot.slane %v971, 4
      %v982 = vrot.slane %v973, 4
      %v987 = vld [vmem:[%s6] sm:$0xf]
      %v988 = vld [vmem:[%s6 + $0x4] sm:$0xf]
      %v989 = vld [vmem:[%s6 + $0x8] sm:$0xf]
      %v990 = vld [vmem:[%s6 + $0xc] sm:$0xf]
      %v991 = vld [vmem:[%s7] sm:$0x1]
      %992 = vst [vmem:[#allocation1] ss:$9 sm:$0xff] %v877
      %s993 = scalar_lea.vmem [#allocation1], 1
      %994 = vst [vmem:[%s993] ss:$9 sm:$0xff] %v895
      %s995 = scalar_lea.vmem [#allocation1], 2
      %996 = vst [vmem:[%s995] ss:$9 sm:$0xff] %v896
      %s997 = scalar_lea.vmem [#allocation1], 3
      %998 = vst [vmem:[%s997] ss:$9 sm:$0xff] %v897
      %s999 = scalar_lea.vmem [#allocation1], 4
      %1000 = vst [vmem:[%s999] ss:$9 sm:$0xff] %v898
      %v1001 = vld [vmem:[#allocation1] sm:$0xff]
      %1002 = vst [vmem:[#allocation1] ss:$9 sm:$0xff] %v899
      %1003 = vst [vmem:[%s993] ss:$9 sm:$0xff] %v900
      %1004 = vst [vmem:[%s995] ss:$9 sm:$0xff] %v901
      %1005 = vst [vmem:[%s997] ss:$9 sm:$0xff] %v879
      %1006 = vst [vmem:[%s999] ss:$9 sm:$0xff] %v902
      %v1007 = vld [vmem:[#allocation1] sm:$0xff]
      %1008 = vst [vmem:[#allocation1] ss:$9 sm:$0xff] %v903
      %1009 = vst [vmem:[%s993] ss:$9 sm:$0xff] %v904
      %1010 = vst [vmem:[%s995] ss:$9 sm:$0xff] %v905
      %1011 = vst [vmem:[%s997] ss:$9 sm:$0xff] %v906
      %1012 = vst [vmem:[%s999] ss:$9 sm:$0xff] %v907
      %v1013 = vld [vmem:[#allocation1] sm:$0xff]
      %1014 = vst [vmem:[#allocation1] ss:$9 sm:$0xff] %v908
      %1015 = vst [vmem:[%s993] ss:$9 sm:$0xff] %v882
      %1016 = vst [vmem:[%s995] ss:$9 sm:$0xff] %v909
      %1017 = vst [vmem:[%s997] ss:$9 sm:$0xff] %v910
      %1018 = vst [vmem:[%s999] ss:$9 sm:$0xff] %v911
      %v1019 = vld [vmem:[#allocation1] sm:$0xff]
      %1020 = vst [vmem:[#allocation1] ss:$9 sm:$0xff] %v912
      %1021 = vst [vmem:[%s993] ss:$9 sm:$0xff] %v913
      %1022 = vst [vmem:[%s995] ss:$9 sm:$0xff] %v914
      %1023 = vst [vmem:[%s997] ss:$9 sm:$0xff] %v915
      %1024 = vst [vmem:[%s999] ss:$9 sm:$0xff] %v884
      %v1025 = vld [vmem:[#allocation1] sm:$0xff]
      %1026 = vst [vmem:[#allocation1] ss:$9 sm:$0xff] %v916
      %1027 = vst [vmem:[%s993] ss:$9 sm:$0xff] %v917
      %1028 = vst [vmem:[%s995] ss:$9 sm:$0xff] %v918
      %1029 = vst [vmem:[%s997] ss:$9 sm:$0xff] %v919
      %1030 = vst [vmem:[%s999] ss:$9 sm:$0xff] %v920
      %v1031 = vld [vmem:[#allocation1] sm:$0xff]
      %1032 = vst [vmem:[#allocation1] ss:$9 sm:$0xff] %v921
      %1033 = vst [vmem:[%s993] ss:$9 sm:$0xff] %v922
      %1034 = vst [vmem:[%s995] ss:$9 sm:$0xff] %v887
      %1035 = vst [vmem:[%s997] ss:$9 sm:$0xff] %v923
      %1036 = vst [vmem:[%s999] ss:$9 sm:$0xff] %v924
      %v1037 = vld [vmem:[#allocation1] sm:$0xff]
      %1038 = vst [vmem:[#allocation1] ss:$9 sm:$0xff] %v925
      %1039 = vst [vmem:[%s993] ss:$9 sm:$0xff] %v926
      %1040 = vst [vmem:[%s995] ss:$9 sm:$0xff] %v927
      %1041 = vst [vmem:[%s997] ss:$9 sm:$0xff] %v928
      %1042 = vst [vmem:[%s999] ss:$9 sm:$0xff] %v929
      %v1043 = vld [vmem:[#allocation1] sm:$0xff]
      %v1052 = vpack.c.bf16 %v1001, %v1001
      %v1053 = vpack.c.bf16 %v1007, %v1007
      %v1054 = vpack.c.bf16 %v1013, %v1013
      %v1055 = vpack.c.bf16 %v1019, %v1019
      %v1056 = vpack.c.bf16 %v1025, %v1025
      %v1057 = vpack.c.bf16 %v1031, %v1031
      %v1058 = vpack.c.bf16 %v1037, %v1037
      %v1059 = vpack.c.bf16 %v1043, %v1043
      %v1060 = vpack.c.bf16 %v966, %v966
      %v1061 = vpack.c.bf16 %v979, %v979
      %v1062 = vpack.c.bf16 %v968, %v968
      %v1063 = vpack.c.bf16 %v980, %v980
      %v1064 = vpack.c.bf16 %v971, %v971
      %v1065 = vpack.c.bf16 %v981, %v981
      %v1066 = vpack.c.bf16 %v973, %v973
      %v1067 = vpack.c.bf16 %v982, %v982
      %vm1068 = vcmask 64512
      %v1070 = vsel %vm1068, %v1052, 0
      %v1073 = vsel %vm1068, %v1060, 0
      %1075 = vmatpush.bf16.xpose.msra.mxu0 0
      %1076 = vmatpush.bf16.xpose.msra.mxu0 0
      %1077 = vmatpush.bf16.xpose.msra.mxu0 0
      %1078 = vmatpush.bf16.xpose.msra.mxu0 0
      %1079 = vmatpush.bf16.xpose.msra.mxu0 0
      %1080 = vmatpush.bf16.xpose.msra.mxu0 0
      %1081 = vmatpush.bf16.xpose.msra.mxu0 0
      %1082 = vmatpush.bf16.xpose.msra.mxu0 %v1073
      %1083 = vmatmul.bf16.gmra.mxu0 %v1070
      %v1084 = vpop.f32.mrf.mxu0
      %v1085 = vadd.f32 0.0, %v1084
      %v1086 = vpop.f32.mrf.mxu0
      %1087 = vdwg.mxu0
      %v1089 = vsel %vm1068, %v1053, 0
      %v1092 = vsel %vm1068, %v1061, 0
      %1094 = vmatpush.bf16.xpose.msra.mxu0 0
      %1095 = vmatpush.bf16.xpose.msra.mxu0 0
      %1096 = vmatpush.bf16.xpose.msra.mxu0 0
      %1097 = vmatpush.bf16.xpose.msra.mxu0 0
      %1098 = vmatpush.bf16.xpose.msra.mxu0 0
      %1099 = vmatpush.bf16.xpose.msra.mxu0 0
      %1100 = vmatpush.bf16.xpose.msra.mxu0 0
      %1101 = vmatpush.bf16.xpose.msra.mxu0 %v1092
      %1102 = vmatmul.bf16.gmra.mxu0 %v1089
      %v1103 = vpop.f32.mrf.mxu0
      %v1104 = vadd.f32 0.0, %v1103
      %v1105 = vpop.f32.mrf.mxu0
      %1106 = vdwg.mxu0
      %v1108 = vsel %vm1068, %v1054, 0
      %v1111 = vsel %vm1068, %v1062, 0
      %1113 = vmatpush.bf16.xpose.msra.mxu0 0
      %1114 = vmatpush.bf16.xpose.msra.mxu0 0
      %1115 = vmatpush.bf16.xpose.msra.mxu0 0
      %1116 = vmatpush.bf16.xpose.msra.mxu0 0
      %1117 = vmatpush.bf16.xpose.msra.mxu0 0
      %1118 = vmatpush.bf16.xpose.msra.mxu0 0
      %1119 = vmatpush.bf16.xpose.msra.mxu0 0
      %1120 = vmatpush.bf16.xpose.msra.mxu0 %v1111
      %1121 = vmatmul.bf16.gmra.mxu0 %v1108
      %v1122 = vpop.f32.mrf.mxu0
      %v1123 = vadd.f32 0.0, %v1122
      %v1124 = vpop.f32.mrf.mxu0
      %1125 = vdwg.mxu0
      %v1127 = vsel %vm1068, %v1055, 0
      %v1130 = vsel %vm1068, %v1063, 0
      %1132 = vmatpush.bf16.xpose.msra.mxu0 0
      %1133 = vmatpush.bf16.xpose.msra.mxu0 0
      %1134 = vmatpush.bf16.xpose.msra.mxu0 0
      %1135 = vmatpush.bf16.xpose.msra.mxu0 0
      %1136 = vmatpush.bf16.xpose.msra.mxu0 0
      %1137 = vmatpush.bf16.xpose.msra.mxu0 0
      %1138 = vmatpush.bf16.xpose.msra.mxu0 0
      %1139 = vmatpush.bf16.xpose.msra.mxu0 %v1130
      %1140 = vmatmul.bf16.gmra.mxu0 %v1127
      %v1141 = vpop.f32.mrf.mxu0
      %v1142 = vadd.f32 0.0, %v1141
      %v1143 = vpop.f32.mrf.mxu0
      %1144 = vdwg.mxu0
      %v1146 = vsel %vm1068, %v1056, 0
      %v1149 = vsel %vm1068, %v1064, 0
      %1151 = vmatpush.bf16.xpose.msra.mxu0 0
      %1152 = vmatpush.bf16.xpose.msra.mxu0 0
      %1153 = vmatpush.bf16.xpose.msra.mxu0 0
      %1154 = vmatpush.bf16.xpose.msra.mxu0 0
      %1155 = vmatpush.bf16.xpose.msra.mxu0 0
      %1156 = vmatpush.bf16.xpose.msra.mxu0 0
      %1157 = vmatpush.bf16.xpose.msra.mxu0 0
      %1158 = vmatpush.bf16.xpose.msra.mxu0 %v1149
      %1159 = vmatmul.bf16.gmra.mxu0 %v1146
      %v1160 = vpop.f32.mrf.mxu0
      %v1161 = vadd.f32 0.0, %v1160
      %v1162 = vpop.f32.mrf.mxu0
      %1163 = vdwg.mxu0
      %v1165 = vsel %vm1068, %v1057, 0
      %v1168 = vsel %vm1068, %v1065, 0
      %1170 = vmatpush.bf16.xpose.msra.mxu0 0
      %1171 = vmatpush.bf16.xpose.msra.mxu0 0
      %1172 = vmatpush.bf16.xpose.msra.mxu0 0
      %1173 = vmatpush.bf16.xpose.msra.mxu0 0
      %1174 = vmatpush.bf16.xpose.msra.mxu0 0
      %1175 = vmatpush.bf16.xpose.msra.mxu0 0
      %1176 = vmatpush.bf16.xpose.msra.mxu0 0
      %1177 = vmatpush.bf16.xpose.msra.mxu0 %v1168
      %1178 = vmatmul.bf16.gmra.mxu0 %v1165
      %v1179 = vpop.f32.mrf.mxu0
      %v1180 = vadd.f32 0.0, %v1179
      %v1181 = vpop.f32.mrf.mxu0
      %1182 = vdwg.mxu0
      %v1184 = vsel %vm1068, %v1058, 0
      %v1187 = vsel %vm1068, %v1066, 0
      %1189 = vmatpush.bf16.xpose.msra.mxu0 0
      %1190 = vmatpush.bf16.xpose.msra.mxu0 0
      %1191 = vmatpush.bf16.xpose.msra.mxu0 0
      %1192 = vmatpush.bf16.xpose.msra.mxu0 0
      %1193 = vmatpush.bf16.xpose.msra.mxu0 0
      %1194 = vmatpush.bf16.xpose.msra.mxu0 0
      %1195 = vmatpush.bf16.xpose.msra.mxu0 0
      %1196 = vmatpush.bf16.xpose.msra.mxu0 %v1187
      %1197 = vmatmul.bf16.gmra.mxu0 %v1184
      %v1198 = vpop.f32.mrf.mxu0
      %v1199 = vadd.f32 0.0, %v1198
      %v1200 = vpop.f32.mrf.mxu0
      %1201 = vdwg.mxu0
      %v1203 = vsel %vm1068, %v1059, 0
      %v1206 = vsel %vm1068, %v1067, 0
      %1208 = vmatpush.bf16.xpose.msra.mxu0 0
      %1209 = vmatpush.bf16.xpose.msra.mxu0 0
      %1210 = vmatpush.bf16.xpose.msra.mxu0 0
      %1211 = vmatpush.bf16.xpose.msra.mxu0 0
      %1212 = vmatpush.bf16.xpose.msra.mxu0 0
      %1213 = vmatpush.bf16.xpose.msra.mxu0 0
      %1214 = vmatpush.bf16.xpose.msra.mxu0 0
      %1215 = vmatpush.bf16.xpose.msra.mxu0 %v1206
      %1216 = vmatmul.bf16.gmra.mxu0 %v1203
      %v1217 = vpop.f32.mrf.mxu0
      %v1218 = vadd.f32 0.0, %v1217
      %v1219 = vpop.f32.mrf.mxu0
      %1220 = vdwg.mxu0
      %v1221 = vmul.f32 %v1085, 0.35355338
      %v1222 = vmul.f32 %v1104, 0.35355338
      %v1223 = vmul.f32 %v1123, 0.35355338
      %v1224 = vmul.f32 %v1142, 0.35355338
      %v1225 = vmul.f32 %v1161, 0.35355338
      %v1226 = vmul.f32 %v1180, 0.35355338
      %v1227 = vmul.f32 %v1199, 0.35355338
      %v1228 = vmul.f32 %v1218, 0.35355338
      %vm1229 = vcmask 28672
      %v1230 = vsel %vm1229, %v1221, -inf
      %1231 = vmax.xlane.f32.xlu0 %v1230
      %v1232 = vpop.xlane.xlu0 %1231
      %v1233 = vsel %vm1229, %v1222, -inf
      %1234 = vmax.xlane.f32.xlu0 %v1233
      %v1235 = vpop.xlane.xlu0 %1234
      %v1236 = vsel %vm1229, %v1223, -inf
      %1237 = vmax.xlane.f32.xlu0 %v1236
      %v1238 = vpop.xlane.xlu0 %1237
      %v1239 = vsel %vm1229, %v1224, -inf
      %1240 = vmax.xlane.f32.xlu0 %v1239
      %v1241 = vpop.xlane.xlu0 %1240
      %v1242 = vsel %vm1229, %v1225, -inf
      %1243 = vmax.xlane.f32.xlu0 %v1242
      %v1244 = vpop.xlane.xlu0 %1243
      %v1245 = vsel %vm1229, %v1226, -inf
      %1246 = vmax.xlane.f32.xlu0 %v1245
      %v1247 = vpop.xlane.xlu0 %1246
      %v1248 = vsel %vm1229, %v1227, -inf
      %1249 = vmax.xlane.f32.xlu0 %v1248
      %v1250 = vpop.xlane.xlu0 %1249
      %v1251 = vsel %vm1229, %v1228, -inf
      %1252 = vmax.xlane.f32.xlu0 %v1251
      %v1253 = vpop.xlane.xlu0 %1252
      %v1254 = vsub.f32 %v1221, %v1232
      %v1255 = vsub.f32 %v1222, %v1235
      %v1256 = vsub.f32 %v1223, %v1238
      %v1257 = vsub.f32 %v1224, %v1241
      %v1258 = vsub.f32 %v1225, %v1244
      %v1259 = vsub.f32 %v1226, %v1247
      %v1260 = vsub.f32 %v1227, %v1250
      %v1261 = vsub.f32 %v1228, %v1253
      %v1262 = vmul.f32 %v1254, 1.442695
      %v1263 = vpow.pop %v1262
      %v1264 = vmul.f32 %v1255, 1.442695
      %v1265 = vpow.pop %v1264
      %v1266 = vmul.f32 %v1256, 1.442695
      %v1267 = vpow.pop %v1266
      %v1268 = vmul.f32 %v1257, 1.442695
      %v1269 = vpow.pop %v1268
      %v1270 = vmul.f32 %v1258, 1.442695
      %v1271 = vpow.pop %v1270
      %v1272 = vmul.f32 %v1259, 1.442695
      %v1273 = vpow.pop %v1272
      %v1274 = vmul.f32 %v1260, 1.442695
      %v1275 = vpow.pop %v1274
      %v1276 = vmul.f32 %v1261, 1.442695
      %v1277 = vpow.pop %v1276
      %v1278 = vsel %vm1229, %v1263, 0.0
      %1279 = vadd.xlane.f32.xlu0 %v1278
      %v1280 = vpop.xlane.xlu0 %1279
      %v1281 = vsel %vm1229, %v1265, 0.0
      %1282 = vadd.xlane.f32.xlu0 %v1281
      %v1283 = vpop.xlane.xlu0 %1282
      %v1284 = vsel %vm1229, %v1267, 0.0
      %1285 = vadd.xlane.f32.xlu0 %v1284
      %v1286 = vpop.xlane.xlu0 %1285
      %v1287 = vsel %vm1229, %v1269, 0.0
      %1288 = vadd.xlane.f32.xlu0 %v1287
      %v1289 = vpop.xlane.xlu0 %1288
      %v1290 = vsel %vm1229, %v1271, 0.0
      %1291 = vadd.xlane.f32.xlu0 %v1290
      %v1292 = vpop.xlane.xlu0 %1291
      %v1293 = vsel %vm1229, %v1273, 0.0
      %1294 = vadd.xlane.f32.xlu0 %v1293
      %v1295 = vpop.xlane.xlu0 %1294
      %v1296 = vsel %vm1229, %v1275, 0.0
      %1297 = vadd.xlane.f32.xlu0 %v1296
      %v1298 = vpop.xlane.xlu0 %1297
      %v1299 = vsel %vm1229, %v1277, 0.0
      %1300 = vadd.xlane.f32.xlu0 %v1299
      %v1301 = vpop.xlane.xlu0 %1300
      %v1302 = vrcp.pop %v1280
      %v1303 = vrcp.pop %v1283
      %v1304 = vrcp.pop %v1286
      %v1305 = vrcp.pop %v1289
      %v1306 = vrcp.pop %v1292
      %v1307 = vrcp.pop %v1295
      %v1308 = vrcp.pop %v1298
      %v1309 = vrcp.pop %v1301
      %v1310 = vmul.f32 %v1263, %v1302
      %v1311 = vmul.f32 %v1265, %v1303
      %v1312 = vmul.f32 %v1267, %v1304
      %v1313 = vmul.f32 %v1269, %v1305
      %v1314 = vmul.f32 %v1271, %v1306
      %v1315 = vmul.f32 %v1273, %v1307
      %v1316 = vmul.f32 %v1275, %v1308
      %v1317 = vmul.f32 %v1277, %v1309
      %v1318 = vpack.c.bf16 %v1310, %v1310
      %v1319 = vpack.c.bf16 %v1311, %v1311
      %v1320 = vpack.c.bf16 %v1312, %v1312
      %v1321 = vpack.c.bf16 %v1313, %v1313
      %v1322 = vpack.c.bf16 %v1314, %v1314
      %v1323 = vpack.c.bf16 %v1315, %v1315
      %v1324 = vpack.c.bf16 %v1316, %v1316
      %v1325 = vpack.c.bf16 %v1317, %v1317
      %v1327 = vunpack.c.l.b16 %v1060
      %v1328 = vpack.c.b16 %v1327, %v1327
      %1329 = vrot.lane.b32.xlu0 %v1328, 96
      %v1330 = vpop.permute.xlu0 %1329
      %vm1331 = vcmask 31744
      %v1333 = vsel %vm1331, %v1318, 0
      %vm1335 = vcmask 1041408
      %v1337 = vsel %vm1335, %v1330, 0
      %1339 = vmatpush.bf16.msra.mxu0 0
      %1340 = vmatpush.bf16.msra.mxu0 0
      %1341 = vmatpush.bf16.msra.mxu0 0
      %1342 = vmatpush.bf16.msra.mxu0 0
      %1343 = vmatpush.bf16.msra.mxu0 0
      %1344 = vmatpush.bf16.msra.mxu0 0
      %1345 = vmatpush.bf16.msra.mxu0 0
      %1346 = vmatpush.bf16.msra.mxu0 %v1337
      %1347 = vmatmul.bf16.gmra.mxu0 %v1333
      %v1348 = vpop.f32.mrf.mxu0
      %v1349 = vadd.f32 0.0, %v1348
      %v1350 = vpop.f32.mrf.mxu0
      %1351 = vdwg.mxu0
      %v1353 = vunpack.c.l.b16 %v1061
      %v1354 = vpack.c.b16 %v1353, %v1353
      %1355 = vrot.lane.b32.xlu0 %v1354, 96
      %v1356 = vpop.permute.xlu0 %1355
      %v1358 = vsel %vm1331, %v1319, 0
      %v1361 = vsel %vm1335, %v1356, 0
      %1363 = vmatpush.bf16.msra.mxu0 0
      %1364 = vmatpush.bf16.msra.mxu0 0
      %1365 = vmatpush.bf16.msra.mxu0 0
      %1366 = vmatpush.bf16.msra.mxu0 0
      %1367 = vmatpush.bf16.msra.mxu0 0
      %1368 = vmatpush.bf16.msra.mxu0 0
      %1369 = vmatpush.bf16.msra.mxu0 0
      %1370 = vmatpush.bf16.msra.mxu0 %v1361
      %1371 = vmatmul.bf16.gmra.mxu0 %v1358
      %v1372 = vpop.f32.mrf.mxu0
      %v1373 = vadd.f32 0.0, %v1372
      %v1374 = vpop.f32.mrf.mxu0
      %1375 = vdwg.mxu0
      %v1377 = vunpack.c.l.b16 %v1062
      %v1378 = vpack.c.b16 %v1377, %v1377
      %1379 = vrot.lane.b32.xlu0 %v1378, 96
      %v1380 = vpop.permute.xlu0 %1379
      %v1382 = vsel %vm1331, %v1320, 0
      %v1385 = vsel %vm1335, %v1380, 0
      %1387 = vmatpush.bf16.msra.mxu0 0
      %1388 = vmatpush.bf16.msra.mxu0 0
      %1389 = vmatpush.bf16.msra.mxu0 0
      %1390 = vmatpush.bf16.msra.mxu0 0
      %1391 = vmatpush.bf16.msra.mxu0 0
      %1392 = vmatpush.bf16.msra.mxu0 0
      %1393 = vmatpush.bf16.msra.mxu0 0
      %1394 = vmatpush.bf16.msra.mxu0 %v1385
      %1395 = vmatmul.bf16.gmra.mxu0 %v1382
      %v1396 = vpop.f32.mrf.mxu0
      %v1397 = vadd.f32 0.0, %v1396
      %v1398 = vpop.f32.mrf.mxu0
      %1399 = vdwg.mxu0
      %v1401 = vunpack.c.l.b16 %v1063
      %v1402 = vpack.c.b16 %v1401, %v1401
      %1403 = vrot.lane.b32.xlu0 %v1402, 96
      %v1404 = vpop.permute.xlu0 %1403
      %v1406 = vsel %vm1331, %v1321, 0
      %v1409 = vsel %vm1335, %v1404, 0
      %1411 = vmatpush.bf16.msra.mxu0 0
      %1412 = vmatpush.bf16.msra.mxu0 0
      %1413 = vmatpush.bf16.msra.mxu0 0
      %1414 = vmatpush.bf16.msra.mxu0 0
      %1415 = vmatpush.bf16.msra.mxu0 0
      %1416 = vmatpush.bf16.msra.mxu0 0
      %1417 = vmatpush.bf16.msra.mxu0 0
      %1418 = vmatpush.bf16.msra.mxu0 %v1409
      %1419 = vmatmul.bf16.gmra.mxu0 %v1406
      %v1420 = vpop.f32.mrf.mxu0
      %v1421 = vadd.f32 0.0, %v1420
      %v1422 = vpop.f32.mrf.mxu0
      %1423 = vdwg.mxu0
      %v1425 = vunpack.c.l.b16 %v1064
      %v1426 = vpack.c.b16 %v1425, %v1425
      %1427 = vrot.lane.b32.xlu0 %v1426, 96
      %v1428 = vpop.permute.xlu0 %1427
      %v1430 = vsel %vm1331, %v1322, 0
      %v1433 = vsel %vm1335, %v1428, 0
      %1435 = vmatpush.bf16.msra.mxu0 0
      %1436 = vmatpush.bf16.msra.mxu0 0
      %1437 = vmatpush.bf16.msra.mxu0 0
      %1438 = vmatpush.bf16.msra.mxu0 0
      %1439 = vmatpush.bf16.msra.mxu0 0
      %1440 = vmatpush.bf16.msra.mxu0 0
      %1441 = vmatpush.bf16.msra.mxu0 0
      %1442 = vmatpush.bf16.msra.mxu0 %v1433
      %1443 = vmatmul.bf16.gmra.mxu0 %v1430
      %v1444 = vpop.f32.mrf.mxu0
      %v1445 = vadd.f32 0.0, %v1444
      %v1446 = vpop.f32.mrf.mxu0
      %1447 = vdwg.mxu0
      %v1449 = vunpack.c.l.b16 %v1065
      %v1450 = vpack.c.b16 %v1449, %v1449
      %1451 = vrot.lane.b32.xlu0 %v1450, 96
      %v1452 = vpop.permute.xlu0 %1451
      %v1454 = vsel %vm1331, %v1323, 0
      %v1457 = vsel %vm1335, %v1452, 0
      %1459 = vmatpush.bf16.msra.mxu0 0
      %1460 = vmatpush.bf16.msra.mxu0 0
      %1461 = vmatpush.bf16.msra.mxu0 0
      %1462 = vmatpush.bf16.msra.mxu0 0
      %1463 = vmatpush.bf16.msra.mxu0 0
      %1464 = vmatpush.bf16.msra.mxu0 0
      %1465 = vmatpush.bf16.msra.mxu0 0
      %1466 = vmatpush.bf16.msra.mxu0 %v1457
      %1467 = vmatmul.bf16.gmra.mxu0 %v1454
      %v1468 = vpop.f32.mrf.mxu0
      %v1469 = vadd.f32 0.0, %v1468
      %v1470 = vpop.f32.mrf.mxu0
      %1471 = vdwg.mxu0
      %v1473 = vunpack.c.l.b16 %v1066
      %v1474 = vpack.c.b16 %v1473, %v1473
      %1475 = vrot.lane.b32.xlu0 %v1474, 96
      %v1476 = vpop.permute.xlu0 %1475
      %v1478 = vsel %vm1331, %v1324, 0
      %v1481 = vsel %vm1335, %v1476, 0
      %1483 = vmatpush.bf16.msra.mxu0 0
      %1484 = vmatpush.bf16.msra.mxu0 0
      %1485 = vmatpush.bf16.msra.mxu0 0
      %1486 = vmatpush.bf16.msra.mxu0 0
      %1487 = vmatpush.bf16.msra.mxu0 0
      %1488 = vmatpush.bf16.msra.mxu0 0
      %1489 = vmatpush.bf16.msra.mxu0 0
      %1490 = vmatpush.bf16.msra.mxu0 %v1481
      %1491 = vmatmul.bf16.gmra.mxu0 %v1478
      %v1492 = vpop.f32.mrf.mxu0
      %v1493 = vadd.f32 0.0, %v1492
      %v1494 = vpop.f32.mrf.mxu0
      %1495 = vdwg.mxu0
      %v1497 = vunpack.c.l.b16 %v1067
      %v1498 = vpack.c.b16 %v1497, %v1497
      %1499 = vrot.lane.b32.xlu0 %v1498, 96
      %v1500 = vpop.permute.xlu0 %1499
      %v1502 = vsel %vm1331, %v1325, 0
      %v1505 = vsel %vm1335, %v1500, 0
      %1507 = vmatpush.bf16.msra.mxu0 0
      %1508 = vmatpush.bf16.msra.mxu0 0
      %1509 = vmatpush.bf16.msra.mxu0 0
      %1510 = vmatpush.bf16.msra.mxu0 0
      %1511 = vmatpush.bf16.msra.mxu0 0
      %1512 = vmatpush.bf16.msra.mxu0 0
      %1513 = vmatpush.bf16.msra.mxu0 0
      %1514 = vmatpush.bf16.msra.mxu0 %v1505
      %1515 = vmatmul.bf16.gmra.mxu0 %v1502
      %v1516 = vpop.f32.mrf.mxu0
      %v1517 = vadd.f32 0.0, %v1516
      %v1518 = vpop.f32.mrf.mxu0
      %1519 = vdwg.mxu0
      %1520 = vst [vmem:[#allocation1] ss:$9 sm:$0xff] %v877
      %s1521 = scalar_lea.vmem [#allocation1], 1
      %1522 = vst [vmem:[%s1521] ss:$9 sm:$0xff] %v895
      %s1523 = scalar_lea.vmem [#allocation1], 2
      %1524 = vst [vmem:[%s1523] ss:$9 sm:$0xff] %v896
      %s1525 = scalar_lea.vmem [#allocation1], 3
      %1526 = vst [vmem:[%s1525] ss:$9 sm:$0xff] %v897
      %s1527 = scalar_lea.vmem [#allocation1], 4
      %1528 = vst [vmem:[%s1527] ss:$9 sm:$0xff] %v898
      %v1529 = vld [vmem:[#allocation1] sm:$0xff]
      %1530 = vst [vmem:[#allocation1] ss:$9 sm:$0xff] %v899
      %1531 = vst [vmem:[%s1521] ss:$9 sm:$0xff] %v900
      %1532 = vst [vmem:[%s1523] ss:$9 sm:$0xff] %v901
      %1533 = vst [vmem:[%s1525] ss:$9 sm:$0xff] %v879
      %1534 = vst [vmem:[%s1527] ss:$9 sm:$0xff] %v902
      %v1535 = vld [vmem:[#allocation1] sm:$0xff]
      %1536 = vst [vmem:[#allocation1] ss:$9 sm:$0xff] %v903
      %1537 = vst [vmem:[%s1521] ss:$9 sm:$0xff] %v904
      %1538 = vst [vmem:[%s1523] ss:$9 sm:$0xff] %v905
      %1539 = vst [vmem:[%s1525] ss:$9 sm:$0xff] %v906
      %1540 = vst [vmem:[%s1527] ss:$9 sm:$0xff] %v907
      %v1541 = vld [vmem:[#allocation1] sm:$0xff]
      %1542 = vst [vmem:[#allocation1] ss:$9 sm:$0xff] %v908
      %1543 = vst [vmem:[%s1521] ss:$9 sm:$0xff] %v882
      %1544 = vst [vmem:[%s1523] ss:$9 sm:$0xff] %v909
      %1545 = vst [vmem:[%s1525] ss:$9 sm:$0xff] %v910
      %1546 = vst [vmem:[%s1527] ss:$9 sm:$0xff] %v911
      %v1547 = vld [vmem:[#allocation1] sm:$0xff]
      %1548 = vst [vmem:[#allocation1] ss:$9 sm:$0xff] %v912
      %1549 = vst [vmem:[%s1521] ss:$9 sm:$0xff] %v913
      %1550 = vst [vmem:[%s1523] ss:$9 sm:$0xff] %v914
      %1551 = vst [vmem:[%s1525] ss:$9 sm:$0xff] %v915
      %1552 = vst [vmem:[%s1527] ss:$9 sm:$0xff] %v884
      %v1553 = vld [vmem:[#allocation1] sm:$0xff]
      %1554 = vst [vmem:[#allocation1] ss:$9 sm:$0xff] %v916
      %1555 = vst [vmem:[%s1521] ss:$9 sm:$0xff] %v917
      %1556 = vst [vmem:[%s1523] ss:$9 sm:$0xff] %v918
      %1557 = vst [vmem:[%s1525] ss:$9 sm:$0xff] %v919
      %1558 = vst [vmem:[%s1527] ss:$9 sm:$0xff] %v920
      %v1559 = vld [vmem:[#allocation1] sm:$0xff]
      %1560 = vst [vmem:[#allocation1] ss:$9 sm:$0xff] %v921
      %1561 = vst [vmem:[%s1521] ss:$9 sm:$0xff] %v922
      %1562 = vst [vmem:[%s1523] ss:$9 sm:$0xff] %v887
      %1563 = vst [vmem:[%s1525] ss:$9 sm:$0xff] %v923
      %1564 = vst [vmem:[%s1527] ss:$9 sm:$0xff] %v924
      %v1565 = vld [vmem:[#allocation1] sm:$0xff]
      %1566 = vst [vmem:[#allocation1] ss:$9 sm:$0xff] %v925
      %1567 = vst [vmem:[%s1521] ss:$9 sm:$0xff] %v926
      %1568 = vst [vmem:[%s1523] ss:$9 sm:$0xff] %v927
      %1569 = vst [vmem:[%s1525] ss:$9 sm:$0xff] %v928
      %1570 = vst [vmem:[%s1527] ss:$9 sm:$0xff] %v929
      %v1571 = vld [vmem:[#allocation1] sm:$0xff]
      %v1580 = vpack.c.bf16 %v1529, %v1529
      %v1581 = vpack.c.bf16 %v1535, %v1535
      %v1582 = vpack.c.bf16 %v1541, %v1541
      %v1583 = vpack.c.bf16 %v1547, %v1547
      %v1584 = vpack.c.bf16 %v1553, %v1553
      %v1585 = vpack.c.bf16 %v1559, %v1559
      %v1586 = vpack.c.bf16 %v1565, %v1565
      %v1587 = vpack.c.bf16 %v1571, %v1571
      %v1589 = vunpack.c.l.b16 %v1580
      %v1590 = vpack.c.b16 %v1589, %v1589
      %1591 = vrot.lane.b32.xlu0 %v1590, 120
      %v1592 = vpop.permute.xlu0 %1591
      %1593 = vrot.lane.b32.xlu0 %v1328, 120
      %v1594 = vpop.permute.xlu0 %1593
      %v1596 = vsel %vm1068, %v1592, 0
      %v1599 = vsel %vm1068, %v1594, 0
      %1601 = vmatpush.bf16.xpose.msra.mxu0 0
      %1602 = vmatpush.bf16.xpose.msra.mxu0 0
      %1603 = vmatpush.bf16.xpose.msra.mxu0 0
      %1604 = vmatpush.bf16.xpose.msra.mxu0 0
      %1605 = vmatpush.bf16.xpose.msra.mxu0 0
      %1606 = vmatpush.bf16.xpose.msra.mxu0 0
      %1607 = vmatpush.bf16.xpose.msra.mxu0 0
      %1608 = vmatpush.bf16.xpose.msra.mxu0 %v1599
      %1609 = vmatmul.bf16.gmra.mxu0 %v1596
      %v1610 = vpop.f32.mrf.mxu0
      %v1611 = vadd.f32 0.0, %v1610
      %v1612 = vpop.f32.mrf.mxu0
      %1613 = vdwg.mxu0
      %v1615 = vunpack.c.l.b16 %v1581
      %v1616 = vpack.c.b16 %v1615, %v1615
      %1617 = vrot.lane.b32.xlu0 %v1616, 120
      %v1618 = vpop.permute.xlu0 %1617
      %1619 = vrot.lane.b32.xlu0 %v1354, 120
      %v1620 = vpop.permute.xlu0 %1619
      %v1622 = vsel %vm1068, %v1618, 0
      %v1625 = vsel %vm1068, %v1620, 0
      %1627 = vmatpush.bf16.xpose.msra.mxu0 0
      %1628 = vmatpush.bf16.xpose.msra.mxu0 0
      %1629 = vmatpush.bf16.xpose.msra.mxu0 0
      %1630 = vmatpush.bf16.xpose.msra.mxu0 0
      %1631 = vmatpush.bf16.xpose.msra.mxu0 0
      %1632 = vmatpush.bf16.xpose.msra.mxu0 0
      %1633 = vmatpush.bf16.xpose.msra.mxu0 0
      %1634 = vmatpush.bf16.xpose.msra.mxu0 %v1625
      %1635 = vmatmul.bf16.gmra.mxu0 %v1622
      %v1636 = vpop.f32.mrf.mxu0
      %v1637 = vadd.f32 0.0, %v1636
      %v1638 = vpop.f32.mrf.mxu0
      %1639 = vdwg.mxu0
      %v1641 = vunpack.c.l.b16 %v1582
      %v1642 = vpack.c.b16 %v1641, %v1641
      %1643 = vrot.lane.b32.xlu0 %v1642, 120
      %v1644 = vpop.permute.xlu0 %1643
      %1645 = vrot.lane.b32.xlu0 %v1378, 120
      %v1646 = vpop.permute.xlu0 %1645
      %v1648 = vsel %vm1068, %v1644, 0
      %v1651 = vsel %vm1068, %v1646, 0
      %1653 = vmatpush.bf16.xpose.msra.mxu0 0
      %1654 = vmatpush.bf16.xpose.msra.mxu0 0
      %1655 = vmatpush.bf16.xpose.msra.mxu0 0
      %1656 = vmatpush.bf16.xpose.msra.mxu0 0
      %1657 = vmatpush.bf16.xpose.msra.mxu0 0
      %1658 = vmatpush.bf16.xpose.msra.mxu0 0
      %1659 = vmatpush.bf16.xpose.msra.mxu0 0
      %1660 = vmatpush.bf16.xpose.msra.mxu0 %v1651
      %1661 = vmatmul.bf16.gmra.mxu0 %v1648
      %v1662 = vpop.f32.mrf.mxu0
      %v1663 = vadd.f32 0.0, %v1662
      %v1664 = vpop.f32.mrf.mxu0
      %1665 = vdwg.mxu0
      %v1667 = vunpack.c.l.b16 %v1583
      %v1668 = vpack.c.b16 %v1667, %v1667
      %1669 = vrot.lane.b32.xlu0 %v1668, 120
      %v1670 = vpop.permute.xlu0 %1669
      %1671 = vrot.lane.b32.xlu0 %v1402, 120
      %v1672 = vpop.permute.xlu0 %1671
      %v1674 = vsel %vm1068, %v1670, 0
      %v1677 = vsel %vm1068, %v1672, 0
      %1679 = vmatpush.bf16.xpose.msra.mxu0 0
      %1680 = vmatpush.bf16.xpose.msra.mxu0 0
      %1681 = vmatpush.bf16.xpose.msra.mxu0 0
      %1682 = vmatpush.bf16.xpose.msra.mxu0 0
      %1683 = vmatpush.bf16.xpose.msra.mxu0 0
      %1684 = vmatpush.bf16.xpose.msra.mxu0 0
      %1685 = vmatpush.bf16.xpose.msra.mxu0 0
      %1686 = vmatpush.bf16.xpose.msra.mxu0 %v1677
      %1687 = vmatmul.bf16.gmra.mxu0 %v1674
      %v1688 = vpop.f32.mrf.mxu0
      %v1689 = vadd.f32 0.0, %v1688
      %v1690 = vpop.f32.mrf.mxu0
      %1691 = vdwg.mxu0
      %v1693 = vunpack.c.l.b16 %v1584
      %v1694 = vpack.c.b16 %v1693, %v1693
      %1695 = vrot.lane.b32.xlu0 %v1694, 120
      %v1696 = vpop.permute.xlu0 %1695
      %1697 = vrot.lane.b32.xlu0 %v1426, 120
      %v1698 = vpop.permute.xlu0 %1697
      %v1700 = vsel %vm1068, %v1696, 0
      %v1703 = vsel %vm1068, %v1698, 0
      %1705 = vmatpush.bf16.xpose.msra.mxu0 0
      %1706 = vmatpush.bf16.xpose.msra.mxu0 0
      %1707 = vmatpush.bf16.xpose.msra.mxu0 0
      %1708 = vmatpush.bf16.xpose.msra.mxu0 0
      %1709 = vmatpush.bf16.xpose.msra.mxu0 0
      %1710 = vmatpush.bf16.xpose.msra.mxu0 0
      %1711 = vmatpush.bf16.xpose.msra.mxu0 0
      %1712 = vmatpush.bf16.xpose.msra.mxu0 %v1703
      %1713 = vmatmul.bf16.gmra.mxu0 %v1700
      %v1714 = vpop.f32.mrf.mxu0
      %v1715 = vadd.f32 0.0, %v1714
      %v1716 = vpop.f32.mrf.mxu0
      %1717 = vdwg.mxu0
      %v1719 = vunpack.c.l.b16 %v1585
      %v1720 = vpack.c.b16 %v1719, %v1719
      %1721 = vrot.lane.b32.xlu0 %v1720, 120
      %v1722 = vpop.permute.xlu0 %1721
      %1723 = vrot.lane.b32.xlu0 %v1450, 120
      %v1724 = vpop.permute.xlu0 %1723
      %v1726 = vsel %vm1068, %v1722, 0
      %v1729 = vsel %vm1068, %v1724, 0
      %1731 = vmatpush.bf16.xpose.msra.mxu0 0
      %1732 = vmatpush.bf16.xpose.msra.mxu0 0
      %1733 = vmatpush.bf16.xpose.msra.mxu0 0
      %1734 = vmatpush.bf16.xpose.msra.mxu0 0
      %1735 = vmatpush.bf16.xpose.msra.mxu0 0
      %1736 = vmatpush.bf16.xpose.msra.mxu0 0
      %1737 = vmatpush.bf16.xpose.msra.mxu0 0
      %1738 = vmatpush.bf16.xpose.msra.mxu0 %v1729
      %1739 = vmatmul.bf16.gmra.mxu0 %v1726
      %v1740 = vpop.f32.mrf.mxu0
      %v1741 = vadd.f32 0.0, %v1740
      %v1742 = vpop.f32.mrf.mxu0
      %1743 = vdwg.mxu0
      %v1745 = vunpack.c.l.b16 %v1586
      %v1746 = vpack.c.b16 %v1745, %v1745
      %1747 = vrot.lane.b32.xlu0 %v1746, 120
      %v1748 = vpop.permute.xlu0 %1747
      %1749 = vrot.lane.b32.xlu0 %v1474, 120
      %v1750 = vpop.permute.xlu0 %1749
      %v1752 = vsel %vm1068, %v1748, 0
      %v1755 = vsel %vm1068, %v1750, 0
      %1757 = vmatpush.bf16.xpose.msra.mxu0 0
      %1758 = vmatpush.bf16.xpose.msra.mxu0 0
      %1759 = vmatpush.bf16.xpose.msra.mxu0 0
      %1760 = vmatpush.bf16.xpose.msra.mxu0 0
      %1761 = vmatpush.bf16.xpose.msra.mxu0 0
      %1762 = vmatpush.bf16.xpose.msra.mxu0 0
      %1763 = vmatpush.bf16.xpose.msra.mxu0 0
      %1764 = vmatpush.bf16.xpose.msra.mxu0 %v1755
      %1765 = vmatmul.bf16.gmra.mxu0 %v1752
      %v1766 = vpop.f32.mrf.mxu0
      %v1767 = vadd.f32 0.0, %v1766
      %v1768 = vpop.f32.mrf.mxu0
      %1769 = vdwg.mxu0
      %v1771 = vunpack.c.l.b16 %v1587
      %v1772 = vpack.c.b16 %v1771, %v1771
      %1773 = vrot.lane.b32.xlu0 %v1772, 120
      %v1774 = vpop.permute.xlu0 %1773
      %1775 = vrot.lane.b32.xlu0 %v1498, 120
      %v1776 = vpop.permute.xlu0 %1775
      %v1778 = vsel %vm1068, %v1774, 0
      %v1781 = vsel %vm1068, %v1776, 0
      %1783 = vmatpush.bf16.xpose.msra.mxu0 0
      %1784 = vmatpush.bf16.xpose.msra.mxu0 0
      %1785 = vmatpush.bf16.xpose.msra.mxu0 0
      %1786 = vmatpush.bf16.xpose.msra.mxu0 0
      %1787 = vmatpush.bf16.xpose.msra.mxu0 0
      %1788 = vmatpush.bf16.xpose.msra.mxu0 0
      %1789 = vmatpush.bf16.xpose.msra.mxu0 0
      %1790 = vmatpush.bf16.xpose.msra.mxu0 %v1781
      %1791 = vmatmul.bf16.gmra.mxu0 %v1778
      %v1792 = vpop.f32.mrf.mxu0
      %v1793 = vadd.f32 0.0, %v1792
      %v1794 = vpop.f32.mrf.mxu0
      %1795 = vdwg.mxu0
      %v1796 = vmul.f32 %v1611, 0.35355338
      %v1797 = vmul.f32 %v1637, 0.35355338
      %v1798 = vmul.f32 %v1663, 0.35355338
      %v1799 = vmul.f32 %v1689, 0.35355338
      %v1800 = vmul.f32 %v1715, 0.35355338
      %v1801 = vmul.f32 %v1741, 0.35355338
      %v1802 = vmul.f32 %v1767, 0.35355338
      %v1803 = vmul.f32 %v1793, 0.35355338
      %v1804 = vsel %vm1229, %v1796, -inf
      %1805 = vmax.xlane.f32.xlu0 %v1804
      %v1806 = vpop.xlane.xlu0 %1805
      %v1807 = vsel %vm1229, %v1797, -inf
      %1808 = vmax.xlane.f32.xlu0 %v1807
      %v1809 = vpop.xlane.xlu0 %1808
      %v1810 = vsel %vm1229, %v1798, -inf
      %1811 = vmax.xlane.f32.xlu0 %v1810
      %v1812 = vpop.xlane.xlu0 %1811
      %v1813 = vsel %vm1229, %v1799, -inf
      %1814 = vmax.xlane.f32.xlu0 %v1813
      %v1815 = vpop.xlane.xlu0 %1814
      %v1816 = vsel %vm1229, %v1800, -inf
      %1817 = vmax.xlane.f32.xlu0 %v1816
      %v1818 = vpop.xlane.xlu0 %1817
      %v1819 = vsel %vm1229, %v1801, -inf
      %1820 = vmax.xlane.f32.xlu0 %v1819
      %v1821 = vpop.xlane.xlu0 %1820
      %v1822 = vsel %vm1229, %v1802, -inf
      %1823 = vmax.xlane.f32.xlu0 %v1822
      %v1824 = vpop.xlane.xlu0 %1823
      %v1825 = vsel %vm1229, %v1803, -inf
      %1826 = vmax.xlane.f32.xlu0 %v1825
      %v1827 = vpop.xlane.xlu0 %1826
      %v1828 = vsub.f32 %v1796, %v1806
      %v1829 = vsub.f32 %v1797, %v1809
      %v1830 = vsub.f32 %v1798, %v1812
      %v1831 = vsub.f32 %v1799, %v1815
      %v1832 = vsub.f32 %v1800, %v1818
      %v1833 = vsub.f32 %v1801, %v1821
      %v1834 = vsub.f32 %v1802, %v1824
      %v1835 = vsub.f32 %v1803, %v1827
      %v1836 = vmul.f32 %v1828, 1.442695
      %v1837 = vpow.pop %v1836
      %v1838 = vmul.f32 %v1829, 1.442695
      %v1839 = vpow.pop %v1838
      %v1840 = vmul.f32 %v1830, 1.442695
      %v1841 = vpow.pop %v1840
      %v1842 = vmul.f32 %v1831, 1.442695
      %v1843 = vpow.pop %v1842
      %v1844 = vmul.f32 %v1832, 1.442695
      %v1845 = vpow.pop %v1844
      %v1846 = vmul.f32 %v1833, 1.442695
      %v1847 = vpow.pop %v1846
      %v1848 = vmul.f32 %v1834, 1.442695
      %v1849 = vpow.pop %v1848
      %v1850 = vmul.f32 %v1835, 1.442695
      %v1851 = vpow.pop %v1850
      %v1852 = vsel %vm1229, %v1837, 0.0
      %1853 = vadd.xlane.f32.xlu0 %v1852
      %v1854 = vpop.xlane.xlu0 %1853
      %v1855 = vsel %vm1229, %v1839, 0.0
      %1856 = vadd.xlane.f32.xlu0 %v1855
      %v1857 = vpop.xlane.xlu0 %1856
      %v1858 = vsel %vm1229, %v1841, 0.0
      %1859 = vadd.xlane.f32.xlu0 %v1858
      %v1860 = vpop.xlane.xlu0 %1859
      %v1861 = vsel %vm1229, %v1843, 0.0
      %1862 = vadd.xlane.f32.xlu0 %v1861
      %v1863 = vpop.xlane.xlu0 %1862
      %v1864 = vsel %vm1229, %v1845, 0.0
      %1865 = vadd.xlane.f32.xlu0 %v1864
      %v1866 = vpop.xlane.xlu0 %1865
      %v1867 = vsel %vm1229, %v1847, 0.0
      %1868 = vadd.xlane.f32.xlu0 %v1867
      %v1869 = vpop.xlane.xlu0 %1868
      %v1870 = vsel %vm1229, %v1849, 0.0
      %1871 = vadd.xlane.f32.xlu0 %v1870
      %v1872 = vpop.xlane.xlu0 %1871
      %v1873 = vsel %vm1229, %v1851, 0.0
      %1874 = vadd.xlane.f32.xlu0 %v1873
      %v1875 = vpop.xlane.xlu0 %1874
      %v1876 = vrcp.pop %v1854
      %v1877 = vrcp.pop %v1857
      %v1878 = vrcp.pop %v1860
      %v1879 = vrcp.pop %v1863
      %v1880 = vrcp.pop %v1866
      %v1881 = vrcp.pop %v1869
      %v1882 = vrcp.pop %v1872
      %v1883 = vrcp.pop %v1875
      %v1884 = vmul.f32 %v1837, %v1876
      %v1885 = vmul.f32 %v1839, %v1877
      %v1886 = vmul.f32 %v1841, %v1878
      %v1887 = vmul.f32 %v1843, %v1879
      %v1888 = vmul.f32 %v1845, %v1880
      %v1889 = vmul.f32 %v1847, %v1881
      %v1890 = vmul.f32 %v1849, %v1882
      %v1891 = vmul.f32 %v1851, %v1883
      %v1892 = vpack.c.bf16 %v1884, %v1884
      %v1893 = vpack.c.bf16 %v1885, %v1885
      %v1894 = vpack.c.bf16 %v1886, %v1886
      %v1895 = vpack.c.bf16 %v1887, %v1887
      %v1896 = vpack.c.bf16 %v1888, %v1888
      %v1897 = vpack.c.bf16 %v1889, %v1889
      %v1898 = vpack.c.bf16 %v1890, %v1890
      %v1899 = vpack.c.bf16 %v1891, %v1891
      %1900 = vrot.lane.b32.xlu0 %v1328, 88
      %v1901 = vpop.permute.xlu0 %1900
      %v1903 = vsel %vm1331, %v1892, 0
      %v1906 = vsel %vm1335, %v1901, 0
      %1908 = vmatpush.bf16.msra.mxu0 0
      %1909 = vmatpush.bf16.msra.mxu0 0
      %1910 = vmatpush.bf16.msra.mxu0 0
      %1911 = vmatpush.bf16.msra.mxu0 0
      %1912 = vmatpush.bf16.msra.mxu0 0
      %1913 = vmatpush.bf16.msra.mxu0 0
      %1914 = vmatpush.bf16.msra.mxu0 0
      %1915 = vmatpush.bf16.msra.mxu0 %v1906
      %1916 = vmatmul.bf16.gmra.mxu0 %v1903
      %v1917 = vpop.f32.mrf.mxu0
      %v1918 = vadd.f32 0.0, %v1917
      %v1919 = vpop.f32.mrf.mxu0
      %1920 = vdwg.mxu0
      %1921 = vrot.lane.b32.xlu0 %v1354, 88
      %v1922 = vpop.permute.xlu0 %1921
      %v1924 = vsel %vm1331, %v1893, 0
      %v1927 = vsel %vm1335, %v1922, 0
      %1929 = vmatpush.bf16.msra.mxu0 0
      %1930 = vmatpush.bf16.msra.mxu0 0
      %1931 = vmatpush.bf16.msra.mxu0 0
      %1932 = vmatpush.bf16.msra.mxu0 0
      %1933 = vmatpush.bf16.msra.mxu0 0
      %1934 = vmatpush.bf16.msra.mxu0 0
      %1935 = vmatpush.bf16.msra.mxu0 0
      %1936 = vmatpush.bf16.msra.mxu0 %v1927
      %1937 = vmatmul.bf16.gmra.mxu0 %v1924
      %v1938 = vpop.f32.mrf.mxu0
      %v1939 = vadd.f32 0.0, %v1938
      %v1940 = vpop.f32.mrf.mxu0
      %1941 = vdwg.mxu0
      %1942 = vrot.lane.b32.xlu0 %v1378, 88
      %v1943 = vpop.permute.xlu0 %1942
      %v1945 = vsel %vm1331, %v1894, 0
      %v1948 = vsel %vm1335, %v1943, 0
      %1950 = vmatpush.bf16.msra.mxu0 0
      %1951 = vmatpush.bf16.msra.mxu0 0
      %1952 = vmatpush.bf16.msra.mxu0 0
      %1953 = vmatpush.bf16.msra.mxu0 0
      %1954 = vmatpush.bf16.msra.mxu0 0
      %1955 = vmatpush.bf16.msra.mxu0 0
      %1956 = vmatpush.bf16.msra.mxu0 0
      %1957 = vmatpush.bf16.msra.mxu0 %v1948
      %1958 = vmatmul.bf16.gmra.mxu0 %v1945
      %v1959 = vpop.f32.mrf.mxu0
      %v1960 = vadd.f32 0.0, %v1959
      %v1961 = vpop.f32.mrf.mxu0
      %1962 = vdwg.mxu0
      %1963 = vrot.lane.b32.xlu0 %v1402, 88
      %v1964 = vpop.permute.xlu0 %1963
      %v1966 = vsel %vm1331, %v1895, 0
      %v1969 = vsel %vm1335, %v1964, 0
      %1971 = vmatpush.bf16.msra.mxu0 0
      %1972 = vmatpush.bf16.msra.mxu0 0
      %1973 = vmatpush.bf16.msra.mxu0 0
      %1974 = vmatpush.bf16.msra.mxu0 0
      %1975 = vmatpush.bf16.msra.mxu0 0
      %1976 = vmatpush.bf16.msra.mxu0 0
      %1977 = vmatpush.bf16.msra.mxu0 0
      %1978 = vmatpush.bf16.msra.mxu0 %v1969
      %1979 = vmatmul.bf16.gmra.mxu0 %v1966
      %v1980 = vpop.f32.mrf.mxu0
      %v1981 = vadd.f32 0.0, %v1980
      %v1982 = vpop.f32.mrf.mxu0
      %1983 = vdwg.mxu0
      %1984 = vrot.lane.b32.xlu0 %v1426, 88
      %v1985 = vpop.permute.xlu0 %1984
      %v1987 = vsel %vm1331, %v1896, 0
      %v1990 = vsel %vm1335, %v1985, 0
      %1992 = vmatpush.bf16.msra.mxu0 0
      %1993 = vmatpush.bf16.msra.mxu0 0
      %1994 = vmatpush.bf16.msra.mxu0 0
      %1995 = vmatpush.bf16.msra.mxu0 0
      %1996 = vmatpush.bf16.msra.mxu0 0
      %1997 = vmatpush.bf16.msra.mxu0 0
      %1998 = vmatpush.bf16.msra.mxu0 0
      %1999 = vmatpush.bf16.msra.mxu0 %v1990
      %2000 = vmatmul.bf16.gmra.mxu0 %v1987
      %v2001 = vpop.f32.mrf.mxu0
      %v2002 = vadd.f32 0.0, %v2001
      %v2003 = vpop.f32.mrf.mxu0
      %2004 = vdwg.mxu0
      %2005 = vrot.lane.b32.xlu0 %v1450, 88
      %v2006 = vpop.permute.xlu0 %2005
      %v2008 = vsel %vm1331, %v1897, 0
      %v2011 = vsel %vm1335, %v2006, 0
      %2013 = vmatpush.bf16.msra.mxu0 0
      %2014 = vmatpush.bf16.msra.mxu0 0
      %2015 = vmatpush.bf16.msra.mxu0 0
      %2016 = vmatpush.bf16.msra.mxu0 0
      %2017 = vmatpush.bf16.msra.mxu0 0
      %2018 = vmatpush.bf16.msra.mxu0 0
      %2019 = vmatpush.bf16.msra.mxu0 0
      %2020 = vmatpush.bf16.msra.mxu0 %v2011
      %2021 = vmatmul.bf16.gmra.mxu0 %v2008
      %v2022 = vpop.f32.mrf.mxu0
      %v2023 = vadd.f32 0.0, %v2022
      %v2024 = vpop.f32.mrf.mxu0
      %2025 = vdwg.mxu0
      %2026 = vrot.lane.b32.xlu0 %v1474, 88
      %v2027 = vpop.permute.xlu0 %2026
      %v2029 = vsel %vm1331, %v1898, 0
      %v2032 = vsel %vm1335, %v2027, 0
      %2034 = vmatpush.bf16.msra.mxu0 0
      %2035 = vmatpush.bf16.msra.mxu0 0
      %2036 = vmatpush.bf16.msra.mxu0 0
      %2037 = vmatpush.bf16.msra.mxu0 0
      %2038 = vmatpush.bf16.msra.mxu0 0
      %2039 = vmatpush.bf16.msra.mxu0 0
      %2040 = vmatpush.bf16.msra.mxu0 0
      %2041 = vmatpush.bf16.msra.mxu0 %v2032
      %2042 = vmatmul.bf16.gmra.mxu0 %v2029
      %v2043 = vpop.f32.mrf.mxu0
      %v2044 = vadd.f32 0.0, %v2043
      %v2045 = vpop.f32.mrf.mxu0
      %2046 = vdwg.mxu0
      %2047 = vrot.lane.b32.xlu0 %v1498, 88
      %v2048 = vpop.permute.xlu0 %2047
      %v2050 = vsel %vm1331, %v1899, 0
      %v2053 = vsel %vm1335, %v2048, 0
      %2055 = vmatpush.bf16.msra.mxu0 0
      %2056 = vmatpush.bf16.msra.mxu0 0
      %2057 = vmatpush.bf16.msra.mxu0 0
      %2058 = vmatpush.bf16.msra.mxu0 0
      %2059 = vmatpush.bf16.msra.mxu0 0
      %2060 = vmatpush.bf16.msra.mxu0 0
      %2061 = vmatpush.bf16.msra.mxu0 0
      %2062 = vmatpush.bf16.msra.mxu0 %v2053
      %2063 = vmatmul.bf16.gmra.mxu0 %v2050
      %v2064 = vpop.f32.mrf.mxu0
      %v2065 = vadd.f32 0.0, %v2064
      %v2066 = vpop.f32.mrf.mxu0
      %2067 = vdwg.mxu0
      %2068 = vst [vmem:[#allocation1] ss:$9 sm:$0xff] %v877
      %s2069 = scalar_lea.vmem [#allocation1], 1
      %2070 = vst [vmem:[%s2069] ss:$9 sm:$0xff] %v895
      %s2071 = scalar_lea.vmem [#allocation1], 2
      %2072 = vst [vmem:[%s2071] ss:$9 sm:$0xff] %v896
      %s2073 = scalar_lea.vmem [#allocation1], 3
      %2074 = vst [vmem:[%s2073] ss:$9 sm:$0xff] %v897
      %s2075 = scalar_lea.vmem [#allocation1], 4
      %2076 = vst [vmem:[%s2075] ss:$9 sm:$0xff] %v898
      %v2077 = vld [vmem:[#allocation1] sm:$0xff]
      %2078 = vst [vmem:[#allocation1] ss:$9 sm:$0xff] %v899
      %2079 = vst [vmem:[%s2069] ss:$9 sm:$0xff] %v900
      %2080 = vst [vmem:[%s2071] ss:$9 sm:$0xff] %v901
      %2081 = vst [vmem:[%s2073] ss:$9 sm:$0xff] %v879
      %2082 = vst [vmem:[%s2075] ss:$9 sm:$0xff] %v902
      %v2083 = vld [vmem:[#allocation1] sm:$0xff]
      %2084 = vst [vmem:[#allocation1] ss:$9 sm:$0xff] %v903
      %2085 = vst [vmem:[%s2069] ss:$9 sm:$0xff] %v904
      %2086 = vst [vmem:[%s2071] ss:$9 sm:$0xff] %v905
      %2087 = vst [vmem:[%s2073] ss:$9 sm:$0xff] %v906
      %2088 = vst [vmem:[%s2075] ss:$9 sm:$0xff] %v907
      %v2089 = vld [vmem:[#allocation1] sm:$0xff]
      %2090 = vst [vmem:[#allocation1] ss:$9 sm:$0xff] %v908
      %2091 = vst [vmem:[%s2069] ss:$9 sm:$0xff] %v882
      %2092 = vst [vmem:[%s2071] ss:$9 sm:$0xff] %v909
      %2093 = vst [vmem:[%s2073] ss:$9 sm:$0xff] %v910
      %2094 = vst [vmem:[%s2075] ss:$9 sm:$0xff] %v911
      %v2095 = vld [vmem:[#allocation1] sm:$0xff]
      %2096 = vst [vmem:[#allocation1] ss:$9 sm:$0xff] %v912
      %2097 = vst [vmem:[%s2069] ss:$9 sm:$0xff] %v913
      %2098 = vst [vmem:[%s2071] ss:$9 sm:$0xff] %v914
      %2099 = vst [vmem:[%s2073] ss:$9 sm:$0xff] %v915
      %2100 = vst [vmem:[%s2075] ss:$9 sm:$0xff] %v884
      %v2101 = vld [vmem:[#allocation1] sm:$0xff]
      %2102 = vst [vmem:[#allocation1] ss:$9 sm:$0xff] %v916
      %2103 = vst [vmem:[%s2069] ss:$9 sm:$0xff] %v917
      %2104 = vst [vmem:[%s2071] ss:$9 sm:$0xff] %v918
      %2105 = vst [vmem:[%s2073] ss:$9 sm:$0xff] %v919
      %2106 = vst [vmem:[%s2075] ss:$9 sm:$0xff] %v920
      %v2107 = vld [vmem:[#allocation1] sm:$0xff]
      %2108 = vst [vmem:[#allocation1] ss:$9 sm:$0xff] %v921
      %2109 = vst [vmem:[%s2069] ss:$9 sm:$0xff] %v922
      %2110 = vst [vmem:[%s2071] ss:$9 sm:$0xff] %v887
      %2111 = vst [vmem:[%s2073] ss:$9 sm:$0xff] %v923
      %2112 = vst [vmem:[%s2075] ss:$9 sm:$0xff] %v924
      %v2113 = vld [vmem:[#allocation1] sm:$0xff]
      %2114 = vst [vmem:[#allocation1] ss:$9 sm:$0xff] %v925
      %2115 = vst [vmem:[%s2069] ss:$9 sm:$0xff] %v926
      %2116 = vst [vmem:[%s2071] ss:$9 sm:$0xff] %v927
      %2117 = vst [vmem:[%s2073] ss:$9 sm:$0xff] %v928
      %2118 = vst [vmem:[%s2075] ss:$9 sm:$0xff] %v929
      %v2119 = vld [vmem:[#allocation1] sm:$0xff]
      %v2128 = vpack.c.bf16 %v2077, %v2077
      %v2129 = vpack.c.bf16 %v2083, %v2083
      %v2130 = vpack.c.bf16 %v2089, %v2089
      %v2131 = vpack.c.bf16 %v2095, %v2095
      %v2132 = vpack.c.bf16 %v2101, %v2101
      %v2133 = vpack.c.bf16 %v2107, %v2107
      %v2134 = vpack.c.bf16 %v2113, %v2113
      %v2135 = vpack.c.bf16 %v2119, %v2119
      %v2137 = vunpack.c.l.b16 %v2128
      %v2138 = vpack.c.b16 %v2137, %v2137
      %2139 = vrot.lane.b32.xlu0 %v2138, 112
      %v2140 = vpop.permute.xlu0 %2139
      %2141 = vrot.lane.b32.xlu0 %v1328, 112
      %v2142 = vpop.permute.xlu0 %2141
      %v2144 = vsel %vm1068, %v2140, 0
      %v2147 = vsel %vm1068, %v2142, 0
      %2149 = vmatpush.bf16.xpose.msra.mxu0 0
      %2150 = vmatpush.bf16.xpose.msra.mxu0 0
      %2151 = vmatpush.bf16.xpose.msra.mxu0 0
      %2152 = vmatpush.bf16.xpose.msra.mxu0 0
      %2153 = vmatpush.bf16.xpose.msra.mxu0 0
      %2154 = vmatpush.bf16.xpose.msra.mxu0 0
      %2155 = vmatpush.bf16.xpose.msra.mxu0 0
      %2156 = vmatpush.bf16.xpose.msra.mxu0 %v2147
      %2157 = vmatmul.bf16.gmra.mxu0 %v2144
      %v2158 = vpop.f32.mrf.mxu0
      %v2159 = vadd.f32 0.0, %v2158
      %v2160 = vpop.f32.mrf.mxu0
      %2161 = vdwg.mxu0
      %v2163 = vunpack.c.l.b16 %v2129
      %v2164 = vpack.c.b16 %v2163, %v2163
      %2165 = vrot.lane.b32.xlu0 %v2164, 112
      %v2166 = vpop.permute.xlu0 %2165
      %2167 = vrot.lane.b32.xlu0 %v1354, 112
      %v2168 = vpop.permute.xlu0 %2167
      %v2170 = vsel %vm1068, %v2166, 0
      %v2173 = vsel %vm1068, %v2168, 0
      %2175 = vmatpush.bf16.xpose.msra.mxu0 0
      %2176 = vmatpush.bf16.xpose.msra.mxu0 0
      %2177 = vmatpush.bf16.xpose.msra.mxu0 0
      %2178 = vmatpush.bf16.xpose.msra.mxu0 0
      %2179 = vmatpush.bf16.xpose.msra.mxu0 0
      %2180 = vmatpush.bf16.xpose.msra.mxu0 0
      %2181 = vmatpush.bf16.xpose.msra.mxu0 0
      %2182 = vmatpush.bf16.xpose.msra.mxu0 %v2173
      %2183 = vmatmul.bf16.gmra.mxu0 %v2170
      %v2184 = vpop.f32.mrf.mxu0
      %v2185 = vadd.f32 0.0, %v2184
      %v2186 = vpop.f32.mrf.mxu0
      %2187 = vdwg.mxu0
      %v2189 = vunpack.c.l.b16 %v2130
      %v2190 = vpack.c.b16 %v2189, %v2189
      %2191 = vrot.lane.b32.xlu0 %v2190, 112
      %v2192 = vpop.permute.xlu0 %2191
      %2193 = vrot.lane.b32.xlu0 %v1378, 112
      %v2194 = vpop.permute.xlu0 %2193
      %v2196 = vsel %vm1068, %v2192, 0
      %v2199 = vsel %vm1068, %v2194, 0
      %2201 = vmatpush.bf16.xpose.msra.mxu0 0
      %2202 = vmatpush.bf16.xpose.msra.mxu0 0
      %2203 = vmatpush.bf16.xpose.msra.mxu0 0
      %2204 = vmatpush.bf16.xpose.msra.mxu0 0
      %2205 = vmatpush.bf16.xpose.msra.mxu0 0
      %2206 = vmatpush.bf16.xpose.msra.mxu0 0
      %2207 = vmatpush.bf16.xpose.msra.mxu0 0
      %2208 = vmatpush.bf16.xpose.msra.mxu0 %v2199
      %2209 = vmatmul.bf16.gmra.mxu0 %v2196
      %v2210 = vpop.f32.mrf.mxu0
      %v2211 = vadd.f32 0.0, %v2210
      %v2212 = vpop.f32.mrf.mxu0
      %2213 = vdwg.mxu0
      %v2215 = vunpack.c.l.b16 %v2131
      %v2216 = vpack.c.b16 %v2215, %v2215
      %2217 = vrot.lane.b32.xlu0 %v2216, 112
      %v2218 = vpop.permute.xlu0 %2217
      %2219 = vrot.lane.b32.xlu0 %v1402, 112
      %v2220 = vpop.permute.xlu0 %2219
      %v2222 = vsel %vm1068, %v2218, 0
      %v2225 = vsel %vm1068, %v2220, 0
      %2227 = vmatpush.bf16.xpose.msra.mxu0 0
      %2228 = vmatpush.bf16.xpose.msra.mxu0 0
      %2229 = vmatpush.bf16.xpose.msra.mxu0 0
      %2230 = vmatpush.bf16.xpose.msra.mxu0 0
      %2231 = vmatpush.bf16.xpose.msra.mxu0 0
      %2232 = vmatpush.bf16.xpose.msra.mxu0 0
      %2233 = vmatpush.bf16.xpose.msra.mxu0 0
      %2234 = vmatpush.bf16.xpose.msra.mxu0 %v2225
      %2235 = vmatmul.bf16.gmra.mxu0 %v2222
      %v2236 = vpop.f32.mrf.mxu0
      %v2237 = vadd.f32 0.0, %v2236
      %v2238 = vpop.f32.mrf.mxu0
      %2239 = vdwg.mxu0
      %v2241 = vunpack.c.l.b16 %v2132
      %v2242 = vpack.c.b16 %v2241, %v2241
      %2243 = vrot.lane.b32.xlu0 %v2242, 112
      %v2244 = vpop.permute.xlu0 %2243
      %2245 = vrot.lane.b32.xlu0 %v1426, 112
      %v2246 = vpop.permute.xlu0 %2245
      %v2248 = vsel %vm1068, %v2244, 0
      %v2251 = vsel %vm1068, %v2246, 0
      %2253 = vmatpush.bf16.xpose.msra.mxu0 0
      %2254 = vmatpush.bf16.xpose.msra.mxu0 0
      %2255 = vmatpush.bf16.xpose.msra.mxu0 0
      %2256 = vmatpush.bf16.xpose.msra.mxu0 0
      %2257 = vmatpush.bf16.xpose.msra.mxu0 0
      %2258 = vmatpush.bf16.xpose.msra.mxu0 0
      %2259 = vmatpush.bf16.xpose.msra.mxu0 0
      %2260 = vmatpush.bf16.xpose.msra.mxu0 %v2251
      %2261 = vmatmul.bf16.gmra.mxu0 %v2248
      %v2262 = vpop.f32.mrf.mxu0
      %v2263 = vadd.f32 0.0, %v2262
      %v2264 = vpop.f32.mrf.mxu0
      %2265 = vdwg.mxu0
      %v2267 = vunpack.c.l.b16 %v2133
      %v2268 = vpack.c.b16 %v2267, %v2267
      %2269 = vrot.lane.b32.xlu0 %v2268, 112
      %v2270 = vpop.permute.xlu0 %2269
      %2271 = vrot.lane.b32.xlu0 %v1450, 112
      %v2272 = vpop.permute.xlu0 %2271
      %v2274 = vsel %vm1068, %v2270, 0
      %v2277 = vsel %vm1068, %v2272, 0
      %2279 = vmatpush.bf16.xpose.msra.mxu0 0
      %2280 = vmatpush.bf16.xpose.msra.mxu0 0
      %2281 = vmatpush.bf16.xpose.msra.mxu0 0
      %2282 = vmatpush.bf16.xpose.msra.mxu0 0
      %2283 = vmatpush.bf16.xpose.msra.mxu0 0
      %2284 = vmatpush.bf16.xpose.msra.mxu0 0
      %2285 = vmatpush.bf16.xpose.msra.mxu0 0
      %2286 = vmatpush.bf16.xpose.msra.mxu0 %v2277
      %2287 = vmatmul.bf16.gmra.mxu0 %v2274
      %v2288 = vpop.f32.mrf.mxu0
      %v2289 = vadd.f32 0.0, %v2288
      %v2290 = vpop.f32.mrf.mxu0
      %2291 = vdwg.mxu0
      %v2293 = vunpack.c.l.b16 %v2134
      %v2294 = vpack.c.b16 %v2293, %v2293
      %2295 = vrot.lane.b32.xlu0 %v2294, 112
      %v2296 = vpop.permute.xlu0 %2295
      %2297 = vrot.lane.b32.xlu0 %v1474, 112
      %v2298 = vpop.permute.xlu0 %2297
      %v2300 = vsel %vm1068, %v2296, 0
      %v2303 = vsel %vm1068, %v2298, 0
      %2305 = vmatpush.bf16.xpose.msra.mxu0 0
      %2306 = vmatpush.bf16.xpose.msra.mxu0 0
      %2307 = vmatpush.bf16.xpose.msra.mxu0 0
      %2308 = vmatpush.bf16.xpose.msra.mxu0 0
      %2309 = vmatpush.bf16.xpose.msra.mxu0 0
      %2310 = vmatpush.bf16.xpose.msra.mxu0 0
      %2311 = vmatpush.bf16.xpose.msra.mxu0 0
      %2312 = vmatpush.bf16.xpose.msra.mxu0 %v2303
      %2313 = vmatmul.bf16.gmra.mxu0 %v2300
      %v2314 = vpop.f32.mrf.mxu0
      %v2315 = vadd.f32 0.0, %v2314
      %v2316 = vpop.f32.mrf.mxu0
      %2317 = vdwg.mxu0
      %v2319 = vunpack.c.l.b16 %v2135
      %v2320 = vpack.c.b16 %v2319, %v2319
      %2321 = vrot.lane.b32.xlu0 %v2320, 112
      %v2322 = vpop.permute.xlu0 %2321
      %2323 = vrot.lane.b32.xlu0 %v1498, 112
      %v2324 = vpop.permute.xlu0 %2323
      %v2326 = vsel %vm1068, %v2322, 0
      %v2329 = vsel %vm1068, %v2324, 0
      %2331 = vmatpush.bf16.xpose.msra.mxu0 0
      %2332 = vmatpush.bf16.xpose.msra.mxu0 0
      %2333 = vmatpush.bf16.xpose.msra.mxu0 0
      %2334 = vmatpush.bf16.xpose.msra.mxu0 0
      %2335 = vmatpush.bf16.xpose.msra.mxu0 0
      %2336 = vmatpush.bf16.xpose.msra.mxu0 0
      %2337 = vmatpush.bf16.xpose.msra.mxu0 0
      %2338 = vmatpush.bf16.xpose.msra.mxu0 %v2329
      %2339 = vmatmul.bf16.gmra.mxu0 %v2326
      %v2340 = vpop.f32.mrf.mxu0
      %v2341 = vadd.f32 0.0, %v2340
      %v2342 = vpop.f32.mrf.mxu0
      %2343 = vdwg.mxu0
      %v2344 = vmul.f32 %v2159, 0.35355338
      %v2345 = vmul.f32 %v2185, 0.35355338
      %v2346 = vmul.f32 %v2211, 0.35355338
      %v2347 = vmul.f32 %v2237, 0.35355338
      %v2348 = vmul.f32 %v2263, 0.35355338
      %v2349 = vmul.f32 %v2289, 0.35355338
      %v2350 = vmul.f32 %v2315, 0.35355338
      %v2351 = vmul.f32 %v2341, 0.35355338
      %v2352 = vsel %vm1229, %v2344, -inf
      %2353 = vmax.xlane.f32.xlu0 %v2352
      %v2354 = vpop.xlane.xlu0 %2353
      %v2355 = vsel %vm1229, %v2345, -inf
      %2356 = vmax.xlane.f32.xlu0 %v2355
      %v2357 = vpop.xlane.xlu0 %2356
      %v2358 = vsel %vm1229, %v2346, -inf
      %2359 = vmax.xlane.f32.xlu0 %v2358
      %v2360 = vpop.xlane.xlu0 %2359
      %v2361 = vsel %vm1229, %v2347, -inf
      %2362 = vmax.xlane.f32.xlu0 %v2361
      %v2363 = vpop.xlane.xlu0 %2362
      %v2364 = vsel %vm1229, %v2348, -inf
      %2365 = vmax.xlane.f32.xlu0 %v2364
      %v2366 = vpop.xlane.xlu0 %2365
      %v2367 = vsel %vm1229, %v2349, -inf
      %2368 = vmax.xlane.f32.xlu0 %v2367
      %v2369 = vpop.xlane.xlu0 %2368
      %v2370 = vsel %vm1229, %v2350, -inf
      %2371 = vmax.xlane.f32.xlu0 %v2370
      %v2372 = vpop.xlane.xlu0 %2371
      %v2373 = vsel %vm1229, %v2351, -inf
      %2374 = vmax.xlane.f32.xlu0 %v2373
      %v2375 = vpop.xlane.xlu0 %2374
      %v2376 = vsub.f32 %v2344, %v2354
      %v2377 = vsub.f32 %v2345, %v2357
      %v2378 = vsub.f32 %v2346, %v2360
      %v2379 = vsub.f32 %v2347, %v2363
      %v2380 = vsub.f32 %v2348, %v2366
      %v2381 = vsub.f32 %v2349, %v2369
      %v2382 = vsub.f32 %v2350, %v2372
      %v2383 = vsub.f32 %v2351, %v2375
      %v2384 = vmul.f32 %v2376, 1.442695
      %v2385 = vpow.pop %v2384
      %v2386 = vmul.f32 %v2377, 1.442695
      %v2387 = vpow.pop %v2386
      %v2388 = vmul.f32 %v2378, 1.442695
      %v2389 = vpow.pop %v2388
      %v2390 = vmul.f32 %v2379, 1.442695
      %v2391 = vpow.pop %v2390
      %v2392 = vmul.f32 %v2380, 1.442695
      %v2393 = vpow.pop %v2392
      %v2394 = vmul.f32 %v2381, 1.442695
      %v2395 = vpow.pop %v2394
      %v2396 = vmul.f32 %v2382, 1.442695
      %v2397 = vpow.pop %v2396
      %v2398 = vmul.f32 %v2383, 1.442695
      %v2399 = vpow.pop %v2398
      %v2400 = vsel %vm1229, %v2385, 0.0
      %2401 = vadd.xlane.f32.xlu0 %v2400
      %v2402 = vpop.xlane.xlu0 %2401
      %v2403 = vsel %vm1229, %v2387, 0.0
      %2404 = vadd.xlane.f32.xlu0 %v2403
      %v2405 = vpop.xlane.xlu0 %2404
      %v2406 = vsel %vm1229, %v2389, 0.0
      %2407 = vadd.xlane.f32.xlu0 %v2406
      %v2408 = vpop.xlane.xlu0 %2407
      %v2409 = vsel %vm1229, %v2391, 0.0
      %2410 = vadd.xlane.f32.xlu0 %v2409
      %v2411 = vpop.xlane.xlu0 %2410
      %v2412 = vsel %vm1229, %v2393, 0.0
      %2413 = vadd.xlane.f32.xlu0 %v2412
      %v2414 = vpop.xlane.xlu0 %2413
      %v2415 = vsel %vm1229, %v2395, 0.0
      %2416 = vadd.xlane.f32.xlu0 %v2415
      %v2417 = vpop.xlane.xlu0 %2416
      %v2418 = vsel %vm1229, %v2397, 0.0
      %2419 = vadd.xlane.f32.xlu0 %v2418
      %v2420 = vpop.xlane.xlu0 %2419
      %v2421 = vsel %vm1229, %v2399, 0.0
      %2422 = vadd.xlane.f32.xlu0 %v2421
      %v2423 = vpop.xlane.xlu0 %2422
      %v2424 = vrcp.pop %v2402
      %v2425 = vrcp.pop %v2405
      %v2426 = vrcp.pop %v2408
      %v2427 = vrcp.pop %v2411
      %v2428 = vrcp.pop %v2414
      %v2429 = vrcp.pop %v2417
      %v2430 = vrcp.pop %v2420
      %v2431 = vrcp.pop %v2423
      %v2432 = vmul.f32 %v2385, %v2424
      %v2433 = vmul.f32 %v2387, %v2425
      %v2434 = vmul.f32 %v2389, %v2426
      %v2435 = vmul.f32 %v2391, %v2427
      %v2436 = vmul.f32 %v2393, %v2428
      %v2437 = vmul.f32 %v2395, %v2429
      %v2438 = vmul.f32 %v2397, %v2430
      %v2439 = vmul.f32 %v2399, %v2431
      %v2440 = vpack.c.bf16 %v2432, %v2432
      %v2441 = vpack.c.bf16 %v2433, %v2433
      %v2442 = vpack.c.bf16 %v2434, %v2434
      %v2443 = vpack.c.bf16 %v2435, %v2435
      %v2444 = vpack.c.bf16 %v2436, %v2436
      %v2445 = vpack.c.bf16 %v2437, %v2437
      %v2446 = vpack.c.bf16 %v2438, %v2438
      %v2447 = vpack.c.bf16 %v2439, %v2439
      %2448 = vrot.lane.b32.xlu0 %v1328, 80
      %v2449 = vpop.permute.xlu0 %2448
      %v2451 = vsel %vm1331, %v2440, 0
      %v2454 = vsel %vm1335, %v2449, 0
      %2456 = vmatpush.bf16.msra.mxu0 0
      %2457 = vmatpush.bf16.msra.mxu0 0
      %2458 = vmatpush.bf16.msra.mxu0 0
      %2459 = vmatpush.bf16.msra.mxu0 0
      %2460 = vmatpush.bf16.msra.mxu0 0
      %2461 = vmatpush.bf16.msra.mxu0 0
      %2462 = vmatpush.bf16.msra.mxu0 0
      %2463 = vmatpush.bf16.msra.mxu0 %v2454
      %2464 = vmatmul.bf16.gmra.mxu0 %v2451
      %v2465 = vpop.f32.mrf.mxu0
      %v2466 = vadd.f32 0.0, %v2465
      %v2467 = vpop.f32.mrf.mxu0
      %2468 = vdwg.mxu0
      %2469 = vrot.lane.b32.xlu0 %v1354, 80
      %v2470 = vpop.permute.xlu0 %2469
      %v2472 = vsel %vm1331, %v2441, 0
      %v2475 = vsel %vm1335, %v2470, 0
      %2477 = vmatpush.bf16.msra.mxu0 0
      %2478 = vmatpush.bf16.msra.mxu0 0
      %2479 = vmatpush.bf16.msra.mxu0 0
      %2480 = vmatpush.bf16.msra.mxu0 0
      %2481 = vmatpush.bf16.msra.mxu0 0
      %2482 = vmatpush.bf16.msra.mxu0 0
      %2483 = vmatpush.bf16.msra.mxu0 0
      %2484 = vmatpush.bf16.msra.mxu0 %v2475
      %2485 = vmatmul.bf16.gmra.mxu0 %v2472
      %v2486 = vpop.f32.mrf.mxu0
      %v2487 = vadd.f32 0.0, %v2486
      %v2488 = vpop.f32.mrf.mxu0
      %2489 = vdwg.mxu0
      %2490 = vrot.lane.b32.xlu0 %v1378, 80
      %v2491 = vpop.permute.xlu0 %2490
      %v2493 = vsel %vm1331, %v2442, 0
      %v2496 = vsel %vm1335, %v2491, 0
      %2498 = vmatpush.bf16.msra.mxu0 0
      %2499 = vmatpush.bf16.msra.mxu0 0
      %2500 = vmatpush.bf16.msra.mxu0 0
      %2501 = vmatpush.bf16.msra.mxu0 0
      %2502 = vmatpush.bf16.msra.mxu0 0
      %2503 = vmatpush.bf16.msra.mxu0 0
      %2504 = vmatpush.bf16.msra.mxu0 0
      %2505 = vmatpush.bf16.msra.mxu0 %v2496
      %2506 = vmatmul.bf16.gmra.mxu0 %v2493
      %v2507 = vpop.f32.mrf.mxu0
      %v2508 = vadd.f32 0.0, %v2507
      %v2509 = vpop.f32.mrf.mxu0
      %2510 = vdwg.mxu0
      %2511 = vrot.lane.b32.xlu0 %v1402, 80
      %v2512 = vpop.permute.xlu0 %2511
      %v2514 = vsel %vm1331, %v2443, 0
      %v2517 = vsel %vm1335, %v2512, 0
      %2519 = vmatpush.bf16.msra.mxu0 0
      %2520 = vmatpush.bf16.msra.mxu0 0
      %2521 = vmatpush.bf16.msra.mxu0 0
      %2522 = vmatpush.bf16.msra.mxu0 0
      %2523 = vmatpush.bf16.msra.mxu0 0
      %2524 = vmatpush.bf16.msra.mxu0 0
      %2525 = vmatpush.bf16.msra.mxu0 0
      %2526 = vmatpush.bf16.msra.mxu0 %v2517
      %2527 = vmatmul.bf16.gmra.mxu0 %v2514
      %v2528 = vpop.f32.mrf.mxu0
      %v2529 = vadd.f32 0.0, %v2528
      %v2530 = vpop.f32.mrf.mxu0
      %2531 = vdwg.mxu0
      %2532 = vrot.lane.b32.xlu0 %v1426, 80
      %v2533 = vpop.permute.xlu0 %2532
      %v2535 = vsel %vm1331, %v2444, 0
      %v2538 = vsel %vm1335, %v2533, 0
      %2540 = vmatpush.bf16.msra.mxu0 0
      %2541 = vmatpush.bf16.msra.mxu0 0
      %2542 = vmatpush.bf16.msra.mxu0 0
      %2543 = vmatpush.bf16.msra.mxu0 0
      %2544 = vmatpush.bf16.msra.mxu0 0
      %2545 = vmatpush.bf16.msra.mxu0 0
      %2546 = vmatpush.bf16.msra.mxu0 0
      %2547 = vmatpush.bf16.msra.mxu0 %v2538
      %2548 = vmatmul.bf16.gmra.mxu0 %v2535
      %v2549 = vpop.f32.mrf.mxu0
      %v2550 = vadd.f32 0.0, %v2549
      %v2551 = vpop.f32.mrf.mxu0
      %2552 = vdwg.mxu0
      %2553 = vrot.lane.b32.xlu0 %v1450, 80
      %v2554 = vpop.permute.xlu0 %2553
      %v2556 = vsel %vm1331, %v2445, 0
      %v2559 = vsel %vm1335, %v2554, 0
      %2561 = vmatpush.bf16.msra.mxu0 0
      %2562 = vmatpush.bf16.msra.mxu0 0
      %2563 = vmatpush.bf16.msra.mxu0 0
      %2564 = vmatpush.bf16.msra.mxu0 0
      %2565 = vmatpush.bf16.msra.mxu0 0
      %2566 = vmatpush.bf16.msra.mxu0 0
      %2567 = vmatpush.bf16.msra.mxu0 0
      %2568 = vmatpush.bf16.msra.mxu0 %v2559
      %2569 = vmatmul.bf16.gmra.mxu0 %v2556
      %v2570 = vpop.f32.mrf.mxu0
      %v2571 = vadd.f32 0.0, %v2570
      %v2572 = vpop.f32.mrf.mxu0
      %2573 = vdwg.mxu0
      %2574 = vrot.lane.b32.xlu0 %v1474, 80
      %v2575 = vpop.permute.xlu0 %2574
      %v2577 = vsel %vm1331, %v2446, 0
      %v2580 = vsel %vm1335, %v2575, 0
      %2582 = vmatpush.bf16.msra.mxu0 0
      %2583 = vmatpush.bf16.msra.mxu0 0
      %2584 = vmatpush.bf16.msra.mxu0 0
      %2585 = vmatpush.bf16.msra.mxu0 0
      %2586 = vmatpush.bf16.msra.mxu0 0
      %2587 = vmatpush.bf16.msra.mxu0 0
      %2588 = vmatpush.bf16.msra.mxu0 0
      %2589 = vmatpush.bf16.msra.mxu0 %v2580
      %2590 = vmatmul.bf16.gmra.mxu0 %v2577
      %v2591 = vpop.f32.mrf.mxu0
      %v2592 = vadd.f32 0.0, %v2591
      %v2593 = vpop.f32.mrf.mxu0
      %2594 = vdwg.mxu0
      %2595 = vrot.lane.b32.xlu0 %v1498, 80
      %v2596 = vpop.permute.xlu0 %2595
      %v2598 = vsel %vm1331, %v2447, 0
      %v2601 = vsel %vm1335, %v2596, 0
      %2603 = vmatpush.bf16.msra.mxu0 0
      %2604 = vmatpush.bf16.msra.mxu0 0
      %2605 = vmatpush.bf16.msra.mxu0 0
      %2606 = vmatpush.bf16.msra.mxu0 0
      %2607 = vmatpush.bf16.msra.mxu0 0
      %2608 = vmatpush.bf16.msra.mxu0 0
      %2609 = vmatpush.bf16.msra.mxu0 0
      %2610 = vmatpush.bf16.msra.mxu0 %v2601
      %2611 = vmatmul.bf16.gmra.mxu0 %v2598
      %v2612 = vpop.f32.mrf.mxu0
      %v2613 = vadd.f32 0.0, %v2612
      %v2614 = vpop.f32.mrf.mxu0
      %2615 = vdwg.mxu0
      %2616 = vst [vmem:[#allocation1] ss:$9 sm:$0xff] %v877
      %s2617 = scalar_lea.vmem [#allocation1], 1
      %2618 = vst [vmem:[%s2617] ss:$9 sm:$0xff] %v895
      %s2619 = scalar_lea.vmem [#allocation1], 2
      %2620 = vst [vmem:[%s2619] ss:$9 sm:$0xff] %v896
      %s2621 = scalar_lea.vmem [#allocation1], 3
      %2622 = vst [vmem:[%s2621] ss:$9 sm:$0xff] %v897
      %s2623 = scalar_lea.vmem [#allocation1], 4
      %2624 = vst [vmem:[%s2623] ss:$9 sm:$0xff] %v898
      %v2625 = vld [vmem:[#allocation1] sm:$0xff]
      %2626 = vst [vmem:[#allocation1] ss:$9 sm:$0xff] %v899
      %2627 = vst [vmem:[%s2617] ss:$9 sm:$0xff] %v900
      %2628 = vst [vmem:[%s2619] ss:$9 sm:$0xff] %v901
      %2629 = vst [vmem:[%s2621] ss:$9 sm:$0xff] %v879
      %2630 = vst [vmem:[%s2623] ss:$9 sm:$0xff] %v902
      %v2631 = vld [vmem:[#allocation1] sm:$0xff]
      %2632 = vst [vmem:[#allocation1] ss:$9 sm:$0xff] %v903
      %2633 = vst [vmem:[%s2617] ss:$9 sm:$0xff] %v904
      %2634 = vst [vmem:[%s2619] ss:$9 sm:$0xff] %v905
      %2635 = vst [vmem:[%s2621] ss:$9 sm:$0xff] %v906
      %2636 = vst [vmem:[%s2623] ss:$9 sm:$0xff] %v907
      %v2637 = vld [vmem:[#allocation1] sm:$0xff]
      %2638 = vst [vmem:[#allocation1] ss:$9 sm:$0xff] %v908
      %2639 = vst [vmem:[%s2617] ss:$9 sm:$0xff] %v882
      %2640 = vst [vmem:[%s2619] ss:$9 sm:$0xff] %v909
      %2641 = vst [vmem:[%s2621] ss:$9 sm:$0xff] %v910
      %2642 = vst [vmem:[%s2623] ss:$9 sm:$0xff] %v911
      %v2643 = vld [vmem:[#allocation1] sm:$0xff]
      %2644 = vst [vmem:[#allocation1] ss:$9 sm:$0xff] %v912
      %2645 = vst [vmem:[%s2617] ss:$9 sm:$0xff] %v913
      %2646 = vst [vmem:[%s2619] ss:$9 sm:$0xff] %v914
      %2647 = vst [vmem:[%s2621] ss:$9 sm:$0xff] %v915
      %2648 = vst [vmem:[%s2623] ss:$9 sm:$0xff] %v884
      %v2649 = vld [vmem:[#allocation1] sm:$0xff]
      %2650 = vst [vmem:[#allocation1] ss:$9 sm:$0xff] %v916
      %2651 = vst [vmem:[%s2617] ss:$9 sm:$0xff] %v917
      %2652 = vst [vmem:[%s2619] ss:$9 sm:$0xff] %v918
      %2653 = vst [vmem:[%s2621] ss:$9 sm:$0xff] %v919
      %2654 = vst [vmem:[%s2623] ss:$9 sm:$0xff] %v920
      %v2655 = vld [vmem:[#allocation1] sm:$0xff]
      %2656 = vst [vmem:[#allocation1] ss:$9 sm:$0xff] %v921
      %2657 = vst [vmem:[%s2617] ss:$9 sm:$0xff] %v922
      %2658 = vst [vmem:[%s2619] ss:$9 sm:$0xff] %v887
      %2659 = vst [vmem:[%s2621] ss:$9 sm:$0xff] %v923
      %2660 = vst [vmem:[%s2623] ss:$9 sm:$0xff] %v924
      %v2661 = vld [vmem:[#allocation1] sm:$0xff]
      %2662 = vst [vmem:[#allocation1] ss:$9 sm:$0xff] %v925
      %2663 = vst [vmem:[%s2617] ss:$9 sm:$0xff] %v926
      %2664 = vst [vmem:[%s2619] ss:$9 sm:$0xff] %v927
      %2665 = vst [vmem:[%s2621] ss:$9 sm:$0xff] %v928
      %2666 = vst [vmem:[%s2623] ss:$9 sm:$0xff] %v929
      %v2667 = vld [vmem:[#allocation1] sm:$0xff]
      %v2676 = vpack.c.bf16 %v2625, %v2625
      %v2677 = vpack.c.bf16 %v2631, %v2631
      %v2678 = vpack.c.bf16 %v2637, %v2637
      %v2679 = vpack.c.bf16 %v2643, %v2643
      %v2680 = vpack.c.bf16 %v2649, %v2649
      %v2681 = vpack.c.bf16 %v2655, %v2655
      %v2682 = vpack.c.bf16 %v2661, %v2661
      %v2683 = vpack.c.bf16 %v2667, %v2667
      %v2685 = vunpack.c.l.b16 %v2676
      %v2686 = vpack.c.b16 %v2685, %v2685
      %2687 = vrot.lane.b32.xlu0 %v2686, 104
      %v2688 = vpop.permute.xlu0 %2687
      %2689 = vrot.lane.b32.xlu0 %v1328, 104
      %v2690 = vpop.permute.xlu0 %2689
      %v2692 = vsel %vm1068, %v2688, 0
      %v2695 = vsel %vm1068, %v2690, 0
      %2697 = vmatpush.bf16.xpose.msra.mxu0 0
      %2698 = vmatpush.bf16.xpose.msra.mxu0 0
      %2699 = vmatpush.bf16.xpose.msra.mxu0 0
      %2700 = vmatpush.bf16.xpose.msra.mxu0 0
      %2701 = vmatpush.bf16.xpose.msra.mxu0 0
      %2702 = vmatpush.bf16.xpose.msra.mxu0 0
      %2703 = vmatpush.bf16.xpose.msra.mxu0 0
      %2704 = vmatpush.bf16.xpose.msra.mxu0 %v2695
      %2705 = vmatmul.bf16.gmra.mxu0 %v2692
      %v2706 = vpop.f32.mrf.mxu0
      %v2707 = vadd.f32 0.0, %v2706
      %v2708 = vpop.f32.mrf.mxu0
      %2709 = vdwg.mxu0
      %v2711 = vunpack.c.l.b16 %v2677
      %v2712 = vpack.c.b16 %v2711, %v2711
      %2713 = vrot.lane.b32.xlu0 %v2712, 104
      %v2714 = vpop.permute.xlu0 %2713
      %2715 = vrot.lane.b32.xlu0 %v1354, 104
      %v2716 = vpop.permute.xlu0 %2715
      %v2718 = vsel %vm1068, %v2714, 0
      %v2721 = vsel %vm1068, %v2716, 0
      %2723 = vmatpush.bf16.xpose.msra.mxu0 0
      %2724 = vmatpush.bf16.xpose.msra.mxu0 0
      %2725 = vmatpush.bf16.xpose.msra.mxu0 0
      %2726 = vmatpush.bf16.xpose.msra.mxu0 0
      %2727 = vmatpush.bf16.xpose.msra.mxu0 0
      %2728 = vmatpush.bf16.xpose.msra.mxu0 0
      %2729 = vmatpush.bf16.xpose.msra.mxu0 0
      %2730 = vmatpush.bf16.xpose.msra.mxu0 %v2721
      %2731 = vmatmul.bf16.gmra.mxu0 %v2718
      %v2732 = vpop.f32.mrf.mxu0
      %v2733 = vadd.f32 0.0, %v2732
      %v2734 = vpop.f32.mrf.mxu0
      %2735 = vdwg.mxu0
      %v2737 = vunpack.c.l.b16 %v2678
      %v2738 = vpack.c.b16 %v2737, %v2737
      %2739 = vrot.lane.b32.xlu0 %v2738, 104
      %v2740 = vpop.permute.xlu0 %2739
      %2741 = vrot.lane.b32.xlu0 %v1378, 104
      %v2742 = vpop.permute.xlu0 %2741
      %v2744 = vsel %vm1068, %v2740, 0
      %v2747 = vsel %vm1068, %v2742, 0
      %2749 = vmatpush.bf16.xpose.msra.mxu0 0
      %2750 = vmatpush.bf16.xpose.msra.mxu0 0
      %2751 = vmatpush.bf16.xpose.msra.mxu0 0
      %2752 = vmatpush.bf16.xpose.msra.mxu0 0
      %2753 = vmatpush.bf16.xpose.msra.mxu0 0
      %2754 = vmatpush.bf16.xpose.msra.mxu0 0
      %2755 = vmatpush.bf16.xpose.msra.mxu0 0
      %2756 = vmatpush.bf16.xpose.msra.mxu0 %v2747
      %2757 = vmatmul.bf16.gmra.mxu0 %v2744
      %v2758 = vpop.f32.mrf.mxu0
      %v2759 = vadd.f32 0.0, %v2758
      %v2760 = vpop.f32.mrf.mxu0
      %2761 = vdwg.mxu0
      %v2763 = vunpack.c.l.b16 %v2679
      %v2764 = vpack.c.b16 %v2763, %v2763
      %2765 = vrot.lane.b32.xlu0 %v2764, 104
      %v2766 = vpop.permute.xlu0 %2765
      %2767 = vrot.lane.b32.xlu0 %v1402, 104
      %v2768 = vpop.permute.xlu0 %2767
      %v2770 = vsel %vm1068, %v2766, 0
      %v2773 = vsel %vm1068, %v2768, 0
      %2775 = vmatpush.bf16.xpose.msra.mxu0 0
      %2776 = vmatpush.bf16.xpose.msra.mxu0 0
      %2777 = vmatpush.bf16.xpose.msra.mxu0 0
      %2778 = vmatpush.bf16.xpose.msra.mxu0 0
      %2779 = vmatpush.bf16.xpose.msra.mxu0 0
      %2780 = vmatpush.bf16.xpose.msra.mxu0 0
      %2781 = vmatpush.bf16.xpose.msra.mxu0 0
      %2782 = vmatpush.bf16.xpose.msra.mxu0 %v2773
      %2783 = vmatmul.bf16.gmra.mxu0 %v2770
      %v2784 = vpop.f32.mrf.mxu0
      %v2785 = vadd.f32 0.0, %v2784
      %v2786 = vpop.f32.mrf.mxu0
      %2787 = vdwg.mxu0
      %v2789 = vunpack.c.l.b16 %v2680
      %v2790 = vpack.c.b16 %v2789, %v2789
      %2791 = vrot.lane.b32.xlu0 %v2790, 104
      %v2792 = vpop.permute.xlu0 %2791
      %2793 = vrot.lane.b32.xlu0 %v1426, 104
      %v2794 = vpop.permute.xlu0 %2793
      %v2796 = vsel %vm1068, %v2792, 0
      %v2799 = vsel %vm1068, %v2794, 0
      %2801 = vmatpush.bf16.xpose.msra.mxu0 0
      %2802 = vmatpush.bf16.xpose.msra.mxu0 0
      %2803 = vmatpush.bf16.xpose.msra.mxu0 0
      %2804 = vmatpush.bf16.xpose.msra.mxu0 0
      %2805 = vmatpush.bf16.xpose.msra.mxu0 0
      %2806 = vmatpush.bf16.xpose.msra.mxu0 0
      %2807 = vmatpush.bf16.xpose.msra.mxu0 0
      %2808 = vmatpush.bf16.xpose.msra.mxu0 %v2799
      %2809 = vmatmul.bf16.gmra.mxu0 %v2796
      %v2810 = vpop.f32.mrf.mxu0
      %v2811 = vadd.f32 0.0, %v2810
      %v2812 = vpop.f32.mrf.mxu0
      %2813 = vdwg.mxu0
      %v2815 = vunpack.c.l.b16 %v2681
      %v2816 = vpack.c.b16 %v2815, %v2815
      %2817 = vrot.lane.b32.xlu0 %v2816, 104
      %v2818 = vpop.permute.xlu0 %2817
      %2819 = vrot.lane.b32.xlu0 %v1450, 104
      %v2820 = vpop.permute.xlu0 %2819
      %v2822 = vsel %vm1068, %v2818, 0
      %v2825 = vsel %vm1068, %v2820, 0
      %2827 = vmatpush.bf16.xpose.msra.mxu0 0
      %2828 = vmatpush.bf16.xpose.msra.mxu0 0
      %2829 = vmatpush.bf16.xpose.msra.mxu0 0
      %2830 = vmatpush.bf16.xpose.msra.mxu0 0
      %2831 = vmatpush.bf16.xpose.msra.mxu0 0
      %2832 = vmatpush.bf16.xpose.msra.mxu0 0
      %2833 = vmatpush.bf16.xpose.msra.mxu0 0
      %2834 = vmatpush.bf16.xpose.msra.mxu0 %v2825
      %2835 = vmatmul.bf16.gmra.mxu0 %v2822
      %v2836 = vpop.f32.mrf.mxu0
      %v2837 = vadd.f32 0.0, %v2836
      %v2838 = vpop.f32.mrf.mxu0
      %2839 = vdwg.mxu0
      %v2841 = vunpack.c.l.b16 %v2682
      %v2842 = vpack.c.b16 %v2841, %v2841
      %2843 = vrot.lane.b32.xlu0 %v2842, 104
      %v2844 = vpop.permute.xlu0 %2843
      %2845 = vrot.lane.b32.xlu0 %v1474, 104
      %v2846 = vpop.permute.xlu0 %2845
      %v2848 = vsel %vm1068, %v2844, 0
      %v2851 = vsel %vm1068, %v2846, 0
      %2853 = vmatpush.bf16.xpose.msra.mxu0 0
      %2854 = vmatpush.bf16.xpose.msra.mxu0 0
      %2855 = vmatpush.bf16.xpose.msra.mxu0 0
      %2856 = vmatpush.bf16.xpose.msra.mxu0 0
      %2857 = vmatpush.bf16.xpose.msra.mxu0 0
      %2858 = vmatpush.bf16.xpose.msra.mxu0 0
      %2859 = vmatpush.bf16.xpose.msra.mxu0 0
      %2860 = vmatpush.bf16.xpose.msra.mxu0 %v2851
      %2861 = vmatmul.bf16.gmra.mxu0 %v2848
      %v2862 = vpop.f32.mrf.mxu0
      %v2863 = vadd.f32 0.0, %v2862
      %v2864 = vpop.f32.mrf.mxu0
      %2865 = vdwg.mxu0
      %v2867 = vunpack.c.l.b16 %v2683
      %v2868 = vpack.c.b16 %v2867, %v2867
      %2869 = vrot.lane.b32.xlu0 %v2868, 104
      %v2870 = vpop.permute.xlu0 %2869
      %2871 = vrot.lane.b32.xlu0 %v1498, 104
      %v2872 = vpop.permute.xlu0 %2871
      %v2874 = vsel %vm1068, %v2870, 0
      %v2877 = vsel %vm1068, %v2872, 0
      %2879 = vmatpush.bf16.xpose.msra.mxu0 0
      %2880 = vmatpush.bf16.xpose.msra.mxu0 0
      %2881 = vmatpush.bf16.xpose.msra.mxu0 0
      %2882 = vmatpush.bf16.xpose.msra.mxu0 0
      %2883 = vmatpush.bf16.xpose.msra.mxu0 0
      %2884 = vmatpush.bf16.xpose.msra.mxu0 0
      %2885 = vmatpush.bf16.xpose.msra.mxu0 0
      %2886 = vmatpush.bf16.xpose.msra.mxu0 %v2877
      %2887 = vmatmul.bf16.gmra.mxu0 %v2874
      %v2888 = vpop.f32.mrf.mxu0
      %v2889 = vadd.f32 0.0, %v2888
      %v2890 = vpop.f32.mrf.mxu0
      %2891 = vdwg.mxu0
      %v2892 = vmul.f32 %v2707, 0.35355338
      %v2893 = vmul.f32 %v2733, 0.35355338
      %v2894 = vmul.f32 %v2759, 0.35355338
      %v2895 = vmul.f32 %v2785, 0.35355338
      %v2896 = vmul.f32 %v2811, 0.35355338
      %v2897 = vmul.f32 %v2837, 0.35355338
      %v2898 = vmul.f32 %v2863, 0.35355338
      %v2899 = vmul.f32 %v2889, 0.35355338
      %v2900 = vsel %vm1229, %v2892, -inf
      %2901 = vmax.xlane.f32.xlu0 %v2900
      %v2902 = vpop.xlane.xlu0 %2901
      %v2903 = vsel %vm1229, %v2893, -inf
      %2904 = vmax.xlane.f32.xlu0 %v2903
      %v2905 = vpop.xlane.xlu0 %2904
      %v2906 = vsel %vm1229, %v2894, -inf
      %2907 = vmax.xlane.f32.xlu0 %v2906
      %v2908 = vpop.xlane.xlu0 %2907
      %v2909 = vsel %vm1229, %v2895, -inf
      %2910 = vmax.xlane.f32.xlu0 %v2909
      %v2911 = vpop.xlane.xlu0 %2910
      %v2912 = vsel %vm1229, %v2896, -inf
      %2913 = vmax.xlane.f32.xlu0 %v2912
      %v2914 = vpop.xlane.xlu0 %2913
      %v2915 = vsel %vm1229, %v2897, -inf
      %2916 = vmax.xlane.f32.xlu0 %v2915
      %v2917 = vpop.xlane.xlu0 %2916
      %v2918 = vsel %vm1229, %v2898, -inf
      %2919 = vmax.xlane.f32.xlu0 %v2918
      %v2920 = vpop.xlane.xlu0 %2919
      %v2921 = vsel %vm1229, %v2899, -inf
      %2922 = vmax.xlane.f32.xlu0 %v2921
      %v2923 = vpop.xlane.xlu0 %2922
      %v2924 = vsub.f32 %v2892, %v2902
      %v2925 = vsub.f32 %v2893, %v2905
      %v2926 = vsub.f32 %v2894, %v2908
      %v2927 = vsub.f32 %v2895, %v2911
      %v2928 = vsub.f32 %v2896, %v2914
      %v2929 = vsub.f32 %v2897, %v2917
      %v2930 = vsub.f32 %v2898, %v2920
      %v2931 = vsub.f32 %v2899, %v2923
      %v2932 = vmul.f32 %v2924, 1.442695
      %v2933 = vpow.pop %v2932
      %v2934 = vmul.f32 %v2925, 1.442695
      %v2935 = vpow.pop %v2934
      %v2936 = vmul.f32 %v2926, 1.442695
      %v2937 = vpow.pop %v2936
      %v2938 = vmul.f32 %v2927, 1.442695
      %v2939 = vpow.pop %v2938
      %v2940 = vmul.f32 %v2928, 1.442695
      %v2941 = vpow.pop %v2940
      %v2942 = vmul.f32 %v2929, 1.442695
      %v2943 = vpow.pop %v2942
      %v2944 = vmul.f32 %v2930, 1.442695
      %v2945 = vpow.pop %v2944
      %v2946 = vmul.f32 %v2931, 1.442695
      %v2947 = vpow.pop %v2946
      %v2948 = vsel %vm1229, %v2933, 0.0
      %2949 = vadd.xlane.f32.xlu0 %v2948
      %v2950 = vpop.xlane.xlu0 %2949
      %v2951 = vsel %vm1229, %v2935, 0.0
      %2952 = vadd.xlane.f32.xlu0 %v2951
      %v2953 = vpop.xlane.xlu0 %2952
      %v2954 = vsel %vm1229, %v2937, 0.0
      %2955 = vadd.xlane.f32.xlu0 %v2954
      %v2956 = vpop.xlane.xlu0 %2955
      %v2957 = vsel %vm1229, %v2939, 0.0
      %2958 = vadd.xlane.f32.xlu0 %v2957
      %v2959 = vpop.xlane.xlu0 %2958
      %v2960 = vsel %vm1229, %v2941, 0.0
      %2961 = vadd.xlane.f32.xlu0 %v2960
      %v2962 = vpop.xlane.xlu0 %2961
      %v2963 = vsel %vm1229, %v2943, 0.0
      %2964 = vadd.xlane.f32.xlu0 %v2963
      %v2965 = vpop.xlane.xlu0 %2964
      %v2966 = vsel %vm1229, %v2945, 0.0
      %2967 = vadd.xlane.f32.xlu0 %v2966
      %v2968 = vpop.xlane.xlu0 %2967
      %v2969 = vsel %vm1229, %v2947, 0.0
      %2970 = vadd.xlane.f32.xlu0 %v2969
      %v2971 = vpop.xlane.xlu0 %2970
      %v2972 = vrcp.pop %v2950
      %v2973 = vrcp.pop %v2953
      %v2974 = vrcp.pop %v2956
      %v2975 = vrcp.pop %v2959
      %v2976 = vrcp.pop %v2962
      %v2977 = vrcp.pop %v2965
      %v2978 = vrcp.pop %v2968
      %v2979 = vrcp.pop %v2971
      %v2980 = vmul.f32 %v2933, %v2972
      %v2981 = vmul.f32 %v2935, %v2973
      %v2982 = vmul.f32 %v2937, %v2974
      %v2983 = vmul.f32 %v2939, %v2975
      %v2984 = vmul.f32 %v2941, %v2976
      %v2985 = vmul.f32 %v2943, %v2977
      %v2986 = vmul.f32 %v2945, %v2978
      %v2987 = vmul.f32 %v2947, %v2979
      %v2988 = vpack.c.bf16 %v2980, %v2980
      %v2989 = vpack.c.bf16 %v2981, %v2981
      %v2990 = vpack.c.bf16 %v2982, %v2982
      %v2991 = vpack.c.bf16 %v2983, %v2983
      %v2992 = vpack.c.bf16 %v2984, %v2984
      %v2993 = vpack.c.bf16 %v2985, %v2985
      %v2994 = vpack.c.bf16 %v2986, %v2986
      %v2995 = vpack.c.bf16 %v2987, %v2987
      %2996 = vrot.lane.b32.xlu0 %v1328, 72
      %v2997 = vpop.permute.xlu0 %2996
      %v2999 = vsel %vm1331, %v2988, 0
      %v3002 = vsel %vm1335, %v2997, 0
      %3004 = vmatpush.bf16.msra.mxu0 0
      %3005 = vmatpush.bf16.msra.mxu0 0
      %3006 = vmatpush.bf16.msra.mxu0 0
      %3007 = vmatpush.bf16.msra.mxu0 0
      %3008 = vmatpush.bf16.msra.mxu0 0
      %3009 = vmatpush.bf16.msra.mxu0 0
      %3010 = vmatpush.bf16.msra.mxu0 0
      %3011 = vmatpush.bf16.msra.mxu0 %v3002
      %3012 = vmatmul.bf16.gmra.mxu0 %v2999
      %v3013 = vpop.f32.mrf.mxu0
      %v3014 = vadd.f32 0.0, %v3013
      %v3015 = vpop.f32.mrf.mxu0
      %3016 = vdwg.mxu0
      %3017 = vrot.lane.b32.xlu0 %v1354, 72
      %v3018 = vpop.permute.xlu0 %3017
      %v3020 = vsel %vm1331, %v2989, 0
      %v3023 = vsel %vm1335, %v3018, 0
      %3025 = vmatpush.bf16.msra.mxu0 0
      %3026 = vmatpush.bf16.msra.mxu0 0
      %3027 = vmatpush.bf16.msra.mxu0 0
      %3028 = vmatpush.bf16.msra.mxu0 0
      %3029 = vmatpush.bf16.msra.mxu0 0
      %3030 = vmatpush.bf16.msra.mxu0 0
      %3031 = vmatpush.bf16.msra.mxu0 0
      %3032 = vmatpush.bf16.msra.mxu0 %v3023
      %3033 = vmatmul.bf16.gmra.mxu0 %v3020
      %v3034 = vpop.f32.mrf.mxu0
      %v3035 = vadd.f32 0.0, %v3034
      %v3036 = vpop.f32.mrf.mxu0
      %3037 = vdwg.mxu0
      %3038 = vrot.lane.b32.xlu0 %v1378, 72
      %v3039 = vpop.permute.xlu0 %3038
      %v3041 = vsel %vm1331, %v2990, 0
      %v3044 = vsel %vm1335, %v3039, 0
      %3046 = vmatpush.bf16.msra.mxu0 0
      %3047 = vmatpush.bf16.msra.mxu0 0
      %3048 = vmatpush.bf16.msra.mxu0 0
      %3049 = vmatpush.bf16.msra.mxu0 0
      %3050 = vmatpush.bf16.msra.mxu0 0
      %3051 = vmatpush.bf16.msra.mxu0 0
      %3052 = vmatpush.bf16.msra.mxu0 0
      %3053 = vmatpush.bf16.msra.mxu0 %v3044
      %3054 = vmatmul.bf16.gmra.mxu0 %v3041
      %v3055 = vpop.f32.mrf.mxu0
      %v3056 = vadd.f32 0.0, %v3055
      %v3057 = vpop.f32.mrf.mxu0
      %3058 = vdwg.mxu0
      %3059 = vrot.lane.b32.xlu0 %v1402, 72
      %v3060 = vpop.permute.xlu0 %3059
      %v3062 = vsel %vm1331, %v2991, 0
      %v3065 = vsel %vm1335, %v3060, 0
      %3067 = vmatpush.bf16.msra.mxu0 0
      %3068 = vmatpush.bf16.msra.mxu0 0
      %3069 = vmatpush.bf16.msra.mxu0 0
      %3070 = vmatpush.bf16.msra.mxu0 0
      %3071 = vmatpush.bf16.msra.mxu0 0
      %3072 = vmatpush.bf16.msra.mxu0 0
      %3073 = vmatpush.bf16.msra.mxu0 0
      %3074 = vmatpush.bf16.msra.mxu0 %v3065
      %3075 = vmatmul.bf16.gmra.mxu0 %v3062
      %v3076 = vpop.f32.mrf.mxu0
      %v3077 = vadd.f32 0.0, %v3076
      %v3078 = vpop.f32.mrf.mxu0
      %3079 = vdwg.mxu0
      %3080 = vrot.lane.b32.xlu0 %v1426, 72
      %v3081 = vpop.permute.xlu0 %3080
      %v3083 = vsel %vm1331, %v2992, 0
      %v3086 = vsel %vm1335, %v3081, 0
      %3088 = vmatpush.bf16.msra.mxu0 0
      %3089 = vmatpush.bf16.msra.mxu0 0
      %3090 = vmatpush.bf16.msra.mxu0 0
      %3091 = vmatpush.bf16.msra.mxu0 0
      %3092 = vmatpush.bf16.msra.mxu0 0
      %3093 = vmatpush.bf16.msra.mxu0 0
      %3094 = vmatpush.bf16.msra.mxu0 0
      %3095 = vmatpush.bf16.msra.mxu0 %v3086
      %3096 = vmatmul.bf16.gmra.mxu0 %v3083
      %v3097 = vpop.f32.mrf.mxu0
      %v3098 = vadd.f32 0.0, %v3097
      %v3099 = vpop.f32.mrf.mxu0
      %3100 = vdwg.mxu0
      %3101 = vrot.lane.b32.xlu0 %v1450, 72
      %v3102 = vpop.permute.xlu0 %3101
      %v3104 = vsel %vm1331, %v2993, 0
      %v3107 = vsel %vm1335, %v3102, 0
      %3109 = vmatpush.bf16.msra.mxu0 0
      %3110 = vmatpush.bf16.msra.mxu0 0
      %3111 = vmatpush.bf16.msra.mxu0 0
      %3112 = vmatpush.bf16.msra.mxu0 0
      %3113 = vmatpush.bf16.msra.mxu0 0
      %3114 = vmatpush.bf16.msra.mxu0 0
      %3115 = vmatpush.bf16.msra.mxu0 0
      %3116 = vmatpush.bf16.msra.mxu0 %v3107
      %3117 = vmatmul.bf16.gmra.mxu0 %v3104
      %v3118 = vpop.f32.mrf.mxu0
      %v3119 = vadd.f32 0.0, %v3118
      %v3120 = vpop.f32.mrf.mxu0
      %3121 = vdwg.mxu0
      %3122 = vrot.lane.b32.xlu0 %v1474, 72
      %v3123 = vpop.permute.xlu0 %3122
      %v3125 = vsel %vm1331, %v2994, 0
      %v3128 = vsel %vm1335, %v3123, 0
      %3130 = vmatpush.bf16.msra.mxu0 0
      %3131 = vmatpush.bf16.msra.mxu0 0
      %3132 = vmatpush.bf16.msra.mxu0 0
      %3133 = vmatpush.bf16.msra.mxu0 0
      %3134 = vmatpush.bf16.msra.mxu0 0
      %3135 = vmatpush.bf16.msra.mxu0 0
      %3136 = vmatpush.bf16.msra.mxu0 0
      %3137 = vmatpush.bf16.msra.mxu0 %v3128
      %3138 = vmatmul.bf16.gmra.mxu0 %v3125
      %v3139 = vpop.f32.mrf.mxu0
      %v3140 = vadd.f32 0.0, %v3139
      %v3141 = vpop.f32.mrf.mxu0
      %3142 = vdwg.mxu0
      %3143 = vrot.lane.b32.xlu0 %v1498, 72
      %v3144 = vpop.permute.xlu0 %3143
      %v3146 = vsel %vm1331, %v2995, 0
      %v3149 = vsel %vm1335, %v3144, 0
      %3151 = vmatpush.bf16.msra.mxu0 0
      %3152 = vmatpush.bf16.msra.mxu0 0
      %3153 = vmatpush.bf16.msra.mxu0 0
      %3154 = vmatpush.bf16.msra.mxu0 0
      %3155 = vmatpush.bf16.msra.mxu0 0
      %3156 = vmatpush.bf16.msra.mxu0 0
      %3157 = vmatpush.bf16.msra.mxu0 0
      %3158 = vmatpush.bf16.msra.mxu0 %v3149
      %3159 = vmatmul.bf16.gmra.mxu0 %v3146
      %v3160 = vpop.f32.mrf.mxu0
      %v3161 = vadd.f32 0.0, %v3160
      %v3162 = vpop.f32.mrf.mxu0
      %3163 = vdwg.mxu0
      %3172 = vrot.lane.b32.xlu0 %v1918, 8
      %v3173 = vpop.permute.xlu0 %3172
      %3174 = vrot.lane.b32.xlu0 %v1939, 8
      %v3175 = vpop.permute.xlu0 %3174
      %3176 = vrot.lane.b32.xlu0 %v1960, 8
      %v3177 = vpop.permute.xlu0 %3176
      %3178 = vrot.lane.b32.xlu0 %v1981, 8
      %v3179 = vpop.permute.xlu0 %3178
      %3180 = vrot.lane.b32.xlu0 %v2002, 8
      %v3181 = vpop.permute.xlu0 %3180
      %3182 = vrot.lane.b32.xlu0 %v2023, 8
      %v3183 = vpop.permute.xlu0 %3182
      %3184 = vrot.lane.b32.xlu0 %v2044, 8
      %v3185 = vpop.permute.xlu0 %3184
      %3186 = vrot.lane.b32.xlu0 %v2065, 8
      %v3187 = vpop.permute.xlu0 %3186
      %3204 = vrot.lane.b32.xlu0 %v2466, 16
      %v3205 = vpop.permute.xlu0 %3204
      %3206 = vrot.lane.b32.xlu0 %v2487, 16
      %v3207 = vpop.permute.xlu0 %3206
      %3208 = vrot.lane.b32.xlu0 %v2508, 16
      %v3209 = vpop.permute.xlu0 %3208
      %3210 = vrot.lane.b32.xlu0 %v2529, 16
      %v3211 = vpop.permute.xlu0 %3210
      %3212 = vrot.lane.b32.xlu0 %v2550, 16
      %v3213 = vpop.permute.xlu0 %3212
      %3214 = vrot.lane.b32.xlu0 %v2571, 16
      %v3215 = vpop.permute.xlu0 %3214
      %3216 = vrot.lane.b32.xlu0 %v2592, 16
      %v3217 = vpop.permute.xlu0 %3216
      %3218 = vrot.lane.b32.xlu0 %v2613, 16
      %v3219 = vpop.permute.xlu0 %3218
      %3236 = vrot.lane.b32.xlu0 %v3014, 24
      %v3237 = vpop.permute.xlu0 %3236
      %3238 = vrot.lane.b32.xlu0 %v3035, 24
      %v3239 = vpop.permute.xlu0 %3238
      %3240 = vrot.lane.b32.xlu0 %v3056, 24
      %v3241 = vpop.permute.xlu0 %3240
      %3242 = vrot.lane.b32.xlu0 %v3077, 24
      %v3243 = vpop.permute.xlu0 %3242
      %3244 = vrot.lane.b32.xlu0 %v3098, 24
      %v3245 = vpop.permute.xlu0 %3244
      %3246 = vrot.lane.b32.xlu0 %v3119, 24
      %v3247 = vpop.permute.xlu0 %3246
      %3248 = vrot.lane.b32.xlu0 %v3140, 24
      %v3249 = vpop.permute.xlu0 %3248
      %3250 = vrot.lane.b32.xlu0 %v3161, 24
      %v3251 = vpop.permute.xlu0 %3250
      %v3260 = vsel %vm1068, %v1349, %v3173
      %v3261 = vsel %vm1068, %v1373, %v3175
      %v3262 = vsel %vm1068, %v1397, %v3177
      %v3263 = vsel %vm1068, %v1421, %v3179
      %v3264 = vsel %vm1068, %v1445, %v3181
      %v3265 = vsel %vm1068, %v1469, %v3183
      %v3266 = vsel %vm1068, %v1493, %v3185
      %v3267 = vsel %vm1068, %v1517, %v3187
      %vm3268 = vcmask 130048
      %v3269 = vsel %vm3268, %v3260, %v3205
      %v3270 = vsel %vm3268, %v3261, %v3207
      %v3271 = vsel %vm3268, %v3262, %v3209
      %v3272 = vsel %vm3268, %v3263, %v3211
      %v3273 = vsel %vm3268, %v3264, %v3213
      %v3274 = vsel %vm3268, %v3265, %v3215
      %v3275 = vsel %vm3268, %v3266, %v3217
      %v3276 = vsel %vm3268, %v3267, %v3219
      %vm3277 = vcmask 195584
      %v3278 = vsel %vm3277, %v3269, %v3237
      %v3279 = vsel %vm3277, %v3270, %v3239
      %v3280 = vsel %vm3277, %v3271, %v3241
      %v3281 = vsel %vm3277, %v3272, %v3243
      %v3282 = vsel %vm3277, %v3273, %v3245
      %v3283 = vsel %vm3277, %v3274, %v3247
      %v3284 = vsel %vm3277, %v3275, %v3249
      %v3285 = vsel %vm3277, %v3276, %v3251
      %v3294 = vrot.slane %v3278, 1
      %v3295 = vrot.slane %v3278, 2
      %v3296 = vrot.slane %v3278, 3
      %v3297 = vrot.slane %v3278, 4
      %v3298 = vrot.slane %v3279, 1
      %v3299 = vrot.slane %v3279, 2
      %v3300 = vrot.slane %v3279, 3
      %v3301 = vrot.slane %v3279, 4
      %v3302 = vrot.slane %v3280, 1
      %v3303 = vrot.slane %v3280, 2
      %v3304 = vrot.slane %v3280, 3
      %v3305 = vrot.slane %v3280, 4
      %v3306 = vrot.slane %v3281, 1
      %v3307 = vrot.slane %v3281, 2
      %v3308 = vrot.slane %v3281, 3
      %v3309 = vrot.slane %v3281, 4
      %v3310 = vrot.slane %v3282, 1
      %v3311 = vrot.slane %v3282, 2
      %v3312 = vrot.slane %v3282, 3
      %v3313 = vrot.slane %v3282, 4
      %v3314 = vrot.slane %v3283, 1
      %v3315 = vrot.slane %v3283, 2
      %v3316 = vrot.slane %v3283, 3
      %v3317 = vrot.slane %v3283, 4
      %v3318 = vrot.slane %v3284, 1
      %v3319 = vrot.slane %v3284, 2
      %v3320 = vrot.slane %v3284, 3
      %v3321 = vrot.slane %v3284, 4
      %v3322 = vrot.slane %v3285, 1
      %v3323 = vrot.slane %v3285, 2
      %v3324 = vrot.slane %v3285, 3
      %v3325 = vrot.slane %v3285, 4
      %3326 = vst [vmem:[#allocation1] ss:$9 sm:$0xff] %v3278
      %s3327 = scalar_lea.vmem [#allocation1], 1
      %3328 = vst [vmem:[%s3327] ss:$9 sm:$0xff] %v3294
      %s3329 = scalar_lea.vmem [#allocation1], 2
      %3330 = vst [vmem:[%s3329] ss:$9 sm:$0xff] %v3295
      %s3331 = scalar_lea.vmem [#allocation1], 3
      %3332 = vst [vmem:[%s3331] ss:$9 sm:$0xff] %v3296
      %s3333 = scalar_lea.vmem [#allocation1], 4
      %3334 = vst [vmem:[%s3333] ss:$9 sm:$0xff] %v3297
      %s3335 = scalar_lea.vmem [#allocation1], 5
      %3336 = vst [vmem:[%s3335] ss:$9 sm:$0xff] %v3279
      %s3337 = scalar_lea.vmem [#allocation1], 6
      %3338 = vst [vmem:[%s3337] ss:$9 sm:$0xff] %v3298
      %s3339 = scalar_lea.vmem [#allocation1], 7
      %3340 = vst [vmem:[%s3339] ss:$9 sm:$0xff] %v3299
      %v3341 = vld [vmem:[#allocation1] sm:$0xff]
      %3342 = vst [vmem:[#allocation1] ss:$9 sm:$0xff] %v3300
      %3343 = vst [vmem:[%s3327] ss:$9 sm:$0xff] %v3301
      %3344 = vst [vmem:[%s3329] ss:$9 sm:$0xff] %v3280
      %3345 = vst [vmem:[%s3331] ss:$9 sm:$0xff] %v3302
      %3346 = vst [vmem:[%s3333] ss:$9 sm:$0xff] %v3303
      %3347 = vst [vmem:[%s3335] ss:$9 sm:$0xff] %v3304
      %3348 = vst [vmem:[%s3337] ss:$9 sm:$0xff] %v3305
      %3349 = vst [vmem:[%s3339] ss:$9 sm:$0xff] %v3281
      %v3350 = vld [vmem:[#allocation1] sm:$0xff]
      %3351 = vst [vmem:[#allocation1] ss:$9 sm:$0xff] %v3306
      %3352 = vst [vmem:[%s3327] ss:$9 sm:$0xff] %v3307
      %3353 = vst [vmem:[%s3329] ss:$9 sm:$0xff] %v3308
      %3354 = vst [vmem:[%s3331] ss:$9 sm:$0xff] %v3309
      %3355 = vst [vmem:[%s3333] ss:$9 sm:$0xff] %v3282
      %3356 = vst [vmem:[%s3335] ss:$9 sm:$0xff] %v3310
      %3357 = vst [vmem:[%s3337] ss:$9 sm:$0xff] %v3311
      %3358 = vst [vmem:[%s3339] ss:$9 sm:$0xff] %v3312
      %v3359 = vld [vmem:[#allocation1] sm:$0xff]
      %3360 = vst [vmem:[#allocation1] ss:$9 sm:$0xff] %v3313
      %3361 = vst [vmem:[%s3327] ss:$9 sm:$0xff] %v3283
      %3362 = vst [vmem:[%s3329] ss:$9 sm:$0xff] %v3314
      %3363 = vst [vmem:[%s3331] ss:$9 sm:$0xff] %v3315
      %3364 = vst [vmem:[%s3333] ss:$9 sm:$0xff] %v3316
      %3365 = vst [vmem:[%s3335] ss:$9 sm:$0xff] %v3317
      %3366 = vst [vmem:[%s3337] ss:$9 sm:$0xff] %v3284
      %3367 = vst [vmem:[%s3339] ss:$9 sm:$0xff] %v3318
      %v3368 = vld [vmem:[#allocation1] sm:$0xff]
      %3369 = vst [vmem:[#allocation1] ss:$9 sm:$0xff] %v3319
      %3370 = vst [vmem:[%s3327] ss:$9 sm:$0xff] %v3320
      %3371 = vst [vmem:[%s3329] ss:$9 sm:$0xff] %v3321
      %3372 = vst [vmem:[%s3331] ss:$9 sm:$0xff] %v3285
      %3373 = vst [vmem:[%s3333] ss:$9 sm:$0xff] %v3322
      %3374 = vst [vmem:[%s3335] ss:$9 sm:$0xff] %v3323
      %3375 = vst [vmem:[%s3337] ss:$9 sm:$0xff] %v3324
      %3376 = vst [vmem:[%s3339] ss:$9 sm:$0xff] %v3325
      %v3377 = vld [vmem:[#allocation1] sm:$0xff]
      %v3383 = vpack.c.bf16 %v3350, %v3341
      %v3384 = vpack.c.bf16 %v3368, %v3359
      %v3385 = vpack.c.bf16 %v3377, %v3377
      %v3387 = vperm.slane %v991, 0
      %v3393 = vunpack.c.l.b16 %v987
      %v3394 = vunpack.c.l.b16 %v988
      %v3395 = vunpack.c.l.b16 %v989
      %v3396 = vunpack.c.l.b16 %v990
      %v3397 = vpack.c.b16 %v3394, %v3393
      %v3398 = vpack.c.b16 %v3396, %v3395
      %v3402 = vsel %vm857, %v3383, 0
      %v3405 = vsel %vm857, %v3384, 0
      %v3408 = vsel %vm857, %v3385, 0
      %3410 = vmatpush.bf16.msra.mxu0 0
      %3411 = vmatpush.bf16.msra.mxu0 0
      %3412 = vmatpush.bf16.msra.mxu0 0
      %3413 = vmatpush.bf16.msra.mxu0 0
      %3414 = vmatpush.bf16.msra.mxu0 0
      %3415 = vmatpush.bf16.msra.mxu0 0
      %3416 = vmatpush.bf16.msra.mxu0 %v3398
      %3417 = vmatpush.bf16.msra.mxu0 %v3397
      %3418 = vmatmul.bf16.gmra.mxu0 %v3402
      %v3419 = vpop.f32.mrf.mxu0
      %v3420 = vadd.f32 %v3387, %v3419
      %v3421 = vpop.f32.mrf.mxu0
      %v3422 = vadd.f32 %v3387, %v3421
      %3423 = vmatmul.bf16.gmra.mxu0 %v3405
      %v3424 = vpop.f32.mrf.mxu0
      %v3425 = vadd.f32 %v3387, %v3424
      %v3426 = vpop.f32.mrf.mxu0
      %v3427 = vadd.f32 %v3387, %v3426
      %3428 = vmatmul.bf16.gmra.mxu0 %v3408
      %v3429 = vpop.f32.mrf.mxu0
      %v3430 = vadd.f32 %v3387, %v3429
      %v3431 = vpop.f32.mrf.mxu0
      %3432 = vdwg.mxu0
      %v3433 = vld [vmem:[%s8] sm:$0xf]
      %v3434 = vld [vmem:[%s8 + $0x4] sm:$0xf]
      %v3435 = vld [vmem:[%s8 + $0x8] sm:$0xf]
      %v3436 = vld [vmem:[%s8 + $0xc] sm:$0xf]
      %v3437 = vld [vmem:[%s9] sm:$0x1]
      %v3439 = vperm.slane %v3437, 0
      %v3445 = vunpack.c.l.b16 %v3433
      %v3446 = vunpack.c.l.b16 %v3434
      %v3447 = vunpack.c.l.b16 %v3435
      %v3448 = vunpack.c.l.b16 %v3436
      %v3449 = vpack.c.b16 %v3446, %v3445
      %v3450 = vpack.c.b16 %v3448, %v3447
      %3453 = vmatpush.bf16.msra.mxu0 0
      %3454 = vmatpush.bf16.msra.mxu0 0
      %3455 = vmatpush.bf16.msra.mxu0 0
      %3456 = vmatpush.bf16.msra.mxu0 0
      %3457 = vmatpush.bf16.msra.mxu0 0
      %3458 = vmatpush.bf16.msra.mxu0 0
      %3459 = vmatpush.bf16.msra.mxu0 %v3450
      %3460 = vmatpush.bf16.msra.mxu0 %v3449
      %3461 = vmatmul.bf16.gmra.mxu0 %v951
      %v3462 = vpop.f32.mrf.mxu0
      %v3463 = vadd.f32 %v3439, %v3462
      %v3464 = vpop.f32.mrf.mxu0
      %v3465 = vadd.f32 %v3439, %v3464
      %3466 = vmatmul.bf16.gmra.mxu0 %v954
      %v3467 = vpop.f32.mrf.mxu0
      %v3468 = vadd.f32 %v3439, %v3467
      %v3469 = vpop.f32.mrf.mxu0
      %v3470 = vadd.f32 %v3439, %v3469
      %3471 = vdwg.mxu0
      %v3476 = vrot.slane %v3463, 4
      %v3477 = vrot.slane %v3465, 4
      %v3478 = vrot.slane %v3468, 4
      %v3479 = vrot.slane %v3470, 4
      %v3484 = vpack.c.bf16 %v3422, %v3420
      %v3485 = vpack.c.bf16 %v3427, %v3425
      %v3486 = vpack.c.bf16 %v3430, %v3430
      %v3487 = vld [vmem:[%s10] sm:$0xf]
      %v3488 = vld [vmem:[%s10 + $0x4] sm:$0xf]
      %v3489 = vld [vmem:[%s10 + $0x8] sm:$0xf]
      %v3490 = vld [vmem:[%s10 + $0xc] sm:$0xf]
      %v3491 = vld [vmem:[%s11] sm:$0x1]
      %v3493 = vperm.slane %v3491, 0
      %v3499 = vunpack.c.l.b16 %v3487
      %v3500 = vunpack.c.l.b16 %v3488
      %v3501 = vunpack.c.l.b16 %v3489
      %v3502 = vunpack.c.l.b16 %v3490
      %v3503 = vpack.c.b16 %v3500, %v3499
      %v3504 = vpack.c.b16 %v3502, %v3501
      %v3508 = vsel %vm857, %v3484, 0
      %v3511 = vsel %vm857, %v3485, 0
      %v3514 = vsel %vm857, %v3486, 0
      %3516 = vmatpush.bf16.msra.mxu0 0
      %3517 = vmatpush.bf16.msra.mxu0 0
      %3518 = vmatpush.bf16.msra.mxu0 0
      %3519 = vmatpush.bf16.msra.mxu0 0
      %3520 = vmatpush.bf16.msra.mxu0 0
      %3521 = vmatpush.bf16.msra.mxu0 0
      %3522 = vmatpush.bf16.msra.mxu0 %v3504
      %3523 = vmatpush.bf16.msra.mxu0 %v3503
      %3524 = vmatmul.bf16.gmra.mxu0 %v3508
      %v3525 = vpop.f32.mrf.mxu0
      %v3526 = vadd.f32 %v3493, %v3525
      %v3527 = vpop.f32.mrf.mxu0
      %v3528 = vadd.f32 %v3493, %v3527
      %3529 = vmatmul.bf16.gmra.mxu0 %v3511
      %v3530 = vpop.f32.mrf.mxu0
      %v3531 = vadd.f32 %v3493, %v3530
      %v3532 = vpop.f32.mrf.mxu0
      %v3533 = vadd.f32 %v3493, %v3532
      %3534 = vmatmul.bf16.gmra.mxu0 %v3514
      %v3535 = vpop.f32.mrf.mxu0
      %v3536 = vadd.f32 %v3493, %v3535
      %v3537 = vpop.f32.mrf.mxu0
      %3538 = vdwg.mxu0
      %v3544 = vrot.slane %v3526, 1
      %v3545 = vrot.slane %v3526, 2
      %v3546 = vrot.slane %v3526, 3
      %v3547 = vrot.slane %v3526, 4
      %v3548 = vrot.slane %v3526, 5
      %v3549 = vrot.slane %v3526, 6
      %v3550 = vrot.slane %v3526, 7
      %v3551 = vrot.slane %v3528, 1
      %v3552 = vrot.slane %v3528, 2
      %v3553 = vrot.slane %v3528, 3
      %v3554 = vrot.slane %v3528, 4
      %v3555 = vrot.slane %v3528, 5
      %v3556 = vrot.slane %v3528, 6
      %v3557 = vrot.slane %v3528, 7
      %v3558 = vrot.slane %v3531, 1
      %v3559 = vrot.slane %v3531, 2
      %v3560 = vrot.slane %v3531, 3
      %v3561 = vrot.slane %v3531, 4
      %v3562 = vrot.slane %v3531, 5
      %v3563 = vrot.slane %v3531, 6
      %v3564 = vrot.slane %v3531, 7
      %v3565 = vrot.slane %v3533, 1
      %v3566 = vrot.slane %v3533, 2
      %v3567 = vrot.slane %v3533, 3
      %v3568 = vrot.slane %v3533, 4
      %v3569 = vrot.slane %v3533, 5
      %v3570 = vrot.slane %v3533, 6
      %v3571 = vrot.slane %v3533, 7
      %v3572 = vrot.slane %v3536, 1
      %v3573 = vrot.slane %v3536, 2
      %v3574 = vrot.slane %v3536, 3
      %v3575 = vrot.slane %v3536, 4
      %v3576 = vrot.slane %v3536, 5
      %v3577 = vrot.slane %v3536, 6
      %v3578 = vrot.slane %v3536, 7
      %v3579 = vld [vmem:[%s12] sm:$0xf]
      %v3580 = vld [vmem:[%s12 + $0x4] sm:$0xf]
      %v3581 = vld [vmem:[%s12 + $0x8] sm:$0xf]
      %v3582 = vld [vmem:[%s12 + $0xc] sm:$0xf]
      %v3583 = vld [vmem:[%s13] sm:$0x1]
      %v3584 = vpack.c.bf16 %v3463, %v3463
      %v3585 = vpack.c.bf16 %v3476, %v3476
      %v3586 = vpack.c.bf16 %v3465, %v3465
      %v3587 = vpack.c.bf16 %v3477, %v3477
      %v3588 = vpack.c.bf16 %v3468, %v3468
      %v3589 = vpack.c.bf16 %v3478, %v3478
      %v3590 = vpack.c.bf16 %v3470, %v3470
      %v3591 = vpack.c.bf16 %v3479, %v3479
      %3592 = vst [vmem:[#allocation1] ss:$9 sm:$0xff] %v3526
      %s3593 = scalar_lea.vmem [#allocation1], 1
      %3594 = vst [vmem:[%s3593] ss:$9 sm:$0xff] %v3544
      %s3595 = scalar_lea.vmem [#allocation1], 2
      %3596 = vst [vmem:[%s3595] ss:$9 sm:$0xff] %v3545
      %s3597 = scalar_lea.vmem [#allocation1], 3
      %3598 = vst [vmem:[%s3597] ss:$9 sm:$0xff] %v3546
      %s3599 = scalar_lea.vmem [#allocation1], 4
      %3600 = vst [vmem:[%s3599] ss:$9 sm:$0xff] %v3547
      %v3601 = vld [vmem:[#allocation1] sm:$0xff]
      %3602 = vst [vmem:[#allocation1] ss:$9 sm:$0xff] %v3548
      %3603 = vst [vmem:[%s3593] ss:$9 sm:$0xff] %v3549
      %3604 = vst [vmem:[%s3595] ss:$9 sm:$0xff] %v3550
      %3605 = vst [vmem:[%s3597] ss:$9 sm:$0xff] %v3528
      %3606 = vst [vmem:[%s3599] ss:$9 sm:$0xff] %v3551
      %v3607 = vld [vmem:[#allocation1] sm:$0xff]
      %3608 = vst [vmem:[#allocation1] ss:$9 sm:$0xff] %v3552
      %3609 = vst [vmem:[%s3593] ss:$9 sm:$0xff] %v3553
      %3610 = vst [vmem:[%s3595] ss:$9 sm:$0xff] %v3554
      %3611 = vst [vmem:[%s3597] ss:$9 sm:$0xff] %v3555
      %3612 = vst [vmem:[%s3599] ss:$9 sm:$0xff] %v3556
      %v3613 = vld [vmem:[#allocation1] sm:$0xff]
      %3614 = vst [vmem:[#allocation1] ss:$9 sm:$0xff] %v3557
      %3615 = vst [vmem:[%s3593] ss:$9 sm:$0xff] %v3531
      %3616 = vst [vmem:[%s3595] ss:$9 sm:$0xff] %v3558
      %3617 = vst [vmem:[%s3597] ss:$9 sm:$0xff] %v3559
      %3618 = vst [vmem:[%s3599] ss:$9 sm:$0xff] %v3560
      %v3619 = vld [vmem:[#allocation1] sm:$0xff]
      %3620 = vst [vmem:[#allocation1] ss:$9 sm:$0xff] %v3561
      %3621 = vst [vmem:[%s3593] ss:$9 sm:$0xff] %v3562
      %3622 = vst [vmem:[%s3595] ss:$9 sm:$0xff] %v3563
      %3623 = vst [vmem:[%s3597] ss:$9 sm:$0xff] %v3564
      %3624 = vst [vmem:[%s3599] ss:$9 sm:$0xff] %v3533
      %v3625 = vld [vmem:[#allocation1] sm:$0xff]
      %3626 = vst [vmem:[#allocation1] ss:$9 sm:$0xff] %v3565
      %3627 = vst [vmem:[%s3593] ss:$9 sm:$0xff] %v3566
      %3628 = vst [vmem:[%s3595] ss:$9 sm:$0xff] %v3567
      %3629 = vst [vmem:[%s3597] ss:$9 sm:$0xff] %v3568
      %3630 = vst [vmem:[%s3599] ss:$9 sm:$0xff] %v3569
      %v3631 = vld [vmem:[#allocation1] sm:$0xff]
      %3632 = vst [vmem:[#allocation1] ss:$9 sm:$0xff] %v3570
      %3633 = vst [vmem:[%s3593] ss:$9 sm:$0xff] %v3571
      %3634 = vst [vmem:[%s3595] ss:$9 sm:$0xff] %v3536
      %3635 = vst [vmem:[%s3597] ss:$9 sm:$0xff] %v3572
      %3636 = vst [vmem:[%s3599] ss:$9 sm:$0xff] %v3573
      %v3637 = vld [vmem:[#allocation1] sm:$0xff]
      %3638 = vst [vmem:[#allocation1] ss:$9 sm:$0xff] %v3574
      %3639 = vst [vmem:[%s3593] ss:$9 sm:$0xff] %v3575
      %3640 = vst [vmem:[%s3595] ss:$9 sm:$0xff] %v3576
      %3641 = vst [vmem:[%s3597] ss:$9 sm:$0xff] %v3577
      %3642 = vst [vmem:[%s3599] ss:$9 sm:$0xff] %v3578
      %v3643 = vld [vmem:[#allocation1] sm:$0xff]
      %v3652 = vpack.c.bf16 %v3601, %v3601
      %v3653 = vpack.c.bf16 %v3607, %v3607
      %v3654 = vpack.c.bf16 %v3613, %v3613
      %v3655 = vpack.c.bf16 %v3619, %v3619
      %v3656 = vpack.c.bf16 %v3625, %v3625
      %v3657 = vpack.c.bf16 %v3631, %v3631
      %v3658 = vpack.c.bf16 %v3637, %v3637
      %v3659 = vpack.c.bf16 %v3643, %v3643
      %3660 = vst [vmem:[#allocation1] ss:$9 sm:$0xff] %v3526
      %s3661 = scalar_lea.vmem [#allocation1], 1
      %3662 = vst [vmem:[%s3661] ss:$9 sm:$0xff] %v3544
      %s3663 = scalar_lea.vmem [#allocation1], 2
      %3664 = vst [vmem:[%s3663] ss:$9 sm:$0xff] %v3545
      %s3665 = scalar_lea.vmem [#allocation1], 3
      %3666 = vst [vmem:[%s3665] ss:$9 sm:$0xff] %v3546
      %s3667 = scalar_lea.vmem [#allocation1], 4
      %3668 = vst [vmem:[%s3667] ss:$9 sm:$0xff] %v3547
      %v3669 = vld [vmem:[#allocation1] sm:$0xff]
      %3670 = vst [vmem:[#allocation1] ss:$9 sm:$0xff] %v3548
      %3671 = vst [vmem:[%s3661] ss:$9 sm:$0xff] %v3549
      %3672 = vst [vmem:[%s3663] ss:$9 sm:$0xff] %v3550
      %3673 = vst [vmem:[%s3665] ss:$9 sm:$0xff] %v3528
      %3674 = vst [vmem:[%s3667] ss:$9 sm:$0xff] %v3551
      %v3675 = vld [vmem:[#allocation1] sm:$0xff]
      %3676 = vst [vmem:[#allocation1] ss:$9 sm:$0xff] %v3552
      %3677 = vst [vmem:[%s3661] ss:$9 sm:$0xff] %v3553
      %3678 = vst [vmem:[%s3663] ss:$9 sm:$0xff] %v3554
      %3679 = vst [vmem:[%s3665] ss:$9 sm:$0xff] %v3555
      %3680 = vst [vmem:[%s3667] ss:$9 sm:$0xff] %v3556
      %v3681 = vld [vmem:[#allocation1] sm:$0xff]
      %3682 = vst [vmem:[#allocation1] ss:$9 sm:$0xff] %v3557
      %3683 = vst [vmem:[%s3661] ss:$9 sm:$0xff] %v3531
      %3684 = vst [vmem:[%s3663] ss:$9 sm:$0xff] %v3558
      %3685 = vst [vmem:[%s3665] ss:$9 sm:$0xff] %v3559
      %3686 = vst [vmem:[%s3667] ss:$9 sm:$0xff] %v3560
      %v3687 = vld [vmem:[#allocation1] sm:$0xff]
      %3688 = vst [vmem:[#allocation1] ss:$9 sm:$0xff] %v3561
      %3689 = vst [vmem:[%s3661] ss:$9 sm:$0xff] %v3562
      %3690 = vst [vmem:[%s3663] ss:$9 sm:$0xff] %v3563
      %3691 = vst [vmem:[%s3665] ss:$9 sm:$0xff] %v3564
      %3692 = vst [vmem:[%s3667] ss:$9 sm:$0xff] %v3533
      %v3693 = vld [vmem:[#allocation1] sm:$0xff]
      %3694 = vst [vmem:[#allocation1] ss:$9 sm:$0xff] %v3565
      %3695 = vst [vmem:[%s3661] ss:$9 sm:$0xff] %v3566
      %3696 = vst [vmem:[%s3663] ss:$9 sm:$0xff] %v3567
      %3697 = vst [vmem:[%s3665] ss:$9 sm:$0xff] %v3568
      %3698 = vst [vmem:[%s3667] ss:$9 sm:$0xff] %v3569
      %v3699 = vld [vmem:[#allocation1] sm:$0xff]
      %3700 = vst [vmem:[#allocation1] ss:$9 sm:$0xff] %v3570
      %3701 = vst [vmem:[%s3661] ss:$9 sm:$0xff] %v3571
      %3702 = vst [vmem:[%s3663] ss:$9 sm:$0xff] %v3536
      %3703 = vst [vmem:[%s3665] ss:$9 sm:$0xff] %v3572
      %3704 = vst [vmem:[%s3667] ss:$9 sm:$0xff] %v3573
      %v3705 = vld [vmem:[#allocation1] sm:$0xff]
      %3706 = vst [vmem:[#allocation1] ss:$9 sm:$0xff] %v3574
      %3707 = vst [vmem:[%s3661] ss:$9 sm:$0xff] %v3575
      %3708 = vst [vmem:[%s3663] ss:$9 sm:$0xff] %v3576
      %3709 = vst [vmem:[%s3665] ss:$9 sm:$0xff] %v3577
      %3710 = vst [vmem:[%s3667] ss:$9 sm:$0xff] %v3578
      %v3711 = vld [vmem:[#allocation1] sm:$0xff]
      %v3720 = vpack.c.bf16 %v3669, %v3669
      %v3721 = vpack.c.bf16 %v3675, %v3675
      %v3722 = vpack.c.bf16 %v3681, %v3681
      %v3723 = vpack.c.bf16 %v3687, %v3687
      %v3724 = vpack.c.bf16 %v3693, %v3693
      %v3725 = vpack.c.bf16 %v3699, %v3699
      %v3726 = vpack.c.bf16 %v3705, %v3705
      %v3727 = vpack.c.bf16 %v3711, %v3711
      %v3729 = vsel %vm1068, %v3584, 0
      %v3732 = vsel %vm1068, %v3652, 0
      %3734 = vmatpush.bf16.xpose.msra.mxu0 0
      %3735 = vmatpush.bf16.xpose.msra.mxu0 0
      %3736 = vmatpush.bf16.xpose.msra.mxu0 0
      %3737 = vmatpush.bf16.xpose.msra.mxu0 0
      %3738 = vmatpush.bf16.xpose.msra.mxu0 0
      %3739 = vmatpush.bf16.xpose.msra.mxu0 0
      %3740 = vmatpush.bf16.xpose.msra.mxu0 0
      %3741 = vmatpush.bf16.xpose.msra.mxu0 %v3732
      %3742 = vmatmul.bf16.gmra.mxu0 %v3729
      %v3743 = vpop.f32.mrf.mxu0
      %v3744 = vadd.f32 0.0, %v3743
      %v3745 = vpop.f32.mrf.mxu0
      %3746 = vdwg.mxu0
      %v3748 = vsel %vm1068, %v3585, 0
      %v3751 = vsel %vm1068, %v3653, 0
      %3753 = vmatpush.bf16.xpose.msra.mxu0 0
      %3754 = vmatpush.bf16.xpose.msra.mxu0 0
      %3755 = vmatpush.bf16.xpose.msra.mxu0 0
      %3756 = vmatpush.bf16.xpose.msra.mxu0 0
      %3757 = vmatpush.bf16.xpose.msra.mxu0 0
      %3758 = vmatpush.bf16.xpose.msra.mxu0 0
      %3759 = vmatpush.bf16.xpose.msra.mxu0 0
      %3760 = vmatpush.bf16.xpose.msra.mxu0 %v3751
      %3761 = vmatmul.bf16.gmra.mxu0 %v3748
      %v3762 = vpop.f32.mrf.mxu0
      %v3763 = vadd.f32 0.0, %v3762
      %v3764 = vpop.f32.mrf.mxu0
      %3765 = vdwg.mxu0
      %v3767 = vsel %vm1068, %v3586, 0
      %v3770 = vsel %vm1068, %v3654, 0
      %3772 = vmatpush.bf16.xpose.msra.mxu0 0
      %3773 = vmatpush.bf16.xpose.msra.mxu0 0
      %3774 = vmatpush.bf16.xpose.msra.mxu0 0
      %3775 = vmatpush.bf16.xpose.msra.mxu0 0
      %3776 = vmatpush.bf16.xpose.msra.mxu0 0
      %3777 = vmatpush.bf16.xpose.msra.mxu0 0
      %3778 = vmatpush.bf16.xpose.msra.mxu0 0
      %3779 = vmatpush.bf16.xpose.msra.mxu0 %v3770
      %3780 = vmatmul.bf16.gmra.mxu0 %v3767
      %v3781 = vpop.f32.mrf.mxu0
      %v3782 = vadd.f32 0.0, %v3781
      %v3783 = vpop.f32.mrf.mxu0
      %3784 = vdwg.mxu0
      %v3786 = vsel %vm1068, %v3587, 0
      %v3789 = vsel %vm1068, %v3655, 0
      %3791 = vmatpush.bf16.xpose.msra.mxu0 0
      %3792 = vmatpush.bf16.xpose.msra.mxu0 0
      %3793 = vmatpush.bf16.xpose.msra.mxu0 0
      %3794 = vmatpush.bf16.xpose.msra.mxu0 0
      %3795 = vmatpush.bf16.xpose.msra.mxu0 0
      %3796 = vmatpush.bf16.xpose.msra.mxu0 0
      %3797 = vmatpush.bf16.xpose.msra.mxu0 0
      %3798 = vmatpush.bf16.xpose.msra.mxu0 %v3789
      %3799 = vmatmul.bf16.gmra.mxu0 %v3786
      %v3800 = vpop.f32.mrf.mxu0
      %v3801 = vadd.f32 0.0, %v3800
      %v3802 = vpop.f32.mrf.mxu0
      %3803 = vdwg.mxu0
      %v3805 = vsel %vm1068, %v3588, 0
      %v3808 = vsel %vm1068, %v3656, 0
      %3810 = vmatpush.bf16.xpose.msra.mxu0 0
      %3811 = vmatpush.bf16.xpose.msra.mxu0 0
      %3812 = vmatpush.bf16.xpose.msra.mxu0 0
      %3813 = vmatpush.bf16.xpose.msra.mxu0 0
      %3814 = vmatpush.bf16.xpose.msra.mxu0 0
      %3815 = vmatpush.bf16.xpose.msra.mxu0 0
      %3816 = vmatpush.bf16.xpose.msra.mxu0 0
      %3817 = vmatpush.bf16.xpose.msra.mxu0 %v3808
      %3818 = vmatmul.bf16.gmra.mxu0 %v3805
      %v3819 = vpop.f32.mrf.mxu0
      %v3820 = vadd.f32 0.0, %v3819
      %v3821 = vpop.f32.mrf.mxu0
      %3822 = vdwg.mxu0
      %v3824 = vsel %vm1068, %v3589, 0
      %v3827 = vsel %vm1068, %v3657, 0
      %3829 = vmatpush.bf16.xpose.msra.mxu0 0
      %3830 = vmatpush.bf16.xpose.msra.mxu0 0
      %3831 = vmatpush.bf16.xpose.msra.mxu0 0
      %3832 = vmatpush.bf16.xpose.msra.mxu0 0
      %3833 = vmatpush.bf16.xpose.msra.mxu0 0
      %3834 = vmatpush.bf16.xpose.msra.mxu0 0
      %3835 = vmatpush.bf16.xpose.msra.mxu0 0
      %3836 = vmatpush.bf16.xpose.msra.mxu0 %v3827
      %3837 = vmatmul.bf16.gmra.mxu0 %v3824
      %v3838 = vpop.f32.mrf.mxu0
      %v3839 = vadd.f32 0.0, %v3838
      %v3840 = vpop.f32.mrf.mxu0
      %3841 = vdwg.mxu0
      %v3843 = vsel %vm1068, %v3590, 0
      %v3846 = vsel %vm1068, %v3658, 0
      %3848 = vmatpush.bf16.xpose.msra.mxu0 0
      %3849 = vmatpush.bf16.xpose.msra.mxu0 0
      %3850 = vmatpush.bf16.xpose.msra.mxu0 0
      %3851 = vmatpush.bf16.xpose.msra.mxu0 0
      %3852 = vmatpush.bf16.xpose.msra.mxu0 0
      %3853 = vmatpush.bf16.xpose.msra.mxu0 0
      %3854 = vmatpush.bf16.xpose.msra.mxu0 0
      %3855 = vmatpush.bf16.xpose.msra.mxu0 %v3846
      %3856 = vmatmul.bf16.gmra.mxu0 %v3843
      %v3857 = vpop.f32.mrf.mxu0
      %v3858 = vadd.f32 0.0, %v3857
      %v3859 = vpop.f32.mrf.mxu0
      %3860 = vdwg.mxu0
      %v3862 = vsel %vm1068, %v3591, 0
      %v3865 = vsel %vm1068, %v3659, 0
      %3867 = vmatpush.bf16.xpose.msra.mxu0 0
      %3868 = vmatpush.bf16.xpose.msra.mxu0 0
      %3869 = vmatpush.bf16.xpose.msra.mxu0 0
      %3870 = vmatpush.bf16.xpose.msra.mxu0 0
      %3871 = vmatpush.bf16.xpose.msra.mxu0 0
      %3872 = vmatpush.bf16.xpose.msra.mxu0 0
      %3873 = vmatpush.bf16.xpose.msra.mxu0 0
      %3874 = vmatpush.bf16.xpose.msra.mxu0 %v3865
      %3875 = vmatmul.bf16.gmra.mxu0 %v3862
      %v3876 = vpop.f32.mrf.mxu0
      %v3877 = vadd.f32 0.0, %v3876
      %v3878 = vpop.f32.mrf.mxu0
      %3879 = vdwg.mxu0
      %v3880 = vmul.f32 %v3744, 0.35355338
      %v3881 = vmul.f32 %v3763, 0.35355338
      %v3882 = vmul.f32 %v3782, 0.35355338
      %v3883 = vmul.f32 %v3801, 0.35355338
      %v3884 = vmul.f32 %v3820, 0.35355338
      %v3885 = vmul.f32 %v3839, 0.35355338
      %v3886 = vmul.f32 %v3858, 0.35355338
      %v3887 = vmul.f32 %v3877, 0.35355338
      %vm3888 = vcmask 35840
      %v3889 = vsel %vm3888, %v3880, -inf
      %3890 = vmax.xlane.f32.xlu0 %v3889
      %v3891 = vpop.xlane.xlu0 %3890
      %v3892 = vsel %vm3888, %v3881, -inf
      %3893 = vmax.xlane.f32.xlu0 %v3892
      %v3894 = vpop.xlane.xlu0 %3893
      %v3895 = vsel %vm3888, %v3882, -inf
      %3896 = vmax.xlane.f32.xlu0 %v3895
      %v3897 = vpop.xlane.xlu0 %3896
      %v3898 = vsel %vm3888, %v3883, -inf
      %3899 = vmax.xlane.f32.xlu0 %v3898
      %v3900 = vpop.xlane.xlu0 %3899
      %v3901 = vsel %vm3888, %v3884, -inf
      %3902 = vmax.xlane.f32.xlu0 %v3901
      %v3903 = vpop.xlane.xlu0 %3902
      %v3904 = vsel %vm3888, %v3885, -inf
      %3905 = vmax.xlane.f32.xlu0 %v3904
      %v3906 = vpop.xlane.xlu0 %3905
      %v3907 = vsel %vm3888, %v3886, -inf
      %3908 = vmax.xlane.f32.xlu0 %v3907
      %v3909 = vpop.xlane.xlu0 %3908
      %v3910 = vsel %vm3888, %v3887, -inf
      %3911 = vmax.xlane.f32.xlu0 %v3910
      %v3912 = vpop.xlane.xlu0 %3911
      %v3913 = vsub.f32 %v3880, %v3891
      %v3914 = vsub.f32 %v3881, %v3894
      %v3915 = vsub.f32 %v3882, %v3897
      %v3916 = vsub.f32 %v3883, %v3900
      %v3917 = vsub.f32 %v3884, %v3903
      %v3918 = vsub.f32 %v3885, %v3906
      %v3919 = vsub.f32 %v3886, %v3909
      %v3920 = vsub.f32 %v3887, %v3912
      %v3921 = vmul.f32 %v3913, 1.442695
      %v3922 = vpow.pop %v3921
      %v3923 = vmul.f32 %v3914, 1.442695
      %v3924 = vpow.pop %v3923
      %v3925 = vmul.f32 %v3915, 1.442695
      %v3926 = vpow.pop %v3925
      %v3927 = vmul.f32 %v3916, 1.442695
      %v3928 = vpow.pop %v3927
      %v3929 = vmul.f32 %v3917, 1.442695
      %v3930 = vpow.pop %v3929
      %v3931 = vmul.f32 %v3918, 1.442695
      %v3932 = vpow.pop %v3931
      %v3933 = vmul.f32 %v3919, 1.442695
      %v3934 = vpow.pop %v3933
      %v3935 = vmul.f32 %v3920, 1.442695
      %v3936 = vpow.pop %v3935
      %v3937 = vsel %vm3888, %v3922, 0.0
      %3938 = vadd.xlane.f32.xlu0 %v3937
      %v3939 = vpop.xlane.xlu0 %3938
      %v3940 = vsel %vm3888, %v3924, 0.0
      %3941 = vadd.xlane.f32.xlu0 %v3940
      %v3942 = vpop.xlane.xlu0 %3941
      %v3943 = vsel %vm3888, %v3926, 0.0
      %3944 = vadd.xlane.f32.xlu0 %v3943
      %v3945 = vpop.xlane.xlu0 %3944
      %v3946 = vsel %vm3888, %v3928, 0.0
      %3947 = vadd.xlane.f32.xlu0 %v3946
      %v3948 = vpop.xlane.xlu0 %3947
      %v3949 = vsel %vm3888, %v3930, 0.0
      %3950 = vadd.xlane.f32.xlu0 %v3949
      %v3951 = vpop.xlane.xlu0 %3950
      %v3952 = vsel %vm3888, %v3932, 0.0
      %3953 = vadd.xlane.f32.xlu0 %v3952
      %v3954 = vpop.xlane.xlu0 %3953
      %v3955 = vsel %vm3888, %v3934, 0.0
      %3956 = vadd.xlane.f32.xlu0 %v3955
      %v3957 = vpop.xlane.xlu0 %3956
      %v3958 = vsel %vm3888, %v3936, 0.0
      %3959 = vadd.xlane.f32.xlu0 %v3958
      %v3960 = vpop.xlane.xlu0 %3959
      %v3961 = vrcp.pop %v3939
      %v3962 = vrcp.pop %v3942
      %v3963 = vrcp.pop %v3945
      %v3964 = vrcp.pop %v3948
      %v3965 = vrcp.pop %v3951
      %v3966 = vrcp.pop %v3954
      %v3967 = vrcp.pop %v3957
      %v3968 = vrcp.pop %v3960
      %v3969 = vmul.f32 %v3922, %v3961
      %v3970 = vmul.f32 %v3924, %v3962
      %v3971 = vmul.f32 %v3926, %v3963
      %v3972 = vmul.f32 %v3928, %v3964
      %v3973 = vmul.f32 %v3930, %v3965
      %v3974 = vmul.f32 %v3932, %v3966
      %v3975 = vmul.f32 %v3934, %v3967
      %v3976 = vmul.f32 %v3936, %v3968
      %v3977 = vpack.c.bf16 %v3969, %v3969
      %v3978 = vpack.c.bf16 %v3970, %v3970
      %v3979 = vpack.c.bf16 %v3971, %v3971
      %v3980 = vpack.c.bf16 %v3972, %v3972
      %v3981 = vpack.c.bf16 %v3973, %v3973
      %v3982 = vpack.c.bf16 %v3974, %v3974
      %v3983 = vpack.c.bf16 %v3975, %v3975
      %v3984 = vpack.c.bf16 %v3976, %v3976
      %v3986 = vunpack.c.l.b16 %v3720
      %v3987 = vpack.c.b16 %v3986, %v3986
      %3988 = vrot.lane.b32.xlu0 %v3987, 96
      %v3989 = vpop.permute.xlu0 %3988
      %vm3990 = vcmask 39936
      %v3992 = vsel %vm3990, %v3977, 0
      %vm3994 = vcmask 1042432
      %v3995 = vsel %vm1335, 4294967295, 65535
      %v3996 = vsel %vm3994, %v3995, 0
      %v3998 = vand.u32 %v3989, %v3996
      %4000 = vmatpush.bf16.msra.mxu0 0
      %4001 = vmatpush.bf16.msra.mxu0 0
      %4002 = vmatpush.bf16.msra.mxu0 0
      %4003 = vmatpush.bf16.msra.mxu0 0
      %4004 = vmatpush.bf16.msra.mxu0 0
      %4005 = vmatpush.bf16.msra.mxu0 0
      %4006 = vmatpush.bf16.msra.mxu0 0
      %4007 = vmatpush.bf16.msra.mxu0 %v3998
      %4008 = vmatmul.bf16.gmra.mxu0 %v3992
      %v4009 = vpop.f32.mrf.mxu0
      %v4010 = vadd.f32 0.0, %v4009
      %v4011 = vpop.f32.mrf.mxu0
      %4012 = vdwg.mxu0
      %v4014 = vunpack.c.l.b16 %v3721
      %v4015 = vpack.c.b16 %v4014, %v4014
      %4016 = vrot.lane.b32.xlu0 %v4015, 96
      %v4017 = vpop.permute.xlu0 %4016
      %v4019 = vsel %vm3990, %v3978, 0
      %v4022 = vand.u32 %v4017, %v3996
      %4024 = vmatpush.bf16.msra.mxu0 0
      %4025 = vmatpush.bf16.msra.mxu0 0
      %4026 = vmatpush.bf16.msra.mxu0 0
      %4027 = vmatpush.bf16.msra.mxu0 0
      %4028 = vmatpush.bf16.msra.mxu0 0
      %4029 = vmatpush.bf16.msra.mxu0 0
      %4030 = vmatpush.bf16.msra.mxu0 0
      %4031 = vmatpush.bf16.msra.mxu0 %v4022
      %4032 = vmatmul.bf16.gmra.mxu0 %v4019
      %v4033 = vpop.f32.mrf.mxu0
      %v4034 = vadd.f32 0.0, %v4033
      %v4035 = vpop.f32.mrf.mxu0
      %4036 = vdwg.mxu0
      %v4038 = vunpack.c.l.b16 %v3722
      %v4039 = vpack.c.b16 %v4038, %v4038
      %4040 = vrot.lane.b32.xlu0 %v4039, 96
      %v4041 = vpop.permute.xlu0 %4040
      %v4043 = vsel %vm3990, %v3979, 0
      %v4046 = vand.u32 %v4041, %v3996
      %4048 = vmatpush.bf16.msra.mxu0 0
      %4049 = vmatpush.bf16.msra.mxu0 0
      %4050 = vmatpush.bf16.msra.mxu0 0
      %4051 = vmatpush.bf16.msra.mxu0 0
      %4052 = vmatpush.bf16.msra.mxu0 0
      %4053 = vmatpush.bf16.msra.mxu0 0
      %4054 = vmatpush.bf16.msra.mxu0 0
      %4055 = vmatpush.bf16.msra.mxu0 %v4046
      %4056 = vmatmul.bf16.gmra.mxu0 %v4043
      %v4057 = vpop.f32.mrf.mxu0
      %v4058 = vadd.f32 0.0, %v4057
      %v4059 = vpop.f32.mrf.mxu0
      %4060 = vdwg.mxu0
      %v4062 = vunpack.c.l.b16 %v3723
      %v4063 = vpack.c.b16 %v4062, %v4062
      %4064 = vrot.lane.b32.xlu0 %v4063, 96
      %v4065 = vpop.permute.xlu0 %4064
      %v4067 = vsel %vm3990, %v3980, 0
      %v4070 = vand.u32 %v4065, %v3996
      %4072 = vmatpush.bf16.msra.mxu0 0
      %4073 = vmatpush.bf16.msra.mxu0 0
      %4074 = vmatpush.bf16.msra.mxu0 0
      %4075 = vmatpush.bf16.msra.mxu0 0
      %4076 = vmatpush.bf16.msra.mxu0 0
      %4077 = vmatpush.bf16.msra.mxu0 0
      %4078 = vmatpush.bf16.msra.mxu0 0
      %4079 = vmatpush.bf16.msra.mxu0 %v4070
      %4080 = vmatmul.bf16.gmra.mxu0 %v4067
      %v4081 = vpop.f32.mrf.mxu0
      %v4082 = vadd.f32 0.0, %v4081
      %v4083 = vpop.f32.mrf.mxu0
      %4084 = vdwg.mxu0
      %v4086 = vunpack.c.l.b16 %v3724
      %v4087 = vpack.c.b16 %v4086, %v4086
      %4088 = vrot.lane.b32.xlu0 %v4087, 96
      %v4089 = vpop.permute.xlu0 %4088
      %v4091 = vsel %vm3990, %v3981, 0
      %v4094 = vand.u32 %v4089, %v3996
      %4096 = vmatpush.bf16.msra.mxu0 0
      %4097 = vmatpush.bf16.msra.mxu0 0
      %4098 = vmatpush.bf16.msra.mxu0 0
      %4099 = vmatpush.bf16.msra.mxu0 0
      %4100 = vmatpush.bf16.msra.mxu0 0
      %4101 = vmatpush.bf16.msra.mxu0 0
      %4102 = vmatpush.bf16.msra.mxu0 0
      %4103 = vmatpush.bf16.msra.mxu0 %v4094
      %4104 = vmatmul.bf16.gmra.mxu0 %v4091
      %v4105 = vpop.f32.mrf.mxu0
      %v4106 = vadd.f32 0.0, %v4105
      %v4107 = vpop.f32.mrf.mxu0
      %4108 = vdwg.mxu0
      %v4110 = vunpack.c.l.b16 %v3725
      %v4111 = vpack.c.b16 %v4110, %v4110
      %4112 = vrot.lane.b32.xlu0 %v4111, 96
      %v4113 = vpop.permute.xlu0 %4112
      %v4115 = vsel %vm3990, %v3982, 0
      %v4118 = vand.u32 %v4113, %v3996
      %4120 = vmatpush.bf16.msra.mxu0 0
      %4121 = vmatpush.bf16.msra.mxu0 0
      %4122 = vmatpush.bf16.msra.mxu0 0
      %4123 = vmatpush.bf16.msra.mxu0 0
      %4124 = vmatpush.bf16.msra.mxu0 0
      %4125 = vmatpush.bf16.msra.mxu0 0
      %4126 = vmatpush.bf16.msra.mxu0 0
      %4127 = vmatpush.bf16.msra.mxu0 %v4118
      %4128 = vmatmul.bf16.gmra.mxu0 %v4115
      %v4129 = vpop.f32.mrf.mxu0
      %v4130 = vadd.f32 0.0, %v4129
      %v4131 = vpop.f32.mrf.mxu0
      %4132 = vdwg.mxu0
      %v4134 = vunpack.c.l.b16 %v3726
      %v4135 = vpack.c.b16 %v4134, %v4134
      %4136 = vrot.lane.b32.xlu0 %v4135, 96
      %v4137 = vpop.permute.xlu0 %4136
      %v4139 = vsel %vm3990, %v3983, 0
      %v4142 = vand.u32 %v4137, %v3996
      %4144 = vmatpush.bf16.msra.mxu0 0
      %4145 = vmatpush.bf16.msra.mxu0 0
      %4146 = vmatpush.bf16.msra.mxu0 0
      %4147 = vmatpush.bf16.msra.mxu0 0
      %4148 = vmatpush.bf16.msra.mxu0 0
      %4149 = vmatpush.bf16.msra.mxu0 0
      %4150 = vmatpush.bf16.msra.mxu0 0
      %4151 = vmatpush.bf16.msra.mxu0 %v4142
      %4152 = vmatmul.bf16.gmra.mxu0 %v4139
      %v4153 = vpop.f32.mrf.mxu0
      %v4154 = vadd.f32 0.0, %v4153
      %v4155 = vpop.f32.mrf.mxu0
      %4156 = vdwg.mxu0
      %v4158 = vunpack.c.l.b16 %v3727
      %v4159 = vpack.c.b16 %v4158, %v4158
      %4160 = vrot.lane.b32.xlu0 %v4159, 96
      %v4161 = vpop.permute.xlu0 %4160
      %v4163 = vsel %vm3990, %v3984, 0
      %v4166 = vand.u32 %v4161, %v3996
      %4168 = vmatpush.bf16.msra.mxu0 0
      %4169 = vmatpush.bf16.msra.mxu0 0
      %4170 = vmatpush.bf16.msra.mxu0 0
      %4171 = vmatpush.bf16.msra.mxu0 0
      %4172 = vmatpush.bf16.msra.mxu0 0
      %4173 = vmatpush.bf16.msra.mxu0 0
      %4174 = vmatpush.bf16.msra.mxu0 0
      %4175 = vmatpush.bf16.msra.mxu0 %v4166
      %4176 = vmatmul.bf16.gmra.mxu0 %v4163
      %v4177 = vpop.f32.mrf.mxu0
      %v4178 = vadd.f32 0.0, %v4177
      %v4179 = vpop.f32.mrf.mxu0
      %4180 = vdwg.mxu0
      %4181 = vst [vmem:[#allocation1] ss:$9 sm:$0xff] %v3526
      %s4182 = scalar_lea.vmem [#allocation1], 1
      %4183 = vst [vmem:[%s4182] ss:$9 sm:$0xff] %v3544
      %s4184 = scalar_lea.vmem [#allocation1], 2
      %4185 = vst [vmem:[%s4184] ss:$9 sm:$0xff] %v3545
      %s4186 = scalar_lea.vmem [#allocation1], 3
      %4187 = vst [vmem:[%s4186] ss:$9 sm:$0xff] %v3546
      %s4188 = scalar_lea.vmem [#allocation1], 4
      %4189 = vst [vmem:[%s4188] ss:$9 sm:$0xff] %v3547
      %v4190 = vld [vmem:[#allocation1] sm:$0xff]
      %4191 = vst [vmem:[#allocation1] ss:$9 sm:$0xff] %v3548
      %4192 = vst [vmem:[%s4182] ss:$9 sm:$0xff] %v3549
      %4193 = vst [vmem:[%s4184] ss:$9 sm:$0xff] %v3550
      %4194 = vst [vmem:[%s4186] ss:$9 sm:$0xff] %v3528
      %4195 = vst [vmem:[%s4188] ss:$9 sm:$0xff] %v3551
      %v4196 = vld [vmem:[#allocation1] sm:$0xff]
      %4197 = vst [vmem:[#allocation1] ss:$9 sm:$0xff] %v3552
      %4198 = vst [vmem:[%s4182] ss:$9 sm:$0xff] %v3553
      %4199 = vst [vmem:[%s4184] ss:$9 sm:$0xff] %v3554
      %4200 = vst [vmem:[%s4186] ss:$9 sm:$0xff] %v3555
      %4201 = vst [vmem:[%s4188] ss:$9 sm:$0xff] %v3556
      %v4202 = vld [vmem:[#allocation1] sm:$0xff]
      %4203 = vst [vmem:[#allocation1] ss:$9 sm:$0xff] %v3557
      %4204 = vst [vmem:[%s4182] ss:$9 sm:$0xff] %v3531
      %4205 = vst [vmem:[%s4184] ss:$9 sm:$0xff] %v3558
      %4206 = vst [vmem:[%s4186] ss:$9 sm:$0xff] %v3559
      %4207 = vst [vmem:[%s4188] ss:$9 sm:$0xff] %v3560
      %v4208 = vld [vmem:[#allocation1] sm:$0xff]
      %4209 = vst [vmem:[#allocation1] ss:$9 sm:$0xff] %v3561
      %4210 = vst [vmem:[%s4182] ss:$9 sm:$0xff] %v3562
      %4211 = vst [vmem:[%s4184] ss:$9 sm:$0xff] %v3563
      %4212 = vst [vmem:[%s4186] ss:$9 sm:$0xff] %v3564
      %4213 = vst [vmem:[%s4188] ss:$9 sm:$0xff] %v3533
      %v4214 = vld [vmem:[#allocation1] sm:$0xff]
      %4215 = vst [vmem:[#allocation1] ss:$9 sm:$0xff] %v3565
      %4216 = vst [vmem:[%s4182] ss:$9 sm:$0xff] %v3566
      %4217 = vst [vmem:[%s4184] ss:$9 sm:$0xff] %v3567
      %4218 = vst [vmem:[%s4186] ss:$9 sm:$0xff] %v3568
      %4219 = vst [vmem:[%s4188] ss:$9 sm:$0xff] %v3569
      %v4220 = vld [vmem:[#allocation1] sm:$0xff]
      %4221 = vst [vmem:[#allocation1] ss:$9 sm:$0xff] %v3570
      %4222 = vst [vmem:[%s4182] ss:$9 sm:$0xff] %v3571
      %4223 = vst [vmem:[%s4184] ss:$9 sm:$0xff] %v3536
      %4224 = vst [vmem:[%s4186] ss:$9 sm:$0xff] %v3572
      %4225 = vst [vmem:[%s4188] ss:$9 sm:$0xff] %v3573
      %v4226 = vld [vmem:[#allocation1] sm:$0xff]
      %4227 = vst [vmem:[#allocation1] ss:$9 sm:$0xff] %v3574
      %4228 = vst [vmem:[%s4182] ss:$9 sm:$0xff] %v3575
      %4229 = vst [vmem:[%s4184] ss:$9 sm:$0xff] %v3576
      %4230 = vst [vmem:[%s4186] ss:$9 sm:$0xff] %v3577
      %4231 = vst [vmem:[%s4188] ss:$9 sm:$0xff] %v3578
      %v4232 = vld [vmem:[#allocation1] sm:$0xff]
      %v4241 = vpack.c.bf16 %v4190, %v4190
      %v4242 = vpack.c.bf16 %v4196, %v4196
      %v4243 = vpack.c.bf16 %v4202, %v4202
      %v4244 = vpack.c.bf16 %v4208, %v4208
      %v4245 = vpack.c.bf16 %v4214, %v4214
      %v4246 = vpack.c.bf16 %v4220, %v4220
      %v4247 = vpack.c.bf16 %v4226, %v4226
      %v4248 = vpack.c.bf16 %v4232, %v4232
      %4249 = vst [vmem:[#allocation1] ss:$9 sm:$0xff] %v3526
      %s4250 = scalar_lea.vmem [#allocation1], 1
      %4251 = vst [vmem:[%s4250] ss:$9 sm:$0xff] %v3544
      %s4252 = scalar_lea.vmem [#allocation1], 2
      %4253 = vst [vmem:[%s4252] ss:$9 sm:$0xff] %v3545
      %s4254 = scalar_lea.vmem [#allocation1], 3
      %4255 = vst [vmem:[%s4254] ss:$9 sm:$0xff] %v3546
      %s4256 = scalar_lea.vmem [#allocation1], 4
      %4257 = vst [vmem:[%s4256] ss:$9 sm:$0xff] %v3547
      %v4258 = vld [vmem:[#allocation1] sm:$0xff]
      %4259 = vst [vmem:[#allocation1] ss:$9 sm:$0xff] %v3548
      %4260 = vst [vmem:[%s4250] ss:$9 sm:$0xff] %v3549
      %4261 = vst [vmem:[%s4252] ss:$9 sm:$0xff] %v3550
      %4262 = vst [vmem:[%s4254] ss:$9 sm:$0xff] %v3528
      %4263 = vst [vmem:[%s4256] ss:$9 sm:$0xff] %v3551
      %v4264 = vld [vmem:[#allocation1] sm:$0xff]
      %4265 = vst [vmem:[#allocation1] ss:$9 sm:$0xff] %v3552
      %4266 = vst [vmem:[%s4250] ss:$9 sm:$0xff] %v3553
      %4267 = vst [vmem:[%s4252] ss:$9 sm:$0xff] %v3554
      %4268 = vst [vmem:[%s4254] ss:$9 sm:$0xff] %v3555
      %4269 = vst [vmem:[%s4256] ss:$9 sm:$0xff] %v3556
      %v4270 = vld [vmem:[#allocation1] sm:$0xff]
      %4271 = vst [vmem:[#allocation1] ss:$9 sm:$0xff] %v3557
      %4272 = vst [vmem:[%s4250] ss:$9 sm:$0xff] %v3531
      %4273 = vst [vmem:[%s4252] ss:$9 sm:$0xff] %v3558
      %4274 = vst [vmem:[%s4254] ss:$9 sm:$0xff] %v3559
      %4275 = vst [vmem:[%s4256] ss:$9 sm:$0xff] %v3560
      %v4276 = vld [vmem:[#allocation1] sm:$0xff]
      %4277 = vst [vmem:[#allocation1] ss:$9 sm:$0xff] %v3561
      %4278 = vst [vmem:[%s4250] ss:$9 sm:$0xff] %v3562
      %4279 = vst [vmem:[%s4252] ss:$9 sm:$0xff] %v3563
      %4280 = vst [vmem:[%s4254] ss:$9 sm:$0xff] %v3564
      %4281 = vst [vmem:[%s4256] ss:$9 sm:$0xff] %v3533
      %v4282 = vld [vmem:[#allocation1] sm:$0xff]
      %4283 = vst [vmem:[#allocation1] ss:$9 sm:$0xff] %v3565
      %4284 = vst [vmem:[%s4250] ss:$9 sm:$0xff] %v3566
      %4285 = vst [vmem:[%s4252] ss:$9 sm:$0xff] %v3567
      %4286 = vst [vmem:[%s4254] ss:$9 sm:$0xff] %v3568
      %4287 = vst [vmem:[%s4256] ss:$9 sm:$0xff] %v3569
      %v4288 = vld [vmem:[#allocation1] sm:$0xff]
      %4289 = vst [vmem:[#allocation1] ss:$9 sm:$0xff] %v3570
      %4290 = vst [vmem:[%s4250] ss:$9 sm:$0xff] %v3571
      %4291 = vst [vmem:[%s4252] ss:$9 sm:$0xff] %v3536
      %4292 = vst [vmem:[%s4254] ss:$9 sm:$0xff] %v3572
      %4293 = vst [vmem:[%s4256] ss:$9 sm:$0xff] %v3573
      %v4294 = vld [vmem:[#allocation1] sm:$0xff]
      %4295 = vst [vmem:[#allocation1] ss:$9 sm:$0xff] %v3574
      %4296 = vst [vmem:[%s4250] ss:$9 sm:$0xff] %v3575
      %4297 = vst [vmem:[%s4252] ss:$9 sm:$0xff] %v3576
      %4298 = vst [vmem:[%s4254] ss:$9 sm:$0xff] %v3577
      %4299 = vst [vmem:[%s4256] ss:$9 sm:$0xff] %v3578
      %v4300 = vld [vmem:[#allocation1] sm:$0xff]
      %v4309 = vpack.c.bf16 %v4258, %v4258
      %v4310 = vpack.c.bf16 %v4264, %v4264
      %v4311 = vpack.c.bf16 %v4270, %v4270
      %v4312 = vpack.c.bf16 %v4276, %v4276
      %v4313 = vpack.c.bf16 %v4282, %v4282
      %v4314 = vpack.c.bf16 %v4288, %v4288
      %v4315 = vpack.c.bf16 %v4294, %v4294
      %v4316 = vpack.c.bf16 %v4300, %v4300
      %v4318 = vunpack.c.l.b16 %v3584
      %v4319 = vpack.c.b16 %v4318, %v4318
      %4320 = vrot.lane.b32.xlu0 %v4319, 120
      %v4321 = vpop.permute.xlu0 %4320
      %v4323 = vunpack.c.l.b16 %v4241
      %v4324 = vpack.c.b16 %v4323, %v4323
      %4325 = vrot.lane.b32.xlu0 %v4324, 120
      %v4326 = vpop.permute.xlu0 %4325
      %v4328 = vsel %vm1068, %v4321, 0
      %v4331 = vsel %vm1068, %v4326, 0
      %4333 = vmatpush.bf16.xpose.msra.mxu0 0
      %4334 = vmatpush.bf16.xpose.msra.mxu0 0
      %4335 = vmatpush.bf16.xpose.msra.mxu0 0
      %4336 = vmatpush.bf16.xpose.msra.mxu0 0
      %4337 = vmatpush.bf16.xpose.msra.mxu0 0
      %4338 = vmatpush.bf16.xpose.msra.mxu0 0
      %4339 = vmatpush.bf16.xpose.msra.mxu0 0
      %4340 = vmatpush.bf16.xpose.msra.mxu0 %v4331
      %4341 = vmatmul.bf16.gmra.mxu0 %v4328
      %v4342 = vpop.f32.mrf.mxu0
      %v4343 = vadd.f32 0.0, %v4342
      %v4344 = vpop.f32.mrf.mxu0
      %4345 = vdwg.mxu0
      %v4347 = vunpack.c.l.b16 %v3585
      %v4348 = vpack.c.b16 %v4347, %v4347
      %4349 = vrot.lane.b32.xlu0 %v4348, 120
      %v4350 = vpop.permute.xlu0 %4349
      %v4352 = vunpack.c.l.b16 %v4242
      %v4353 = vpack.c.b16 %v4352, %v4352
      %4354 = vrot.lane.b32.xlu0 %v4353, 120
      %v4355 = vpop.permute.xlu0 %4354
      %v4357 = vsel %vm1068, %v4350, 0
      %v4360 = vsel %vm1068, %v4355, 0
      %4362 = vmatpush.bf16.xpose.msra.mxu0 0
      %4363 = vmatpush.bf16.xpose.msra.mxu0 0
      %4364 = vmatpush.bf16.xpose.msra.mxu0 0
      %4365 = vmatpush.bf16.xpose.msra.mxu0 0
      %4366 = vmatpush.bf16.xpose.msra.mxu0 0
      %4367 = vmatpush.bf16.xpose.msra.mxu0 0
      %4368 = vmatpush.bf16.xpose.msra.mxu0 0
      %4369 = vmatpush.bf16.xpose.msra.mxu0 %v4360
      %4370 = vmatmul.bf16.gmra.mxu0 %v4357
      %v4371 = vpop.f32.mrf.mxu0
      %v4372 = vadd.f32 0.0, %v4371
      %v4373 = vpop.f32.mrf.mxu0
      %4374 = vdwg.mxu0
      %v4376 = vunpack.c.l.b16 %v3586
      %v4377 = vpack.c.b16 %v4376, %v4376
      %4378 = vrot.lane.b32.xlu0 %v4377, 120
      %v4379 = vpop.permute.xlu0 %4378
      %v4381 = vunpack.c.l.b16 %v4243
      %v4382 = vpack.c.b16 %v4381, %v4381
      %4383 = vrot.lane.b32.xlu0 %v4382, 120
      %v4384 = vpop.permute.xlu0 %4383
      %v4386 = vsel %vm1068, %v4379, 0
      %v4389 = vsel %vm1068, %v4384, 0
      %4391 = vmatpush.bf16.xpose.msra.mxu0 0
      %4392 = vmatpush.bf16.xpose.msra.mxu0 0
      %4393 = vmatpush.bf16.xpose.msra.mxu0 0
      %4394 = vmatpush.bf16.xpose.msra.mxu0 0
      %4395 = vmatpush.bf16.xpose.msra.mxu0 0
      %4396 = vmatpush.bf16.xpose.msra.mxu0 0
      %4397 = vmatpush.bf16.xpose.msra.mxu0 0
      %4398 = vmatpush.bf16.xpose.msra.mxu0 %v4389
      %4399 = vmatmul.bf16.gmra.mxu0 %v4386
      %v4400 = vpop.f32.mrf.mxu0
      %v4401 = vadd.f32 0.0, %v4400
      %v4402 = vpop.f32.mrf.mxu0
      %4403 = vdwg.mxu0
      %v4405 = vunpack.c.l.b16 %v3587
      %v4406 = vpack.c.b16 %v4405, %v4405
      %4407 = vrot.lane.b32.xlu0 %v4406, 120
      %v4408 = vpop.permute.xlu0 %4407
      %v4410 = vunpack.c.l.b16 %v4244
      %v4411 = vpack.c.b16 %v4410, %v4410
      %4412 = vrot.lane.b32.xlu0 %v4411, 120
      %v4413 = vpop.permute.xlu0 %4412
      %v4415 = vsel %vm1068, %v4408, 0
      %v4418 = vsel %vm1068, %v4413, 0
      %4420 = vmatpush.bf16.xpose.msra.mxu0 0
      %4421 = vmatpush.bf16.xpose.msra.mxu0 0
      %4422 = vmatpush.bf16.xpose.msra.mxu0 0
      %4423 = vmatpush.bf16.xpose.msra.mxu0 0
      %4424 = vmatpush.bf16.xpose.msra.mxu0 0
      %4425 = vmatpush.bf16.xpose.msra.mxu0 0
      %4426 = vmatpush.bf16.xpose.msra.mxu0 0
      %4427 = vmatpush.bf16.xpose.msra.mxu0 %v4418
      %4428 = vmatmul.bf16.gmra.mxu0 %v4415
      %v4429 = vpop.f32.mrf.mxu0
      %v4430 = vadd.f32 0.0, %v4429
      %v4431 = vpop.f32.mrf.mxu0
      %4432 = vdwg.mxu0
      %v4434 = vunpack.c.l.b16 %v3588
      %v4435 = vpack.c.b16 %v4434, %v4434
      %4436 = vrot.lane.b32.xlu0 %v4435, 120
      %v4437 = vpop.permute.xlu0 %4436
      %v4439 = vunpack.c.l.b16 %v4245
      %v4440 = vpack.c.b16 %v4439, %v4439
      %4441 = vrot.lane.b32.xlu0 %v4440, 120
      %v4442 = vpop.permute.xlu0 %4441
      %v4444 = vsel %vm1068, %v4437, 0
      %v4447 = vsel %vm1068, %v4442, 0
      %4449 = vmatpush.bf16.xpose.msra.mxu0 0
      %4450 = vmatpush.bf16.xpose.msra.mxu0 0
      %4451 = vmatpush.bf16.xpose.msra.mxu0 0
      %4452 = vmatpush.bf16.xpose.msra.mxu0 0
      %4453 = vmatpush.bf16.xpose.msra.mxu0 0
      %4454 = vmatpush.bf16.xpose.msra.mxu0 0
      %4455 = vmatpush.bf16.xpose.msra.mxu0 0
      %4456 = vmatpush.bf16.xpose.msra.mxu0 %v4447
      %4457 = vmatmul.bf16.gmra.mxu0 %v4444
      %v4458 = vpop.f32.mrf.mxu0
      %v4459 = vadd.f32 0.0, %v4458
      %v4460 = vpop.f32.mrf.mxu0
      %4461 = vdwg.mxu0
      %v4463 = vunpack.c.l.b16 %v3589
      %v4464 = vpack.c.b16 %v4463, %v4463
      %4465 = vrot.lane.b32.xlu0 %v4464, 120
      %v4466 = vpop.permute.xlu0 %4465
      %v4468 = vunpack.c.l.b16 %v4246
      %v4469 = vpack.c.b16 %v4468, %v4468
      %4470 = vrot.lane.b32.xlu0 %v4469, 120
      %v4471 = vpop.permute.xlu0 %4470
      %v4473 = vsel %vm1068, %v4466, 0
      %v4476 = vsel %vm1068, %v4471, 0
      %4478 = vmatpush.bf16.xpose.msra.mxu0 0
      %4479 = vmatpush.bf16.xpose.msra.mxu0 0
      %4480 = vmatpush.bf16.xpose.msra.mxu0 0
      %4481 = vmatpush.bf16.xpose.msra.mxu0 0
      %4482 = vmatpush.bf16.xpose.msra.mxu0 0
      %4483 = vmatpush.bf16.xpose.msra.mxu0 0
      %4484 = vmatpush.bf16.xpose.msra.mxu0 0
      %4485 = vmatpush.bf16.xpose.msra.mxu0 %v4476
      %4486 = vmatmul.bf16.gmra.mxu0 %v4473
      %v4487 = vpop.f32.mrf.mxu0
      %v4488 = vadd.f32 0.0, %v4487
      %v4489 = vpop.f32.mrf.mxu0
      %4490 = vdwg.mxu0
      %v4492 = vunpack.c.l.b16 %v3590
      %v4493 = vpack.c.b16 %v4492, %v4492
      %4494 = vrot.lane.b32.xlu0 %v4493, 120
      %v4495 = vpop.permute.xlu0 %4494
      %v4497 = vunpack.c.l.b16 %v4247
      %v4498 = vpack.c.b16 %v4497, %v4497
      %4499 = vrot.lane.b32.xlu0 %v4498, 120
      %v4500 = vpop.permute.xlu0 %4499
      %v4502 = vsel %vm1068, %v4495, 0
      %v4505 = vsel %vm1068, %v4500, 0
      %4507 = vmatpush.bf16.xpose.msra.mxu0 0
      %4508 = vmatpush.bf16.xpose.msra.mxu0 0
      %4509 = vmatpush.bf16.xpose.msra.mxu0 0
      %4510 = vmatpush.bf16.xpose.msra.mxu0 0
      %4511 = vmatpush.bf16.xpose.msra.mxu0 0
      %4512 = vmatpush.bf16.xpose.msra.mxu0 0
      %4513 = vmatpush.bf16.xpose.msra.mxu0 0
      %4514 = vmatpush.bf16.xpose.msra.mxu0 %v4505
      %4515 = vmatmul.bf16.gmra.mxu0 %v4502
      %v4516 = vpop.f32.mrf.mxu0
      %v4517 = vadd.f32 0.0, %v4516
      %v4518 = vpop.f32.mrf.mxu0
      %4519 = vdwg.mxu0
      %v4521 = vunpack.c.l.b16 %v3591
      %v4522 = vpack.c.b16 %v4521, %v4521
      %4523 = vrot.lane.b32.xlu0 %v4522, 120
      %v4524 = vpop.permute.xlu0 %4523
      %v4526 = vunpack.c.l.b16 %v4248
      %v4527 = vpack.c.b16 %v4526, %v4526
      %4528 = vrot.lane.b32.xlu0 %v4527, 120
      %v4529 = vpop.permute.xlu0 %4528
      %v4531 = vsel %vm1068, %v4524, 0
      %v4534 = vsel %vm1068, %v4529, 0
      %4536 = vmatpush.bf16.xpose.msra.mxu0 0
      %4537 = vmatpush.bf16.xpose.msra.mxu0 0
      %4538 = vmatpush.bf16.xpose.msra.mxu0 0
      %4539 = vmatpush.bf16.xpose.msra.mxu0 0
      %4540 = vmatpush.bf16.xpose.msra.mxu0 0
      %4541 = vmatpush.bf16.xpose.msra.mxu0 0
      %4542 = vmatpush.bf16.xpose.msra.mxu0 0
      %4543 = vmatpush.bf16.xpose.msra.mxu0 %v4534
      %4544 = vmatmul.bf16.gmra.mxu0 %v4531
      %v4545 = vpop.f32.mrf.mxu0
      %v4546 = vadd.f32 0.0, %v4545
      %v4547 = vpop.f32.mrf.mxu0
      %4548 = vdwg.mxu0
      %v4549 = vmul.f32 %v4343, 0.35355338
      %v4550 = vmul.f32 %v4372, 0.35355338
      %v4551 = vmul.f32 %v4401, 0.35355338
      %v4552 = vmul.f32 %v4430, 0.35355338
      %v4553 = vmul.f32 %v4459, 0.35355338
      %v4554 = vmul.f32 %v4488, 0.35355338
      %v4555 = vmul.f32 %v4517, 0.35355338
      %v4556 = vmul.f32 %v4546, 0.35355338
      %v4557 = vsel %vm3888, %v4549, -inf
      %4558 = vmax.xlane.f32.xlu0 %v4557
      %v4559 = vpop.xlane.xlu0 %4558
      %v4560 = vsel %vm3888, %v4550, -inf
      %4561 = vmax.xlane.f32.xlu0 %v4560
      %v4562 = vpop.xlane.xlu0 %4561
      %v4563 = vsel %vm3888, %v4551, -inf
      %4564 = vmax.xlane.f32.xlu0 %v4563
      %v4565 = vpop.xlane.xlu0 %4564
      %v4566 = vsel %vm3888, %v4552, -inf
      %4567 = vmax.xlane.f32.xlu0 %v4566
      %v4568 = vpop.xlane.xlu0 %4567
      %v4569 = vsel %vm3888, %v4553, -inf
      %4570 = vmax.xlane.f32.xlu0 %v4569
      %v4571 = vpop.xlane.xlu0 %4570
      %v4572 = vsel %vm3888, %v4554, -inf
      %4573 = vmax.xlane.f32.xlu0 %v4572
      %v4574 = vpop.xlane.xlu0 %4573
      %v4575 = vsel %vm3888, %v4555, -inf
      %4576 = vmax.xlane.f32.xlu0 %v4575
      %v4577 = vpop.xlane.xlu0 %4576
      %v4578 = vsel %vm3888, %v4556, -inf
      %4579 = vmax.xlane.f32.xlu0 %v4578
      %v4580 = vpop.xlane.xlu0 %4579
      %v4581 = vsub.f32 %v4549, %v4559
      %v4582 = vsub.f32 %v4550, %v4562
      %v4583 = vsub.f32 %v4551, %v4565
      %v4584 = vsub.f32 %v4552, %v4568
      %v4585 = vsub.f32 %v4553, %v4571
      %v4586 = vsub.f32 %v4554, %v4574
      %v4587 = vsub.f32 %v4555, %v4577
      %v4588 = vsub.f32 %v4556, %v4580
      %v4589 = vmul.f32 %v4581, 1.442695
      %v4590 = vpow.pop %v4589
      %v4591 = vmul.f32 %v4582, 1.442695
      %v4592 = vpow.pop %v4591
      %v4593 = vmul.f32 %v4583, 1.442695
      %v4594 = vpow.pop %v4593
      %v4595 = vmul.f32 %v4584, 1.442695
      %v4596 = vpow.pop %v4595
      %v4597 = vmul.f32 %v4585, 1.442695
      %v4598 = vpow.pop %v4597
      %v4599 = vmul.f32 %v4586, 1.442695
      %v4600 = vpow.pop %v4599
      %v4601 = vmul.f32 %v4587, 1.442695
      %v4602 = vpow.pop %v4601
      %v4603 = vmul.f32 %v4588, 1.442695
      %v4604 = vpow.pop %v4603
      %v4605 = vsel %vm3888, %v4590, 0.0
      %4606 = vadd.xlane.f32.xlu0 %v4605
      %v4607 = vpop.xlane.xlu0 %4606
      %v4608 = vsel %vm3888, %v4592, 0.0
      %4609 = vadd.xlane.f32.xlu0 %v4608
      %v4610 = vpop.xlane.xlu0 %4609
      %v4611 = vsel %vm3888, %v4594, 0.0
      %4612 = vadd.xlane.f32.xlu0 %v4611
      %v4613 = vpop.xlane.xlu0 %4612
      %v4614 = vsel %vm3888, %v4596, 0.0
      %4615 = vadd.xlane.f32.xlu0 %v4614
      %v4616 = vpop.xlane.xlu0 %4615
      %v4617 = vsel %vm3888, %v4598, 0.0
      %4618 = vadd.xlane.f32.xlu0 %v4617
      %v4619 = vpop.xlane.xlu0 %4618
      %v4620 = vsel %vm3888, %v4600, 0.0
      %4621 = vadd.xlane.f32.xlu0 %v4620
      %v4622 = vpop.xlane.xlu0 %4621
      %v4623 = vsel %vm3888, %v4602, 0.0
      %4624 = vadd.xlane.f32.xlu0 %v4623
      %v4625 = vpop.xlane.xlu0 %4624
      %v4626 = vsel %vm3888, %v4604, 0.0
      %4627 = vadd.xlane.f32.xlu0 %v4626
      %v4628 = vpop.xlane.xlu0 %4627
      %v4629 = vrcp.pop %v4607
      %v4630 = vrcp.pop %v4610
      %v4631 = vrcp.pop %v4613
      %v4632 = vrcp.pop %v4616
      %v4633 = vrcp.pop %v4619
      %v4634 = vrcp.pop %v4622
      %v4635 = vrcp.pop %v4625
      %v4636 = vrcp.pop %v4628
      %v4637 = vmul.f32 %v4590, %v4629
      %v4638 = vmul.f32 %v4592, %v4630
      %v4639 = vmul.f32 %v4594, %v4631
      %v4640 = vmul.f32 %v4596, %v4632
      %v4641 = vmul.f32 %v4598, %v4633
      %v4642 = vmul.f32 %v4600, %v4634
      %v4643 = vmul.f32 %v4602, %v4635
      %v4644 = vmul.f32 %v4604, %v4636
      %v4645 = vpack.c.bf16 %v4637, %v4637
      %v4646 = vpack.c.bf16 %v4638, %v4638
      %v4647 = vpack.c.bf16 %v4639, %v4639
      %v4648 = vpack.c.bf16 %v4640, %v4640
      %v4649 = vpack.c.bf16 %v4641, %v4641
      %v4650 = vpack.c.bf16 %v4642, %v4642
      %v4651 = vpack.c.bf16 %v4643, %v4643
      %v4652 = vpack.c.bf16 %v4644, %v4644
      %v4654 = vunpack.c.l.b16 %v4309
      %v4655 = vpack.c.b16 %v4654, %v4654
      %4656 = vrot.lane.b32.xlu0 %v4655, 88
      %v4657 = vpop.permute.xlu0 %4656
      %v4659 = vsel %vm3990, %v4645, 0
      %v4662 = vand.u32 %v4657, %v3996
      %4664 = vmatpush.bf16.msra.mxu0 0
      %4665 = vmatpush.bf16.msra.mxu0 0
      %4666 = vmatpush.bf16.msra.mxu0 0
      %4667 = vmatpush.bf16.msra.mxu0 0
      %4668 = vmatpush.bf16.msra.mxu0 0
      %4669 = vmatpush.bf16.msra.mxu0 0
      %4670 = vmatpush.bf16.msra.mxu0 0
      %4671 = vmatpush.bf16.msra.mxu0 %v4662
      %4672 = vmatmul.bf16.gmra.mxu0 %v4659
      %v4673 = vpop.f32.mrf.mxu0
      %v4674 = vadd.f32 0.0, %v4673
      %v4675 = vpop.f32.mrf.mxu0
      %4676 = vdwg.mxu0
      %v4678 = vunpack.c.l.b16 %v4310
      %v4679 = vpack.c.b16 %v4678, %v4678
      %4680 = vrot.lane.b32.xlu0 %v4679, 88
      %v4681 = vpop.permute.xlu0 %4680
      %v4683 = vsel %vm3990, %v4646, 0
      %v4686 = vand.u32 %v4681, %v3996
      %4688 = vmatpush.bf16.msra.mxu0 0
      %4689 = vmatpush.bf16.msra.mxu0 0
      %4690 = vmatpush.bf16.msra.mxu0 0
      %4691 = vmatpush.bf16.msra.mxu0 0
      %4692 = vmatpush.bf16.msra.mxu0 0
      %4693 = vmatpush.bf16.msra.mxu0 0
      %4694 = vmatpush.bf16.msra.mxu0 0
      %4695 = vmatpush.bf16.msra.mxu0 %v4686
      %4696 = vmatmul.bf16.gmra.mxu0 %v4683
      %v4697 = vpop.f32.mrf.mxu0
      %v4698 = vadd.f32 0.0, %v4697
      %v4699 = vpop.f32.mrf.mxu0
      %4700 = vdwg.mxu0
      %v4702 = vunpack.c.l.b16 %v4311
      %v4703 = vpack.c.b16 %v4702, %v4702
      %4704 = vrot.lane.b32.xlu0 %v4703, 88
      %v4705 = vpop.permute.xlu0 %4704
      %v4707 = vsel %vm3990, %v4647, 0
      %v4710 = vand.u32 %v4705, %v3996
      %4712 = vmatpush.bf16.msra.mxu0 0
      %4713 = vmatpush.bf16.msra.mxu0 0
      %4714 = vmatpush.bf16.msra.mxu0 0
      %4715 = vmatpush.bf16.msra.mxu0 0
      %4716 = vmatpush.bf16.msra.mxu0 0
      %4717 = vmatpush.bf16.msra.mxu0 0
      %4718 = vmatpush.bf16.msra.mxu0 0
      %4719 = vmatpush.bf16.msra.mxu0 %v4710
      %4720 = vmatmul.bf16.gmra.mxu0 %v4707
      %v4721 = vpop.f32.mrf.mxu0
      %v4722 = vadd.f32 0.0, %v4721
      %v4723 = vpop.f32.mrf.mxu0
      %4724 = vdwg.mxu0
      %v4726 = vunpack.c.l.b16 %v4312
      %v4727 = vpack.c.b16 %v4726, %v4726
      %4728 = vrot.lane.b32.xlu0 %v4727, 88
      %v4729 = vpop.permute.xlu0 %4728
      %v4731 = vsel %vm3990, %v4648, 0
      %v4734 = vand.u32 %v4729, %v3996
      %4736 = vmatpush.bf16.msra.mxu0 0
      %4737 = vmatpush.bf16.msra.mxu0 0
      %4738 = vmatpush.bf16.msra.mxu0 0
      %4739 = vmatpush.bf16.msra.mxu0 0
      %4740 = vmatpush.bf16.msra.mxu0 0
      %4741 = vmatpush.bf16.msra.mxu0 0
      %4742 = vmatpush.bf16.msra.mxu0 0
      %4743 = vmatpush.bf16.msra.mxu0 %v4734
      %4744 = vmatmul.bf16.gmra.mxu0 %v4731
      %v4745 = vpop.f32.mrf.mxu0
      %v4746 = vadd.f32 0.0, %v4745
      %v4747 = vpop.f32.mrf.mxu0
      %4748 = vdwg.mxu0
      %v4750 = vunpack.c.l.b16 %v4313
      %v4751 = vpack.c.b16 %v4750, %v4750
      %4752 = vrot.lane.b32.xlu0 %v4751, 88
      %v4753 = vpop.permute.xlu0 %4752
      %v4755 = vsel %vm3990, %v4649, 0
      %v4758 = vand.u32 %v4753, %v3996
      %4760 = vmatpush.bf16.msra.mxu0 0
      %4761 = vmatpush.bf16.msra.mxu0 0
      %4762 = vmatpush.bf16.msra.mxu0 0
      %4763 = vmatpush.bf16.msra.mxu0 0
      %4764 = vmatpush.bf16.msra.mxu0 0
      %4765 = vmatpush.bf16.msra.mxu0 0
      %4766 = vmatpush.bf16.msra.mxu0 0
      %4767 = vmatpush.bf16.msra.mxu0 %v4758
      %4768 = vmatmul.bf16.gmra.mxu0 %v4755
      %v4769 = vpop.f32.mrf.mxu0
      %v4770 = vadd.f32 0.0, %v4769
      %v4771 = vpop.f32.mrf.mxu0
      %4772 = vdwg.mxu0
      %v4774 = vunpack.c.l.b16 %v4314
      %v4775 = vpack.c.b16 %v4774, %v4774
      %4776 = vrot.lane.b32.xlu0 %v4775, 88
      %v4777 = vpop.permute.xlu0 %4776
      %v4779 = vsel %vm3990, %v4650, 0
      %v4782 = vand.u32 %v4777, %v3996
      %4784 = vmatpush.bf16.msra.mxu0 0
      %4785 = vmatpush.bf16.msra.mxu0 0
      %4786 = vmatpush.bf16.msra.mxu0 0
      %4787 = vmatpush.bf16.msra.mxu0 0
      %4788 = vmatpush.bf16.msra.mxu0 0
      %4789 = vmatpush.bf16.msra.mxu0 0
      %4790 = vmatpush.bf16.msra.mxu0 0
      %4791 = vmatpush.bf16.msra.mxu0 %v4782
      %4792 = vmatmul.bf16.gmra.mxu0 %v4779
      %v4793 = vpop.f32.mrf.mxu0
      %v4794 = vadd.f32 0.0, %v4793
      %v4795 = vpop.f32.mrf.mxu0
      %4796 = vdwg.mxu0
      %v4798 = vunpack.c.l.b16 %v4315
      %v4799 = vpack.c.b16 %v4798, %v4798
      %4800 = vrot.lane.b32.xlu0 %v4799, 88
      %v4801 = vpop.permute.xlu0 %4800
      %v4803 = vsel %vm3990, %v4651, 0
      %v4806 = vand.u32 %v4801, %v3996
      %4808 = vmatpush.bf16.msra.mxu0 0
      %4809 = vmatpush.bf16.msra.mxu0 0
      %4810 = vmatpush.bf16.msra.mxu0 0
      %4811 = vmatpush.bf16.msra.mxu0 0
      %4812 = vmatpush.bf16.msra.mxu0 0
      %4813 = vmatpush.bf16.msra.mxu0 0
      %4814 = vmatpush.bf16.msra.mxu0 0
      %4815 = vmatpush.bf16.msra.mxu0 %v4806
      %4816 = vmatmul.bf16.gmra.mxu0 %v4803
      %v4817 = vpop.f32.mrf.mxu0
      %v4818 = vadd.f32 0.0, %v4817
      %v4819 = vpop.f32.mrf.mxu0
      %4820 = vdwg.mxu0
      %v4822 = vunpack.c.l.b16 %v4316
      %v4823 = vpack.c.b16 %v4822, %v4822
      %4824 = vrot.lane.b32.xlu0 %v4823, 88
      %v4825 = vpop.permute.xlu0 %4824
      %v4827 = vsel %vm3990, %v4652, 0
      %v4830 = vand.u32 %v4825, %v3996
      %4832 = vmatpush.bf16.msra.mxu0 0
      %4833 = vmatpush.bf16.msra.mxu0 0
      %4834 = vmatpush.bf16.msra.mxu0 0
      %4835 = vmatpush.bf16.msra.mxu0 0
      %4836 = vmatpush.bf16.msra.mxu0 0
      %4837 = vmatpush.bf16.msra.mxu0 0
      %4838 = vmatpush.bf16.msra.mxu0 0
      %4839 = vmatpush.bf16.msra.mxu0 %v4830
      %4840 = vmatmul.bf16.gmra.mxu0 %v4827
      %v4841 = vpop.f32.mrf.mxu0
      %v4842 = vadd.f32 0.0, %v4841
      %v4843 = vpop.f32.mrf.mxu0
      %4844 = vdwg.mxu0
      %4845 = vst [vmem:[#allocation1] ss:$9 sm:$0xff] %v3526
      %s4846 = scalar_lea.vmem [#allocation1], 1
      %4847 = vst [vmem:[%s4846] ss:$9 sm:$0xff] %v3544
      %s4848 = scalar_lea.vmem [#allocation1], 2
      %4849 = vst [vmem:[%s4848] ss:$9 sm:$0xff] %v3545
      %s4850 = scalar_lea.vmem [#allocation1], 3
      %4851 = vst [vmem:[%s4850] ss:$9 sm:$0xff] %v3546
      %s4852 = scalar_lea.vmem [#allocation1], 4
      %4853 = vst [vmem:[%s4852] ss:$9 sm:$0xff] %v3547
      %v4854 = vld [vmem:[#allocation1] sm:$0xff]
      %4855 = vst [vmem:[#allocation1] ss:$9 sm:$0xff] %v3548
      %4856 = vst [vmem:[%s4846] ss:$9 sm:$0xff] %v3549
      %4857 = vst [vmem:[%s4848] ss:$9 sm:$0xff] %v3550
      %4858 = vst [vmem:[%s4850] ss:$9 sm:$0xff] %v3528
      %4859 = vst [vmem:[%s4852] ss:$9 sm:$0xff] %v3551
      %v4860 = vld [vmem:[#allocation1] sm:$0xff]
      %4861 = vst [vmem:[#allocation1] ss:$9 sm:$0xff] %v3552
      %4862 = vst [vmem:[%s4846] ss:$9 sm:$0xff] %v3553
      %4863 = vst [vmem:[%s4848] ss:$9 sm:$0xff] %v3554
      %4864 = vst [vmem:[%s4850] ss:$9 sm:$0xff] %v3555
      %4865 = vst [vmem:[%s4852] ss:$9 sm:$0xff] %v3556
      %v4866 = vld [vmem:[#allocation1] sm:$0xff]
      %4867 = vst [vmem:[#allocation1] ss:$9 sm:$0xff] %v3557
      %4868 = vst [vmem:[%s4846] ss:$9 sm:$0xff] %v3531
      %4869 = vst [vmem:[%s4848] ss:$9 sm:$0xff] %v3558
      %4870 = vst [vmem:[%s4850] ss:$9 sm:$0xff] %v3559
      %4871 = vst [vmem:[%s4852] ss:$9 sm:$0xff] %v3560
      %v4872 = vld [vmem:[#allocation1] sm:$0xff]
      %4873 = vst [vmem:[#allocation1] ss:$9 sm:$0xff] %v3561
      %4874 = vst [vmem:[%s4846] ss:$9 sm:$0xff] %v3562
      %4875 = vst [vmem:[%s4848] ss:$9 sm:$0xff] %v3563
      %4876 = vst [vmem:[%s4850] ss:$9 sm:$0xff] %v3564
      %4877 = vst [vmem:[%s4852] ss:$9 sm:$0xff] %v3533
      %v4878 = vld [vmem:[#allocation1] sm:$0xff]
      %4879 = vst [vmem:[#allocation1] ss:$9 sm:$0xff] %v3565
      %4880 = vst [vmem:[%s4846] ss:$9 sm:$0xff] %v3566
      %4881 = vst [vmem:[%s4848] ss:$9 sm:$0xff] %v3567
      %4882 = vst [vmem:[%s4850] ss:$9 sm:$0xff] %v3568
      %4883 = vst [vmem:[%s4852] ss:$9 sm:$0xff] %v3569
      %v4884 = vld [vmem:[#allocation1] sm:$0xff]
      %4885 = vst [vmem:[#allocation1] ss:$9 sm:$0xff] %v3570
      %4886 = vst [vmem:[%s4846] ss:$9 sm:$0xff] %v3571
      %4887 = vst [vmem:[%s4848] ss:$9 sm:$0xff] %v3536
      %4888 = vst [vmem:[%s4850] ss:$9 sm:$0xff] %v3572
      %4889 = vst [vmem:[%s4852] ss:$9 sm:$0xff] %v3573
      %v4890 = vld [vmem:[#allocation1] sm:$0xff]
      %4891 = vst [vmem:[#allocation1] ss:$9 sm:$0xff] %v3574
      %4892 = vst [vmem:[%s4846] ss:$9 sm:$0xff] %v3575
      %4893 = vst [vmem:[%s4848] ss:$9 sm:$0xff] %v3576
      %4894 = vst [vmem:[%s4850] ss:$9 sm:$0xff] %v3577
      %4895 = vst [vmem:[%s4852] ss:$9 sm:$0xff] %v3578
      %v4896 = vld [vmem:[#allocation1] sm:$0xff]
      %v4905 = vpack.c.bf16 %v4854, %v4854
      %v4906 = vpack.c.bf16 %v4860, %v4860
      %v4907 = vpack.c.bf16 %v4866, %v4866
      %v4908 = vpack.c.bf16 %v4872, %v4872
      %v4909 = vpack.c.bf16 %v4878, %v4878
      %v4910 = vpack.c.bf16 %v4884, %v4884
      %v4911 = vpack.c.bf16 %v4890, %v4890
      %v4912 = vpack.c.bf16 %v4896, %v4896
      %4913 = vst [vmem:[#allocation1] ss:$9 sm:$0xff] %v3526
      %s4914 = scalar_lea.vmem [#allocation1], 1
      %4915 = vst [vmem:[%s4914] ss:$9 sm:$0xff] %v3544
      %s4916 = scalar_lea.vmem [#allocation1], 2
      %4917 = vst [vmem:[%s4916] ss:$9 sm:$0xff] %v3545
      %s4918 = scalar_lea.vmem [#allocation1], 3
      %4919 = vst [vmem:[%s4918] ss:$9 sm:$0xff] %v3546
      %s4920 = scalar_lea.vmem [#allocation1], 4
      %4921 = vst [vmem:[%s4920] ss:$9 sm:$0xff] %v3547
      %v4922 = vld [vmem:[#allocation1] sm:$0xff]
      %4923 = vst [vmem:[#allocation1] ss:$9 sm:$0xff] %v3548
      %4924 = vst [vmem:[%s4914] ss:$9 sm:$0xff] %v3549
      %4925 = vst [vmem:[%s4916] ss:$9 sm:$0xff] %v3550
      %4926 = vst [vmem:[%s4918] ss:$9 sm:$0xff] %v3528
      %4927 = vst [vmem:[%s4920] ss:$9 sm:$0xff] %v3551
      %v4928 = vld [vmem:[#allocation1] sm:$0xff]
      %4929 = vst [vmem:[#allocation1] ss:$9 sm:$0xff] %v3552
      %4930 = vst [vmem:[%s4914] ss:$9 sm:$0xff] %v3553
      %4931 = vst [vmem:[%s4916] ss:$9 sm:$0xff] %v3554
      %4932 = vst [vmem:[%s4918] ss:$9 sm:$0xff] %v3555
      %4933 = vst [vmem:[%s4920] ss:$9 sm:$0xff] %v3556
      %v4934 = vld [vmem:[#allocation1] sm:$0xff]
      %4935 = vst [vmem:[#allocation1] ss:$9 sm:$0xff] %v3557
      %4936 = vst [vmem:[%s4914] ss:$9 sm:$0xff] %v3531
      %4937 = vst [vmem:[%s4916] ss:$9 sm:$0xff] %v3558
      %4938 = vst [vmem:[%s4918] ss:$9 sm:$0xff] %v3559
      %4939 = vst [vmem:[%s4920] ss:$9 sm:$0xff] %v3560
      %v4940 = vld [vmem:[#allocation1] sm:$0xff]
      %4941 = vst [vmem:[#allocation1] ss:$9 sm:$0xff] %v3561
      %4942 = vst [vmem:[%s4914] ss:$9 sm:$0xff] %v3562
      %4943 = vst [vmem:[%s4916] ss:$9 sm:$0xff] %v3563
      %4944 = vst [vmem:[%s4918] ss:$9 sm:$0xff] %v3564
      %4945 = vst [vmem:[%s4920] ss:$9 sm:$0xff] %v3533
      %v4946 = vld [vmem:[#allocation1] sm:$0xff]
      %4947 = vst [vmem:[#allocation1] ss:$9 sm:$0xff] %v3565
      %4948 = vst [vmem:[%s4914] ss:$9 sm:$0xff] %v3566
      %4949 = vst [vmem:[%s4916] ss:$9 sm:$0xff] %v3567
      %4950 = vst [vmem:[%s4918] ss:$9 sm:$0xff] %v3568
      %4951 = vst [vmem:[%s4920] ss:$9 sm:$0xff] %v3569
      %v4952 = vld [vmem:[#allocation1] sm:$0xff]
      %4953 = vst [vmem:[#allocation1] ss:$9 sm:$0xff] %v3570
      %4954 = vst [vmem:[%s4914] ss:$9 sm:$0xff] %v3571
      %4955 = vst [vmem:[%s4916] ss:$9 sm:$0xff] %v3536
      %4956 = vst [vmem:[%s4918] ss:$9 sm:$0xff] %v3572
      %4957 = vst [vmem:[%s4920] ss:$9 sm:$0xff] %v3573
      %v4958 = vld [vmem:[#allocation1] sm:$0xff]
      %4959 = vst [vmem:[#allocation1] ss:$9 sm:$0xff] %v3574
      %4960 = vst [vmem:[%s4914] ss:$9 sm:$0xff] %v3575
      %4961 = vst [vmem:[%s4916] ss:$9 sm:$0xff] %v3576
      %4962 = vst [vmem:[%s4918] ss:$9 sm:$0xff] %v3577
      %4963 = vst [vmem:[%s4920] ss:$9 sm:$0xff] %v3578
      %v4964 = vld [vmem:[#allocation1] sm:$0xff]
      %v4973 = vpack.c.bf16 %v4922, %v4922
      %v4974 = vpack.c.bf16 %v4928, %v4928
      %v4975 = vpack.c.bf16 %v4934, %v4934
      %v4976 = vpack.c.bf16 %v4940, %v4940
      %v4977 = vpack.c.bf16 %v4946, %v4946
      %v4978 = vpack.c.bf16 %v4952, %v4952
      %v4979 = vpack.c.bf16 %v4958, %v4958
      %v4980 = vpack.c.bf16 %v4964, %v4964
      %4981 = vrot.lane.b32.xlu0 %v4319, 112
      %v4982 = vpop.permute.xlu0 %4981
      %v4984 = vunpack.c.l.b16 %v4905
      %v4985 = vpack.c.b16 %v4984, %v4984
      %4986 = vrot.lane.b32.xlu0 %v4985, 112
      %v4987 = vpop.permute.xlu0 %4986
      %v4989 = vsel %vm1068, %v4982, 0
      %v4992 = vsel %vm1068, %v4987, 0
      %4994 = vmatpush.bf16.xpose.msra.mxu0 0
      %4995 = vmatpush.bf16.xpose.msra.mxu0 0
      %4996 = vmatpush.bf16.xpose.msra.mxu0 0
      %4997 = vmatpush.bf16.xpose.msra.mxu0 0
      %4998 = vmatpush.bf16.xpose.msra.mxu0 0
      %4999 = vmatpush.bf16.xpose.msra.mxu0 0
      %5000 = vmatpush.bf16.xpose.msra.mxu0 0
      %5001 = vmatpush.bf16.xpose.msra.mxu0 %v4992
      %5002 = vmatmul.bf16.gmra.mxu0 %v4989
      %v5003 = vpop.f32.mrf.mxu0
      %v5004 = vadd.f32 0.0, %v5003
      %v5005 = vpop.f32.mrf.mxu0
      %5006 = vdwg.mxu0
      %5007 = vrot.lane.b32.xlu0 %v4348, 112
      %v5008 = vpop.permute.xlu0 %5007
      %v5010 = vunpack.c.l.b16 %v4906
      %v5011 = vpack.c.b16 %v5010, %v5010
      %5012 = vrot.lane.b32.xlu0 %v5011, 112
      %v5013 = vpop.permute.xlu0 %5012
      %v5015 = vsel %vm1068, %v5008, 0
      %v5018 = vsel %vm1068, %v5013, 0
      %5020 = vmatpush.bf16.xpose.msra.mxu0 0
      %5021 = vmatpush.bf16.xpose.msra.mxu0 0
      %5022 = vmatpush.bf16.xpose.msra.mxu0 0
      %5023 = vmatpush.bf16.xpose.msra.mxu0 0
      %5024 = vmatpush.bf16.xpose.msra.mxu0 0
      %5025 = vmatpush.bf16.xpose.msra.mxu0 0
      %5026 = vmatpush.bf16.xpose.msra.mxu0 0
      %5027 = vmatpush.bf16.xpose.msra.mxu0 %v5018
      %5028 = vmatmul.bf16.gmra.mxu0 %v5015
      %v5029 = vpop.f32.mrf.mxu0
      %v5030 = vadd.f32 0.0, %v5029
      %v5031 = vpop.f32.mrf.mxu0
      %5032 = vdwg.mxu0
      %5033 = vrot.lane.b32.xlu0 %v4377, 112
      %v5034 = vpop.permute.xlu0 %5033
      %v5036 = vunpack.c.l.b16 %v4907
      %v5037 = vpack.c.b16 %v5036, %v5036
      %5038 = vrot.lane.b32.xlu0 %v5037, 112
      %v5039 = vpop.permute.xlu0 %5038
      %v5041 = vsel %vm1068, %v5034, 0
      %v5044 = vsel %vm1068, %v5039, 0
      %5046 = vmatpush.bf16.xpose.msra.mxu0 0
      %5047 = vmatpush.bf16.xpose.msra.mxu0 0
      %5048 = vmatpush.bf16.xpose.msra.mxu0 0
      %5049 = vmatpush.bf16.xpose.msra.mxu0 0
      %5050 = vmatpush.bf16.xpose.msra.mxu0 0
      %5051 = vmatpush.bf16.xpose.msra.mxu0 0
      %5052 = vmatpush.bf16.xpose.msra.mxu0 0
      %5053 = vmatpush.bf16.xpose.msra.mxu0 %v5044
      %5054 = vmatmul.bf16.gmra.mxu0 %v5041
      %v5055 = vpop.f32.mrf.mxu0
      %v5056 = vadd.f32 0.0, %v5055
      %v5057 = vpop.f32.mrf.mxu0
      %5058 = vdwg.mxu0
      %5059 = vrot.lane.b32.xlu0 %v4406, 112
      %v5060 = vpop.permute.xlu0 %5059
      %v5062 = vunpack.c.l.b16 %v4908
      %v5063 = vpack.c.b16 %v5062, %v5062
      %5064 = vrot.lane.b32.xlu0 %v5063, 112
      %v5065 = vpop.permute.xlu0 %5064
      %v5067 = vsel %vm1068, %v5060, 0
      %v5070 = vsel %vm1068, %v5065, 0
      %5072 = vmatpush.bf16.xpose.msra.mxu0 0
      %5073 = vmatpush.bf16.xpose.msra.mxu0 0
      %5074 = vmatpush.bf16.xpose.msra.mxu0 0
      %5075 = vmatpush.bf16.xpose.msra.mxu0 0
      %5076 = vmatpush.bf16.xpose.msra.mxu0 0
      %5077 = vmatpush.bf16.xpose.msra.mxu0 0
      %5078 = vmatpush.bf16.xpose.msra.mxu0 0
      %5079 = vmatpush.bf16.xpose.msra.mxu0 %v5070
      %5080 = vmatmul.bf16.gmra.mxu0 %v5067
      %v5081 = vpop.f32.mrf.mxu0
      %v5082 = vadd.f32 0.0, %v5081
      %v5083 = vpop.f32.mrf.mxu0
      %5084 = vdwg.mxu0
      %5085 = vrot.lane.b32.xlu0 %v4435, 112
      %v5086 = vpop.permute.xlu0 %5085
      %v5088 = vunpack.c.l.b16 %v4909
      %v5089 = vpack.c.b16 %v5088, %v5088
      %5090 = vrot.lane.b32.xlu0 %v5089, 112
      %v5091 = vpop.permute.xlu0 %5090
      %v5093 = vsel %vm1068, %v5086, 0
      %v5096 = vsel %vm1068, %v5091, 0
      %5098 = vmatpush.bf16.xpose.msra.mxu0 0
      %5099 = vmatpush.bf16.xpose.msra.mxu0 0
      %5100 = vmatpush.bf16.xpose.msra.mxu0 0
      %5101 = vmatpush.bf16.xpose.msra.mxu0 0
      %5102 = vmatpush.bf16.xpose.msra.mxu0 0
      %5103 = vmatpush.bf16.xpose.msra.mxu0 0
      %5104 = vmatpush.bf16.xpose.msra.mxu0 0
      %5105 = vmatpush.bf16.xpose.msra.mxu0 %v5096
      %5106 = vmatmul.bf16.gmra.mxu0 %v5093
      %v5107 = vpop.f32.mrf.mxu0
      %v5108 = vadd.f32 0.0, %v5107
      %v5109 = vpop.f32.mrf.mxu0
      %5110 = vdwg.mxu0
      %5111 = vrot.lane.b32.xlu0 %v4464, 112
      %v5112 = vpop.permute.xlu0 %5111
      %v5114 = vunpack.c.l.b16 %v4910
      %v5115 = vpack.c.b16 %v5114, %v5114
      %5116 = vrot.lane.b32.xlu0 %v5115, 112
      %v5117 = vpop.permute.xlu0 %5116
      %v5119 = vsel %vm1068, %v5112, 0
      %v5122 = vsel %vm1068, %v5117, 0
      %5124 = vmatpush.bf16.xpose.msra.mxu0 0
      %5125 = vmatpush.bf16.xpose.msra.mxu0 0
      %5126 = vmatpush.bf16.xpose.msra.mxu0 0
      %5127 = vmatpush.bf16.xpose.msra.mxu0 0
      %5128 = vmatpush.bf16.xpose.msra.mxu0 0
      %5129 = vmatpush.bf16.xpose.msra.mxu0 0
      %5130 = vmatpush.bf16.xpose.msra.mxu0 0
      %5131 = vmatpush.bf16.xpose.msra.mxu0 %v5122
      %5132 = vmatmul.bf16.gmra.mxu0 %v5119
      %v5133 = vpop.f32.mrf.mxu0
      %v5134 = vadd.f32 0.0, %v5133
      %v5135 = vpop.f32.mrf.mxu0
      %5136 = vdwg.mxu0
      %5137 = vrot.lane.b32.xlu0 %v4493, 112
      %v5138 = vpop.permute.xlu0 %5137
      %v5140 = vunpack.c.l.b16 %v4911
      %v5141 = vpack.c.b16 %v5140, %v5140
      %5142 = vrot.lane.b32.xlu0 %v5141, 112
      %v5143 = vpop.permute.xlu0 %5142
      %v5145 = vsel %vm1068, %v5138, 0
      %v5148 = vsel %vm1068, %v5143, 0
      %5150 = vmatpush.bf16.xpose.msra.mxu0 0
      %5151 = vmatpush.bf16.xpose.msra.mxu0 0
      %5152 = vmatpush.bf16.xpose.msra.mxu0 0
      %5153 = vmatpush.bf16.xpose.msra.mxu0 0
      %5154 = vmatpush.bf16.xpose.msra.mxu0 0
      %5155 = vmatpush.bf16.xpose.msra.mxu0 0
      %5156 = vmatpush.bf16.xpose.msra.mxu0 0
      %5157 = vmatpush.bf16.xpose.msra.mxu0 %v5148
      %5158 = vmatmul.bf16.gmra.mxu0 %v5145
      %v5159 = vpop.f32.mrf.mxu0
      %v5160 = vadd.f32 0.0, %v5159
      %v5161 = vpop.f32.mrf.mxu0
      %5162 = vdwg.mxu0
      %5163 = vrot.lane.b32.xlu0 %v4522, 112
      %v5164 = vpop.permute.xlu0 %5163
      %v5166 = vunpack.c.l.b16 %v4912
      %v5167 = vpack.c.b16 %v5166, %v5166
      %5168 = vrot.lane.b32.xlu0 %v5167, 112
      %v5169 = vpop.permute.xlu0 %5168
      %v5171 = vsel %vm1068, %v5164, 0
      %v5174 = vsel %vm1068, %v5169, 0
      %5176 = vmatpush.bf16.xpose.msra.mxu0 0
      %5177 = vmatpush.bf16.xpose.msra.mxu0 0
      %5178 = vmatpush.bf16.xpose.msra.mxu0 0
      %5179 = vmatpush.bf16.xpose.msra.mxu0 0
      %5180 = vmatpush.bf16.xpose.msra.mxu0 0
      %5181 = vmatpush.bf16.xpose.msra.mxu0 0
      %5182 = vmatpush.bf16.xpose.msra.mxu0 0
      %5183 = vmatpush.bf16.xpose.msra.mxu0 %v5174
      %5184 = vmatmul.bf16.gmra.mxu0 %v5171
      %v5185 = vpop.f32.mrf.mxu0
      %v5186 = vadd.f32 0.0, %v5185
      %v5187 = vpop.f32.mrf.mxu0
      %5188 = vdwg.mxu0
      %v5189 = vmul.f32 %v5004, 0.35355338
      %v5190 = vmul.f32 %v5030, 0.35355338
      %v5191 = vmul.f32 %v5056, 0.35355338
      %v5192 = vmul.f32 %v5082, 0.35355338
      %v5193 = vmul.f32 %v5108, 0.35355338
      %v5194 = vmul.f32 %v5134, 0.35355338
      %v5195 = vmul.f32 %v5160, 0.35355338
      %v5196 = vmul.f32 %v5186, 0.35355338
      %v5197 = vsel %vm3888, %v5189, -inf
      %5198 = vmax.xlane.f32.xlu0 %v5197
      %v5199 = vpop.xlane.xlu0 %5198
      %v5200 = vsel %vm3888, %v5190, -inf
      %5201 = vmax.xlane.f32.xlu0 %v5200
      %v5202 = vpop.xlane.xlu0 %5201
      %v5203 = vsel %vm3888, %v5191, -inf
      %5204 = vmax.xlane.f32.xlu0 %v5203
      %v5205 = vpop.xlane.xlu0 %5204
      %v5206 = vsel %vm3888, %v5192, -inf
      %5207 = vmax.xlane.f32.xlu0 %v5206
      %v5208 = vpop.xlane.xlu0 %5207
      %v5209 = vsel %vm3888, %v5193, -inf
      %5210 = vmax.xlane.f32.xlu0 %v5209
      %v5211 = vpop.xlane.xlu0 %5210
      %v5212 = vsel %vm3888, %v5194, -inf
      %5213 = vmax.xlane.f32.xlu0 %v5212
      %v5214 = vpop.xlane.xlu0 %5213
      %v5215 = vsel %vm3888, %v5195, -inf
      %5216 = vmax.xlane.f32.xlu0 %v5215
      %v5217 = vpop.xlane.xlu0 %5216
      %v5218 = vsel %vm3888, %v5196, -inf
      %5219 = vmax.xlane.f32.xlu0 %v5218
      %v5220 = vpop.xlane.xlu0 %5219
      %v5221 = vsub.f32 %v5189, %v5199
      %v5222 = vsub.f32 %v5190, %v5202
      %v5223 = vsub.f32 %v5191, %v5205
      %v5224 = vsub.f32 %v5192, %v5208
      %v5225 = vsub.f32 %v5193, %v5211
      %v5226 = vsub.f32 %v5194, %v5214
      %v5227 = vsub.f32 %v5195, %v5217
      %v5228 = vsub.f32 %v5196, %v5220
      %v5229 = vmul.f32 %v5221, 1.442695
      %v5230 = vpow.pop %v5229
      %v5231 = vmul.f32 %v5222, 1.442695
      %v5232 = vpow.pop %v5231
      %v5233 = vmul.f32 %v5223, 1.442695
      %v5234 = vpow.pop %v5233
      %v5235 = vmul.f32 %v5224, 1.442695
      %v5236 = vpow.pop %v5235
      %v5237 = vmul.f32 %v5225, 1.442695
      %v5238 = vpow.pop %v5237
      %v5239 = vmul.f32 %v5226, 1.442695
      %v5240 = vpow.pop %v5239
      %v5241 = vmul.f32 %v5227, 1.442695
      %v5242 = vpow.pop %v5241
      %v5243 = vmul.f32 %v5228, 1.442695
      %v5244 = vpow.pop %v5243
      %v5245 = vsel %vm3888, %v5230, 0.0
      %5246 = vadd.xlane.f32.xlu0 %v5245
      %v5247 = vpop.xlane.xlu0 %5246
      %v5248 = vsel %vm3888, %v5232, 0.0
      %5249 = vadd.xlane.f32.xlu0 %v5248
      %v5250 = vpop.xlane.xlu0 %5249
      %v5251 = vsel %vm3888, %v5234, 0.0
      %5252 = vadd.xlane.f32.xlu0 %v5251
      %v5253 = vpop.xlane.xlu0 %5252
      %v5254 = vsel %vm3888, %v5236, 0.0
      %5255 = vadd.xlane.f32.xlu0 %v5254
      %v5256 = vpop.xlane.xlu0 %5255
      %v5257 = vsel %vm3888, %v5238, 0.0
      %5258 = vadd.xlane.f32.xlu0 %v5257
      %v5259 = vpop.xlane.xlu0 %5258
      %v5260 = vsel %vm3888, %v5240, 0.0
      %5261 = vadd.xlane.f32.xlu0 %v5260
      %v5262 = vpop.xlane.xlu0 %5261
      %v5263 = vsel %vm3888, %v5242, 0.0
      %5264 = vadd.xlane.f32.xlu0 %v5263
      %v5265 = vpop.xlane.xlu0 %5264
      %v5266 = vsel %vm3888, %v5244, 0.0
      %5267 = vadd.xlane.f32.xlu0 %v5266
      %v5268 = vpop.xlane.xlu0 %5267
      %v5269 = vrcp.pop %v5247
      %v5270 = vrcp.pop %v5250
      %v5271 = vrcp.pop %v5253
      %v5272 = vrcp.pop %v5256
      %v5273 = vrcp.pop %v5259
      %v5274 = vrcp.pop %v5262
      %v5275 = vrcp.pop %v5265
      %v5276 = vrcp.pop %v5268
      %v5277 = vmul.f32 %v5230, %v5269
      %v5278 = vmul.f32 %v5232, %v5270
      %v5279 = vmul.f32 %v5234, %v5271
      %v5280 = vmul.f32 %v5236, %v5272
      %v5281 = vmul.f32 %v5238, %v5273
      %v5282 = vmul.f32 %v5240, %v5274
      %v5283 = vmul.f32 %v5242, %v5275
      %v5284 = vmul.f32 %v5244, %v5276
      %v5285 = vpack.c.bf16 %v5277, %v5277
      %v5286 = vpack.c.bf16 %v5278, %v5278
      %v5287 = vpack.c.bf16 %v5279, %v5279
      %v5288 = vpack.c.bf16 %v5280, %v5280
      %v5289 = vpack.c.bf16 %v5281, %v5281
      %v5290 = vpack.c.bf16 %v5282, %v5282
      %v5291 = vpack.c.bf16 %v5283, %v5283
      %v5292 = vpack.c.bf16 %v5284, %v5284
      %v5294 = vunpack.c.l.b16 %v4973
      %v5295 = vpack.c.b16 %v5294, %v5294
      %5296 = vrot.lane.b32.xlu0 %v5295, 80
      %v5297 = vpop.permute.xlu0 %5296
      %v5299 = vsel %vm3990, %v5285, 0
      %v5302 = vand.u32 %v5297, %v3996
      %5304 = vmatpush.bf16.msra.mxu0 0
      %5305 = vmatpush.bf16.msra.mxu0 0
      %5306 = vmatpush.bf16.msra.mxu0 0
      %5307 = vmatpush.bf16.msra.mxu0 0
      %5308 = vmatpush.bf16.msra.mxu0 0
      %5309 = vmatpush.bf16.msra.mxu0 0
      %5310 = vmatpush.bf16.msra.mxu0 0
      %5311 = vmatpush.bf16.msra.mxu0 %v5302
      %5312 = vmatmul.bf16.gmra.mxu0 %v5299
      %v5313 = vpop.f32.mrf.mxu0
      %v5314 = vadd.f32 0.0, %v5313
      %v5315 = vpop.f32.mrf.mxu0
      %5316 = vdwg.mxu0
      %v5318 = vunpack.c.l.b16 %v4974
      %v5319 = vpack.c.b16 %v5318, %v5318
      %5320 = vrot.lane.b32.xlu0 %v5319, 80
      %v5321 = vpop.permute.xlu0 %5320
      %v5323 = vsel %vm3990, %v5286, 0
      %v5326 = vand.u32 %v5321, %v3996
      %5328 = vmatpush.bf16.msra.mxu0 0
      %5329 = vmatpush.bf16.msra.mxu0 0
      %5330 = vmatpush.bf16.msra.mxu0 0
      %5331 = vmatpush.bf16.msra.mxu0 0
      %5332 = vmatpush.bf16.msra.mxu0 0
      %5333 = vmatpush.bf16.msra.mxu0 0
      %5334 = vmatpush.bf16.msra.mxu0 0
      %5335 = vmatpush.bf16.msra.mxu0 %v5326
      %5336 = vmatmul.bf16.gmra.mxu0 %v5323
      %v5337 = vpop.f32.mrf.mxu0
      %v5338 = vadd.f32 0.0, %v5337
      %v5339 = vpop.f32.mrf.mxu0
      %5340 = vdwg.mxu0
      %v5342 = vunpack.c.l.b16 %v4975
      %v5343 = vpack.c.b16 %v5342, %v5342
      %5344 = vrot.lane.b32.xlu0 %v5343, 80
      %v5345 = vpop.permute.xlu0 %5344
      %v5347 = vsel %vm3990, %v5287, 0
      %v5350 = vand.u32 %v5345, %v3996
      %5352 = vmatpush.bf16.msra.mxu0 0
      %5353 = vmatpush.bf16.msra.mxu0 0
      %5354 = vmatpush.bf16.msra.mxu0 0
      %5355 = vmatpush.bf16.msra.mxu0 0
      %5356 = vmatpush.bf16.msra.mxu0 0
      %5357 = vmatpush.bf16.msra.mxu0 0
      %5358 = vmatpush.bf16.msra.mxu0 0
      %5359 = vmatpush.bf16.msra.mxu0 %v5350
      %5360 = vmatmul.bf16.gmra.mxu0 %v5347
      %v5361 = vpop.f32.mrf.mxu0
      %v5362 = vadd.f32 0.0, %v5361
      %v5363 = vpop.f32.mrf.mxu0
      %5364 = vdwg.mxu0
      %v5366 = vunpack.c.l.b16 %v4976
      %v5367 = vpack.c.b16 %v5366, %v5366
      %5368 = vrot.lane.b32.xlu0 %v5367, 80
      %v5369 = vpop.permute.xlu0 %5368
      %v5371 = vsel %vm3990, %v5288, 0
      %v5374 = vand.u32 %v5369, %v3996
      %5376 = vmatpush.bf16.msra.mxu0 0
      %5377 = vmatpush.bf16.msra.mxu0 0
      %5378 = vmatpush.bf16.msra.mxu0 0
      %5379 = vmatpush.bf16.msra.mxu0 0
      %5380 = vmatpush.bf16.msra.mxu0 0
      %5381 = vmatpush.bf16.msra.mxu0 0
      %5382 = vmatpush.bf16.msra.mxu0 0
      %5383 = vmatpush.bf16.msra.mxu0 %v5374
      %5384 = vmatmul.bf16.gmra.mxu0 %v5371
      %v5385 = vpop.f32.mrf.mxu0
      %v5386 = vadd.f32 0.0, %v5385
      %v5387 = vpop.f32.mrf.mxu0
      %5388 = vdwg.mxu0
      %v5390 = vunpack.c.l.b16 %v4977
      %v5391 = vpack.c.b16 %v5390, %v5390
      %5392 = vrot.lane.b32.xlu0 %v5391, 80
      %v5393 = vpop.permute.xlu0 %5392
      %v5395 = vsel %vm3990, %v5289, 0
      %v5398 = vand.u32 %v5393, %v3996
      %5400 = vmatpush.bf16.msra.mxu0 0
      %5401 = vmatpush.bf16.msra.mxu0 0
      %5402 = vmatpush.bf16.msra.mxu0 0
      %5403 = vmatpush.bf16.msra.mxu0 0
      %5404 = vmatpush.bf16.msra.mxu0 0
      %5405 = vmatpush.bf16.msra.mxu0 0
      %5406 = vmatpush.bf16.msra.mxu0 0
      %5407 = vmatpush.bf16.msra.mxu0 %v5398
      %5408 = vmatmul.bf16.gmra.mxu0 %v5395
      %v5409 = vpop.f32.mrf.mxu0
      %v5410 = vadd.f32 0.0, %v5409
      %v5411 = vpop.f32.mrf.mxu0
      %5412 = vdwg.mxu0
      %v5414 = vunpack.c.l.b16 %v4978
      %v5415 = vpack.c.b16 %v5414, %v5414
      %5416 = vrot.lane.b32.xlu0 %v5415, 80
      %v5417 = vpop.permute.xlu0 %5416
      %v5419 = vsel %vm3990, %v5290, 0
      %v5422 = vand.u32 %v5417, %v3996
      %5424 = vmatpush.bf16.msra.mxu0 0
      %5425 = vmatpush.bf16.msra.mxu0 0
      %5426 = vmatpush.bf16.msra.mxu0 0
      %5427 = vmatpush.bf16.msra.mxu0 0
      %5428 = vmatpush.bf16.msra.mxu0 0
      %5429 = vmatpush.bf16.msra.mxu0 0
      %5430 = vmatpush.bf16.msra.mxu0 0
      %5431 = vmatpush.bf16.msra.mxu0 %v5422
      %5432 = vmatmul.bf16.gmra.mxu0 %v5419
      %v5433 = vpop.f32.mrf.mxu0
      %v5434 = vadd.f32 0.0, %v5433
      %v5435 = vpop.f32.mrf.mxu0
      %5436 = vdwg.mxu0
      %v5438 = vunpack.c.l.b16 %v4979
      %v5439 = vpack.c.b16 %v5438, %v5438
      %5440 = vrot.lane.b32.xlu0 %v5439, 80
      %v5441 = vpop.permute.xlu0 %5440
      %v5443 = vsel %vm3990, %v5291, 0
      %v5446 = vand.u32 %v5441, %v3996
      %5448 = vmatpush.bf16.msra.mxu0 0
      %5449 = vmatpush.bf16.msra.mxu0 0
      %5450 = vmatpush.bf16.msra.mxu0 0
      %5451 = vmatpush.bf16.msra.mxu0 0
      %5452 = vmatpush.bf16.msra.mxu0 0
      %5453 = vmatpush.bf16.msra.mxu0 0
      %5454 = vmatpush.bf16.msra.mxu0 0
      %5455 = vmatpush.bf16.msra.mxu0 %v5446
      %5456 = vmatmul.bf16.gmra.mxu0 %v5443
      %v5457 = vpop.f32.mrf.mxu0
      %v5458 = vadd.f32 0.0, %v5457
      %v5459 = vpop.f32.mrf.mxu0
      %5460 = vdwg.mxu0
      %v5462 = vunpack.c.l.b16 %v4980
      %v5463 = vpack.c.b16 %v5462, %v5462
      %5464 = vrot.lane.b32.xlu0 %v5463, 80
      %v5465 = vpop.permute.xlu0 %5464
      %v5467 = vsel %vm3990, %v5292, 0
      %v5470 = vand.u32 %v5465, %v3996
      %5472 = vmatpush.bf16.msra.mxu0 0
      %5473 = vmatpush.bf16.msra.mxu0 0
      %5474 = vmatpush.bf16.msra.mxu0 0
      %5475 = vmatpush.bf16.msra.mxu0 0
      %5476 = vmatpush.bf16.msra.mxu0 0
      %5477 = vmatpush.bf16.msra.mxu0 0
      %5478 = vmatpush.bf16.msra.mxu0 0
      %5479 = vmatpush.bf16.msra.mxu0 %v5470
      %5480 = vmatmul.bf16.gmra.mxu0 %v5467
      %v5481 = vpop.f32.mrf.mxu0
      %v5482 = vadd.f32 0.0, %v5481
      %v5483 = vpop.f32.mrf.mxu0
      %5484 = vdwg.mxu0
      %5485 = vst [vmem:[#allocation1] ss:$9 sm:$0xff] %v3526
      %s5486 = scalar_lea.vmem [#allocation1], 1
      %5487 = vst [vmem:[%s5486] ss:$9 sm:$0xff] %v3544
      %s5488 = scalar_lea.vmem [#allocation1], 2
      %5489 = vst [vmem:[%s5488] ss:$9 sm:$0xff] %v3545
      %s5490 = scalar_lea.vmem [#allocation1], 3
      %5491 = vst [vmem:[%s5490] ss:$9 sm:$0xff] %v3546
      %s5492 = scalar_lea.vmem [#allocation1], 4
      %5493 = vst [vmem:[%s5492] ss:$9 sm:$0xff] %v3547
      %v5494 = vld [vmem:[#allocation1] sm:$0xff]
      %5495 = vst [vmem:[#allocation1] ss:$9 sm:$0xff] %v3548
      %5496 = vst [vmem:[%s5486] ss:$9 sm:$0xff] %v3549
      %5497 = vst [vmem:[%s5488] ss:$9 sm:$0xff] %v3550
      %5498 = vst [vmem:[%s5490] ss:$9 sm:$0xff] %v3528
      %5499 = vst [vmem:[%s5492] ss:$9 sm:$0xff] %v3551
      %v5500 = vld [vmem:[#allocation1] sm:$0xff]
      %5501 = vst [vmem:[#allocation1] ss:$9 sm:$0xff] %v3552
      %5502 = vst [vmem:[%s5486] ss:$9 sm:$0xff] %v3553
      %5503 = vst [vmem:[%s5488] ss:$9 sm:$0xff] %v3554
      %5504 = vst [vmem:[%s5490] ss:$9 sm:$0xff] %v3555
      %5505 = vst [vmem:[%s5492] ss:$9 sm:$0xff] %v3556
      %v5506 = vld [vmem:[#allocation1] sm:$0xff]
      %5507 = vst [vmem:[#allocation1] ss:$9 sm:$0xff] %v3557
      %5508 = vst [vmem:[%s5486] ss:$9 sm:$0xff] %v3531
      %5509 = vst [vmem:[%s5488] ss:$9 sm:$0xff] %v3558
      %5510 = vst [vmem:[%s5490] ss:$9 sm:$0xff] %v3559
      %5511 = vst [vmem:[%s5492] ss:$9 sm:$0xff] %v3560
      %v5512 = vld [vmem:[#allocation1] sm:$0xff]
      %5513 = vst [vmem:[#allocation1] ss:$9 sm:$0xff] %v3561
      %5514 = vst [vmem:[%s5486] ss:$9 sm:$0xff] %v3562
      %5515 = vst [vmem:[%s5488] ss:$9 sm:$0xff] %v3563
      %5516 = vst [vmem:[%s5490] ss:$9 sm:$0xff] %v3564
      %5517 = vst [vmem:[%s5492] ss:$9 sm:$0xff] %v3533
      %v5518 = vld [vmem:[#allocation1] sm:$0xff]
      %5519 = vst [vmem:[#allocation1] ss:$9 sm:$0xff] %v3565
      %5520 = vst [vmem:[%s5486] ss:$9 sm:$0xff] %v3566
      %5521 = vst [vmem:[%s5488] ss:$9 sm:$0xff] %v3567
      %5522 = vst [vmem:[%s5490] ss:$9 sm:$0xff] %v3568
      %5523 = vst [vmem:[%s5492] ss:$9 sm:$0xff] %v3569
      %v5524 = vld [vmem:[#allocation1] sm:$0xff]
      %5525 = vst [vmem:[#allocation1] ss:$9 sm:$0xff] %v3570
      %5526 = vst [vmem:[%s5486] ss:$9 sm:$0xff] %v3571
      %5527 = vst [vmem:[%s5488] ss:$9 sm:$0xff] %v3536
      %5528 = vst [vmem:[%s5490] ss:$9 sm:$0xff] %v3572
      %5529 = vst [vmem:[%s5492] ss:$9 sm:$0xff] %v3573
      %v5530 = vld [vmem:[#allocation1] sm:$0xff]
      %5531 = vst [vmem:[#allocation1] ss:$9 sm:$0xff] %v3574
      %5532 = vst [vmem:[%s5486] ss:$9 sm:$0xff] %v3575
      %5533 = vst [vmem:[%s5488] ss:$9 sm:$0xff] %v3576
      %5534 = vst [vmem:[%s5490] ss:$9 sm:$0xff] %v3577
      %5535 = vst [vmem:[%s5492] ss:$9 sm:$0xff] %v3578
      %v5536 = vld [vmem:[#allocation1] sm:$0xff]
      %v5545 = vpack.c.bf16 %v5494, %v5494
      %v5546 = vpack.c.bf16 %v5500, %v5500
      %v5547 = vpack.c.bf16 %v5506, %v5506
      %v5548 = vpack.c.bf16 %v5512, %v5512
      %v5549 = vpack.c.bf16 %v5518, %v5518
      %v5550 = vpack.c.bf16 %v5524, %v5524
      %v5551 = vpack.c.bf16 %v5530, %v5530
      %v5552 = vpack.c.bf16 %v5536, %v5536
      %5553 = vst [vmem:[#allocation1] ss:$9 sm:$0xff] %v3526
      %s5554 = scalar_lea.vmem [#allocation1], 1
      %5555 = vst [vmem:[%s5554] ss:$9 sm:$0xff] %v3544
      %s5556 = scalar_lea.vmem [#allocation1], 2
      %5557 = vst [vmem:[%s5556] ss:$9 sm:$0xff] %v3545
      %s5558 = scalar_lea.vmem [#allocation1], 3
      %5559 = vst [vmem:[%s5558] ss:$9 sm:$0xff] %v3546
      %s5560 = scalar_lea.vmem [#allocation1], 4
      %5561 = vst [vmem:[%s5560] ss:$9 sm:$0xff] %v3547
      %v5562 = vld [vmem:[#allocation1] sm:$0xff]
      %5563 = vst [vmem:[#allocation1] ss:$9 sm:$0xff] %v3548
      %5564 = vst [vmem:[%s5554] ss:$9 sm:$0xff] %v3549
      %5565 = vst [vmem:[%s5556] ss:$9 sm:$0xff] %v3550
      %5566 = vst [vmem:[%s5558] ss:$9 sm:$0xff] %v3528
      %5567 = vst [vmem:[%s5560] ss:$9 sm:$0xff] %v3551
      %v5568 = vld [vmem:[#allocation1] sm:$0xff]
      %5569 = vst [vmem:[#allocation1] ss:$9 sm:$0xff] %v3552
      %5570 = vst [vmem:[%s5554] ss:$9 sm:$0xff] %v3553
      %5571 = vst [vmem:[%s5556] ss:$9 sm:$0xff] %v3554
      %5572 = vst [vmem:[%s5558] ss:$9 sm:$0xff] %v3555
      %5573 = vst [vmem:[%s5560] ss:$9 sm:$0xff] %v3556
      %v5574 = vld [vmem:[#allocation1] sm:$0xff]
      %5575 = vst [vmem:[#allocation1] ss:$9 sm:$0xff] %v3557
      %5576 = vst [vmem:[%s5554] ss:$9 sm:$0xff] %v3531
      %5577 = vst [vmem:[%s5556] ss:$9 sm:$0xff] %v3558
      %5578 = vst [vmem:[%s5558] ss:$9 sm:$0xff] %v3559
      %5579 = vst [vmem:[%s5560] ss:$9 sm:$0xff] %v3560
      %v5580 = vld [vmem:[#allocation1] sm:$0xff]
      %5581 = vst [vmem:[#allocation1] ss:$9 sm:$0xff] %v3561
      %5582 = vst [vmem:[%s5554] ss:$9 sm:$0xff] %v3562
      %5583 = vst [vmem:[%s5556] ss:$9 sm:$0xff] %v3563
      %5584 = vst [vmem:[%s5558] ss:$9 sm:$0xff] %v3564
      %5585 = vst [vmem:[%s5560] ss:$9 sm:$0xff] %v3533
      %v5586 = vld [vmem:[#allocation1] sm:$0xff]
      %5587 = vst [vmem:[#allocation1] ss:$9 sm:$0xff] %v3565
      %5588 = vst [vmem:[%s5554] ss:$9 sm:$0xff] %v3566
      %5589 = vst [vmem:[%s5556] ss:$9 sm:$0xff] %v3567
      %5590 = vst [vmem:[%s5558] ss:$9 sm:$0xff] %v3568
      %5591 = vst [vmem:[%s5560] ss:$9 sm:$0xff] %v3569
      %v5592 = vld [vmem:[#allocation1] sm:$0xff]
      %5593 = vst [vmem:[#allocation1] ss:$9 sm:$0xff] %v3570
      %5594 = vst [vmem:[%s5554] ss:$9 sm:$0xff] %v3571
      %5595 = vst [vmem:[%s5556] ss:$9 sm:$0xff] %v3536
      %5596 = vst [vmem:[%s5558] ss:$9 sm:$0xff] %v3572
      %5597 = vst [vmem:[%s5560] ss:$9 sm:$0xff] %v3573
      %v5598 = vld [vmem:[#allocation1] sm:$0xff]
      %5599 = vst [vmem:[#allocation1] ss:$9 sm:$0xff] %v3574
      %5600 = vst [vmem:[%s5554] ss:$9 sm:$0xff] %v3575
      %5601 = vst [vmem:[%s5556] ss:$9 sm:$0xff] %v3576
      %5602 = vst [vmem:[%s5558] ss:$9 sm:$0xff] %v3577
      %5603 = vst [vmem:[%s5560] ss:$9 sm:$0xff] %v3578
      %v5604 = vld [vmem:[#allocation1] sm:$0xff]
      %v5613 = vpack.c.bf16 %v5562, %v5562
      %v5614 = vpack.c.bf16 %v5568, %v5568
      %v5615 = vpack.c.bf16 %v5574, %v5574
      %v5616 = vpack.c.bf16 %v5580, %v5580
      %v5617 = vpack.c.bf16 %v5586, %v5586
      %v5618 = vpack.c.bf16 %v5592, %v5592
      %v5619 = vpack.c.bf16 %v5598, %v5598
      %v5620 = vpack.c.bf16 %v5604, %v5604
      %5621 = vrot.lane.b32.xlu0 %v4319, 104
      %v5622 = vpop.permute.xlu0 %5621
      %v5624 = vunpack.c.l.b16 %v5545
      %v5625 = vpack.c.b16 %v5624, %v5624
      %5626 = vrot.lane.b32.xlu0 %v5625, 104
      %v5627 = vpop.permute.xlu0 %5626
      %v5629 = vsel %vm1068, %v5622, 0
      %v5632 = vsel %vm1068, %v5627, 0
      %5634 = vmatpush.bf16.xpose.msra.mxu0 0
      %5635 = vmatpush.bf16.xpose.msra.mxu0 0
      %5636 = vmatpush.bf16.xpose.msra.mxu0 0
      %5637 = vmatpush.bf16.xpose.msra.mxu0 0
      %5638 = vmatpush.bf16.xpose.msra.mxu0 0
      %5639 = vmatpush.bf16.xpose.msra.mxu0 0
      %5640 = vmatpush.bf16.xpose.msra.mxu0 0
      %5641 = vmatpush.bf16.xpose.msra.mxu0 %v5632
      %5642 = vmatmul.bf16.gmra.mxu0 %v5629
      %v5643 = vpop.f32.mrf.mxu0
      %v5644 = vadd.f32 0.0, %v5643
      %v5645 = vpop.f32.mrf.mxu0
      %5646 = vdwg.mxu0
      %5647 = vrot.lane.b32.xlu0 %v4348, 104
      %v5648 = vpop.permute.xlu0 %5647
      %v5650 = vunpack.c.l.b16 %v5546
      %v5651 = vpack.c.b16 %v5650, %v5650
      %5652 = vrot.lane.b32.xlu0 %v5651, 104
      %v5653 = vpop.permute.xlu0 %5652
      %v5655 = vsel %vm1068, %v5648, 0
      %v5658 = vsel %vm1068, %v5653, 0
      %5660 = vmatpush.bf16.xpose.msra.mxu0 0
      %5661 = vmatpush.bf16.xpose.msra.mxu0 0
      %5662 = vmatpush.bf16.xpose.msra.mxu0 0
      %5663 = vmatpush.bf16.xpose.msra.mxu0 0
      %5664 = vmatpush.bf16.xpose.msra.mxu0 0
      %5665 = vmatpush.bf16.xpose.msra.mxu0 0
      %5666 = vmatpush.bf16.xpose.msra.mxu0 0
      %5667 = vmatpush.bf16.xpose.msra.mxu0 %v5658
      %5668 = vmatmul.bf16.gmra.mxu0 %v5655
      %v5669 = vpop.f32.mrf.mxu0
      %v5670 = vadd.f32 0.0, %v5669
      %v5671 = vpop.f32.mrf.mxu0
      %5672 = vdwg.mxu0
      %5673 = vrot.lane.b32.xlu0 %v4377, 104
      %v5674 = vpop.permute.xlu0 %5673
      %v5676 = vunpack.c.l.b16 %v5547
      %v5677 = vpack.c.b16 %v5676, %v5676
      %5678 = vrot.lane.b32.xlu0 %v5677, 104
      %v5679 = vpop.permute.xlu0 %5678
      %v5681 = vsel %vm1068, %v5674, 0
      %v5684 = vsel %vm1068, %v5679, 0
      %5686 = vmatpush.bf16.xpose.msra.mxu0 0
      %5687 = vmatpush.bf16.xpose.msra.mxu0 0
      %5688 = vmatpush.bf16.xpose.msra.mxu0 0
      %5689 = vmatpush.bf16.xpose.msra.mxu0 0
      %5690 = vmatpush.bf16.xpose.msra.mxu0 0
      %5691 = vmatpush.bf16.xpose.msra.mxu0 0
      %5692 = vmatpush.bf16.xpose.msra.mxu0 0
      %5693 = vmatpush.bf16.xpose.msra.mxu0 %v5684
      %5694 = vmatmul.bf16.gmra.mxu0 %v5681
      %v5695 = vpop.f32.mrf.mxu0
      %v5696 = vadd.f32 0.0, %v5695
      %v5697 = vpop.f32.mrf.mxu0
      %5698 = vdwg.mxu0
      %5699 = vrot.lane.b32.xlu0 %v4406, 104
      %v5700 = vpop.permute.xlu0 %5699
      %v5702 = vunpack.c.l.b16 %v5548
      %v5703 = vpack.c.b16 %v5702, %v5702
      %5704 = vrot.lane.b32.xlu0 %v5703, 104
      %v5705 = vpop.permute.xlu0 %5704
      %v5707 = vsel %vm1068, %v5700, 0
      %v5710 = vsel %vm1068, %v5705, 0
      %5712 = vmatpush.bf16.xpose.msra.mxu0 0
      %5713 = vmatpush.bf16.xpose.msra.mxu0 0
      %5714 = vmatpush.bf16.xpose.msra.mxu0 0
      %5715 = vmatpush.bf16.xpose.msra.mxu0 0
      %5716 = vmatpush.bf16.xpose.msra.mxu0 0
      %5717 = vmatpush.bf16.xpose.msra.mxu0 0
      %5718 = vmatpush.bf16.xpose.msra.mxu0 0
      %5719 = vmatpush.bf16.xpose.msra.mxu0 %v5710
      %5720 = vmatmul.bf16.gmra.mxu0 %v5707
      %v5721 = vpop.f32.mrf.mxu0
      %v5722 = vadd.f32 0.0, %v5721
      %v5723 = vpop.f32.mrf.mxu0
      %5724 = vdwg.mxu0
      %5725 = vrot.lane.b32.xlu0 %v4435, 104
      %v5726 = vpop.permute.xlu0 %5725
      %v5728 = vunpack.c.l.b16 %v5549
      %v5729 = vpack.c.b16 %v5728, %v5728
      %5730 = vrot.lane.b32.xlu0 %v5729, 104
      %v5731 = vpop.permute.xlu0 %5730
      %v5733 = vsel %vm1068, %v5726, 0
      %v5736 = vsel %vm1068, %v5731, 0
      %5738 = vmatpush.bf16.xpose.msra.mxu0 0
      %5739 = vmatpush.bf16.xpose.msra.mxu0 0
      %5740 = vmatpush.bf16.xpose.msra.mxu0 0
      %5741 = vmatpush.bf16.xpose.msra.mxu0 0
      %5742 = vmatpush.bf16.xpose.msra.mxu0 0
      %5743 = vmatpush.bf16.xpose.msra.mxu0 0
      %5744 = vmatpush.bf16.xpose.msra.mxu0 0
      %5745 = vmatpush.bf16.xpose.msra.mxu0 %v5736
      %5746 = vmatmul.bf16.gmra.mxu0 %v5733
      %v5747 = vpop.f32.mrf.mxu0
      %v5748 = vadd.f32 0.0, %v5747
      %v5749 = vpop.f32.mrf.mxu0
      %5750 = vdwg.mxu0
      %5751 = vrot.lane.b32.xlu0 %v4464, 104
      %v5752 = vpop.permute.xlu0 %5751
      %v5754 = vunpack.c.l.b16 %v5550
      %v5755 = vpack.c.b16 %v5754, %v5754
      %5756 = vrot.lane.b32.xlu0 %v5755, 104
      %v5757 = vpop.permute.xlu0 %5756
      %v5759 = vsel %vm1068, %v5752, 0
      %v5762 = vsel %vm1068, %v5757, 0
      %5764 = vmatpush.bf16.xpose.msra.mxu0 0
      %5765 = vmatpush.bf16.xpose.msra.mxu0 0
      %5766 = vmatpush.bf16.xpose.msra.mxu0 0
      %5767 = vmatpush.bf16.xpose.msra.mxu0 0
      %5768 = vmatpush.bf16.xpose.msra.mxu0 0
      %5769 = vmatpush.bf16.xpose.msra.mxu0 0
      %5770 = vmatpush.bf16.xpose.msra.mxu0 0
      %5771 = vmatpush.bf16.xpose.msra.mxu0 %v5762
      %5772 = vmatmul.bf16.gmra.mxu0 %v5759
      %v5773 = vpop.f32.mrf.mxu0
      %v5774 = vadd.f32 0.0, %v5773
      %v5775 = vpop.f32.mrf.mxu0
      %5776 = vdwg.mxu0
      %5777 = vrot.lane.b32.xlu0 %v4493, 104
      %v5778 = vpop.permute.xlu0 %5777
      %v5780 = vunpack.c.l.b16 %v5551
      %v5781 = vpack.c.b16 %v5780, %v5780
      %5782 = vrot.lane.b32.xlu0 %v5781, 104
      %v5783 = vpop.permute.xlu0 %5782
      %v5785 = vsel %vm1068, %v5778, 0
      %v5788 = vsel %vm1068, %v5783, 0
      %5790 = vmatpush.bf16.xpose.msra.mxu0 0
      %5791 = vmatpush.bf16.xpose.msra.mxu0 0
      %5792 = vmatpush.bf16.xpose.msra.mxu0 0
      %5793 = vmatpush.bf16.xpose.msra.mxu0 0
      %5794 = vmatpush.bf16.xpose.msra.mxu0 0
      %5795 = vmatpush.bf16.xpose.msra.mxu0 0
      %5796 = vmatpush.bf16.xpose.msra.mxu0 0
      %5797 = vmatpush.bf16.xpose.msra.mxu0 %v5788
      %5798 = vmatmul.bf16.gmra.mxu0 %v5785
      %v5799 = vpop.f32.mrf.mxu0
      %v5800 = vadd.f32 0.0, %v5799
      %v5801 = vpop.f32.mrf.mxu0
      %5802 = vdwg.mxu0
      %5803 = vrot.lane.b32.xlu0 %v4522, 104
      %v5804 = vpop.permute.xlu0 %5803
      %v5806 = vunpack.c.l.b16 %v5552
      %v5807 = vpack.c.b16 %v5806, %v5806
      %5808 = vrot.lane.b32.xlu0 %v5807, 104
      %v5809 = vpop.permute.xlu0 %5808
      %v5811 = vsel %vm1068, %v5804, 0
      %v5814 = vsel %vm1068, %v5809, 0
      %5816 = vmatpush.bf16.xpose.msra.mxu0 0
      %5817 = vmatpush.bf16.xpose.msra.mxu0 0
      %5818 = vmatpush.bf16.xpose.msra.mxu0 0
      %5819 = vmatpush.bf16.xpose.msra.mxu0 0
      %5820 = vmatpush.bf16.xpose.msra.mxu0 0
      %5821 = vmatpush.bf16.xpose.msra.mxu0 0
      %5822 = vmatpush.bf16.xpose.msra.mxu0 0
      %5823 = vmatpush.bf16.xpose.msra.mxu0 %v5814
      %5824 = vmatmul.bf16.gmra.mxu0 %v5811
      %v5825 = vpop.f32.mrf.mxu0
      %v5826 = vadd.f32 0.0, %v5825
      %v5827 = vpop.f32.mrf.mxu0
      %5828 = vdwg.mxu0
      %v5829 = vmul.f32 %v5644, 0.35355338
      %v5830 = vmul.f32 %v5670, 0.35355338
      %v5831 = vmul.f32 %v5696, 0.35355338
      %v5832 = vmul.f32 %v5722, 0.35355338
      %v5833 = vmul.f32 %v5748, 0.35355338
      %v5834 = vmul.f32 %v5774, 0.35355338
      %v5835 = vmul.f32 %v5800, 0.35355338
      %v5836 = vmul.f32 %v5826, 0.35355338
      %v5837 = vsel %vm3888, %v5829, -inf
      %5838 = vmax.xlane.f32.xlu0 %v5837
      %v5839 = vpop.xlane.xlu0 %5838
      %v5840 = vsel %vm3888, %v5830, -inf
      %5841 = vmax.xlane.f32.xlu0 %v5840
      %v5842 = vpop.xlane.xlu0 %5841
      %v5843 = vsel %vm3888, %v5831, -inf
      %5844 = vmax.xlane.f32.xlu0 %v5843
      %v5845 = vpop.xlane.xlu0 %5844
      %v5846 = vsel %vm3888, %v5832, -inf
      %5847 = vmax.xlane.f32.xlu0 %v5846
      %v5848 = vpop.xlane.xlu0 %5847
      %v5849 = vsel %vm3888, %v5833, -inf
      %5850 = vmax.xlane.f32.xlu0 %v5849
      %v5851 = vpop.xlane.xlu0 %5850
      %v5852 = vsel %vm3888, %v5834, -inf
      %5853 = vmax.xlane.f32.xlu0 %v5852
      %v5854 = vpop.xlane.xlu0 %5853
      %v5855 = vsel %vm3888, %v5835, -inf
      %5856 = vmax.xlane.f32.xlu0 %v5855
      %v5857 = vpop.xlane.xlu0 %5856
      %v5858 = vsel %vm3888, %v5836, -inf
      %5859 = vmax.xlane.f32.xlu0 %v5858
      %v5860 = vpop.xlane.xlu0 %5859
      %v5861 = vsub.f32 %v5829, %v5839
      %v5862 = vsub.f32 %v5830, %v5842
      %v5863 = vsub.f32 %v5831, %v5845
      %v5864 = vsub.f32 %v5832, %v5848
      %v5865 = vsub.f32 %v5833, %v5851
      %v5866 = vsub.f32 %v5834, %v5854
      %v5867 = vsub.f32 %v5835, %v5857
      %v5868 = vsub.f32 %v5836, %v5860
      %v5869 = vmul.f32 %v5861, 1.442695
      %v5870 = vpow.pop %v5869
      %v5871 = vmul.f32 %v5862, 1.442695
      %v5872 = vpow.pop %v5871
      %v5873 = vmul.f32 %v5863, 1.442695
      %v5874 = vpow.pop %v5873
      %v5875 = vmul.f32 %v5864, 1.442695
      %v5876 = vpow.pop %v5875
      %v5877 = vmul.f32 %v5865, 1.442695
      %v5878 = vpow.pop %v5877
      %v5879 = vmul.f32 %v5866, 1.442695
      %v5880 = vpow.pop %v5879
      %v5881 = vmul.f32 %v5867, 1.442695
      %v5882 = vpow.pop %v5881
      %v5883 = vmul.f32 %v5868, 1.442695
      %v5884 = vpow.pop %v5883
      %v5885 = vsel %vm3888, %v5870, 0.0
      %5886 = vadd.xlane.f32.xlu0 %v5885
      %v5887 = vpop.xlane.xlu0 %5886
      %v5888 = vsel %vm3888, %v5872, 0.0
      %5889 = vadd.xlane.f32.xlu0 %v5888
      %v5890 = vpop.xlane.xlu0 %5889
      %v5891 = vsel %vm3888, %v5874, 0.0
      %5892 = vadd.xlane.f32.xlu0 %v5891
      %v5893 = vpop.xlane.xlu0 %5892
      %v5894 = vsel %vm3888, %v5876, 0.0
      %5895 = vadd.xlane.f32.xlu0 %v5894
      %v5896 = vpop.xlane.xlu0 %5895
      %v5897 = vsel %vm3888, %v5878, 0.0
      %5898 = vadd.xlane.f32.xlu0 %v5897
      %v5899 = vpop.xlane.xlu0 %5898
      %v5900 = vsel %vm3888, %v5880, 0.0
      %5901 = vadd.xlane.f32.xlu0 %v5900
      %v5902 = vpop.xlane.xlu0 %5901
      %v5903 = vsel %vm3888, %v5882, 0.0
      %5904 = vadd.xlane.f32.xlu0 %v5903
      %v5905 = vpop.xlane.xlu0 %5904
      %v5906 = vsel %vm3888, %v5884, 0.0
      %5907 = vadd.xlane.f32.xlu0 %v5906
      %v5908 = vpop.xlane.xlu0 %5907
      %v5909 = vrcp.pop %v5887
      %v5910 = vrcp.pop %v5890
      %v5911 = vrcp.pop %v5893
      %v5912 = vrcp.pop %v5896
      %v5913 = vrcp.pop %v5899
      %v5914 = vrcp.pop %v5902
      %v5915 = vrcp.pop %v5905
      %v5916 = vrcp.pop %v5908
      %v5917 = vmul.f32 %v5870, %v5909
      %v5918 = vmul.f32 %v5872, %v5910
      %v5919 = vmul.f32 %v5874, %v5911
      %v5920 = vmul.f32 %v5876, %v5912
      %v5921 = vmul.f32 %v5878, %v5913
      %v5922 = vmul.f32 %v5880, %v5914
      %v5923 = vmul.f32 %v5882, %v5915
      %v5924 = vmul.f32 %v5884, %v5916
      %v5925 = vpack.c.bf16 %v5917, %v5917
      %v5926 = vpack.c.bf16 %v5918, %v5918
      %v5927 = vpack.c.bf16 %v5919, %v5919
      %v5928 = vpack.c.bf16 %v5920, %v5920
      %v5929 = vpack.c.bf16 %v5921, %v5921
      %v5930 = vpack.c.bf16 %v5922, %v5922
      %v5931 = vpack.c.bf16 %v5923, %v5923
      %v5932 = vpack.c.bf16 %v5924, %v5924
      %v5934 = vunpack.c.l.b16 %v5613
      %v5935 = vpack.c.b16 %v5934, %v5934
      %5936 = vrot.lane.b32.xlu0 %v5935, 72
      %v5937 = vpop.permute.xlu0 %5936
      %v5939 = vsel %vm3990, %v5925, 0
      %v5942 = vand.u32 %v5937, %v3996
      %5944 = vmatpush.bf16.msra.mxu0 0
      %5945 = vmatpush.bf16.msra.mxu0 0
      %5946 = vmatpush.bf16.msra.mxu0 0
      %5947 = vmatpush.bf16.msra.mxu0 0
      %5948 = vmatpush.bf16.msra.mxu0 0
      %5949 = vmatpush.bf16.msra.mxu0 0
      %5950 = vmatpush.bf16.msra.mxu0 0
      %5951 = vmatpush.bf16.msra.mxu0 %v5942
      %5952 = vmatmul.bf16.gmra.mxu0 %v5939
      %v5953 = vpop.f32.mrf.mxu0
      %v5954 = vadd.f32 0.0, %v5953
      %v5955 = vpop.f32.mrf.mxu0
      %5956 = vdwg.mxu0
      %v5958 = vunpack.c.l.b16 %v5614
      %v5959 = vpack.c.b16 %v5958, %v5958
      %5960 = vrot.lane.b32.xlu0 %v5959, 72
      %v5961 = vpop.permute.xlu0 %5960
      %v5963 = vsel %vm3990, %v5926, 0
      %v5966 = vand.u32 %v5961, %v3996
      %5968 = vmatpush.bf16.msra.mxu0 0
      %5969 = vmatpush.bf16.msra.mxu0 0
      %5970 = vmatpush.bf16.msra.mxu0 0
      %5971 = vmatpush.bf16.msra.mxu0 0
      %5972 = vmatpush.bf16.msra.mxu0 0
      %5973 = vmatpush.bf16.msra.mxu0 0
      %5974 = vmatpush.bf16.msra.mxu0 0
      %5975 = vmatpush.bf16.msra.mxu0 %v5966
      %5976 = vmatmul.bf16.gmra.mxu0 %v5963
      %v5977 = vpop.f32.mrf.mxu0
      %v5978 = vadd.f32 0.0, %v5977
      %v5979 = vpop.f32.mrf.mxu0
      %5980 = vdwg.mxu0
      %v5982 = vunpack.c.l.b16 %v5615
      %v5983 = vpack.c.b16 %v5982, %v5982
      %5984 = vrot.lane.b32.xlu0 %v5983, 72
      %v5985 = vpop.permute.xlu0 %5984
      %v5987 = vsel %vm3990, %v5927, 0
      %v5990 = vand.u32 %v5985, %v3996
      %5992 = vmatpush.bf16.msra.mxu0 0
      %5993 = vmatpush.bf16.msra.mxu0 0
      %5994 = vmatpush.bf16.msra.mxu0 0
      %5995 = vmatpush.bf16.msra.mxu0 0
      %5996 = vmatpush.bf16.msra.mxu0 0
      %5997 = vmatpush.bf16.msra.mxu0 0
      %5998 = vmatpush.bf16.msra.mxu0 0
      %5999 = vmatpush.bf16.msra.mxu0 %v5990
      %6000 = vmatmul.bf16.gmra.mxu0 %v5987
      %v6001 = vpop.f32.mrf.mxu0
      %v6002 = vadd.f32 0.0, %v6001
      %v6003 = vpop.f32.mrf.mxu0
      %6004 = vdwg.mxu0
      %v6006 = vunpack.c.l.b16 %v5616
      %v6007 = vpack.c.b16 %v6006, %v6006
      %6008 = vrot.lane.b32.xlu0 %v6007, 72
      %v6009 = vpop.permute.xlu0 %6008
      %v6011 = vsel %vm3990, %v5928, 0
      %v6014 = vand.u32 %v6009, %v3996
      %6016 = vmatpush.bf16.msra.mxu0 0
      %6017 = vmatpush.bf16.msra.mxu0 0
      %6018 = vmatpush.bf16.msra.mxu0 0
      %6019 = vmatpush.bf16.msra.mxu0 0
      %6020 = vmatpush.bf16.msra.mxu0 0
      %6021 = vmatpush.bf16.msra.mxu0 0
      %6022 = vmatpush.bf16.msra.mxu0 0
      %6023 = vmatpush.bf16.msra.mxu0 %v6014
      %6024 = vmatmul.bf16.gmra.mxu0 %v6011
      %v6025 = vpop.f32.mrf.mxu0
      %v6026 = vadd.f32 0.0, %v6025
      %v6027 = vpop.f32.mrf.mxu0
      %6028 = vdwg.mxu0
      %v6030 = vunpack.c.l.b16 %v5617
      %v6031 = vpack.c.b16 %v6030, %v6030
      %6032 = vrot.lane.b32.xlu0 %v6031, 72
      %v6033 = vpop.permute.xlu0 %6032
      %v6035 = vsel %vm3990, %v5929, 0
      %v6038 = vand.u32 %v6033, %v3996
      %6040 = vmatpush.bf16.msra.mxu0 0
      %6041 = vmatpush.bf16.msra.mxu0 0
      %6042 = vmatpush.bf16.msra.mxu0 0
      %6043 = vmatpush.bf16.msra.mxu0 0
      %6044 = vmatpush.bf16.msra.mxu0 0
      %6045 = vmatpush.bf16.msra.mxu0 0
      %6046 = vmatpush.bf16.msra.mxu0 0
      %6047 = vmatpush.bf16.msra.mxu0 %v6038
      %6048 = vmatmul.bf16.gmra.mxu0 %v6035
      %v6049 = vpop.f32.mrf.mxu0
      %v6050 = vadd.f32 0.0, %v6049
      %v6051 = vpop.f32.mrf.mxu0
      %6052 = vdwg.mxu0
      %v6054 = vunpack.c.l.b16 %v5618
      %v6055 = vpack.c.b16 %v6054, %v6054
      %6056 = vrot.lane.b32.xlu0 %v6055, 72
      %v6057 = vpop.permute.xlu0 %6056
      %v6059 = vsel %vm3990, %v5930, 0
      %v6062 = vand.u32 %v6057, %v3996
      %6064 = vmatpush.bf16.msra.mxu0 0
      %6065 = vmatpush.bf16.msra.mxu0 0
      %6066 = vmatpush.bf16.msra.mxu0 0
      %6067 = vmatpush.bf16.msra.mxu0 0
      %6068 = vmatpush.bf16.msra.mxu0 0
      %6069 = vmatpush.bf16.msra.mxu0 0
      %6070 = vmatpush.bf16.msra.mxu0 0
      %6071 = vmatpush.bf16.msra.mxu0 %v6062
      %6072 = vmatmul.bf16.gmra.mxu0 %v6059
      %v6073 = vpop.f32.mrf.mxu0
      %v6074 = vadd.f32 0.0, %v6073
      %v6075 = vpop.f32.mrf.mxu0
      %6076 = vdwg.mxu0
      %v6078 = vunpack.c.l.b16 %v5619
      %v6079 = vpack.c.b16 %v6078, %v6078
      %6080 = vrot.lane.b32.xlu0 %v6079, 72
      %v6081 = vpop.permute.xlu0 %6080
      %v6083 = vsel %vm3990, %v5931, 0
      %v6086 = vand.u32 %v6081, %v3996
      %6088 = vmatpush.bf16.msra.mxu0 0
      %6089 = vmatpush.bf16.msra.mxu0 0
      %6090 = vmatpush.bf16.msra.mxu0 0
      %6091 = vmatpush.bf16.msra.mxu0 0
      %6092 = vmatpush.bf16.msra.mxu0 0
      %6093 = vmatpush.bf16.msra.mxu0 0
      %6094 = vmatpush.bf16.msra.mxu0 0
      %6095 = vmatpush.bf16.msra.mxu0 %v6086
      %6096 = vmatmul.bf16.gmra.mxu0 %v6083
      %v6097 = vpop.f32.mrf.mxu0
      %v6098 = vadd.f32 0.0, %v6097
      %v6099 = vpop.f32.mrf.mxu0
      %6100 = vdwg.mxu0
      %v6102 = vunpack.c.l.b16 %v5620
      %v6103 = vpack.c.b16 %v6102, %v6102
      %6104 = vrot.lane.b32.xlu0 %v6103, 72
      %v6105 = vpop.permute.xlu0 %6104
      %v6107 = vsel %vm3990, %v5932, 0
      %v6110 = vand.u32 %v6105, %v3996
      %6112 = vmatpush.bf16.msra.mxu0 0
      %6113 = vmatpush.bf16.msra.mxu0 0
      %6114 = vmatpush.bf16.msra.mxu0 0
      %6115 = vmatpush.bf16.msra.mxu0 0
      %6116 = vmatpush.bf16.msra.mxu0 0
      %6117 = vmatpush.bf16.msra.mxu0 0
      %6118 = vmatpush.bf16.msra.mxu0 0
      %6119 = vmatpush.bf16.msra.mxu0 %v6110
      %6120 = vmatmul.bf16.gmra.mxu0 %v6107
      %v6121 = vpop.f32.mrf.mxu0
      %v6122 = vadd.f32 0.0, %v6121
      %v6123 = vpop.f32.mrf.mxu0
      %6124 = vdwg.mxu0
      %6133 = vrot.lane.b32.xlu0 %v4674, 8
      %v6134 = vpop.permute.xlu0 %6133
      %6135 = vrot.lane.b32.xlu0 %v4698, 8
      %v6136 = vpop.permute.xlu0 %6135
      %6137 = vrot.lane.b32.xlu0 %v4722, 8
      %v6138 = vpop.permute.xlu0 %6137
      %6139 = vrot.lane.b32.xlu0 %v4746, 8
      %v6140 = vpop.permute.xlu0 %6139
      %6141 = vrot.lane.b32.xlu0 %v4770, 8
      %v6142 = vpop.permute.xlu0 %6141
      %6143 = vrot.lane.b32.xlu0 %v4794, 8
      %v6144 = vpop.permute.xlu0 %6143
      %6145 = vrot.lane.b32.xlu0 %v4818, 8
      %v6146 = vpop.permute.xlu0 %6145
      %6147 = vrot.lane.b32.xlu0 %v4842, 8
      %v6148 = vpop.permute.xlu0 %6147
      %6165 = vrot.lane.b32.xlu0 %v5314, 16
      %v6166 = vpop.permute.xlu0 %6165
      %6167 = vrot.lane.b32.xlu0 %v5338, 16
      %v6168 = vpop.permute.xlu0 %6167
      %6169 = vrot.lane.b32.xlu0 %v5362, 16
      %v6170 = vpop.permute.xlu0 %6169
      %6171 = vrot.lane.b32.xlu0 %v5386, 16
      %v6172 = vpop.permute.xlu0 %6171
      %6173 = vrot.lane.b32.xlu0 %v5410, 16
      %v6174 = vpop.permute.xlu0 %6173
      %6175 = vrot.lane.b32.xlu0 %v5434, 16
      %v6176 = vpop.permute.xlu0 %6175
      %6177 = vrot.lane.b32.xlu0 %v5458, 16
      %v6178 = vpop.permute.xlu0 %6177
      %6179 = vrot.lane.b32.xlu0 %v5482, 16
      %v6180 = vpop.permute.xlu0 %6179
      %6197 = vrot.lane.b32.xlu0 %v5954, 24
      %v6198 = vpop.permute.xlu0 %6197
      %6199 = vrot.lane.b32.xlu0 %v5978, 24
      %v6200 = vpop.permute.xlu0 %6199
      %6201 = vrot.lane.b32.xlu0 %v6002, 24
      %v6202 = vpop.permute.xlu0 %6201
      %6203 = vrot.lane.b32.xlu0 %v6026, 24
      %v6204 = vpop.permute.xlu0 %6203
      %6205 = vrot.lane.b32.xlu0 %v6050, 24
      %v6206 = vpop.permute.xlu0 %6205
      %6207 = vrot.lane.b32.xlu0 %v6074, 24
      %v6208 = vpop.permute.xlu0 %6207
      %6209 = vrot.lane.b32.xlu0 %v6098, 24
      %v6210 = vpop.permute.xlu0 %6209
      %6211 = vrot.lane.b32.xlu0 %v6122, 24
      %v6212 = vpop.permute.xlu0 %6211
      %v6221 = vsel %vm1068, %v4010, %v6134
      %v6222 = vsel %vm1068, %v4034, %v6136
      %v6223 = vsel %vm1068, %v4058, %v6138
      %v6224 = vsel %vm1068, %v4082, %v6140
      %v6225 = vsel %vm1068, %v4106, %v6142
      %v6226 = vsel %vm1068, %v4130, %v6144
      %v6227 = vsel %vm1068, %v4154, %v6146
      %v6228 = vsel %vm1068, %v4178, %v6148
      %v6229 = vsel %vm3268, %v6221, %v6166
      %v6230 = vsel %vm3268, %v6222, %v6168
      %v6231 = vsel %vm3268, %v6223, %v6170
      %v6232 = vsel %vm3268, %v6224, %v6172
      %v6233 = vsel %vm3268, %v6225, %v6174
      %v6234 = vsel %vm3268, %v6226, %v6176
      %v6235 = vsel %vm3268, %v6227, %v6178
      %v6236 = vsel %vm3268, %v6228, %v6180
      %v6237 = vsel %vm3277, %v6229, %v6198
      %v6238 = vsel %vm3277, %v6230, %v6200
      %v6239 = vsel %vm3277, %v6231, %v6202
      %v6240 = vsel %vm3277, %v6232, %v6204
      %v6241 = vsel %vm3277, %v6233, %v6206
      %v6242 = vsel %vm3277, %v6234, %v6208
      %v6243 = vsel %vm3277, %v6235, %v6210
      %v6244 = vsel %vm3277, %v6236, %v6212
      %6253 = vst [vmem:[#allocation1] ss:$2 sm:$0xff] %v6237
      %s6254 = scalar_lea.vmem [#allocation1], 1
      %6255 = vst [vmem:[%s6254] ss:$2 sm:$0xff] %v6238
      %s6256 = scalar_lea.vmem [#allocation1], 16
      %6257 = vst [vmem:[%s6256] ss:$2 sm:$0xff] %v6239
      %s6258 = scalar_lea.vmem [#allocation1], 17
      %6259 = vst [vmem:[%s6258] ss:$2 sm:$0xff] %v6240
      %s6260 = scalar_lea.vmem [#allocation1], 32
      %6261 = vst [vmem:[%s6260] ss:$2 sm:$0xff] %v6241
      %s6262 = scalar_lea.vmem [#allocation1], 33
      %6263 = vst [vmem:[%s6262] ss:$2 sm:$0xff] %v6242
      %s6264 = scalar_lea.vmem [#allocation1], 48
      %6265 = vst [vmem:[%s6264] ss:$2 sm:$0xff] %v6243
      %s6266 = scalar_lea.vmem [#allocation1], 49
      %6267 = vst [vmem:[%s6266] ss:$2 sm:$0xff] %v6244
      %v6268 = vld.sshfl [vmem:[#allocation1] sm:$0xff pattern:$0x75316420]
      %v6269 = vld.sshfl [vmem:[#allocation1 + $0x10] sm:$0xff pattern:$0x75316420]
      %v6270 = vld.sshfl [vmem:[#allocation1 + $0x20] sm:$0xff pattern:$0x75316420]
      %v6271 = vld.sshfl [vmem:[#allocation1 + $0x30] sm:$0xff pattern:$0x75316420]
      %v6276 = vpack.c.bf16 %v6269, %v6268
      %v6277 = vpack.c.bf16 %v6271, %v6270
      %v6279 = vperm.slane %v3583, 0
      %v6285 = vunpack.c.l.b16 %v3579
      %v6286 = vunpack.c.l.b16 %v3580
      %v6287 = vunpack.c.l.b16 %v3581
      %v6288 = vunpack.c.l.b16 %v3582
      %v6289 = vpack.c.b16 %v6286, %v6285
      %v6290 = vpack.c.b16 %v6288, %v6287
      %v6294 = vsel %vm857, %v6276, 0
      %v6297 = vsel %vm857, %v6277, 0
      %6299 = vmatpush.bf16.msra.mxu0 0
      %6300 = vmatpush.bf16.msra.mxu0 0
      %6301 = vmatpush.bf16.msra.mxu0 0
      %6302 = vmatpush.bf16.msra.mxu0 0
      %6303 = vmatpush.bf16.msra.mxu0 0
      %6304 = vmatpush.bf16.msra.mxu0 0
      %6305 = vmatpush.bf16.msra.mxu0 %v6290
      %6306 = vmatpush.bf16.msra.mxu0 %v6289
      %6307 = vmatmul.bf16.gmra.mxu0 %v6294
      %v6308 = vpop.f32.mrf.mxu0
      %v6309 = vadd.f32 %v6279, %v6308
      %v6310 = vpop.f32.mrf.mxu0
      %v6311 = vadd.f32 %v6279, %v6310
      %6312 = vmatmul.bf16.gmra.mxu0 %v6297
      %v6313 = vpop.f32.mrf.mxu0
      %v6314 = vadd.f32 %v6279, %v6313
      %v6315 = vpop.f32.mrf.mxu0
      %v6316 = vadd.f32 %v6279, %v6315
      %6317 = vdwg.mxu0
      %v6318 = vld [vmem:[%s14] sm:$0x1]
      %v6319 = vld [vmem:[%s15] sm:$0x1]
      %v6320 = vld [vmem:[%s16] sm:$0xf]
      %v6321 = vld [vmem:[%s16 + $0x4] sm:$0xf]
      %v6322 = vld [vmem:[%s16 + $0x8] sm:$0xf]
      %v6323 = vld [vmem:[%s16 + $0xc] sm:$0xf]
      %v6324 = vld [vmem:[%s17] sm:$0x1]
      %v6325 = vld [vmem:[%s18] sm:$0xf]
      %v6326 = vld [vmem:[%s18 + $0x4] sm:$0xf]
      %v6327 = vld [vmem:[%s18 + $0x8] sm:$0xf]
      %v6328 = vld [vmem:[%s18 + $0xc] sm:$0xf]
      %v6329 = vld [vmem:[%s18 + $0x10] sm:$0xf]
      %v6330 = vld [vmem:[%s18 + $0x14] sm:$0xf]
      %v6331 = vld [vmem:[%s18 + $0x18] sm:$0xf]
      %v6332 = vld [vmem:[%s18 + $0x1c] sm:$0xf]
      %v6333 = vld [vmem:[%s18 + $0x20] sm:$0xf]
      %v6334 = vld [vmem:[%s18 + $0x24] sm:$0xf]
      %v6335 = vld [vmem:[%s18 + $0x28] sm:$0xf]
      %v6336 = vld [vmem:[%s18 + $0x2c] sm:$0xf]
      %v6337 = vld [vmem:[%s18 + $0x30] sm:$0xf]
      %v6338 = vld [vmem:[%s18 + $0x34] sm:$0xf]
      %v6339 = vld [vmem:[%s18 + $0x38] sm:$0xf]
      %v6340 = vld [vmem:[%s18 + $0x3c] sm:$0xf]
      %v6341 = vld [vmem:[%s19] sm:$0x1]
      %v6342 = vld [vmem:[%s20] sm:$0x1]
      %v6343 = vld [vmem:[%s21] sm:$0x1]
      %v6348 = vrot.slane %v6309, 4
      %v6349 = vrot.slane %v6311, 4
      %v6350 = vrot.slane %v6314, 4
      %v6351 = vrot.slane %v6316, 4
      %v6356 = vadd.f32 %v688, %v6309
      %v6357 = vadd.f32 %v689, %v6348
      %v6358 = vadd.f32 %v690, %v6311
      %v6359 = vadd.f32 %v691, %v6349
      %v6360 = vadd.f32 %v692, %v6314
      %v6361 = vadd.f32 %v693, %v6350
      %v6362 = vadd.f32 %v694, %v6316
      %v6363 = vadd.f32 %v695, %v6351
      %6372 = vst [vmem:[#allocation1] ss:$2 sm:$0xff] %v6356
      %s6373 = scalar_lea.vmem [#allocation1], 1
      %6374 = vst [vmem:[%s6373] ss:$2 sm:$0xff] %v6357
      %s6375 = scalar_lea.vmem [#allocation1], 16
      %6376 = vst [vmem:[%s6375] ss:$2 sm:$0xff] %v6358
      %s6377 = scalar_lea.vmem [#allocation1], 17
      %6378 = vst [vmem:[%s6377] ss:$2 sm:$0xff] %v6359
      %s6379 = scalar_lea.vmem [#allocation1], 32
      %6380 = vst [vmem:[%s6379] ss:$2 sm:$0xff] %v6360
      %s6381 = scalar_lea.vmem [#allocation1], 33
      %6382 = vst [vmem:[%s6381] ss:$2 sm:$0xff] %v6361
      %s6383 = scalar_lea.vmem [#allocation1], 48
      %6384 = vst [vmem:[%s6383] ss:$2 sm:$0xff] %v6362
      %s6385 = scalar_lea.vmem [#allocation1], 49
      %6386 = vst [vmem:[%s6385] ss:$2 sm:$0xff] %v6363
      %v6387 = vld.sshfl [vmem:[#allocation1] sm:$0xff pattern:$0x75316420]
      %v6388 = vld.sshfl [vmem:[#allocation1 + $0x10] sm:$0xff pattern:$0x75316420]
      %v6389 = vld.sshfl [vmem:[#allocation1 + $0x20] sm:$0xff pattern:$0x75316420]
      %v6390 = vld.sshfl [vmem:[#allocation1 + $0x30] sm:$0xff pattern:$0x75316420]
      %v6395 = vsel %vm857, %v6387, 0.0
      %6396 = vadd.xlane.f32.xlu0 %v6395
      %v6397 = vpop.xlane.xlu0 %6396
      %v6398 = vsel %vm857, %v6388, 0.0
      %6399 = vadd.xlane.f32.xlu0 %v6398
      %v6400 = vpop.xlane.xlu0 %6399
      %v6401 = vsel %vm857, %v6389, 0.0
      %6402 = vadd.xlane.f32.xlu0 %v6401
      %v6403 = vpop.xlane.xlu0 %6402
      %v6404 = vsel %vm857, %v6390, 0.0
      %6405 = vadd.xlane.f32.xlu0 %v6404
      %v6406 = vpop.xlane.xlu0 %6405
      %v6407 = vrcp.pop 32.0
      %v6408 = vmul.f32 32.0, %v6407
      %v6409 = vsub.f32 1.0, %v6408
      %v6410 = vmul.f32 %v6407, %v6409
      %v6411 = vadd.f32 %v6407, %v6410
      %vm6412 = vweird.f32 %v6407
      %v6413 = vsel %vm6412, %v6407, %v6411
      %v6414 = vmul.f32 %v6397, %v6413
      %v6415 = vmul.f32 %v6400, %v6413
      %v6416 = vmul.f32 %v6403, %v6413
      %v6417 = vmul.f32 %v6406, %v6413
      %v6423 = vunpack.c.l.s4 839922192
      %v6424 = vunpack.c.0.s8 %v6423
      %v6425 = vperm.slane %v6414, %v6424
      %v6427 = vunpack.c.l.s4 1985246804
      %v6428 = vunpack.c.0.s8 %v6427
      %v6429 = vperm.slane %v6414, %v6428
      %v6431 = vunpack.c.l.s4 839922192
      %v6432 = vunpack.c.0.s8 %v6431
      %v6433 = vperm.slane %v6415, %v6432
      %v6435 = vunpack.c.l.s4 1985246804
      %v6436 = vunpack.c.0.s8 %v6435
      %v6437 = vperm.slane %v6415, %v6436
      %v6439 = vunpack.c.l.s4 839922192
      %v6440 = vunpack.c.0.s8 %v6439
      %v6441 = vperm.slane %v6416, %v6440
      %v6443 = vunpack.c.l.s4 1985246804
      %v6444 = vunpack.c.0.s8 %v6443
      %v6445 = vperm.slane %v6416, %v6444
      %v6447 = vunpack.c.l.s4 839922192
      %v6448 = vunpack.c.0.s8 %v6447
      %v6449 = vperm.slane %v6417, %v6448
      %v6451 = vunpack.c.l.s4 1985246804
      %v6452 = vunpack.c.0.s8 %v6451
      %v6453 = vperm.slane %v6417, %v6452
      %v6462 = vsub.f32 %v6356, %v6425
      %v6463 = vsub.f32 %v6357, %v6429
      %v6464 = vsub.f32 %v6358, %v6433
      %v6465 = vsub.f32 %v6359, %v6437
      %v6466 = vsub.f32 %v6360, %v6441
      %v6467 = vsub.f32 %v6361, %v6445
      %v6468 = vsub.f32 %v6362, %v6449
      %v6469 = vsub.f32 %v6363, %v6453
      %v6470 = vmul.f32 %v6462, %v6462
      %v6471 = vmul.f32 %v6463, %v6463
      %v6472 = vmul.f32 %v6464, %v6464
      %v6473 = vmul.f32 %v6465, %v6465
      %v6474 = vmul.f32 %v6466, %v6466
      %v6475 = vmul.f32 %v6467, %v6467
      %v6476 = vmul.f32 %v6468, %v6468
      %v6477 = vmul.f32 %v6469, %v6469
      %6486 = vst [vmem:[#allocation1] ss:$2 sm:$0xff] %v6470
      %s6487 = scalar_lea.vmem [#allocation1], 1
      %6488 = vst [vmem:[%s6487] ss:$2 sm:$0xff] %v6471
      %s6489 = scalar_lea.vmem [#allocation1], 16
      %6490 = vst [vmem:[%s6489] ss:$2 sm:$0xff] %v6472
      %s6491 = scalar_lea.vmem [#allocation1], 17
      %6492 = vst [vmem:[%s6491] ss:$2 sm:$0xff] %v6473
      %s6493 = scalar_lea.vmem [#allocation1], 32
      %6494 = vst [vmem:[%s6493] ss:$2 sm:$0xff] %v6474
      %s6495 = scalar_lea.vmem [#allocation1], 33
      %6496 = vst [vmem:[%s6495] ss:$2 sm:$0xff] %v6475
      %s6497 = scalar_lea.vmem [#allocation1], 48
      %6498 = vst [vmem:[%s6497] ss:$2 sm:$0xff] %v6476
      %s6499 = scalar_lea.vmem [#allocation1], 49
      %6500 = vst [vmem:[%s6499] ss:$2 sm:$0xff] %v6477
      %v6501 = vld.sshfl [vmem:[#allocation1] sm:$0xff pattern:$0x75316420]
      %v6502 = vld.sshfl [vmem:[#allocation1 + $0x10] sm:$0xff pattern:$0x75316420]
      %v6503 = vld.sshfl [vmem:[#allocation1 + $0x20] sm:$0xff pattern:$0x75316420]
      %v6504 = vld.sshfl [vmem:[#allocation1 + $0x30] sm:$0xff pattern:$0x75316420]
      %v6509 = vsel %vm857, %v6501, 0.0
      %6510 = vadd.xlane.f32.xlu0 %v6509
      %v6511 = vpop.xlane.xlu0 %6510
      %v6512 = vsel %vm857, %v6502, 0.0
      %6513 = vadd.xlane.f32.xlu0 %v6512
      %v6514 = vpop.xlane.xlu0 %6513
      %v6515 = vsel %vm857, %v6503, 0.0
      %6516 = vadd.xlane.f32.xlu0 %v6515
      %v6517 = vpop.xlane.xlu0 %6516
      %v6518 = vsel %vm857, %v6504, 0.0
      %6519 = vadd.xlane.f32.xlu0 %v6518
      %v6520 = vpop.xlane.xlu0 %6519
      %v6521 = vmul.f32 %v6511, %v6413
      %v6522 = vmul.f32 %v6514, %v6413
      %v6523 = vmul.f32 %v6517, %v6413
      %v6524 = vmul.f32 %v6520, %v6413
      %v6525 = vadd.f32 %v6521, 1e-05
      %v6526 = vadd.f32 %v6522, 1e-05
      %v6527 = vadd.f32 %v6523, 1e-05
      %v6528 = vadd.f32 %v6524, 1e-05
      %v6529 = vrsqrt.pop %v6525
      %v6530 = vmul.f32 %v6529, %v6525
      %v6531 = vmul.f32 %v6530, %v6529
      %v6532 = vmul.f32 0.5, %v6531
      %v6533 = vsub.f32 1.5, %v6532
      %v6534 = vmul.f32 %v6529, %v6533
      %vm6535 = vweird.f32 %v6525
      %vm6536 = vweird.f32 %v6529
      %vm6537 = vmor %vm6535, %vm6536
      %v6538 = vsel %vm6537, %v6529, %v6534
      %v6539 = vrsqrt.pop %v6526
      %v6540 = vmul.f32 %v6539, %v6526
      %v6541 = vmul.f32 %v6540, %v6539
      %v6542 = vmul.f32 0.5, %v6541
      %v6543 = vsub.f32 1.5, %v6542
      %v6544 = vmul.f32 %v6539, %v6543
      %vm6545 = vweird.f32 %v6526
      %vm6546 = vweird.f32 %v6539
      %vm6547 = vmor %vm6545, %vm6546
      %v6548 = vsel %vm6547, %v6539, %v6544
      %v6549 = vrsqrt.pop %v6527
      %v6550 = vmul.f32 %v6549, %v6527
      %v6551 = vmul.f32 %v6550, %v6549
      %v6552 = vmul.f32 0.5, %v6551
      %v6553 = vsub.f32 1.5, %v6552
      %v6554 = vmul.f32 %v6549, %v6553
      %vm6555 = vweird.f32 %v6527
      %vm6556 = vweird.f32 %v6549
      %vm6557 = vmor %vm6555, %vm6556
      %v6558 = vsel %vm6557, %v6549, %v6554
      %v6559 = vrsqrt.pop %v6528
      %v6560 = vmul.f32 %v6559, %v6528
      %v6561 = vmul.f32 %v6560, %v6559
      %v6562 = vmul.f32 0.5, %v6561
      %v6563 = vsub.f32 1.5, %v6562
      %v6564 = vmul.f32 %v6559, %v6563
      %vm6565 = vweird.f32 %v6528
      %vm6566 = vweird.f32 %v6559
      %vm6567 = vmor %vm6565, %vm6566
      %v6568 = vsel %vm6567, %v6559, %v6564
      %v6574 = vunpack.c.l.s4 839922192
      %v6575 = vunpack.c.0.s8 %v6574
      %v6576 = vperm.slane %v6538, %v6575
      %v6578 = vunpack.c.l.s4 1985246804
      %v6579 = vunpack.c.0.s8 %v6578
      %v6580 = vperm.slane %v6538, %v6579
      %v6582 = vunpack.c.l.s4 839922192
      %v6583 = vunpack.c.0.s8 %v6582
      %v6584 = vperm.slane %v6548, %v6583
      %v6586 = vunpack.c.l.s4 1985246804
      %v6587 = vunpack.c.0.s8 %v6586
      %v6588 = vperm.slane %v6548, %v6587
      %v6590 = vunpack.c.l.s4 839922192
      %v6591 = vunpack.c.0.s8 %v6590
      %v6592 = vperm.slane %v6558, %v6591
      %v6594 = vunpack.c.l.s4 1985246804
      %v6595 = vunpack.c.0.s8 %v6594
      %v6596 = vperm.slane %v6558, %v6595
      %v6598 = vunpack.c.l.s4 839922192
      %v6599 = vunpack.c.0.s8 %v6598
      %v6600 = vperm.slane %v6568, %v6599
      %v6602 = vunpack.c.l.s4 1985246804
      %v6603 = vunpack.c.0.s8 %v6602
      %v6604 = vperm.slane %v6568, %v6603
      %v6613 = vmul.f32 %v6462, %v6576
      %v6614 = vmul.f32 %v6463, %v6580
      %v6615 = vmul.f32 %v6464, %v6584
      %v6616 = vmul.f32 %v6465, %v6588
      %v6617 = vmul.f32 %v6466, %v6592
      %v6618 = vmul.f32 %v6467, %v6596
      %v6619 = vmul.f32 %v6468, %v6600
      %v6620 = vmul.f32 %v6469, %v6604
      %v6622 = vperm.slane %v6318, 0
      %v6624 = vrot.slane %v6622, 4
      %v6626 = vmul.f32 %v6613, %v6622
      %v6627 = vmul.f32 %v6614, %v6624
      %v6628 = vmul.f32 %v6615, %v6622
      %v6629 = vmul.f32 %v6616, %v6624
      %v6630 = vmul.f32 %v6617, %v6622
      %v6631 = vmul.f32 %v6618, %v6624
      %v6632 = vmul.f32 %v6619, %v6622
      %v6633 = vmul.f32 %v6620, %v6624
      %v6635 = vperm.slane %v6319, 0
      %v6637 = vrot.slane %v6635, 4
      %v6639 = vadd.f32 %v6626, %v6635
      %v6640 = vadd.f32 %v6627, %v6637
      %v6641 = vadd.f32 %v6628, %v6635
      %v6642 = vadd.f32 %v6629, %v6637
      %v6643 = vadd.f32 %v6630, %v6635
      %v6644 = vadd.f32 %v6631, %v6637
      %v6645 = vadd.f32 %v6632, %v6635
      %v6646 = vadd.f32 %v6633, %v6637
      %6655 = vst [vmem:[#allocation1] ss:$2 sm:$0xff] %v6639
      %s6656 = scalar_lea.vmem [#allocation1], 1
      %6657 = vst [vmem:[%s6656] ss:$2 sm:$0xff] %v6640
      %s6658 = scalar_lea.vmem [#allocation1], 16
      %6659 = vst [vmem:[%s6658] ss:$2 sm:$0xff] %v6641
      %s6660 = scalar_lea.vmem [#allocation1], 17
      %6661 = vst [vmem:[%s6660] ss:$2 sm:$0xff] %v6642
      %s6662 = scalar_lea.vmem [#allocation1], 32
      %6663 = vst [vmem:[%s6662] ss:$2 sm:$0xff] %v6643
      %s6664 = scalar_lea.vmem [#allocation1], 33
      %6665 = vst [vmem:[%s6664] ss:$2 sm:$0xff] %v6644
      %s6666 = scalar_lea.vmem [#allocation1], 48
      %6667 = vst [vmem:[%s6666] ss:$2 sm:$0xff] %v6645
      %s6668 = scalar_lea.vmem [#allocation1], 49
      %6669 = vst [vmem:[%s6668] ss:$2 sm:$0xff] %v6646
      %v6670 = vld.sshfl [vmem:[#allocation1] sm:$0xff pattern:$0x75316420]
      %v6671 = vld.sshfl [vmem:[#allocation1 + $0x10] sm:$0xff pattern:$0x75316420]
      %v6672 = vld.sshfl [vmem:[#allocation1 + $0x20] sm:$0xff pattern:$0x75316420]
      %v6673 = vld.sshfl [vmem:[#allocation1 + $0x30] sm:$0xff pattern:$0x75316420]
      %v6678 = vpack.c.bf16 %v6671, %v6670
      %v6679 = vpack.c.bf16 %v6673, %v6672
      %v6681 = vperm.slane %v6324, 0
      %v6687 = vunpack.c.l.b16 %v6320
      %v6688 = vunpack.c.l.b16 %v6321
      %v6689 = vunpack.c.l.b16 %v6322
      %v6690 = vunpack.c.l.b16 %v6323
      %v6691 = vpack.c.b16 %v6688, %v6687
      %v6692 = vpack.c.b16 %v6690, %v6689
      %v6696 = vsel %vm857, %v6678, 0
      %v6699 = vsel %vm857, %v6679, 0
      %6701 = vmatpush.bf16.msra.mxu0 0
      %6702 = vmatpush.bf16.msra.mxu0 0
      %6703 = vmatpush.bf16.msra.mxu0 0
      %6704 = vmatpush.bf16.msra.mxu0 0
      %6705 = vmatpush.bf16.msra.mxu0 0
      %6706 = vmatpush.bf16.msra.mxu0 0
      %6707 = vmatpush.bf16.msra.mxu0 %v6692
      %6708 = vmatpush.bf16.msra.mxu0 %v6691
      %6709 = vmatmul.bf16.gmra.mxu0 %v6696
      %v6710 = vpop.f32.mrf.mxu0
      %v6711 = vadd.f32 %v6681, %v6710
      %v6712 = vpop.f32.mrf.mxu0
      %v6713 = vadd.f32 %v6681, %v6712
      %6714 = vmatmul.bf16.gmra.mxu0 %v6699
      %v6715 = vpop.f32.mrf.mxu0
      %v6716 = vadd.f32 %v6681, %v6715
      %v6717 = vpop.f32.mrf.mxu0
      %v6718 = vadd.f32 %v6681, %v6717
      %6719 = vdwg.mxu0
      %v6720 = vmul.f32 %v6711, 0.5
      %v6721 = vmul.f32 %v6713, 0.5
      %v6722 = vmul.f32 %v6716, 0.5
      %v6723 = vmul.f32 %v6718, 0.5
      %v6724 = vmul.f32 %v6711, 0.044715
      %v6725 = vmul.f32 %v6713, 0.044715
      %v6726 = vmul.f32 %v6716, 0.044715
      %v6727 = vmul.f32 %v6718, 0.044715
      %v6728 = vmul.f32 %v6724, %v6711
      %v6729 = vmul.f32 %v6725, %v6713
      %v6730 = vmul.f32 %v6726, %v6716
      %v6731 = vmul.f32 %v6727, %v6718
      %v6732 = vmul.f32 %v6728, %v6711
      %v6733 = vmul.f32 %v6729, %v6713
      %v6734 = vmul.f32 %v6730, %v6716
      %v6735 = vmul.f32 %v6731, %v6718
      %v6736 = vadd.f32 %v6711, %v6732
      %v6737 = vadd.f32 %v6713, %v6733
      %v6738 = vadd.f32 %v6716, %v6734
      %v6739 = vadd.f32 %v6718, %v6735
      %v6740 = vmul.f32 %v6736, 0.7978846
      %v6741 = vmul.f32 %v6737, 0.7978846
      %v6742 = vmul.f32 %v6738, 0.7978846
      %v6743 = vmul.f32 %v6739, 0.7978846
      %v6744 = vtanh.pop %v6740
      %v6745 = vtanh.pop %v6741
      %v6746 = vtanh.pop %v6742
      %v6747 = vtanh.pop %v6743
      %v6748 = vadd.f32 %v6744, 1.0
      %v6749 = vadd.f32 %v6745, 1.0
      %v6750 = vadd.f32 %v6746, 1.0
      %v6751 = vadd.f32 %v6747, 1.0
      %v6752 = vmul.f32 %v6720, %v6748
      %v6753 = vmul.f32 %v6721, %v6749
      %v6754 = vmul.f32 %v6722, %v6750
      %v6755 = vmul.f32 %v6723, %v6751
      %v6756 = vpack.c.bf16 %v6753, %v6752
      %v6757 = vpack.c.bf16 %v6755, %v6754
      %v6759 = vperm.slane %v6341, 0
      %v6777 = vunpack.c.l.b16 %v6325
      %v6778 = vunpack.c.l.b16 %v6326
      %v6779 = vunpack.c.l.b16 %v6327
      %v6780 = vunpack.c.l.b16 %v6328
      %v6781 = vunpack.c.l.b16 %v6329
      %v6782 = vunpack.c.l.b16 %v6330
      %v6783 = vunpack.c.l.b16 %v6331
      %v6784 = vunpack.c.l.b16 %v6332
      %v6785 = vunpack.c.l.b16 %v6333
      %v6786 = vunpack.c.l.b16 %v6334
      %v6787 = vunpack.c.l.b16 %v6335
      %v6788 = vunpack.c.l.b16 %v6336
      %v6789 = vunpack.c.l.b16 %v6337
      %v6790 = vunpack.c.l.b16 %v6338
      %v6791 = vunpack.c.l.b16 %v6339
      %v6792 = vunpack.c.l.b16 %v6340
      %v6793 = vpack.c.b16 %v6778, %v6777
      %v6794 = vpack.c.b16 %v6780, %v6779
      %v6795 = vpack.c.b16 %v6782, %v6781
      %v6796 = vpack.c.b16 %v6784, %v6783
      %v6797 = vpack.c.b16 %v6786, %v6785
      %v6798 = vpack.c.b16 %v6788, %v6787
      %v6799 = vpack.c.b16 %v6790, %v6789
      %v6800 = vpack.c.b16 %v6792, %v6791
      %6809 = vmatpush.bf16.msra.mxu0 %v6800
      %6810 = vmatpush.bf16.msra.mxu0 %v6799
      %6811 = vmatpush.bf16.msra.mxu0 %v6798
      %6812 = vmatpush.bf16.msra.mxu0 %v6797
      %6813 = vmatpush.bf16.msra.mxu0 %v6796
      %6814 = vmatpush.bf16.msra.mxu0 %v6795
      %6815 = vmatpush.bf16.msra.mxu0 %v6794
      %6816 = vmatpush.bf16.msra.mxu0 %v6793
      %6817 = vmatmul.bf16.gmra.mxu0 %v6756
      %v6818 = vpop.f32.mrf.mxu0
      %v6819 = vadd.f32 %v6759, %v6818
      %v6820 = vpop.f32.mrf.mxu0
      %v6821 = vadd.f32 %v6759, %v6820
      %6822 = vmatmul.bf16.gmra.mxu0 %v6757
      %v6823 = vpop.f32.mrf.mxu0
      %v6824 = vadd.f32 %v6759, %v6823
      %v6825 = vpop.f32.mrf.mxu0
      %v6826 = vadd.f32 %v6759, %v6825
      %6827 = vdwg.mxu0
      %v6832 = vrot.slane %v6819, 4
      %v6833 = vrot.slane %v6821, 4
      %v6834 = vrot.slane %v6824, 4
      %v6835 = vrot.slane %v6826, 4
      %v6840 = vadd.f32 %v6639, %v6819
      %v6841 = vadd.f32 %v6640, %v6832
      %v6842 = vadd.f32 %v6641, %v6821
      %v6843 = vadd.f32 %v6642, %v6833
      %v6844 = vadd.f32 %v6643, %v6824
      %v6845 = vadd.f32 %v6644, %v6834
      %v6846 = vadd.f32 %v6645, %v6826
      %v6847 = vadd.f32 %v6646, %v6835
      %6856 = vst [vmem:[#allocation1] ss:$2 sm:$0xff] %v6840
      %s6857 = scalar_lea.vmem [#allocation1], 1
      %6858 = vst [vmem:[%s6857] ss:$2 sm:$0xff] %v6841
      %s6859 = scalar_lea.vmem [#allocation1], 16
      %6860 = vst [vmem:[%s6859] ss:$2 sm:$0xff] %v6842
      %s6861 = scalar_lea.vmem [#allocation1], 17
      %6862 = vst [vmem:[%s6861] ss:$2 sm:$0xff] %v6843
      %s6863 = scalar_lea.vmem [#allocation1], 32
      %6864 = vst [vmem:[%s6863] ss:$2 sm:$0xff] %v6844
      %s6865 = scalar_lea.vmem [#allocation1], 33
      %6866 = vst [vmem:[%s6865] ss:$2 sm:$0xff] %v6845
      %s6867 = scalar_lea.vmem [#allocation1], 48
      %6868 = vst [vmem:[%s6867] ss:$2 sm:$0xff] %v6846
      %s6869 = scalar_lea.vmem [#allocation1], 49
      %6870 = vst [vmem:[%s6869] ss:$2 sm:$0xff] %v6847
      %v6871 = vld.sshfl [vmem:[#allocation1] sm:$0xff pattern:$0x75316420]
      %v6872 = vld.sshfl [vmem:[#allocation1 + $0x10] sm:$0xff pattern:$0x75316420]
      %v6873 = vld.sshfl [vmem:[#allocation1 + $0x20] sm:$0xff pattern:$0x75316420]
      %v6874 = vld.sshfl [vmem:[#allocation1 + $0x30] sm:$0xff pattern:$0x75316420]
      %v6879 = vsel %vm857, %v6871, 0.0
      %6880 = vadd.xlane.f32.xlu0 %v6879
      %v6881 = vpop.xlane.xlu0 %6880
      %v6882 = vsel %vm857, %v6872, 0.0
      %6883 = vadd.xlane.f32.xlu0 %v6882
      %v6884 = vpop.xlane.xlu0 %6883
      %v6885 = vsel %vm857, %v6873, 0.0
      %6886 = vadd.xlane.f32.xlu0 %v6885
      %v6887 = vpop.xlane.xlu0 %6886
      %v6888 = vsel %vm857, %v6874, 0.0
      %6889 = vadd.xlane.f32.xlu0 %v6888
      %v6890 = vpop.xlane.xlu0 %6889
      %v6891 = vmul.f32 %v6881, %v6413
      %v6892 = vmul.f32 %v6884, %v6413
      %v6893 = vmul.f32 %v6887, %v6413
      %v6894 = vmul.f32 %v6890, %v6413
      %v6900 = vunpack.c.l.s4 839922192
      %v6901 = vunpack.c.0.s8 %v6900
      %v6902 = vperm.slane %v6891, %v6901
      %v6904 = vunpack.c.l.s4 1985246804
      %v6905 = vunpack.c.0.s8 %v6904
      %v6906 = vperm.slane %v6891, %v6905
      %v6908 = vunpack.c.l.s4 839922192
      %v6909 = vunpack.c.0.s8 %v6908
      %v6910 = vperm.slane %v6892, %v6909
      %v6912 = vunpack.c.l.s4 1985246804
      %v6913 = vunpack.c.0.s8 %v6912
      %v6914 = vperm.slane %v6892, %v6913
      %v6916 = vunpack.c.l.s4 839922192
      %v6917 = vunpack.c.0.s8 %v6916
      %v6918 = vperm.slane %v6893, %v6917
      %v6920 = vunpack.c.l.s4 1985246804
      %v6921 = vunpack.c.0.s8 %v6920
      %v6922 = vperm.slane %v6893, %v6921
      %v6924 = vunpack.c.l.s4 839922192
      %v6925 = vunpack.c.0.s8 %v6924
      %v6926 = vperm.slane %v6894, %v6925
      %v6928 = vunpack.c.l.s4 1985246804
      %v6929 = vunpack.c.0.s8 %v6928
      %v6930 = vperm.slane %v6894, %v6929
      %v6939 = vsub.f32 %v6840, %v6902
      %v6940 = vsub.f32 %v6841, %v6906
      %v6941 = vsub.f32 %v6842, %v6910
      %v6942 = vsub.f32 %v6843, %v6914
      %v6943 = vsub.f32 %v6844, %v6918
      %v6944 = vsub.f32 %v6845, %v6922
      %v6945 = vsub.f32 %v6846, %v6926
      %v6946 = vsub.f32 %v6847, %v6930
      %v6947 = vmul.f32 %v6939, %v6939
      %v6948 = vmul.f32 %v6940, %v6940
      %v6949 = vmul.f32 %v6941, %v6941
      %v6950 = vmul.f32 %v6942, %v6942
      %v6951 = vmul.f32 %v6943, %v6943
      %v6952 = vmul.f32 %v6944, %v6944
      %v6953 = vmul.f32 %v6945, %v6945
      %v6954 = vmul.f32 %v6946, %v6946
      %6963 = vst [vmem:[#allocation1] ss:$2 sm:$0xff] %v6947
      %s6964 = scalar_lea.vmem [#allocation1], 1
      %6965 = vst [vmem:[%s6964] ss:$2 sm:$0xff] %v6948
      %s6966 = scalar_lea.vmem [#allocation1], 16
      %6967 = vst [vmem:[%s6966] ss:$2 sm:$0xff] %v6949
      %s6968 = scalar_lea.vmem [#allocation1], 17
      %6969 = vst [vmem:[%s6968] ss:$2 sm:$0xff] %v6950
      %s6970 = scalar_lea.vmem [#allocation1], 32
      %6971 = vst [vmem:[%s6970] ss:$2 sm:$0xff] %v6951
      %s6972 = scalar_lea.vmem [#allocation1], 33
      %6973 = vst [vmem:[%s6972] ss:$2 sm:$0xff] %v6952
      %s6974 = scalar_lea.vmem [#allocation1], 48
      %6975 = vst [vmem:[%s6974] ss:$2 sm:$0xff] %v6953
      %s6976 = scalar_lea.vmem [#allocation1], 49
      %6977 = vst [vmem:[%s6976] ss:$2 sm:$0xff] %v6954
      %v6978 = vld.sshfl [vmem:[#allocation1] sm:$0xff pattern:$0x75316420]
      %v6979 = vld.sshfl [vmem:[#allocation1 + $0x10] sm:$0xff pattern:$0x75316420]
      %v6980 = vld.sshfl [vmem:[#allocation1 + $0x20] sm:$0xff pattern:$0x75316420]
      %v6981 = vld.sshfl [vmem:[#allocation1 + $0x30] sm:$0xff pattern:$0x75316420]
      %v6986 = vsel %vm857, %v6978, 0.0
      %6987 = vadd.xlane.f32.xlu0 %v6986
      %v6988 = vpop.xlane.xlu0 %6987
      %v6989 = vsel %vm857, %v6979, 0.0
      %6990 = vadd.xlane.f32.xlu0 %v6989
      %v6991 = vpop.xlane.xlu0 %6990
      %v6992 = vsel %vm857, %v6980, 0.0
      %6993 = vadd.xlane.f32.xlu0 %v6992
      %v6994 = vpop.xlane.xlu0 %6993
      %v6995 = vsel %vm857, %v6981, 0.0
      %6996 = vadd.xlane.f32.xlu0 %v6995
      %v6997 = vpop.xlane.xlu0 %6996
      %v6998 = vmul.f32 %v6988, %v6413
      %v6999 = vmul.f32 %v6991, %v6413
      %v7000 = vmul.f32 %v6994, %v6413
      %v7001 = vmul.f32 %v6997, %v6413
      %v7002 = vadd.f32 %v6998, 1e-05
      %v7003 = vadd.f32 %v6999, 1e-05
      %v7004 = vadd.f32 %v7000, 1e-05
      %v7005 = vadd.f32 %v7001, 1e-05
      %v7006 = vrsqrt.pop %v7002
      %v7007 = vmul.f32 %v7006, %v7002
      %v7008 = vmul.f32 %v7007, %v7006
      %v7009 = vmul.f32 0.5, %v7008
      %v7010 = vsub.f32 1.5, %v7009
      %v7011 = vmul.f32 %v7006, %v7010
      %vm7012 = vweird.f32 %v7002
      %vm7013 = vweird.f32 %v7006
      %vm7014 = vmor %vm7012, %vm7013
      %v7015 = vsel %vm7014, %v7006, %v7011
      %v7016 = vrsqrt.pop %v7003
      %v7017 = vmul.f32 %v7016, %v7003
      %v7018 = vmul.f32 %v7017, %v7016
      %v7019 = vmul.f32 0.5, %v7018
      %v7020 = vsub.f32 1.5, %v7019
      %v7021 = vmul.f32 %v7016, %v7020
      %vm7022 = vweird.f32 %v7003
      %vm7023 = vweird.f32 %v7016
      %vm7024 = vmor %vm7022, %vm7023
      %v7025 = vsel %vm7024, %v7016, %v7021
      %v7026 = vrsqrt.pop %v7004
      %v7027 = vmul.f32 %v7026, %v7004
      %v7028 = vmul.f32 %v7027, %v7026
      %v7029 = vmul.f32 0.5, %v7028
      %v7030 = vsub.f32 1.5, %v7029
      %v7031 = vmul.f32 %v7026, %v7030
      %vm7032 = vweird.f32 %v7004
      %vm7033 = vweird.f32 %v7026
      %vm7034 = vmor %vm7032, %vm7033
      %v7035 = vsel %vm7034, %v7026, %v7031
      %v7036 = vrsqrt.pop %v7005
      %v7037 = vmul.f32 %v7036, %v7005
      %v7038 = vmul.f32 %v7037, %v7036
      %v7039 = vmul.f32 0.5, %v7038
      %v7040 = vsub.f32 1.5, %v7039
      %v7041 = vmul.f32 %v7036, %v7040
      %vm7042 = vweird.f32 %v7005
      %vm7043 = vweird.f32 %v7036
      %vm7044 = vmor %vm7042, %vm7043
      %v7045 = vsel %vm7044, %v7036, %v7041
      %v7051 = vunpack.c.l.s4 839922192
      %v7052 = vunpack.c.0.s8 %v7051
      %v7053 = vperm.slane %v7015, %v7052
      %v7055 = vunpack.c.l.s4 1985246804
      %v7056 = vunpack.c.0.s8 %v7055
      %v7057 = vperm.slane %v7015, %v7056
      %v7059 = vunpack.c.l.s4 839922192
      %v7060 = vunpack.c.0.s8 %v7059
      %v7061 = vperm.slane %v7025, %v7060
      %v7063 = vunpack.c.l.s4 1985246804
      %v7064 = vunpack.c.0.s8 %v7063
      %v7065 = vperm.slane %v7025, %v7064
      %v7067 = vunpack.c.l.s4 839922192
      %v7068 = vunpack.c.0.s8 %v7067
      %v7069 = vperm.slane %v7035, %v7068
      %v7071 = vunpack.c.l.s4 1985246804
      %v7072 = vunpack.c.0.s8 %v7071
      %v7073 = vperm.slane %v7035, %v7072
      %v7075 = vunpack.c.l.s4 839922192
      %v7076 = vunpack.c.0.s8 %v7075
      %v7077 = vperm.slane %v7045, %v7076
      %v7079 = vunpack.c.l.s4 1985246804
      %v7080 = vunpack.c.0.s8 %v7079
      %v7081 = vperm.slane %v7045, %v7080
      %v7090 = vmul.f32 %v6939, %v7053
      %v7091 = vmul.f32 %v6940, %v7057
      %v7092 = vmul.f32 %v6941, %v7061
      %v7093 = vmul.f32 %v6942, %v7065
      %v7094 = vmul.f32 %v6943, %v7069
      %v7095 = vmul.f32 %v6944, %v7073
      %v7096 = vmul.f32 %v6945, %v7077
      %v7097 = vmul.f32 %v6946, %v7081
      %v7099 = vperm.slane %v6342, 0
      %v7101 = vrot.slane %v7099, 4
      %v7103 = vmul.f32 %v7090, %v7099
      %v7104 = vmul.f32 %v7091, %v7101
      %v7105 = vmul.f32 %v7092, %v7099
      %v7106 = vmul.f32 %v7093, %v7101
      %v7107 = vmul.f32 %v7094, %v7099
      %v7108 = vmul.f32 %v7095, %v7101
      %v7109 = vmul.f32 %v7096, %v7099
      %v7110 = vmul.f32 %v7097, %v7101
      %v7112 = vperm.slane %v6343, 0
      %v7114 = vrot.slane %v7112, 4
      %v7116 = vadd.f32 %v7103, %v7112
      %v7117 = vadd.f32 %v7104, %v7114
      %v7118 = vadd.f32 %v7105, %v7112
      %v7119 = vadd.f32 %v7106, %v7114
      %v7120 = vadd.f32 %v7107, %v7112
      %v7121 = vadd.f32 %v7108, %v7114
      %v7122 = vadd.f32 %v7109, %v7112
      %v7123 = vadd.f32 %v7110, %v7114
      %vm7124 = vcmask 257024
      %7125 = vst.msk [vmem:[%s685] sm:$0xf] %vm7124, %v7116
      %7126 = vst.msk [vmem:[%s685 + $0x4] sm:$0xf] %vm7124, %v7117
      %7127 = vst.msk [vmem:[%s685 + $0x8] sm:$0xf] %vm7124, %v7118
      %7128 = vst.msk [vmem:[%s685 + $0xc] sm:$0xf] %vm7124, %v7119
      %7129 = vst.msk [vmem:[%s685 + $0x10] sm:$0xf] %vm7124, %v7120
      %7130 = vst.msk [vmem:[%s685 + $0x14] sm:$0xf] %vm7124, %v7121
      %7131 = vst.msk [vmem:[%s685 + $0x18] sm:$0xf] %vm7124, %v7122
      %7132 = vst.msk [vmem:[%s685 + $0x1c] sm:$0xf] %vm7124, %v7123
      %s7133 = smul.u32 8, %s33
      %p7134 = scmp.lt.s32.totalorder %s7133, 15
      %s7135 = scalar_select %p7134, %s7133, 15
      %s7136 = smul.addr %s7135, 4
      %s7137 = scalar_lea.vmem %s22, %s7136
      // Predicated region
      $region109: #{two_stage_attention.3} parent=107 // pred_check
        %p7138 = pneg %p518
      $region110: #{two_stage_attention.3} parent=107 // pred_check_branch
        %7140 = sbr.rel (%p7138) target = $region112
      $region111: #{two_stage_attention.3} parent=107 // pred_region
        %s7141 = smul.u32 8, %s33
      $region112: #{two_stage_attention.3} parent=107 // pred_fallthru
        _
    $region108: #{two_stage_attention.3} parent=5 // pred_fallthru
      _
    %p7142 = scmp.le.s32.totalorder 2, %s28
    // Predicated region
    $region113: #{two_stage_attention.3} parent=5 // pred_check
      %p7143 = pneg %p7142
    $region114: #{two_stage_attention.3} parent=5 // pred_check_branch
      %7145 = sbr.rel (%p7143) target = $region116
    $region115: #{two_stage_attention.3} parent=5 // pred_region
      %s7146 = ssub.s32 %s28, 2
      // Predicated region
      $region117: #{two_stage_attention.3} parent=115 // pred_check
        %p7147 = pneg %p524
      $region118: #{two_stage_attention.3} parent=115 // pred_check_branch
        %7149 = sbr.rel (%p7147) target = $region120
      $region119: #{two_stage_attention.3} parent=115 // pred_region
        %s7150 = smul.u32 8, %s34
        %p7151 = scmp.lt.s32.totalorder %s7150, 15
        %s7152 = scalar_select %p7151, %s7150, 15
        %s7153 = smul.addr %s7152, 4
        %s7154 = scalar_lea.vmem %s22, %s7153
      $region120: #{two_stage_attention.3} parent=115 // pred_fallthru
        _
    $region116: #{two_stage_attention.3} parent=5 // pred_fallthru
      _
  $region6: #{two_stage_attention.3} parent=0 // loop_footer
    %s32 = sadd.s32 1, %s28
  $region7: #{two_stage_attention.3} parent=0 // loop_footer_branch
    %27 = sbr.rel target = $region3
  $region8: #{two_stage_attention.3} parent=0 // loop_exit
    _

</llo_original>
